<compile_context>
chip_gen: v6e
topology: v6e:2x2x1
jax: 0.10.0
libtpu: 0.0.40
codegen_flags: <defaults>
</compile_context>

<pallas_src>
import functools
import numpy as np

import jax
import jax.numpy as jnp
from jax import lax
from jax.experimental import pallas as pl
from jax.experimental.pallas import tpu as pltpu

LEAKY_SLOPE = 0.01          # F.leaky_relu default negative slope
Z_SIZE = 100
INTERMEDIATE = 32 * 7 * 7   # 1568


def _round_up(n, m):
    return ((n + m - 1) // m) * m


def _vmem_limit_bytes():
    """Scoped-VMEM limit safe on v5e/v6e (128 MiB) and v7x (64 MiB per TC)."""
    cap = 64 * 1024 * 1024
    try:
        cap = int(getattr(pltpu.get_tpu_info(), "vmem_capacity_bytes", cap))
    except Exception:
        pass
    return int(min(32 * 1024 * 1024, cap * 3 // 4))


_VMEM_LIMIT = _vmem_limit_bytes()
_CPARAMS = pltpu.CompilerParams(vmem_limit_bytes=_VMEM_LIMIT)


def _leaky(x):
    return jnp.where(x >= 0, x, x * LEAKY_SLOPE)


# ------------------------------------------------------------------ kernels ---

def _gemm_bias_act_kernel(a_ref, w_ref, b_ref, o_ref, *, act):
    """(M, K)bf16 @ (K, Npad)bf16 -> f32 acc + bias + optional leaky (f32 epilogue)."""
    acc = jnp.dot(a_ref[...], w_ref[...], preferred_element_type=jnp.float32)
    acc = acc + b_ref[...]
    if act == "leaky":
        acc = jnp.where(acc >= 0, acc, acc * LEAKY_SLOPE)
    o_ref[...] = acc.astype(o_ref.dtype)


def _fc_stack_kernel(x_ref, w1_ref, b1_ref, w2_ref, b2_ref, w3_ref, b3_ref,
                     w4_ref, b4_ref, stats_ref, hdec_ref):
    """fc1 -> leaky -> fc2 -> (logvar clamp) -> fc3 -> leaky -> fc4 -> leaky, one kernel.
    fc3 consumes the *padded* fc2 output directly: its weight rows >= Z_SIZE are zero,
    so logvar / padding lanes contribute nothing (no in-kernel slicing needed)."""
    h1 = jnp.dot(x_ref[...], w1_ref[...], preferred_element_type=jnp.float32) + b1_ref[...]
    h1 = jnp.where(h1 >= 0, h1, h1 * LEAKY_SLOPE)
    h2 = jnp.dot(h1.astype(jnp.bfloat16), w2_ref[...],
                 preferred_element_type=jnp.float32) + b2_ref[...]
    lane = lax.broadcasted_iota(jnp.int32, h2.shape, 1)
    is_logvar = (lane >= Z_SIZE) & (lane < 2 * Z_SIZE)
    stats_ref[...] = jnp.where(is_logvar, jnp.maximum(h2, -20.0), h2)   # mu | clamped logvar
    h3 = jnp.dot(h2.astype(jnp.bfloat16), w3_ref[...],
                 preferred_element_type=jnp.float32) + b3_ref[...]
    h3 = jnp.where(h3 >= 0, h3, h3 * LEAKY_SLOPE)
    h4 = jnp.dot(h3.astype(jnp.bfloat16), w4_ref[...],
                 preferred_element_type=jnp.float32) + b4_ref[...]
    h4 = jnp.where(h4 >= 0, h4, h4 * LEAKY_SLOPE)
    hdec_ref[...] = h4.astype(hdec_ref.dtype)


def _deconv12_kernel(p_ref, w1_ref, b1_ref, w2_ref, o_ref):
    """deconv1 (as dense conv GEMM) + bias + leaky, then the deconv2 GEMM, fused."""
    h = jnp.dot(p_ref[...], w1_ref[...], preferred_element_type=jnp.float32) + b1_ref[...]
    h = jnp.where(h >= 0, h, h * LEAKY_SLOPE)
    o = jnp.dot(h.astype(w2_ref.dtype), w2_ref[...], preferred_element_type=jnp.float32)
    o_ref[...] = o.astype(o_ref.dtype)


# ----------------------------------------------------------- Pallas wrappers ---

def gemm_bias_act(a, w, b, act="none", out_dtype=jnp.bfloat16, use_pallas=True):
    """Single-invocation fused GEMM (no grid: whole working set << VMEM)."""
    M, K = a.shape
    K2, N = w.shape
    assert K == K2 and N % 128 == 0
    if use_pallas:
        return pl.pallas_call(
            functools.partial(_gemm_bias_act_kernel, act=act),
            out_shape=jax.ShapeDtypeStruct((M, N), out_dtype),
            compiler_params=_CPARAMS,
        )(a, w, b)
    acc = jnp.dot(a, w, preferred_element_type=jnp.float32) + b
    if act == "leaky":
        acc = _leaky(acc)
    return acc.astype(out_dtype)


def fc_stack(x, fw, use_pallas=True):
    """Fused fc1..fc4; returns (stats(B, 256) f32, hdec(B, 1664) bf16)."""
    B = x.shape[0]
    n2 = fw["w2"].shape[1]
    n4 = fw["w4"].shape[1]
    args = (x, fw["w1"], fw["b1"], fw["w2"], fw["b2"],
            fw["w3"], fw["b3"], fw["w4"], fw["b4"])
    if use_pallas:
        return pl.pallas_call(
            _fc_stack_kernel,
            out_shape=(jax.ShapeDtypeStruct((B, n2), jnp.float32),
                       jax.ShapeDtypeStruct((B, n4), jnp.bfloat16)),
            compiler_params=_CPARAMS,
        )(*args)
    h1 = _leaky(jnp.dot(x, fw["w1"], preferred_element_type=jnp.float32) + fw["b1"])
    h2 = jnp.dot(h1.astype(jnp.bfloat16), fw["w2"],
                 preferred_element_type=jnp.float32) + fw["b2"]
    lane = jnp.arange(n2)[None, :]
    stats = jnp.where((lane >= Z_SIZE) & (lane < 2 * Z_SIZE), jnp.maximum(h2, -20.0), h2)
    h3 = _leaky(jnp.dot(h2.astype(jnp.bfloat16), fw["w3"],
                        preferred_element_type=jnp.float32) + fw["b3"])
    h4 = _leaky(jnp.dot(h3.astype(jnp.bfloat16), fw["w4"],
                        preferred_element_type=jnp.float32) + fw["b4"])
    return stats, h4.astype(jnp.bfloat16)


def deconv12(patches, w1, b1, w2, use_pallas=True):
    """Fused deconv1-as-conv GEMM (+bias+leaky) and deconv2 GEMM.  Output bf16."""
    M = patches.shape[0]
    N = w2.shape[1]
    if use_pallas:
        return pl.pallas_call(
            _deconv12_kernel,
            out_shape=jax.ShapeDtypeStruct((M, N), jnp.bfloat16),
            compiler_params=_CPARAMS,
        )(patches, w1, b1, w2)
    h = _leaky(jnp.dot(patches, w1, preferred_element_type=jnp.float32) + b1)
    o = jnp.dot(h.astype(jnp.bfloat16), w2, preferred_element_type=jnp.float32)
    return o.astype(jnp.bfloat16)


# ---------------------------------------------------------------- glue (XLA) ---

def _im2col(x, k, stride):
    """x: (B, H, W, C) -> (B*Ho*Wo, k*k*C) via static strided slices (no gathers).
    K ordered (di, dj, c), matching the packed conv weights."""
    B, H, W, C = x.shape
    Ho = (H - k) // stride + 1
    Wo = (W - k) // stride + 1
    cols = []
    for di in range(k):
        for dj in range(k):
            sl = lax.slice(x, (0, di, dj, 0),
                           (B, di + (Ho - 1) * stride + 1, dj + (Wo - 1) * stride + 1, C),
                           (1, stride, stride, 1))
            cols.append(sl)                              # (B, Ho, Wo, C)
    p = jnp.concatenate(cols, axis=-1)                   # (B, Ho, Wo, k*k*C)
    return p.reshape(B * Ho * Wo, k * k * C)


def _col2im_k2s(y, B, H, W, s, C):
    """col2im for ConvTranspose2d with kernel = 2*stride.
    y: (B*H*W, 4*s*s*C) GEMM output, columns ordered (qi, qj, ri, rj, c).
    Returns (B, (H+1)*s, (W+1)*s, C) f32 via 4 dense shifted adds (no strided scatter)."""
    y = y.astype(jnp.float32).reshape(B, H, W, 2, 2, s, s, C)
    y = jnp.transpose(y, (0, 3, 4, 1, 5, 2, 6, 7))       # (B, qi, qj, H, ri, W, rj, C)
    out = jnp.zeros((B, H + 1, s, W + 1, s, C), jnp.float32)
    for qi in range(2):
        for qj in range(2):
            out = out.at[:, qi:qi + H, :, qj:qj + W, :, :].add(y[:, qi, qj])
    return out.reshape(B, (H + 1) * s, (W + 1) * s, C)


# ---------------------------------------------------------- params / packing ---

def _uniform(key, shape, fan_in):
    bound = 1.0 / float(np.sqrt(fan_in))
    return jax.random.uniform(key, shape, jnp.float32, -bound, bound)


def init_params(key):
    ks = jax.random.split(key, 20)

    def conv(i, cout, cin, k):
        fan = cin * k * k
        return (_uniform(ks[2 * i], (cout, cin, k, k), fan),
                _uniform(ks[2 * i + 1], (cout,), fan))

    def deconv(i, cin, cout, k):
        fan = cout * k * k
        return (_uniform(ks[2 * i], (cin, cout, k, k), fan),
                _uniform(ks[2 * i + 1], (cout,), fan))

    def lin(i, out, inp):
        return (_uniform(ks[2 * i], (out, inp), inp),
                _uniform(ks[2 * i + 1], (out,), inp))

    return {
        "conv1": conv(0, 32, 2, 8),
        "conv2": conv(1, 64, 32, 4),
        "conv3": conv(2, 32, 64, 3),
        "fc1": lin(3, 200, INTERMEDIATE),
        "fc2": lin(4, 2 * Z_SIZE, 200),
        "fc3": lin(5, 200, Z_SIZE),
        "fc4": lin(6, INTERMEDIATE, 200),
        "deconv1": deconv(7, 32, 64, 3),
        "deconv2": deconv(8, 64, 64, 4),
        "deconv3": deconv(9, 64, 2, 8),
    }


def prepare_params(p):
    """One-time (outside jit) weight packing: GEMM layouts, lane-dense N padding,
    bf16 cast, flatten-order permutations, deconv restructuring."""
    f32, b16 = jnp.float32, jnp.bfloat16

    def pad2(w, kp, npad):
        return jnp.pad(w, ((0, kp - w.shape[0]), (0, npad - w.shape[1])))

    def pack_conv(w, b):
        Cout, Cin, kh, kw = w.shape
        Np = _round_up(Cout, 128)
        wg = jnp.transpose(w, (2, 3, 1, 0)).reshape(kh * kw * Cin, Cout)   # K=(kh,kw,Cin)
        return (jnp.pad(wg, ((0, 0), (0, Np - Cout))).astype(b16),
                jnp.pad(b, (0, Np - Cout)).astype(f32).reshape(1, Np))

    packed = {"conv1": pack_conv(*p["conv1"]),
              "conv2": pack_conv(*p["conv2"]),
              "conv3": pack_conv(*p["conv3"])}

    # ---- FC stack (fc1 rows permuted to accept HWC flatten; fc4 cols permuted to emit it)
    Z = Z_SIZE
    fw = {}
    w1, b1 = p["fc1"]                                                   # (200, 1568)
    w1 = jnp.transpose(w1.reshape(200, 32, 7, 7), (0, 2, 3, 1)).reshape(200, INTERMEDIATE)
    n1 = _round_up(200, 128)                                            # 256
    fw["w1"] = jnp.pad(jnp.transpose(w1), ((0, 0), (0, n1 - 200))).astype(b16)
    fw["b1"] = jnp.pad(b1, (0, n1 - 200)).astype(f32).reshape(1, n1)

    w2, b2 = p["fc2"]                                                   # (200, 200)
    n2 = _round_up(2 * Z, 128)                                          # 256
    fw["w2"] = pad2(jnp.transpose(w2), n1, n2).astype(b16)
    fw["b2"] = jnp.pad(b2, (0, n2 - 2 * Z)).astype(f32).reshape(1, n2)

    w3, b3 = p["fc3"]                                                   # (200, 100)
    n3 = _round_up(200, 128)                                            # 256
    w3g = jnp.zeros((n2, n3), f32).at[:Z, :200].set(jnp.transpose(w3))  # mu rows only
    fw["w3"] = w3g.astype(b16)
    fw["b3"] = jnp.pad(b3, (0, n3 - 200)).astype(f32).reshape(1, n3)

    w4, b4 = p["fc4"]                                                   # (1568, 200)
    w4 = jnp.transpose(w4.reshape(32, 7, 7, 200), (1, 2, 0, 3)).reshape(INTERMEDIATE, 200)
    b4 = jnp.transpose(b4.reshape(32, 7, 7), (1, 2, 0)).reshape(INTERMEDIATE)
    n4 = _round_up(INTERMEDIATE, 128)                                   # 1664
    fw["w4"] = pad2(jnp.transpose(w4), n3, n4).astype(b16)
    fw["b4"] = jnp.pad(b4, (0, n4 - INTERMEDIATE)).astype(f32).reshape(1, n4)
    packed["fc"] = fw

    # ---- deconv1 (stride 1) as a dense conv on a zero-padded input (flipped kernel)
    wd1, bd1 = p["deconv1"]                                             # (32, 64, 3, 3)
    Cin, Cout, kh, kw = wd1.shape
    nd1 = _round_up(Cout, 128)                                          # 128
    wf = jnp.transpose(wd1[:, :, ::-1, ::-1], (2, 3, 0, 1)).reshape(kh * kw * Cin, Cout)
    packed["deconv1"] = (jnp.pad(wf, ((0, 0), (0, nd1 - Cout))).astype(b16),
                         jnp.pad(bd1, (0, nd1 - Cout)).astype(f32).reshape(1, nd1))

    # ---- deconv2/3 (kernel = 2*stride): columns ordered (qi, qj, ri, rj, c) for col2im
    def pack_deconv_k2s(w):
        Cin, Cout, kh, kw = w.shape
        s = kh // 2
        w6 = w.reshape(Cin, Cout, 2, s, 2, s)                           # (ci,co,qi,ri,qj,rj)
        w6 = jnp.transpose(w6, (0, 2, 4, 3, 5, 1))                      # (ci,qi,qj,ri,rj,co)
        return w6.reshape(Cin, 4 * s * s * Cout).astype(b16)

    wd2, bd2 = p["deconv2"]                                             # (64, 64, 4, 4)
    wg2 = jnp.pad(pack_deconv_k2s(wd2), ((0, 64), (0, 0)))              # K 64->128 to chain
    packed["deconv2"] = (wg2, bd2.astype(f32))                          # (128, 1024)

    wd3, bd3 = p["deconv3"]                                             # (64, 2, 8, 8)
    packed["deconv3"] = (pack_deconv_k2s(wd3), bd3.astype(f32))         # (64, 128)
    packed["zero_bias_128"] = jnp.zeros((1, 128), f32)
    return packed


# -------------------------------------------------------------------- forward ---

def vae_forward(pk, x, use_pallas=True):
    """Reconstruction path of VAE.forward(): encode -> decode(mu) -> sigmoid."""
    B = x.shape[0]

    # ---------------- encode ----------------
    h = jnp.transpose(x, (0, 2, 3, 1)).astype(jnp.bfloat16)            # NHWC (B,84,84,2)
    p1 = _im2col(h, 8, 4)                                              # (B*400, 128)
    y1 = gemm_bias_act(p1, *pk["conv1"], act="leaky", use_pallas=use_pallas)
    h = y1[:, :32].reshape(B, 20, 20, 32)
    p2 = _im2col(h, 4, 2)                                              # (B*81, 512)
    y2 = gemm_bias_act(p2, *pk["conv2"], act="leaky", use_pallas=use_pallas)
    h = y2[:, :64].reshape(B, 9, 9, 64)
    p3 = _im2col(h, 3, 1)                                              # (B*49, 576)
    y3 = gemm_bias_act(p3, *pk["conv3"], act="leaky", use_pallas=use_pallas)
    feat = y3[:, :32].reshape(B, INTERMEDIATE)                         # HWC flatten

    stats, hdec = fc_stack(feat, pk["fc"], use_pallas=use_pallas)      # fused fc1..fc4
    mu = stats[:, :Z_SIZE]
    logvar = stats[:, Z_SIZE:2 * Z_SIZE]                               # clamped in-kernel

    # ---------------- decode ----------------
    hd = hdec[:, :INTERMEDIATE].reshape(B, 7, 7, 32)                   # NHWC, leaky applied
    hd = jnp.pad(hd, ((0, 0), (2, 2), (2, 2), (0, 0)))                 # deconv1-as-conv pad
    pd1 = _im2col(hd, 3, 1)                                            # (B*81, 288)
    yd2 = deconv12(pd1, pk["deconv1"][0], pk["deconv1"][1], pk["deconv2"][0],
                   use_pallas=use_pallas)                              # (B*81, 1024) bf16
    h2 = _col2im_k2s(yd2, B, 9, 9, 2, 64)                              # (B, 20, 20, 64) f32
    h2 = _leaky(h2 + pk["deconv2"][1][None, None, None, :])
    a3 = h2.astype(jnp.bfloat16).reshape(B * 400, 64)
    yd3 = gemm_bias_act(a3, pk["deconv3"][0], pk["zero_bias_128"], act="none",
                        out_dtype=jnp.bfloat16, use_pallas=use_pallas) # (B*400, 128)
    xh = _col2im_k2s(yd3, B, 20, 20, 4, 2)                             # (B, 84, 84, 2) f32
    xh = xh + pk["deconv3"][1][None, None, None, :]
    x_hat = jnp.transpose(xh, (0, 3, 1, 2))                            # NCHW f32
    x_hat_sigmoid = jax.nn.sigmoid(x_hat)

    # TODO(synk): the policy-dependent terms of forward() (policies[p].action_logdist KL,
    # torch.autograd.grad entropy-gradient penalty, log_bernoulli, Adam update) require
    # external policy networks / autodiff of them and are not translated here.
    return mu, logvar, x_hat, x_hat_sigmoid


# ------------------------------------------------------------------------ main ---

if __name__ == "__main__":
    key = jax.random.PRNGKey(0)
    pkey, xkey = jax.random.split(key)
    params = init_params(pkey)
    packed = prepare_params(params)     # one-time weight packing, outside the jit

    B = 2
    # module hardcodes 84x84 inputs with 2 channels (intermediate_size = 32*7*7)
    x = jax.random.uniform(xkey, (B, 2, 84, 84), jnp.float32)

    fwd_pallas = jax.jit(functools.partial(vae_forward, use_pallas=True))
    mu, logvar, x_hat, x_hat_sig = fwd_pallas(packed, x)
    jax.block_until_ready((mu, logvar, x_hat, x_hat_sig))

    # pure-JAX reference with identical glue/numerics (XLA matmuls instead of Pallas)
    fwd_ref = jax.jit(functools.partial(vae_forward, use_pallas=False))
    mu_r, logvar_r, x_hat_r, x_hat_sig_r = fwd_ref(packed, x)
    jax.block_until_ready((mu_r, logvar_r, x_hat_r, x_hat_sig_r))

    assert mu.shape == (B, Z_SIZE) and logvar.shape == (B, Z_SIZE)
    assert x_hat.shape == (B, 2, 84, 84) and x_hat_sig.shape == (B, 2, 84, 84)
    assert bool(jnp.all(jnp.isfinite(x_hat)))
    np.testing.assert_allclose(np.asarray(mu), np.asarray(mu_r), rtol=5e-2, atol=5e-2)
    np.testing.assert_allclose(np.asarray(logvar), np.asarray(logvar_r), rtol=5e-2, atol=5e-2)
    np.testing.assert_allclose(np.asarray(x_hat), np.asarray(x_hat_r), rtol=5e-2, atol=5e-2)
    np.testing.assert_allclose(np.asarray(x_hat_sig), np.asarray(x_hat_sig_r),
                               rtol=5e-2, atol=5e-2)

    print("KERNEL_OK")
</pallas_src>

<mosaic_0001>
module attributes {stable_mosaic.version = 11 : i64} {
  func.func @_gemm_bias_act_kernel(%arg0: memref<800x128xbf16, #tpu.memory_space<vmem>>, %arg1: memref<128x128xbf16, #tpu.memory_space<vmem>>, %arg2: memref<1x128xf32, #tpu.memory_space<vmem>>, %arg3: memref<800x128xbf16, #tpu.memory_space<vmem>>) attributes {dimension_semantics = [], scalar_prefetch = 0 : i64, scratch_operands = 0 : i64, tpu.core_type = #tpu.core_type<tc>} {
    %c0 = arith.constant 0 : index
    %c0_0 = arith.constant 0 : index
    %0 = vector.load %arg0[%c0, %c0_0] : memref<800x128xbf16, #tpu.memory_space<vmem>>, vector<800x128xbf16>
    %c0_1 = arith.constant 0 : index
    %c0_2 = arith.constant 0 : index
    %1 = vector.load %arg1[%c0_1, %c0_2] : memref<128x128xbf16, #tpu.memory_space<vmem>>, vector<128x128xbf16>
    %cst = arith.constant dense<0.000000e+00> : vector<800x128xf32>
    %2 = tpu.matmul %0, %1, %cst {dimension_numbers = #tpu.dot_dimension_numbers<[1], [0], [0], [1], [0, 0, 1, 1], [], []>} : vector<800x128xbf16>, vector<128x128xbf16>, vector<800x128xf32> -> vector<800x128xf32>
    %c0_3 = arith.constant 0 : index
    %c0_4 = arith.constant 0 : index
    %3 = vector.load %arg2[%c0_3, %c0_4] : memref<1x128xf32, #tpu.memory_space<vmem>>, vector<1x128xf32>
    %4 = vector.broadcast %3 : vector<1x128xf32> to vector<800x128xf32>
    %5 = arith.addf %2, %4 : vector<800x128xf32>
    %cst_5 = arith.constant 0.000000e+00 : f32
    %6 = vector.broadcast %cst_5 : f32 to vector<800x128xf32>
    %7 = arith.cmpf oge, %5, %6 : vector<800x128xf32>
    %cst_6 = arith.constant 0.00999999977 : f32
    %8 = vector.broadcast %cst_6 : f32 to vector<800x128xf32>
    %9 = arith.mulf %5, %8 : vector<800x128xf32>
    %10 = arith.select %7, %5, %9 : vector<800x128xi1>, vector<800x128xf32>
    %11 = arith.truncf %10 : vector<800x128xf32> to vector<800x128xbf16>
    %c0_7 = arith.constant 0 : index
    %c0_8 = arith.constant 0 : index
    %12 = vector.load %arg3[%c0_7, %c0_8] : memref<800x128xbf16, #tpu.memory_space<vmem>>, vector<800x128xbf16>
    tpu.vector_store %arg3[%c0_7, %c0_8], %11 {strides = array<i32>} : memref<800x128xbf16, #tpu.memory_space<vmem>>, vector<800x128xbf16>,
    return
  }
}

module attributes {stable_mosaic.version = 11 : i64} {
  func.func @_gemm_bias_act_kernel(%arg0: memref<162x512xbf16, #tpu.memory_space<vmem>>, %arg1: memref<512x128xbf16, #tpu.memory_space<vmem>>, %arg2: memref<1x128xf32, #tpu.memory_space<vmem>>, %arg3: memref<162x128xbf16, #tpu.memory_space<vmem>>) attributes {dimension_semantics = [], scalar_prefetch = 0 : i64, scratch_operands = 0 : i64, tpu.core_type = #tpu.core_type<tc>} {
    %c0 = arith.constant 0 : index
    %c0_0 = arith.constant 0 : index
    %0 = vector.load %arg0[%c0, %c0_0] : memref<162x512xbf16, #tpu.memory_space<vmem>>, vector<162x512xbf16>
    %c0_1 = arith.constant 0 : index
    %c0_2 = arith.constant 0 : index
    %1 = vector.load %arg1[%c0_1, %c0_2] : memref<512x128xbf16, #tpu.memory_space<vmem>>, vector<512x128xbf16>
    %cst = arith.constant dense<0.000000e+00> : vector<162x128xf32>
    %2 = tpu.matmul %0, %1, %cst {dimension_numbers = #tpu.dot_dimension_numbers<[1], [0], [0], [1], [0, 0, 1, 1], [], []>} : vector<162x512xbf16>, vector<512x128xbf16>, vector<162x128xf32> -> vector<162x128xf32>
    %c0_3 = arith.constant 0 : index
    %c0_4 = arith.constant 0 : index
    %3 = vector.load %arg2[%c0_3, %c0_4] : memref<1x128xf32, #tpu.memory_space<vmem>>, vector<1x128xf32>
    %4 = vector.broadcast %3 : vector<1x128xf32> to vector<162x128xf32>
    %5 = arith.addf %2, %4 : vector<162x128xf32>
    %cst_5 = arith.constant 0.000000e+00 : f32
    %6 = vector.broadcast %cst_5 : f32 to vector<162x128xf32>
    %7 = arith.cmpf oge, %5, %6 : vector<162x128xf32>
    %cst_6 = arith.constant 0.00999999977 : f32
    %8 = vector.broadcast %cst_6 : f32 to vector<162x128xf32>
    %9 = arith.mulf %5, %8 : vector<162x128xf32>
    %10 = arith.select %7, %5, %9 : vector<162x128xi1>, vector<162x128xf32>
    %11 = arith.truncf %10 : vector<162x128xf32> to vector<162x128xbf16>
    %c0_7 = arith.constant 0 : index
    %c0_8 = arith.constant 0 : index
    %12 = vector.load %arg3[%c0_7, %c0_8] : memref<162x128xbf16, #tpu.memory_space<vmem>>, vector<162x128xbf16>
    tpu.vector_store %arg3[%c0_7, %c0_8], %11 {strides = array<i32>} : memref<162x128xbf16, #tpu.memory_space<vmem>>, vector<162x128xbf16>,
    return
  }
}

module attributes {stable_mosaic.version = 11 : i64} {
  func.func @_gemm_bias_act_kernel(%arg0: memref<98x576xbf16, #tpu.memory_space<vmem>>, %arg1: memref<576x128xbf16, #tpu.memory_space<vmem>>, %arg2: memref<1x128xf32, #tpu.memory_space<vmem>>, %arg3: memref<98x128xbf16, #tpu.memory_space<vmem>>) attributes {dimension_semantics = [], scalar_prefetch = 0 : i64, scratch_operands = 0 : i64, tpu.core_type = #tpu.core_type<tc>} {
    %c0 = arith.constant 0 : index
    %c0_0 = arith.constant 0 : index
    %0 = vector.load %arg0[%c0, %c0_0] : memref<98x576xbf16, #tpu.memory_space<vmem>>, vector<98x576xbf16>
    %c0_1 = arith.constant 0 : index
    %c0_2 = arith.constant 0 : index
    %1 = vector.load %arg1[%c0_1, %c0_2] : memref<576x128xbf16, #tpu.memory_space<vmem>>, vector<576x128xbf16>
    %cst = arith.constant dense<0.000000e+00> : vector<98x128xf32>
    %2 = tpu.matmul %0, %1, %cst {dimension_numbers = #tpu.dot_dimension_numbers<[1], [0], [0], [1], [0, 0, 1, 1], [], []>} : vector<98x576xbf16>, vector<576x128xbf16>, vector<98x128xf32> -> vector<98x128xf32>
    %c0_3 = arith.constant 0 : index
    %c0_4 = arith.constant 0 : index
    %3 = vector.load %arg2[%c0_3, %c0_4] : memref<1x128xf32, #tpu.memory_space<vmem>>, vector<1x128xf32>
    %4 = vector.broadcast %3 : vector<1x128xf32> to vector<98x128xf32>
    %5 = arith.addf %2, %4 : vector<98x128xf32>
    %cst_5 = arith.constant 0.000000e+00 : f32
    %6 = vector.broadcast %cst_5 : f32 to vector<98x128xf32>
    %7 = arith.cmpf oge, %5, %6 : vector<98x128xf32>
    %cst_6 = arith.constant 0.00999999977 : f32
    %8 = vector.broadcast %cst_6 : f32 to vector<98x128xf32>
    %9 = arith.mulf %5, %8 : vector<98x128xf32>
    %10 = arith.select %7, %5, %9 : vector<98x128xi1>, vector<98x128xf32>
    %11 = arith.truncf %10 : vector<98x128xf32> to vector<98x128xbf16>
    %c0_7 = arith.constant 0 : index
    %c0_8 = arith.constant 0 : index
    %12 = vector.load %arg3[%c0_7, %c0_8] : memref<98x128xbf16, #tpu.memory_space<vmem>>, vector<98x128xbf16>
    tpu.vector_store %arg3[%c0_7, %c0_8], %11 {strides = array<i32>} : memref<98x128xbf16, #tpu.memory_space<vmem>>, vector<98x128xbf16>,
    return
  }
}

module attributes {stable_mosaic.version = 11 : i64} {
  func.func @_fc_stack_kernel(%arg0: memref<2x1568xbf16, #tpu.memory_space<vmem>>, %arg1: memref<1568x256xbf16, #tpu.memory_space<vmem>>, %arg2: memref<1x256xf32, #tpu.memory_space<vmem>>, %arg3: memref<256x256xbf16, #tpu.memory_space<vmem>>, %arg4: memref<1x256xf32, #tpu.memory_space<vmem>>, %arg5: memref<256x256xbf16, #tpu.memory_space<vmem>>, %arg6: memref<1x256xf32, #tpu.memory_space<vmem>>, %arg7: memref<256x1664xbf16, #tpu.memory_space<vmem>>, %arg8: memref<1x1664xf32, #tpu.memory_space<vmem>>, %arg9: memref<2x256xf32, #tpu.memory_space<vmem>>, %arg10: memref<2x1664xbf16, #tpu.memory_space<vmem>>) attributes {dimension_semantics = [], scalar_prefetch = 0 : i64, scratch_operands = 0 : i64, tpu.core_type = #tpu.core_type<tc>} {
    %c0 = arith.constant 0 : index
    %c0_0 = arith.constant 0 : index
    %0 = vector.load %arg0[%c0, %c0_0] : memref<2x1568xbf16, #tpu.memory_space<vmem>>, vector<2x1568xbf16>
    %c0_1 = arith.constant 0 : index
    %c0_2 = arith.constant 0 : index
    %1 = vector.load %arg1[%c0_1, %c0_2] : memref<1568x256xbf16, #tpu.memory_space<vmem>>, vector<1568x256xbf16>
    %cst = arith.constant dense<0.000000e+00> : vector<2x256xf32>
    %2 = tpu.matmul %0, %1, %cst {dimension_numbers = #tpu.dot_dimension_numbers<[1], [0], [0], [1], [0, 0, 1, 1], [], []>} : vector<2x1568xbf16>, vector<1568x256xbf16>, vector<2x256xf32> -> vector<2x256xf32>
    %c0_3 = arith.constant 0 : index
    %c0_4 = arith.constant 0 : index
    %3 = vector.load %arg2[%c0_3, %c0_4] : memref<1x256xf32, #tpu.memory_space<vmem>>, vector<1x256xf32>
    %4 = vector.broadcast %3 : vector<1x256xf32> to vector<2x256xf32>
    %5 = arith.addf %2, %4 : vector<2x256xf32>
    %cst_5 = arith.constant 0.000000e+00 : f32
    %6 = vector.broadcast %cst_5 : f32 to vector<2x256xf32>
    %7 = arith.cmpf oge, %5, %6 : vector<2x256xf32>
    %cst_6 = arith.constant 0.00999999977 : f32
    %8 = vector.broadcast %cst_6 : f32 to vector<2x256xf32>
    %9 = arith.mulf %5, %8 : vector<2x256xf32>
    %10 = arith.select %7, %5, %9 : vector<2x256xi1>, vector<2x256xf32>
    %11 = arith.truncf %10 : vector<2x256xf32> to vector<2x256xbf16>
    %c0_7 = arith.constant 0 : index
    %c0_8 = arith.constant 0 : index
    %12 = vector.load %arg3[%c0_7, %c0_8] : memref<256x256xbf16, #tpu.memory_space<vmem>>, vector<256x256xbf16>
    %cst_9 = arith.constant dense<0.000000e+00> : vector<2x256xf32>
    %13 = tpu.matmul %11, %12, %cst_9 {dimension_numbers = #tpu.dot_dimension_numbers<[1], [0], [0], [1], [0, 0, 1, 1], [], []>} : vector<2x256xbf16>, vector<256x256xbf16>, vector<2x256xf32> -> vector<2x256xf32>
    %c0_10 = arith.constant 0 : index
    %c0_11 = arith.constant 0 : index
    %14 = vector.load %arg4[%c0_10, %c0_11] : memref<1x256xf32, #tpu.memory_space<vmem>>, vector<1x256xf32>
    %15 = vector.broadcast %14 : vector<1x256xf32> to vector<2x256xf32>
    %16 = arith.addf %13, %15 : vector<2x256xf32>
    %17 = tpu.iota {dimensions = array<i32: 1>} : vector<2x256xi32>
    %c100_i32 = arith.constant 100 : i32
    %18 = vector.broadcast %c100_i32 : i32 to vector<2x256xi32>
    %19 = arith.cmpi sge, %17, %18 : vector<2x256xi32>
    %c200_i32 = arith.constant 200 : i32
    %20 = vector.broadcast %c200_i32 : i32 to vector<2x256xi32>
    %21 = arith.cmpi slt, %17, %20 : vector<2x256xi32>
    %22 = arith.andi %19, %21 : vector<2x256xi1>
    %cst_12 = arith.constant -2.000000e+01 : f32
    %23 = vector.broadcast %cst_12 : f32 to vector<2x256xf32>
    %24 = arith.maximumf %16, %23 : vector<2x256xf32>
    %25 = arith.select %22, %24, %16 : vector<2x256xi1>, vector<2x256xf32>
    %c0_13 = arith.constant 0 : index
    %c0_14 = arith.constant 0 : index
    %26 = vector.load %arg9[%c0_13, %c0_14] : memref<2x256xf32, #tpu.memory_space<vmem>>, vector<2x256xf32>
    tpu.vector_store %arg9[%c0_13, %c0_14], %25 {strides = array<i32>} : memref<2x256xf32, #tpu.memory_space<vmem>>, vector<2x256xf32>,
    %27 = arith.truncf %16 : vector<2x256xf32> to vector<2x256xbf16>
    %c0_15 = arith.constant 0 : index
    %c0_16 = arith.constant 0 : index
    %28 = vector.load %arg5[%c0_15, %c0_16] : memref<256x256xbf16, #tpu.memory_space<vmem>>, vector<256x256xbf16>
    %cst_17 = arith.constant dense<0.000000e+00> : vector<2x256xf32>
    %29 = tpu.matmul %27, %28, %cst_17 {dimension_numbers = #tpu.dot_dimension_numbers<[1], [0], [0], [1], [0, 0, 1, 1], [], []>} : vector<2x256xbf16>, vector<256x256xbf16>, vector<2x256xf32> -> vector<2x256xf32>
    %c0_18 = arith.constant 0 : index
    %c0_19 = arith.constant 0 : index
    %30 = vector.load %arg6[%c0_18, %c0_19] : memref<1x256xf32, #tpu.memory_space<vmem>>, vector<1x256xf32>
    %31 = vector.broadcast %30 : vector<1x256xf32> to vector<2x256xf32>
    %32 = arith.addf %29, %31 : vector<2x256xf32>
    %cst_20 = arith.constant 0.000000e+00 : f32
    %33 = vector.broadcast %cst_20 : f32 to vector<2x256xf32>
    %34 = arith.cmpf oge, %32, %33 : vector<2x256xf32>
    %cst_21 = arith.constant 0.00999999977 : f32
    %35 = vector.broadcast %cst_21 : f32 to vector<2x256xf32>
    %36 = arith.mulf %32, %35 : vector<2x256xf32>
    %37 = arith.select %34, %32, %36 : vector<2x256xi1>, vector<2x256xf32>
    %38 = arith.truncf %37 : vector<2x256xf32> to vector<2x256xbf16>
    %c0_22 = arith.constant 0 : index
    %c0_23 = arith.constant 0 : index
    %39 = vector.load %arg7[%c0_22, %c0_23] : memref<256x1664xbf16, #tpu.memory_space<vmem>>, vector<256x1664xbf16>
    %cst_24 = arith.constant dense<0.000000e+00> : vector<2x1664xf32>
    %40 = tpu.matmul %38, %39, %cst_24 {dimension_numbers = #tpu.dot_dimension_numbers<[1], [0], [0], [1], [0, 0, 1, 1], [], []>} : vector<2x256xbf16>, vector<256x1664xbf16>, vector<2x1664xf32> -> vector<2x1664xf32>
    %c0_25 = arith.constant 0 : index
    %c0_26 = arith.constant 0 : index
    %41 = vector.load %arg8[%c0_25, %c0_26] : memref<1x1664xf32, #tpu.memory_space<vmem>>, vector<1x1664xf32>
    %42 = vector.broadcast %41 : vector<1x1664xf32> to vector<2x1664xf32>
    %43 = arith.addf %40, %42 : vector<2x1664xf32>
    %cst_27 = arith.constant 0.000000e+00 : f32
    %44 = vector.broadcast %cst_27 : f32 to vector<2x1664xf32>
    %45 = arith.cmpf oge, %43, %44 : vector<2x1664xf32>
    %cst_28 = arith.constant 0.00999999977 : f32
    %46 = vector.broadcast %cst_28 : f32 to vector<2x1664xf32>
    %47 = arith.mulf %43, %46 : vector<2x1664xf32>
    %48 = arith.select %45, %43, %47 : vector<2x1664xi1>, vector<2x1664xf32>
    %49 = arith.truncf %48 : vector<2x1664xf32> to vector<2x1664xbf16>
    %c0_29 = arith.constant 0 : index
    %c0_30 = arith.constant 0 : index
    %50 = vector.load %arg10[%c0_29, %c0_30] : memref<2x1664xbf16, #tpu.memory_space<vmem>>, vector<2x1664xbf16>
    tpu.vector_store %arg10[%c0_29, %c0_30], %49 {strides = array<i32>} : memref<2x1664xbf16, #tpu.memory_space<vmem>>, vector<2x1664xbf16>,
    return
  }
}

module attributes {stable_mosaic.version = 11 : i64} {
  func.func @_deconv12_kernel(%arg0: memref<162x288xbf16, #tpu.memory_space<vmem>>, %arg1: memref<288x128xbf16, #tpu.memory_space<vmem>>, %arg2: memref<1x128xf32, #tpu.memory_space<vmem>>, %arg3: memref<128x1024xbf16, #tpu.memory_space<vmem>>, %arg4: memref<162x1024xbf16, #tpu.memory_space<vmem>>) attributes {dimension_semantics = [], scalar_prefetch = 0 : i64, scratch_operands = 0 : i64, tpu.core_type = #tpu.core_type<tc>} {
    %c0 = arith.constant 0 : index
    %c0_0 = arith.constant 0 : index
    %0 = vector.load %arg0[%c0, %c0_0] : memref<162x288xbf16, #tpu.memory_space<vmem>>, vector<162x288xbf16>
    %c0_1 = arith.constant 0 : index
    %c0_2 = arith.constant 0 : index
    %1 = vector.load %arg1[%c0_1, %c0_2] : memref<288x128xbf16, #tpu.memory_space<vmem>>, vector<288x128xbf16>
    %cst = arith.constant dense<0.000000e+00> : vector<162x128xf32>
    %2 = tpu.matmul %0, %1, %cst {dimension_numbers = #tpu.dot_dimension_numbers<[1], [0], [0], [1], [0, 0, 1, 1], [], []>} : vector<162x288xbf16>, vector<288x128xbf16>, vector<162x128xf32> -> vector<162x128xf32>
    %c0_3 = arith.constant 0 : index
    %c0_4 = arith.constant 0 : index
    %3 = vector.load %arg2[%c0_3, %c0_4] : memref<1x128xf32, #tpu.memory_space<vmem>>, vector<1x128xf32>
    %4 = vector.broadcast %3 : vector<1x128xf32> to vector<162x128xf32>
    %5 = arith.addf %2, %4 : vector<162x128xf32>
    %cst_5 = arith.constant 0.000000e+00 : f32
    %6 = vector.broadcast %cst_5 : f32 to vector<162x128xf32>
    %7 = arith.cmpf oge, %5, %6 : vector<162x128xf32>
    %cst_6 = arith.constant 0.00999999977 : f32
    %8 = vector.broadcast %cst_6 : f32 to vector<162x128xf32>
    %9 = arith.mulf %5, %8 : vector<162x128xf32>
    %10 = arith.select %7, %5, %9 : vector<162x128xi1>, vector<162x128xf32>
    %11 = arith.truncf %10 : vector<162x128xf32> to vector<162x128xbf16>
    %c0_7 = arith.constant 0 : index
    %c0_8 = arith.constant 0 : index
    %12 = vector.load %arg3[%c0_7, %c0_8] : memref<128x1024xbf16, #tpu.memory_space<vmem>>, vector<128x1024xbf16>
    %cst_9 = arith.constant dense<0.000000e+00> : vector<162x1024xf32>
    %13 = tpu.matmul %11, %12, %cst_9 {dimension_numbers = #tpu.dot_dimension_numbers<[1], [0], [0], [1], [0, 0, 1, 1], [], []>} : vector<162x128xbf16>, vector<128x1024xbf16>, vector<162x1024xf32> -> vector<162x1024xf32>
    %14 = arith.truncf %13 : vector<162x1024xf32> to vector<162x1024xbf16>
    %c0_10 = arith.constant 0 : index
    %c0_11 = arith.constant 0 : index
    %15 = vector.load %arg4[%c0_10, %c0_11] : memref<162x1024xbf16, #tpu.memory_space<vmem>>, vector<162x1024xbf16>
    tpu.vector_store %arg4[%c0_10, %c0_11], %14 {strides = array<i32>} : memref<162x1024xbf16, #tpu.memory_space<vmem>>, vector<162x1024xbf16>,
    return
  }
}

module attributes {stable_mosaic.version = 11 : i64} {
  func.func @_gemm_bias_act_kernel(%arg0: memref<800x64xbf16, #tpu.memory_space<vmem>>, %arg1: memref<64x128xbf16, #tpu.memory_space<vmem>>, %arg2: memref<1x128xf32, #tpu.memory_space<vmem>>, %arg3: memref<800x128xbf16, #tpu.memory_space<vmem>>) attributes {dimension_semantics = [], scalar_prefetch = 0 : i64, scratch_operands = 0 : i64, tpu.core_type = #tpu.core_type<tc>} {
    %c0 = arith.constant 0 : index
    %c0_0 = arith.constant 0 : index
    %0 = vector.load %arg0[%c0, %c0_0] : memref<800x64xbf16, #tpu.memory_space<vmem>>, vector<800x64xbf16>
    %c0_1 = arith.constant 0 : index
    %c0_2 = arith.constant 0 : index
    %1 = vector.load %arg1[%c0_1, %c0_2] : memref<64x128xbf16, #tpu.memory_space<vmem>>, vector<64x128xbf16>
    %cst = arith.constant dense<0.000000e+00> : vector<800x128xf32>
    %2 = tpu.matmul %0, %1, %cst {dimension_numbers = #tpu.dot_dimension_numbers<[1], [0], [0], [1], [0, 0, 1, 1], [], []>} : vector<800x64xbf16>, vector<64x128xbf16>, vector<800x128xf32> -> vector<800x128xf32>
    %c0_3 = arith.constant 0 : index
    %c0_4 = arith.constant 0 : index
    %3 = vector.load %arg2[%c0_3, %c0_4] : memref<1x128xf32, #tpu.memory_space<vmem>>, vector<1x128xf32>
    %4 = vector.broadcast %3 : vector<1x128xf32> to vector<800x128xf32>
    %5 = arith.addf %2, %4 : vector<800x128xf32>
    %6 = arith.truncf %5 : vector<800x128xf32> to vector<800x128xbf16>
    %c0_5 = arith.constant 0 : index
    %c0_6 = arith.constant 0 : index
    %7 = vector.load %arg3[%c0_5, %c0_6] : memref<800x128xbf16, #tpu.memory_space<vmem>>, vector<800x128xbf16>
    tpu.vector_store %arg3[%c0_5, %c0_6], %6 {strides = array<i32>} : memref<800x128xbf16, #tpu.memory_space<vmem>>, vector<800x128xbf16>,
    return
  }
}

</mosaic_0001>

<llo_original>
// kernel: vae_forward.6
$region0: #{vae_forward.6}
  #allocation0 [shape = 'u32[]', space=smem, size = 0x4, offset = 0x4, fixed_abs, tag = 'smem constant byte address 0x4 - core index']
  #allocation1 [shape = 'u32[144,128]{1,0:T(1,128)}', space=vmem, size = 0x12000, scoped, tag = 'internal scratch']
  %s0 = inlined_call_operand.vmem [shape: bf16[800,128], index: 0, kind: input, shape index: {}]
  %s1 = inlined_call_operand.vmem [shape: bf16[128,128], index: 1, kind: input, shape index: {}]
  %s2 = inlined_call_operand.vmem [shape: f32[1,128], index: 2, kind: input, shape index: {}]
  %s3 = inlined_call_operand.vmem [shape: bf16[800,128], index: 3, kind: output, shape index: {}]
  %s4 = sld [smem:[#allocation0]]
  $region22: #{vae_forward.6} parent=0
    _
  %s6 = ssub.s32 1, %s4
  %s7 = scalar_select 0, %s6, %s4
  // Predicated region
  $region2: #{vae_forward.6} parent=0 // pred_check
    _
  $region3: #{vae_forward.6} parent=0 // pred_check_branch
    %9 = sbr.rel (0) target = $region5
  $region4: #{vae_forward.6} parent=0 // pred_region
    _
  $region5: #{vae_forward.6} parent=0 // pred_fallthru
    _
  // Predicated region
  $region6: #{vae_forward.6} parent=0 // pred_check
    _
  $region7: #{vae_forward.6} parent=0 // pred_check_branch
    %11 = sbr.rel (0) target = $region9
  $region8: #{vae_forward.6} parent=0 // pred_region
    _
  $region9: #{vae_forward.6} parent=0 // pred_fallthru
    _
  // Predicated region
  $region10: #{vae_forward.6} parent=0 // pred_check
    _
  $region11: #{vae_forward.6} parent=0 // pred_check_branch
    %13 = sbr.rel (0) target = $region13
  $region12: #{vae_forward.6} parent=0 // pred_region
    _
  $region13: #{vae_forward.6} parent=0 // pred_fallthru
    _
  %v15 = vld [vmem:[%s0] sm:$0xf]
  %v16 = vld [vmem:[%s0 + $0x4] sm:$0xf]
  %v17 = vld [vmem:[%s0 + $0x8] sm:$0xf]
  %v18 = vld [vmem:[%s0 + $0xc] sm:$0xf]
  %v19 = vld [vmem:[%s0 + $0x10] sm:$0xf]
  %v20 = vld [vmem:[%s0 + $0x14] sm:$0xf]
  %v21 = vld [vmem:[%s0 + $0x18] sm:$0xf]
  %v22 = vld [vmem:[%s0 + $0x1c] sm:$0xf]
  %v23 = vld [vmem:[%s0 + $0x20] sm:$0xf]
  %v24 = vld [vmem:[%s0 + $0x24] sm:$0xf]
  %v25 = vld [vmem:[%s0 + $0x28] sm:$0xf]
  %v26 = vld [vmem:[%s0 + $0x2c] sm:$0xf]
  %v27 = vld [vmem:[%s0 + $0x30] sm:$0xf]
  %v28 = vld [vmem:[%s0 + $0x34] sm:$0xf]
  %v29 = vld [vmem:[%s0 + $0x38] sm:$0xf]
  %v30 = vld [vmem:[%s0 + $0x3c] sm:$0xf]
  %v31 = vld [vmem:[%s0 + $0x40] sm:$0xf]
  %v32 = vld [vmem:[%s0 + $0x44] sm:$0xf]
  %v33 = vld [vmem:[%s0 + $0x48] sm:$0xf]
  %v34 = vld [vmem:[%s0 + $0x4c] sm:$0xf]
  %v35 = vld [vmem:[%s0 + $0x50] sm:$0xf]
  %v36 = vld [vmem:[%s0 + $0x54] sm:$0xf]
  %v37 = vld [vmem:[%s0 + $0x58] sm:$0xf]
  %v38 = vld [vmem:[%s0 + $0x5c] sm:$0xf]
  %v39 = vld [vmem:[%s0 + $0x60] sm:$0xf]
  %v40 = vld [vmem:[%s0 + $0x64] sm:$0xf]
  %v41 = vld [vmem:[%s0 + $0x68] sm:$0xf]
  %v42 = vld [vmem:[%s0 + $0x6c] sm:$0xf]
  %v43 = vld [vmem:[%s0 + $0x70] sm:$0xf]
  %v44 = vld [vmem:[%s0 + $0x74] sm:$0xf]
  %v45 = vld [vmem:[%s0 + $0x78] sm:$0xf]
  %v46 = vld [vmem:[%s0 + $0x7c] sm:$0xf]
  %v47 = vld [vmem:[%s0 + $0x80] sm:$0xf]
  %v48 = vld [vmem:[%s0 + $0x84] sm:$0xf]
  %v49 = vld [vmem:[%s0 + $0x88] sm:$0xf]
  %v50 = vld [vmem:[%s0 + $0x8c] sm:$0xf]
  %v51 = vld [vmem:[%s0 + $0x90] sm:$0xf]
  %v52 = vld [vmem:[%s0 + $0x94] sm:$0xf]
  %v53 = vld [vmem:[%s0 + $0x98] sm:$0xf]
  %v54 = vld [vmem:[%s0 + $0x9c] sm:$0xf]
  %v55 = vld [vmem:[%s0 + $0xa0] sm:$0xf]
  %v56 = vld [vmem:[%s0 + $0xa4] sm:$0xf]
  %v57 = vld [vmem:[%s0 + $0xa8] sm:$0xf]
  %v58 = vld [vmem:[%s0 + $0xac] sm:$0xf]
  %v59 = vld [vmem:[%s0 + $0xb0] sm:$0xf]
  %v60 = vld [vmem:[%s0 + $0xb4] sm:$0xf]
  %v61 = vld [vmem:[%s0 + $0xb8] sm:$0xf]
  %v62 = vld [vmem:[%s0 + $0xbc] sm:$0xf]
  %v63 = vld [vmem:[%s0 + $0xc0] sm:$0xf]
  %v64 = vld [vmem:[%s0 + $0xc4] sm:$0xf]
  %v65 = vld [vmem:[%s0 + $0xc8] sm:$0xf]
  %v66 = vld [vmem:[%s0 + $0xcc] sm:$0xf]
  %v67 = vld [vmem:[%s0 + $0xd0] sm:$0xf]
  %v68 = vld [vmem:[%s0 + $0xd4] sm:$0xf]
  %v69 = vld [vmem:[%s0 + $0xd8] sm:$0xf]
  %v70 = vld [vmem:[%s0 + $0xdc] sm:$0xf]
  %v71 = vld [vmem:[%s0 + $0xe0] sm:$0xf]
  %v72 = vld [vmem:[%s0 + $0xe4] sm:$0xf]
  %v73 = vld [vmem:[%s0 + $0xe8] sm:$0xf]
  %v74 = vld [vmem:[%s0 + $0xec] sm:$0xf]
  %v75 = vld [vmem:[%s0 + $0xf0] sm:$0xf]
  %v76 = vld [vmem:[%s0 + $0xf4] sm:$0xf]
  %v77 = vld [vmem:[%s0 + $0xf8] sm:$0xf]
  %v78 = vld [vmem:[%s0 + $0xfc] sm:$0xf]
  %v79 = vld [vmem:[%s0 + $0x100] sm:$0xf]
  %v80 = vld [vmem:[%s0 + $0x104] sm:$0xf]
  %v81 = vld [vmem:[%s0 + $0x108] sm:$0xf]
  %v82 = vld [vmem:[%s0 + $0x10c] sm:$0xf]
  %v83 = vld [vmem:[%s0 + $0x110] sm:$0xf]
  %v84 = vld [vmem:[%s0 + $0x114] sm:$0xf]
  %v85 = vld [vmem:[%s0 + $0x118] sm:$0xf]
  %v86 = vld [vmem:[%s0 + $0x11c] sm:$0xf]
  %v87 = vld [vmem:[%s0 + $0x120] sm:$0xf]
  %v88 = vld [vmem:[%s0 + $0x124] sm:$0xf]
  %v89 = vld [vmem:[%s0 + $0x128] sm:$0xf]
  %v90 = vld [vmem:[%s0 + $0x12c] sm:$0xf]
  %v91 = vld [vmem:[%s0 + $0x130] sm:$0xf]
  %v92 = vld [vmem:[%s0 + $0x134] sm:$0xf]
  %v93 = vld [vmem:[%s0 + $0x138] sm:$0xf]
  %v94 = vld [vmem:[%s0 + $0x13c] sm:$0xf]
  %v95 = vld [vmem:[%s0 + $0x140] sm:$0xf]
  %v96 = vld [vmem:[%s0 + $0x144] sm:$0xf]
  %v97 = vld [vmem:[%s0 + $0x148] sm:$0xf]
  %v98 = vld [vmem:[%s0 + $0x14c] sm:$0xf]
  %v99 = vld [vmem:[%s0 + $0x150] sm:$0xf]
  %v100 = vld [vmem:[%s0 + $0x154] sm:$0xf]
  %v101 = vld [vmem:[%s0 + $0x158] sm:$0xf]
  %v102 = vld [vmem:[%s0 + $0x15c] sm:$0xf]
  %v103 = vld [vmem:[%s0 + $0x160] sm:$0xf]
  %v104 = vld [vmem:[%s0 + $0x164] sm:$0xf]
  %v105 = vld [vmem:[%s0 + $0x168] sm:$0xf]
  %v106 = vld [vmem:[%s0 + $0x16c] sm:$0xf]
  %v107 = vld [vmem:[%s0 + $0x170] sm:$0xf]
  %v108 = vld [vmem:[%s0 + $0x174] sm:$0xf]
  %v109 = vld [vmem:[%s0 + $0x178] sm:$0xf]
  %v110 = vld [vmem:[%s0 + $0x17c] sm:$0xf]
  %v111 = vld [vmem:[%s0 + $0x180] sm:$0xf]
  %v112 = vld [vmem:[%s0 + $0x184] sm:$0xf]
  %v113 = vld [vmem:[%s0 + $0x188] sm:$0xf]
  %v114 = vld [vmem:[%s0 + $0x18c] sm:$0xf]
  %v115 = vld [vmem:[%s1] sm:$0xf]
  %v116 = vld [vmem:[%s1 + $0x4] sm:$0xf]
  %v117 = vld [vmem:[%s1 + $0x8] sm:$0xf]
  %v118 = vld [vmem:[%s1 + $0xc] sm:$0xf]
  %v119 = vld [vmem:[%s1 + $0x10] sm:$0xf]
  %v120 = vld [vmem:[%s1 + $0x14] sm:$0xf]
  %v121 = vld [vmem:[%s1 + $0x18] sm:$0xf]
  %v122 = vld [vmem:[%s1 + $0x1c] sm:$0xf]
  %v123 = vld [vmem:[%s1 + $0x20] sm:$0xf]
  %v124 = vld [vmem:[%s1 + $0x24] sm:$0xf]
  %v125 = vld [vmem:[%s1 + $0x28] sm:$0xf]
  %v126 = vld [vmem:[%s1 + $0x2c] sm:$0xf]
  %v127 = vld [vmem:[%s1 + $0x30] sm:$0xf]
  %v128 = vld [vmem:[%s1 + $0x34] sm:$0xf]
  %v129 = vld [vmem:[%s1 + $0x38] sm:$0xf]
  %v130 = vld [vmem:[%s1 + $0x3c] sm:$0xf]
  %v131 = vld [vmem:[%s2] sm:$0x1]
  %v133 = vlaneseq
  %v134 = vshrl.u32 %v133, 7
  %v135 = vsub.s32 0, %v134
  %v136 = vrot.slane %v131, %v135
  %v238 = vunpack.c.l.b16 %v15
  %v239 = vunpack.c.l.b16 %v16
  %v240 = vunpack.c.l.b16 %v17
  %v241 = vunpack.c.l.b16 %v18
  %v242 = vunpack.c.l.b16 %v19
  %v243 = vunpack.c.l.b16 %v20
  %v244 = vunpack.c.l.b16 %v21
  %v245 = vunpack.c.l.b16 %v22
  %v246 = vunpack.c.l.b16 %v23
  %v247 = vunpack.c.l.b16 %v24
  %v248 = vunpack.c.l.b16 %v25
  %v249 = vunpack.c.l.b16 %v26
  %v250 = vunpack.c.l.b16 %v27
  %v251 = vunpack.c.l.b16 %v28
  %v252 = vunpack.c.l.b16 %v29
  %v253 = vunpack.c.l.b16 %v30
  %v254 = vunpack.c.l.b16 %v31
  %v255 = vunpack.c.l.b16 %v32
  %v256 = vunpack.c.l.b16 %v33
  %v257 = vunpack.c.l.b16 %v34
  %v258 = vunpack.c.l.b16 %v35
  %v259 = vunpack.c.l.b16 %v36
  %v260 = vunpack.c.l.b16 %v37
  %v261 = vunpack.c.l.b16 %v38
  %v262 = vunpack.c.l.b16 %v39
  %v263 = vunpack.c.l.b16 %v40
  %v264 = vunpack.c.l.b16 %v41
  %v265 = vunpack.c.l.b16 %v42
  %v266 = vunpack.c.l.b16 %v43
  %v267 = vunpack.c.l.b16 %v44
  %v268 = vunpack.c.l.b16 %v45
  %v269 = vunpack.c.l.b16 %v46
  %v270 = vunpack.c.l.b16 %v47
  %v271 = vunpack.c.l.b16 %v48
  %v272 = vunpack.c.l.b16 %v49
  %v273 = vunpack.c.l.b16 %v50
  %v274 = vunpack.c.l.b16 %v51
  %v275 = vunpack.c.l.b16 %v52
  %v276 = vunpack.c.l.b16 %v53
  %v277 = vunpack.c.l.b16 %v54
  %v278 = vunpack.c.l.b16 %v55
  %v279 = vunpack.c.l.b16 %v56
  %v280 = vunpack.c.l.b16 %v57
  %v281 = vunpack.c.l.b16 %v58
  %v282 = vunpack.c.l.b16 %v59
  %v283 = vunpack.c.l.b16 %v60
  %v284 = vunpack.c.l.b16 %v61
  %v285 = vunpack.c.l.b16 %v62
  %v286 = vunpack.c.l.b16 %v63
  %v287 = vunpack.c.l.b16 %v64
  %v288 = vunpack.c.l.b16 %v65
  %v289 = vunpack.c.l.b16 %v66
  %v290 = vunpack.c.l.b16 %v67
  %v291 = vunpack.c.l.b16 %v68
  %v292 = vunpack.c.l.b16 %v69
  %v293 = vunpack.c.l.b16 %v70
  %v294 = vunpack.c.l.b16 %v71
  %v295 = vunpack.c.l.b16 %v72
  %v296 = vunpack.c.l.b16 %v73
  %v297 = vunpack.c.l.b16 %v74
  %v298 = vunpack.c.l.b16 %v75
  %v299 = vunpack.c.l.b16 %v76
  %v300 = vunpack.c.l.b16 %v77
  %v301 = vunpack.c.l.b16 %v78
  %v302 = vunpack.c.l.b16 %v79
  %v303 = vunpack.c.l.b16 %v80
  %v304 = vunpack.c.l.b16 %v81
  %v305 = vunpack.c.l.b16 %v82
  %v306 = vunpack.c.l.b16 %v83
  %v307 = vunpack.c.l.b16 %v84
  %v308 = vunpack.c.l.b16 %v85
  %v309 = vunpack.c.l.b16 %v86
  %v310 = vunpack.c.l.b16 %v87
  %v311 = vunpack.c.l.b16 %v88
  %v312 = vunpack.c.l.b16 %v89
  %v313 = vunpack.c.l.b16 %v90
  %v314 = vunpack.c.l.b16 %v91
  %v315 = vunpack.c.l.b16 %v92
  %v316 = vunpack.c.l.b16 %v93
  %v317 = vunpack.c.l.b16 %v94
  %v318 = vunpack.c.l.b16 %v95
  %v319 = vunpack.c.l.b16 %v96
  %v320 = vunpack.c.l.b16 %v97
  %v321 = vunpack.c.l.b16 %v98
  %v322 = vunpack.c.l.b16 %v99
  %v323 = vunpack.c.l.b16 %v100
  %v324 = vunpack.c.l.b16 %v101
  %v325 = vunpack.c.l.b16 %v102
  %v326 = vunpack.c.l.b16 %v103
  %v327 = vunpack.c.l.b16 %v104
  %v328 = vunpack.c.l.b16 %v105
  %v329 = vunpack.c.l.b16 %v106
  %v330 = vunpack.c.l.b16 %v107
  %v331 = vunpack.c.l.b16 %v108
  %v332 = vunpack.c.l.b16 %v109
  %v333 = vunpack.c.l.b16 %v110
  %v334 = vunpack.c.l.b16 %v111
  %v335 = vunpack.c.l.b16 %v112
  %v336 = vunpack.c.l.b16 %v113
  %v337 = vunpack.c.l.b16 %v114
  %v338 = vpack.c.b16 %v239, %v238
  %v339 = vpack.c.b16 %v241, %v240
  %v340 = vpack.c.b16 %v243, %v242
  %v341 = vpack.c.b16 %v245, %v244
  %v342 = vpack.c.b16 %v247, %v246
  %v343 = vpack.c.b16 %v249, %v248
  %v344 = vpack.c.b16 %v251, %v250
  %v345 = vpack.c.b16 %v253, %v252
  %v346 = vpack.c.b16 %v255, %v254
  %v347 = vpack.c.b16 %v257, %v256
  %v348 = vpack.c.b16 %v259, %v258
  %v349 = vpack.c.b16 %v261, %v260
  %v350 = vpack.c.b16 %v263, %v262
  %v351 = vpack.c.b16 %v265, %v264
  %v352 = vpack.c.b16 %v267, %v266
  %v353 = vpack.c.b16 %v269, %v268
  %v354 = vpack.c.b16 %v271, %v270
  %v355 = vpack.c.b16 %v273, %v272
  %v356 = vpack.c.b16 %v275, %v274
  %v357 = vpack.c.b16 %v277, %v276
  %v358 = vpack.c.b16 %v279, %v278
  %v359 = vpack.c.b16 %v281, %v280
  %v360 = vpack.c.b16 %v283, %v282
  %v361 = vpack.c.b16 %v285, %v284
  %v362 = vpack.c.b16 %v287, %v286
  %v363 = vpack.c.b16 %v289, %v288
  %v364 = vpack.c.b16 %v291, %v290
  %v365 = vpack.c.b16 %v293, %v292
  %v366 = vpack.c.b16 %v295, %v294
  %v367 = vpack.c.b16 %v297, %v296
  %v368 = vpack.c.b16 %v299, %v298
  %v369 = vpack.c.b16 %v301, %v300
  %v370 = vpack.c.b16 %v303, %v302
  %v371 = vpack.c.b16 %v305, %v304
  %v372 = vpack.c.b16 %v307, %v306
  %v373 = vpack.c.b16 %v309, %v308
  %v374 = vpack.c.b16 %v311, %v310
  %v375 = vpack.c.b16 %v313, %v312
  %v376 = vpack.c.b16 %v315, %v314
  %v377 = vpack.c.b16 %v317, %v316
  %v378 = vpack.c.b16 %v319, %v318
  %v379 = vpack.c.b16 %v321, %v320
  %v380 = vpack.c.b16 %v323, %v322
  %v381 = vpack.c.b16 %v325, %v324
  %v382 = vpack.c.b16 %v327, %v326
  %v383 = vpack.c.b16 %v329, %v328
  %v384 = vpack.c.b16 %v331, %v330
  %v385 = vpack.c.b16 %v333, %v332
  %v386 = vpack.c.b16 %v335, %v334
  %v387 = vpack.c.b16 %v337, %v336
  %v454 = vunpack.c.l.b16 %v115
  %v455 = vunpack.c.l.b16 %v116
  %v456 = vunpack.c.l.b16 %v117
  %v457 = vunpack.c.l.b16 %v118
  %v458 = vunpack.c.l.b16 %v119
  %v459 = vunpack.c.l.b16 %v120
  %v460 = vunpack.c.l.b16 %v121
  %v461 = vunpack.c.l.b16 %v122
  %v462 = vunpack.c.l.b16 %v123
  %v463 = vunpack.c.l.b16 %v124
  %v464 = vunpack.c.l.b16 %v125
  %v465 = vunpack.c.l.b16 %v126
  %v466 = vunpack.c.l.b16 %v127
  %v467 = vunpack.c.l.b16 %v128
  %v468 = vunpack.c.l.b16 %v129
  %v469 = vunpack.c.l.b16 %v130
  %v470 = vpack.c.b16 %v455, %v454
  %v471 = vpack.c.b16 %v457, %v456
  %v472 = vpack.c.b16 %v459, %v458
  %v473 = vpack.c.b16 %v461, %v460
  %v474 = vpack.c.b16 %v463, %v462
  %v475 = vpack.c.b16 %v465, %v464
  %v476 = vpack.c.b16 %v467, %v466
  %v477 = vpack.c.b16 %v469, %v468
  %486 = vmatprep.subr.bf16.mxu0 0
  %487 = vmatpush1.bf16.msra.mxu0 %v477
  %488 = vmatprep.subr.bf16.mxu0 0
  %489 = vmatpush1.bf16.msra.mxu0 %v476
  %490 = vmatprep.subr.bf16.mxu0 0
  %491 = vmatpush1.bf16.msra.mxu0 %v475
  %492 = vmatprep.subr.bf16.mxu0 0
  %493 = vmatpush1.bf16.msra.mxu0 %v474
  %494 = vmatprep.subr.bf16.mxu0 0
  %495 = vmatpush1.bf16.msra.mxu0 %v473
  %496 = vmatprep.subr.bf16.mxu0 0
  %497 = vmatpush1.bf16.msra.mxu0 %v472
  %498 = vmatprep.subr.bf16.mxu0 0
  %499 = vmatpush1.bf16.msra.mxu0 %v471
  %500 = vmatprep.subr.bf16.mxu0 0
  %501 = vmatpush1.bf16.msra.mxu0 %v470
  %502 = vmatprep.subr.bf16.mxu0 0
  %503 = vmatpush2.bf16.msra.mxu0 0
  %504 = vmatprep.subr.bf16.mxu0 0
  %505 = vmatpush2.bf16.msra.mxu0 0
  %506 = vmatprep.subr.bf16.mxu0 0
  %507 = vmatpush2.bf16.msra.mxu0 0
  %508 = vmatprep.subr.bf16.mxu0 0
  %509 = vmatpush2.bf16.msra.mxu0 0
  %510 = vmatprep.subr.bf16.mxu0 0
  %511 = vmatpush2.bf16.msra.mxu0 0
  %512 = vmatprep.subr.bf16.mxu0 0
  %513 = vmatpush2.bf16.msra.mxu0 0
  %514 = vmatprep.subr.bf16.mxu0 0
  %515 = vmatpush2.bf16.msra.mxu0 0
  %516 = vmatprep.subr.bf16.mxu0 0
  %517 = vmatpush2.bf16.msra.mxu0 0
  %518 = vmatprep.mubr.bf16.mxu0 0
  %519 = vmatmul.mubr.bf16.gmra.mxu0 %v338
  %v520 = vpop.f32.mrf.mxu0
  %v521 = vadd.f32 %v136, %v520
  %v522 = vpop.f32.mrf.mxu0
  %v523 = vpop.f32.mrf.mxu0
  %v524 = vadd.f32 %v136, %v523
  %v525 = vpop.f32.mrf.mxu0
  %526 = vmatprep.mubr.bf16.mxu0 0
  %527 = vmatmul.mubr.bf16.gmra.mxu0 %v339
  %v528 = vpop.f32.mrf.mxu0
  %v529 = vadd.f32 %v136, %v528
  %v530 = vpop.f32.mrf.mxu0
  %v531 = vpop.f32.mrf.mxu0
  %v532 = vadd.f32 %v136, %v531
  %v533 = vpop.f32.mrf.mxu0
  %534 = vmatprep.mubr.bf16.mxu0 0
  %535 = vmatmul.mubr.bf16.gmra.mxu0 %v340
  %v536 = vpop.f32.mrf.mxu0
  %v537 = vadd.f32 %v136, %v536
  %v538 = vpop.f32.mrf.mxu0
  %v539 = vpop.f32.mrf.mxu0
  %v540 = vadd.f32 %v136, %v539
  %v541 = vpop.f32.mrf.mxu0
  %542 = vmatprep.mubr.bf16.mxu0 0
  %543 = vmatmul.mubr.bf16.gmra.mxu0 %v341
  %v544 = vpop.f32.mrf.mxu0
  %v545 = vadd.f32 %v136, %v544
  %v546 = vpop.f32.mrf.mxu0
  %v547 = vpop.f32.mrf.mxu0
  %v548 = vadd.f32 %v136, %v547
  %v549 = vpop.f32.mrf.mxu0
  %550 = vmatprep.mubr.bf16.mxu0 0
  %551 = vmatmul.mubr.bf16.gmra.mxu0 %v342
  %v552 = vpop.f32.mrf.mxu0
  %v553 = vadd.f32 %v136, %v552
  %v554 = vpop.f32.mrf.mxu0
  %v555 = vpop.f32.mrf.mxu0
  %v556 = vadd.f32 %v136, %v555
  %v557 = vpop.f32.mrf.mxu0
  %558 = vmatprep.mubr.bf16.mxu0 0
  %559 = vmatmul.mubr.bf16.gmra.mxu0 %v343
  %v560 = vpop.f32.mrf.mxu0
  %v561 = vadd.f32 %v136, %v560
  %v562 = vpop.f32.mrf.mxu0
  %v563 = vpop.f32.mrf.mxu0
  %v564 = vadd.f32 %v136, %v563
  %v565 = vpop.f32.mrf.mxu0
  %566 = vmatprep.mubr.bf16.mxu0 0
  %567 = vmatmul.mubr.bf16.gmra.mxu0 %v344
  %v568 = vpop.f32.mrf.mxu0
  %v569 = vadd.f32 %v136, %v568
  %v570 = vpop.f32.mrf.mxu0
  %v571 = vpop.f32.mrf.mxu0
  %v572 = vadd.f32 %v136, %v571
  %v573 = vpop.f32.mrf.mxu0
  %574 = vmatprep.mubr.bf16.mxu0 0
  %575 = vmatmul.mubr.bf16.gmra.mxu0 %v345
  %v576 = vpop.f32.mrf.mxu0
  %v577 = vadd.f32 %v136, %v576
  %v578 = vpop.f32.mrf.mxu0
  %v579 = vpop.f32.mrf.mxu0
  %v580 = vadd.f32 %v136, %v579
  %v581 = vpop.f32.mrf.mxu0
  %582 = vmatprep.mubr.bf16.mxu0 0
  %583 = vmatmul.mubr.bf16.gmra.mxu0 %v346
  %v584 = vpop.f32.mrf.mxu0
  %v585 = vadd.f32 %v136, %v584
  %v586 = vpop.f32.mrf.mxu0
  %v587 = vpop.f32.mrf.mxu0
  %v588 = vadd.f32 %v136, %v587
  %v589 = vpop.f32.mrf.mxu0
  %590 = vmatprep.mubr.bf16.mxu0 0
  %591 = vmatmul.mubr.bf16.gmra.mxu0 %v347
  %v592 = vpop.f32.mrf.mxu0
  %v593 = vadd.f32 %v136, %v592
  %v594 = vpop.f32.mrf.mxu0
  %v595 = vpop.f32.mrf.mxu0
  %v596 = vadd.f32 %v136, %v595
  %v597 = vpop.f32.mrf.mxu0
  %598 = vmatprep.mubr.bf16.mxu0 0
  %599 = vmatmul.mubr.bf16.gmra.mxu0 %v348
  %v600 = vpop.f32.mrf.mxu0
  %v601 = vadd.f32 %v136, %v600
  %v602 = vpop.f32.mrf.mxu0
  %v603 = vpop.f32.mrf.mxu0
  %v604 = vadd.f32 %v136, %v603
  %v605 = vpop.f32.mrf.mxu0
  %606 = vmatprep.mubr.bf16.mxu0 0
  %607 = vmatmul.mubr.bf16.gmra.mxu0 %v349
  %v608 = vpop.f32.mrf.mxu0
  %v609 = vadd.f32 %v136, %v608
  %v610 = vpop.f32.mrf.mxu0
  %v611 = vpop.f32.mrf.mxu0
  %v612 = vadd.f32 %v136, %v611
  %v613 = vpop.f32.mrf.mxu0
  %614 = vmatprep.mubr.bf16.mxu0 0
  %615 = vmatmul.mubr.bf16.gmra.mxu0 %v350
  %v616 = vpop.f32.mrf.mxu0
  %v617 = vadd.f32 %v136, %v616
  %v618 = vpop.f32.mrf.mxu0
  %v619 = vpop.f32.mrf.mxu0
  %v620 = vadd.f32 %v136, %v619
  %v621 = vpop.f32.mrf.mxu0
  %622 = vmatprep.mubr.bf16.mxu0 0
  %623 = vmatmul.mubr.bf16.gmra.mxu0 %v351
  %v624 = vpop.f32.mrf.mxu0
  %v625 = vadd.f32 %v136, %v624
  %v626 = vpop.f32.mrf.mxu0
  %v627 = vpop.f32.mrf.mxu0
  %v628 = vadd.f32 %v136, %v627
  %v629 = vpop.f32.mrf.mxu0
  %630 = vmatprep.mubr.bf16.mxu0 0
  %631 = vmatmul.mubr.bf16.gmra.mxu0 %v352
  %v632 = vpop.f32.mrf.mxu0
  %v633 = vadd.f32 %v136, %v632
  %v634 = vpop.f32.mrf.mxu0
  %v635 = vpop.f32.mrf.mxu0
  %v636 = vadd.f32 %v136, %v635
  %v637 = vpop.f32.mrf.mxu0
  %638 = vmatprep.mubr.bf16.mxu0 0
  %639 = vmatmul.mubr.bf16.gmra.mxu0 %v353
  %v640 = vpop.f32.mrf.mxu0
  %v641 = vadd.f32 %v136, %v640
  %v642 = vpop.f32.mrf.mxu0
  %v643 = vpop.f32.mrf.mxu0
  %v644 = vadd.f32 %v136, %v643
  %v645 = vpop.f32.mrf.mxu0
  %646 = vmatprep.mubr.bf16.mxu0 0
  %647 = vmatmul.mubr.bf16.gmra.mxu0 %v354
  %v648 = vpop.f32.mrf.mxu0
  %v649 = vadd.f32 %v136, %v648
  %v650 = vpop.f32.mrf.mxu0
  %v651 = vpop.f32.mrf.mxu0
  %v652 = vadd.f32 %v136, %v651
  %v653 = vpop.f32.mrf.mxu0
  %654 = vmatprep.mubr.bf16.mxu0 0
  %655 = vmatmul.mubr.bf16.gmra.mxu0 %v355
  %v656 = vpop.f32.mrf.mxu0
  %v657 = vadd.f32 %v136, %v656
  %v658 = vpop.f32.mrf.mxu0
  %v659 = vpop.f32.mrf.mxu0
  %v660 = vadd.f32 %v136, %v659
  %v661 = vpop.f32.mrf.mxu0
  %662 = vmatprep.mubr.bf16.mxu0 0
  %663 = vmatmul.mubr.bf16.gmra.mxu0 %v356
  %v664 = vpop.f32.mrf.mxu0
  %v665 = vadd.f32 %v136, %v664
  %v666 = vpop.f32.mrf.mxu0
  %v667 = vpop.f32.mrf.mxu0
  %v668 = vadd.f32 %v136, %v667
  %v669 = vpop.f32.mrf.mxu0
  %670 = vmatprep.mubr.bf16.mxu0 0
  %671 = vmatmul.mubr.bf16.gmra.mxu0 %v357
  %v672 = vpop.f32.mrf.mxu0
  %v673 = vadd.f32 %v136, %v672
  %v674 = vpop.f32.mrf.mxu0
  %v675 = vpop.f32.mrf.mxu0
  %v676 = vadd.f32 %v136, %v675
  %v677 = vpop.f32.mrf.mxu0
  %678 = vmatprep.mubr.bf16.mxu0 0
  %679 = vmatmul.mubr.bf16.gmra.mxu0 %v358
  %v680 = vpop.f32.mrf.mxu0
  %v681 = vadd.f32 %v136, %v680
  %v682 = vpop.f32.mrf.mxu0
  %v683 = vpop.f32.mrf.mxu0
  %v684 = vadd.f32 %v136, %v683
  %v685 = vpop.f32.mrf.mxu0
  %686 = vmatprep.mubr.bf16.mxu0 0
  %687 = vmatmul.mubr.bf16.gmra.mxu0 %v359
  %v688 = vpop.f32.mrf.mxu0
  %v689 = vadd.f32 %v136, %v688
  %v690 = vpop.f32.mrf.mxu0
  %v691 = vpop.f32.mrf.mxu0
  %v692 = vadd.f32 %v136, %v691
  %v693 = vpop.f32.mrf.mxu0
  %694 = vmatprep.mubr.bf16.mxu0 0
  %695 = vmatmul.mubr.bf16.gmra.mxu0 %v360
  %v696 = vpop.f32.mrf.mxu0
  %v697 = vadd.f32 %v136, %v696
  %v698 = vpop.f32.mrf.mxu0
  %v699 = vpop.f32.mrf.mxu0
  %v700 = vadd.f32 %v136, %v699
  %v701 = vpop.f32.mrf.mxu0
  %702 = vmatprep.mubr.bf16.mxu0 0
  %703 = vmatmul.mubr.bf16.gmra.mxu0 %v361
  %v704 = vpop.f32.mrf.mxu0
  %v705 = vadd.f32 %v136, %v704
  %v706 = vpop.f32.mrf.mxu0
  %v707 = vpop.f32.mrf.mxu0
  %v708 = vadd.f32 %v136, %v707
  %v709 = vpop.f32.mrf.mxu0
  %710 = vmatprep.mubr.bf16.mxu0 0
  %711 = vmatmul.mubr.bf16.gmra.mxu0 %v362
  %v712 = vpop.f32.mrf.mxu0
  %v713 = vadd.f32 %v136, %v712
  %v714 = vpop.f32.mrf.mxu0
  %v715 = vpop.f32.mrf.mxu0
  %v716 = vadd.f32 %v136, %v715
  %v717 = vpop.f32.mrf.mxu0
  %718 = vmatprep.mubr.bf16.mxu0 0
  %719 = vmatmul.mubr.bf16.gmra.mxu0 %v363
  %v720 = vpop.f32.mrf.mxu0
  %v721 = vadd.f32 %v136, %v720
  %v722 = vpop.f32.mrf.mxu0
  %v723 = vpop.f32.mrf.mxu0
  %v724 = vadd.f32 %v136, %v723
  %v725 = vpop.f32.mrf.mxu0
  %726 = vmatprep.mubr.bf16.mxu0 0
  %727 = vmatmul.mubr.bf16.gmra.mxu0 %v364
  %v728 = vpop.f32.mrf.mxu0
  %v729 = vadd.f32 %v136, %v728
  %v730 = vpop.f32.mrf.mxu0
  %v731 = vpop.f32.mrf.mxu0
  %v732 = vadd.f32 %v136, %v731
  %v733 = vpop.f32.mrf.mxu0
  %734 = vmatprep.mubr.bf16.mxu0 0
  %735 = vmatmul.mubr.bf16.gmra.mxu0 %v365
  %v736 = vpop.f32.mrf.mxu0
  %v737 = vadd.f32 %v136, %v736
  %v738 = vpop.f32.mrf.mxu0
  %v739 = vpop.f32.mrf.mxu0
  %v740 = vadd.f32 %v136, %v739
  %v741 = vpop.f32.mrf.mxu0
  %742 = vmatprep.mubr.bf16.mxu0 0
  %743 = vmatmul.mubr.bf16.gmra.mxu0 %v366
  %v744 = vpop.f32.mrf.mxu0
  %v745 = vadd.f32 %v136, %v744
  %v746 = vpop.f32.mrf.mxu0
  %v747 = vpop.f32.mrf.mxu0
  %v748 = vadd.f32 %v136, %v747
  %v749 = vpop.f32.mrf.mxu0
  %750 = vmatprep.mubr.bf16.mxu0 0
  %751 = vmatmul.mubr.bf16.gmra.mxu0 %v367
  %v752 = vpop.f32.mrf.mxu0
  %v753 = vadd.f32 %v136, %v752
  %v754 = vpop.f32.mrf.mxu0
  %v755 = vpop.f32.mrf.mxu0
  %v756 = vadd.f32 %v136, %v755
  %v757 = vpop.f32.mrf.mxu0
  %758 = vmatprep.mubr.bf16.mxu0 0
  %759 = vmatmul.mubr.bf16.gmra.mxu0 %v368
  %v760 = vpop.f32.mrf.mxu0
  %v761 = vadd.f32 %v136, %v760
  %v762 = vpop.f32.mrf.mxu0
  %v763 = vpop.f32.mrf.mxu0
  %v764 = vadd.f32 %v136, %v763
  %v765 = vpop.f32.mrf.mxu0
  %766 = vmatprep.mubr.bf16.mxu0 0
  %767 = vmatmul.mubr.bf16.gmra.mxu0 %v369
  %v768 = vpop.f32.mrf.mxu0
  %v769 = vadd.f32 %v136, %v768
  %v770 = vpop.f32.mrf.mxu0
  %v771 = vpop.f32.mrf.mxu0
  %v772 = vadd.f32 %v136, %v771
  %v773 = vpop.f32.mrf.mxu0
  %774 = vmatprep.mubr.bf16.mxu0 0
  %775 = vmatmul.mubr.bf16.gmra.mxu0 %v370
  %v776 = vpop.f32.mrf.mxu0
  %v777 = vadd.f32 %v136, %v776
  %v778 = vpop.f32.mrf.mxu0
  %v779 = vpop.f32.mrf.mxu0
  %v780 = vadd.f32 %v136, %v779
  %v781 = vpop.f32.mrf.mxu0
  %782 = vmatprep.mubr.bf16.mxu0 0
  %783 = vmatmul.mubr.bf16.gmra.mxu0 %v371
  %v784 = vpop.f32.mrf.mxu0
  %v785 = vadd.f32 %v136, %v784
  %v786 = vpop.f32.mrf.mxu0
  %v787 = vpop.f32.mrf.mxu0
  %v788 = vadd.f32 %v136, %v787
  %v789 = vpop.f32.mrf.mxu0
  %790 = vmatprep.mubr.bf16.mxu0 0
  %791 = vmatmul.mubr.bf16.gmra.mxu0 %v372
  %v792 = vpop.f32.mrf.mxu0
  %v793 = vadd.f32 %v136, %v792
  %v794 = vpop.f32.mrf.mxu0
  %v795 = vpop.f32.mrf.mxu0
  %v796 = vadd.f32 %v136, %v795
  %v797 = vpop.f32.mrf.mxu0
  %798 = vmatprep.mubr.bf16.mxu0 0
  %799 = vmatmul.mubr.bf16.gmra.mxu0 %v373
  %v800 = vpop.f32.mrf.mxu0
  %v801 = vadd.f32 %v136, %v800
  %v802 = vpop.f32.mrf.mxu0
  %v803 = vpop.f32.mrf.mxu0
  %v804 = vadd.f32 %v136, %v803
  %v805 = vpop.f32.mrf.mxu0
  %806 = vmatprep.mubr.bf16.mxu0 0
  %807 = vmatmul.mubr.bf16.gmra.mxu0 %v374
  %v808 = vpop.f32.mrf.mxu0
  %v809 = vadd.f32 %v136, %v808
  %v810 = vpop.f32.mrf.mxu0
  %v811 = vpop.f32.mrf.mxu0
  %v812 = vadd.f32 %v136, %v811
  %v813 = vpop.f32.mrf.mxu0
  %814 = vmatprep.mubr.bf16.mxu0 0
  %815 = vmatmul.mubr.bf16.gmra.mxu0 %v375
  %v816 = vpop.f32.mrf.mxu0
  %v817 = vadd.f32 %v136, %v816
  %v818 = vpop.f32.mrf.mxu0
  %v819 = vpop.f32.mrf.mxu0
  %v820 = vadd.f32 %v136, %v819
  %v821 = vpop.f32.mrf.mxu0
  %822 = vmatprep.mubr.bf16.mxu0 0
  %823 = vmatmul.mubr.bf16.gmra.mxu0 %v376
  %v824 = vpop.f32.mrf.mxu0
  %v825 = vadd.f32 %v136, %v824
  %v826 = vpop.f32.mrf.mxu0
  %v827 = vpop.f32.mrf.mxu0
  %v828 = vadd.f32 %v136, %v827
  %v829 = vpop.f32.mrf.mxu0
  %830 = vmatprep.mubr.bf16.mxu0 0
  %831 = vmatmul.mubr.bf16.gmra.mxu0 %v377
  %v832 = vpop.f32.mrf.mxu0
  %v833 = vadd.f32 %v136, %v832
  %v834 = vpop.f32.mrf.mxu0
  %v835 = vpop.f32.mrf.mxu0
  %v836 = vadd.f32 %v136, %v835
  %v837 = vpop.f32.mrf.mxu0
  %838 = vmatprep.mubr.bf16.mxu0 0
  %839 = vmatmul.mubr.bf16.gmra.mxu0 %v378
  %v840 = vpop.f32.mrf.mxu0
  %v841 = vadd.f32 %v136, %v840
  %v842 = vpop.f32.mrf.mxu0
  %v843 = vpop.f32.mrf.mxu0
  %v844 = vadd.f32 %v136, %v843
  %v845 = vpop.f32.mrf.mxu0
  %846 = vmatprep.mubr.bf16.mxu0 0
  %847 = vmatmul.mubr.bf16.gmra.mxu0 %v379
  %v848 = vpop.f32.mrf.mxu0
  %v849 = vadd.f32 %v136, %v848
  %v850 = vpop.f32.mrf.mxu0
  %v851 = vpop.f32.mrf.mxu0
  %v852 = vadd.f32 %v136, %v851
  %v853 = vpop.f32.mrf.mxu0
  %854 = vmatprep.mubr.bf16.mxu0 0
  %855 = vmatmul.mubr.bf16.gmra.mxu0 %v380
  %v856 = vpop.f32.mrf.mxu0
  %v857 = vadd.f32 %v136, %v856
  %v858 = vpop.f32.mrf.mxu0
  %v859 = vpop.f32.mrf.mxu0
  %v860 = vadd.f32 %v136, %v859
  %v861 = vpop.f32.mrf.mxu0
  %862 = vmatprep.mubr.bf16.mxu0 0
  %863 = vmatmul.mubr.bf16.gmra.mxu0 %v381
  %v864 = vpop.f32.mrf.mxu0
  %v865 = vadd.f32 %v136, %v864
  %v866 = vpop.f32.mrf.mxu0
  %v867 = vpop.f32.mrf.mxu0
  %v868 = vadd.f32 %v136, %v867
  %v869 = vpop.f32.mrf.mxu0
  %870 = vmatprep.mubr.bf16.mxu0 0
  %871 = vmatmul.mubr.bf16.gmra.mxu0 %v382
  %v872 = vpop.f32.mrf.mxu0
  %v873 = vadd.f32 %v136, %v872
  %v874 = vpop.f32.mrf.mxu0
  %v875 = vpop.f32.mrf.mxu0
  %v876 = vadd.f32 %v136, %v875
  %v877 = vpop.f32.mrf.mxu0
  %878 = vmatprep.mubr.bf16.mxu0 0
  %879 = vmatmul.mubr.bf16.gmra.mxu0 %v383
  %v880 = vpop.f32.mrf.mxu0
  %v881 = vadd.f32 %v136, %v880
  %v882 = vpop.f32.mrf.mxu0
  %v883 = vpop.f32.mrf.mxu0
  %v884 = vadd.f32 %v136, %v883
  %v885 = vpop.f32.mrf.mxu0
  %886 = vmatprep.mubr.bf16.mxu0 0
  %887 = vmatmul.mubr.bf16.gmra.mxu0 %v384
  %v888 = vpop.f32.mrf.mxu0
  %v889 = vadd.f32 %v136, %v888
  %v890 = vpop.f32.mrf.mxu0
  %v891 = vpop.f32.mrf.mxu0
  %v892 = vadd.f32 %v136, %v891
  %v893 = vpop.f32.mrf.mxu0
  %894 = vmatprep.mubr.bf16.mxu0 0
  %895 = vmatmul.mubr.bf16.gmra.mxu0 %v385
  %v896 = vpop.f32.mrf.mxu0
  %v897 = vadd.f32 %v136, %v896
  %v898 = vpop.f32.mrf.mxu0
  %v899 = vpop.f32.mrf.mxu0
  %v900 = vadd.f32 %v136, %v899
  %v901 = vpop.f32.mrf.mxu0
  %902 = vmatprep.mubr.bf16.mxu0 0
  %903 = vmatmul.mubr.bf16.gmra.mxu0 %v386
  %v904 = vpop.f32.mrf.mxu0
  %v905 = vadd.f32 %v136, %v904
  %v906 = vpop.f32.mrf.mxu0
  %v907 = vpop.f32.mrf.mxu0
  %v908 = vadd.f32 %v136, %v907
  %v909 = vpop.f32.mrf.mxu0
  %910 = vmatprep.mubr.bf16.mxu0 0
  %911 = vmatmul.mubr.bf16.gmra.mxu0 %v387
  %v912 = vpop.f32.mrf.mxu0
  %v913 = vadd.f32 %v136, %v912
  %v914 = vpop.f32.mrf.mxu0
  %v915 = vpop.f32.mrf.mxu0
  %v916 = vadd.f32 %v136, %v915
  %v917 = vpop.f32.mrf.mxu0
  %918 = vdwg.mxu0
  %vm919 = vcmp.ge.f32.partialorder %v521, 0.0
  %vm920 = vcmp.ge.f32.partialorder %v524, 0.0
  %vm921 = vcmp.ge.f32.partialorder %v529, 0.0
  %vm922 = vcmp.ge.f32.partialorder %v532, 0.0
  %vm923 = vcmp.ge.f32.partialorder %v537, 0.0
  %vm924 = vcmp.ge.f32.partialorder %v540, 0.0
  %vm925 = vcmp.ge.f32.partialorder %v545, 0.0
  %vm926 = vcmp.ge.f32.partialorder %v548, 0.0
  %vm927 = vcmp.ge.f32.partialorder %v553, 0.0
  %vm928 = vcmp.ge.f32.partialorder %v556, 0.0
  %vm929 = vcmp.ge.f32.partialorder %v561, 0.0
  %vm930 = vcmp.ge.f32.partialorder %v564, 0.0
  %vm931 = vcmp.ge.f32.partialorder %v569, 0.0
  %vm932 = vcmp.ge.f32.partialorder %v572, 0.0
  %vm933 = vcmp.ge.f32.partialorder %v577, 0.0
  %vm934 = vcmp.ge.f32.partialorder %v580, 0.0
  %vm935 = vcmp.ge.f32.partialorder %v585, 0.0
  %vm936 = vcmp.ge.f32.partialorder %v588, 0.0
  %vm937 = vcmp.ge.f32.partialorder %v593, 0.0
  %vm938 = vcmp.ge.f32.partialorder %v596, 0.0
  %vm939 = vcmp.ge.f32.partialorder %v601, 0.0
  %vm940 = vcmp.ge.f32.partialorder %v604, 0.0
  %vm941 = vcmp.ge.f32.partialorder %v609, 0.0
  %vm942 = vcmp.ge.f32.partialorder %v612, 0.0
  %vm943 = vcmp.ge.f32.partialorder %v617, 0.0
  %vm944 = vcmp.ge.f32.partialorder %v620, 0.0
  %vm945 = vcmp.ge.f32.partialorder %v625, 0.0
  %vm946 = vcmp.ge.f32.partialorder %v628, 0.0
  %vm947 = vcmp.ge.f32.partialorder %v633, 0.0
  %vm948 = vcmp.ge.f32.partialorder %v636, 0.0
  %vm949 = vcmp.ge.f32.partialorder %v641, 0.0
  %vm950 = vcmp.ge.f32.partialorder %v644, 0.0
  %vm951 = vcmp.ge.f32.partialorder %v649, 0.0
  %vm952 = vcmp.ge.f32.partialorder %v652, 0.0
  %vm953 = vcmp.ge.f32.partialorder %v657, 0.0
  %vm954 = vcmp.ge.f32.partialorder %v660, 0.0
  %vm955 = vcmp.ge.f32.partialorder %v665, 0.0
  %vm956 = vcmp.ge.f32.partialorder %v668, 0.0
  %vm957 = vcmp.ge.f32.partialorder %v673, 0.0
  %vm958 = vcmp.ge.f32.partialorder %v676, 0.0
  %vm959 = vcmp.ge.f32.partialorder %v681, 0.0
  %vm960 = vcmp.ge.f32.partialorder %v684, 0.0
  %vm961 = vcmp.ge.f32.partialorder %v689, 0.0
  %vm962 = vcmp.ge.f32.partialorder %v692, 0.0
  %vm963 = vcmp.ge.f32.partialorder %v697, 0.0
  %vm964 = vcmp.ge.f32.partialorder %v700, 0.0
  %vm965 = vcmp.ge.f32.partialorder %v705, 0.0
  %vm966 = vcmp.ge.f32.partialorder %v708, 0.0
  %vm967 = vcmp.ge.f32.partialorder %v713, 0.0
  %vm968 = vcmp.ge.f32.partialorder %v716, 0.0
  %vm969 = vcmp.ge.f32.partialorder %v721, 0.0
  %vm970 = vcmp.ge.f32.partialorder %v724, 0.0
  %vm971 = vcmp.ge.f32.partialorder %v729, 0.0
  %vm972 = vcmp.ge.f32.partialorder %v732, 0.0
  %vm973 = vcmp.ge.f32.partialorder %v737, 0.0
  %vm974 = vcmp.ge.f32.partialorder %v740, 0.0
  %vm975 = vcmp.ge.f32.partialorder %v745, 0.0
  %vm976 = vcmp.ge.f32.partialorder %v748, 0.0
  %vm977 = vcmp.ge.f32.partialorder %v753, 0.0
  %vm978 = vcmp.ge.f32.partialorder %v756, 0.0
  %vm979 = vcmp.ge.f32.partialorder %v761, 0.0
  %vm980 = vcmp.ge.f32.partialorder %v764, 0.0
  %vm981 = vcmp.ge.f32.partialorder %v769, 0.0
  %vm982 = vcmp.ge.f32.partialorder %v772, 0.0
  %vm983 = vcmp.ge.f32.partialorder %v777, 0.0
  %vm984 = vcmp.ge.f32.partialorder %v780, 0.0
  %vm985 = vcmp.ge.f32.partialorder %v785, 0.0
  %vm986 = vcmp.ge.f32.partialorder %v788, 0.0
  %vm987 = vcmp.ge.f32.partialorder %v793, 0.0
  %vm988 = vcmp.ge.f32.partialorder %v796, 0.0
  %vm989 = vcmp.ge.f32.partialorder %v801, 0.0
  %vm990 = vcmp.ge.f32.partialorder %v804, 0.0
  %vm991 = vcmp.ge.f32.partialorder %v809, 0.0
  %vm992 = vcmp.ge.f32.partialorder %v812, 0.0
  %vm993 = vcmp.ge.f32.partialorder %v817, 0.0
  %vm994 = vcmp.ge.f32.partialorder %v820, 0.0
  %vm995 = vcmp.ge.f32.partialorder %v825, 0.0
  %vm996 = vcmp.ge.f32.partialorder %v828, 0.0
  %vm997 = vcmp.ge.f32.partialorder %v833, 0.0
  %vm998 = vcmp.ge.f32.partialorder %v836, 0.0
  %vm999 = vcmp.ge.f32.partialorder %v841, 0.0
  %vm1000 = vcmp.ge.f32.partialorder %v844, 0.0
  %vm1001 = vcmp.ge.f32.partialorder %v849, 0.0
  %vm1002 = vcmp.ge.f32.partialorder %v852, 0.0
  %vm1003 = vcmp.ge.f32.partialorder %v857, 0.0
  %vm1004 = vcmp.ge.f32.partialorder %v860, 0.0
  %vm1005 = vcmp.ge.f32.partialorder %v865, 0.0
  %vm1006 = vcmp.ge.f32.partialorder %v868, 0.0
  %vm1007 = vcmp.ge.f32.partialorder %v873, 0.0
  %vm1008 = vcmp.ge.f32.partialorder %v876, 0.0
  %vm1009 = vcmp.ge.f32.partialorder %v881, 0.0
  %vm1010 = vcmp.ge.f32.partialorder %v884, 0.0
  %vm1011 = vcmp.ge.f32.partialorder %v889, 0.0
  %vm1012 = vcmp.ge.f32.partialorder %v892, 0.0
  %vm1013 = vcmp.ge.f32.partialorder %v897, 0.0
  %vm1014 = vcmp.ge.f32.partialorder %v900, 0.0
  %vm1015 = vcmp.ge.f32.partialorder %v905, 0.0
  %vm1016 = vcmp.ge.f32.partialorder %v908, 0.0
  %vm1017 = vcmp.ge.f32.partialorder %v913, 0.0
  %vm1018 = vcmp.ge.f32.partialorder %v916, 0.0
  %v1019 = vmul.f32 %v521, 0.01
  %v1020 = vmul.f32 %v524, 0.01
  %v1021 = vmul.f32 %v529, 0.01
  %v1022 = vmul.f32 %v532, 0.01
  %v1023 = vmul.f32 %v537, 0.01
  %v1024 = vmul.f32 %v540, 0.01
  %v1025 = vmul.f32 %v545, 0.01
  %v1026 = vmul.f32 %v548, 0.01
  %v1027 = vmul.f32 %v553, 0.01
  %v1028 = vmul.f32 %v556, 0.01
  %v1029 = vmul.f32 %v561, 0.01
  %v1030 = vmul.f32 %v564, 0.01
  %v1031 = vmul.f32 %v569, 0.01
  %v1032 = vmul.f32 %v572, 0.01
  %v1033 = vmul.f32 %v577, 0.01
  %v1034 = vmul.f32 %v580, 0.01
  %v1035 = vmul.f32 %v585, 0.01
  %v1036 = vmul.f32 %v588, 0.01
  %v1037 = vmul.f32 %v593, 0.01
  %v1038 = vmul.f32 %v596, 0.01
  %v1039 = vmul.f32 %v601, 0.01
  %v1040 = vmul.f32 %v604, 0.01
  %v1041 = vmul.f32 %v609, 0.01
  %v1042 = vmul.f32 %v612, 0.01
  %v1043 = vmul.f32 %v617, 0.01
  %v1044 = vmul.f32 %v620, 0.01
  %v1045 = vmul.f32 %v625, 0.01
  %v1046 = vmul.f32 %v628, 0.01
  %v1047 = vmul.f32 %v633, 0.01
  %v1048 = vmul.f32 %v636, 0.01
  %v1049 = vmul.f32 %v641, 0.01
  %v1050 = vmul.f32 %v644, 0.01
  %v1051 = vmul.f32 %v649, 0.01
  %v1052 = vmul.f32 %v652, 0.01
  %v1053 = vmul.f32 %v657, 0.01
  %v1054 = vmul.f32 %v660, 0.01
  %v1055 = vmul.f32 %v665, 0.01
  %v1056 = vmul.f32 %v668, 0.01
  %v1057 = vmul.f32 %v673, 0.01
  %v1058 = vmul.f32 %v676, 0.01
  %v1059 = vmul.f32 %v681, 0.01
  %v1060 = vmul.f32 %v684, 0.01
  %v1061 = vmul.f32 %v689, 0.01
  %v1062 = vmul.f32 %v692, 0.01
  %v1063 = vmul.f32 %v697, 0.01
  %v1064 = vmul.f32 %v700, 0.01
  %v1065 = vmul.f32 %v705, 0.01
  %v1066 = vmul.f32 %v708, 0.01
  %v1067 = vmul.f32 %v713, 0.01
  %v1068 = vmul.f32 %v716, 0.01
  %v1069 = vmul.f32 %v721, 0.01
  %v1070 = vmul.f32 %v724, 0.01
  %v1071 = vmul.f32 %v729, 0.01
  %v1072 = vmul.f32 %v732, 0.01
  %v1073 = vmul.f32 %v737, 0.01
  %v1074 = vmul.f32 %v740, 0.01
  %v1075 = vmul.f32 %v745, 0.01
  %v1076 = vmul.f32 %v748, 0.01
  %v1077 = vmul.f32 %v753, 0.01
  %v1078 = vmul.f32 %v756, 0.01
  %v1079 = vmul.f32 %v761, 0.01
  %v1080 = vmul.f32 %v764, 0.01
  %v1081 = vmul.f32 %v769, 0.01
  %v1082 = vmul.f32 %v772, 0.01
  %v1083 = vmul.f32 %v777, 0.01
  %v1084 = vmul.f32 %v780, 0.01
  %v1085 = vmul.f32 %v785, 0.01
  %v1086 = vmul.f32 %v788, 0.01
  %v1087 = vmul.f32 %v793, 0.01
  %v1088 = vmul.f32 %v796, 0.01
  %v1089 = vmul.f32 %v801, 0.01
  %v1090 = vmul.f32 %v804, 0.01
  %v1091 = vmul.f32 %v809, 0.01
  %v1092 = vmul.f32 %v812, 0.01
  %v1093 = vmul.f32 %v817, 0.01
  %v1094 = vmul.f32 %v820, 0.01
  %v1095 = vmul.f32 %v825, 0.01
  %v1096 = vmul.f32 %v828, 0.01
  %v1097 = vmul.f32 %v833, 0.01
  %v1098 = vmul.f32 %v836, 0.01
  %v1099 = vmul.f32 %v841, 0.01
  %v1100 = vmul.f32 %v844, 0.01
  %v1101 = vmul.f32 %v849, 0.01
  %v1102 = vmul.f32 %v852, 0.01
  %v1103 = vmul.f32 %v857, 0.01
  %v1104 = vmul.f32 %v860, 0.01
  %v1105 = vmul.f32 %v865, 0.01
  %v1106 = vmul.f32 %v868, 0.01
  %v1107 = vmul.f32 %v873, 0.01
  %v1108 = vmul.f32 %v876, 0.01
  %v1109 = vmul.f32 %v881, 0.01
  %v1110 = vmul.f32 %v884, 0.01
  %v1111 = vmul.f32 %v889, 0.01
  %v1112 = vmul.f32 %v892, 0.01
  %v1113 = vmul.f32 %v897, 0.01
  %v1114 = vmul.f32 %v900, 0.01
  %v1115 = vmul.f32 %v905, 0.01
  %v1116 = vmul.f32 %v908, 0.01
  %v1117 = vmul.f32 %v913, 0.01
  %v1118 = vmul.f32 %v916, 0.01
  %v1119 = vsel %vm919, %v521, %v1019
  %v1120 = vsel %vm920, %v524, %v1020
  %v1121 = vsel %vm921, %v529, %v1021
  %v1122 = vsel %vm922, %v532, %v1022
  %v1123 = vsel %vm923, %v537, %v1023
  %v1124 = vsel %vm924, %v540, %v1024
  %v1125 = vsel %vm925, %v545, %v1025
  %v1126 = vsel %vm926, %v548, %v1026
  %v1127 = vsel %vm927, %v553, %v1027
  %v1128 = vsel %vm928, %v556, %v1028
  %v1129 = vsel %vm929, %v561, %v1029
  %v1130 = vsel %vm930, %v564, %v1030
  %v1131 = vsel %vm931, %v569, %v1031
  %v1132 = vsel %vm932, %v572, %v1032
  %v1133 = vsel %vm933, %v577, %v1033
  %v1134 = vsel %vm934, %v580, %v1034
  %v1135 = vsel %vm935, %v585, %v1035
  %v1136 = vsel %vm936, %v588, %v1036
  %v1137 = vsel %vm937, %v593, %v1037
  %v1138 = vsel %vm938, %v596, %v1038
  %v1139 = vsel %vm939, %v601, %v1039
  %v1140 = vsel %vm940, %v604, %v1040
  %v1141 = vsel %vm941, %v609, %v1041
  %v1142 = vsel %vm942, %v612, %v1042
  %v1143 = vsel %vm943, %v617, %v1043
  %v1144 = vsel %vm944, %v620, %v1044
  %v1145 = vsel %vm945, %v625, %v1045
  %v1146 = vsel %vm946, %v628, %v1046
  %v1147 = vsel %vm947, %v633, %v1047
  %v1148 = vsel %vm948, %v636, %v1048
  %v1149 = vsel %vm949, %v641, %v1049
  %v1150 = vsel %vm950, %v644, %v1050
  %v1151 = vsel %vm951, %v649, %v1051
  %v1152 = vsel %vm952, %v652, %v1052
  %v1153 = vsel %vm953, %v657, %v1053
  %v1154 = vsel %vm954, %v660, %v1054
  %v1155 = vsel %vm955, %v665, %v1055
  %v1156 = vsel %vm956, %v668, %v1056
  %v1157 = vsel %vm957, %v673, %v1057
  %v1158 = vsel %vm958, %v676, %v1058
  %v1159 = vsel %vm959, %v681, %v1059
  %v1160 = vsel %vm960, %v684, %v1060
  %v1161 = vsel %vm961, %v689, %v1061
  %v1162 = vsel %vm962, %v692, %v1062
  %v1163 = vsel %vm963, %v697, %v1063
  %v1164 = vsel %vm964, %v700, %v1064
  %v1165 = vsel %vm965, %v705, %v1065
  %v1166 = vsel %vm966, %v708, %v1066
  %v1167 = vsel %vm967, %v713, %v1067
  %v1168 = vsel %vm968, %v716, %v1068
  %v1169 = vsel %vm969, %v721, %v1069
  %v1170 = vsel %vm970, %v724, %v1070
  %v1171 = vsel %vm971, %v729, %v1071
  %v1172 = vsel %vm972, %v732, %v1072
  %v1173 = vsel %vm973, %v737, %v1073
  %v1174 = vsel %vm974, %v740, %v1074
  %v1175 = vsel %vm975, %v745, %v1075
  %v1176 = vsel %vm976, %v748, %v1076
  %v1177 = vsel %vm977, %v753, %v1077
  %v1178 = vsel %vm978, %v756, %v1078
  %v1179 = vsel %vm979, %v761, %v1079
  %v1180 = vsel %vm980, %v764, %v1080
  %v1181 = vsel %vm981, %v769, %v1081
  %v1182 = vsel %vm982, %v772, %v1082
  %v1183 = vsel %vm983, %v777, %v1083
  %v1184 = vsel %vm984, %v780, %v1084
  %v1185 = vsel %vm985, %v785, %v1085
  %v1186 = vsel %vm986, %v788, %v1086
  %v1187 = vsel %vm987, %v793, %v1087
  %v1188 = vsel %vm988, %v796, %v1088
  %v1189 = vsel %vm989, %v801, %v1089
  %v1190 = vsel %vm990, %v804, %v1090
  %v1191 = vsel %vm991, %v809, %v1091
  %v1192 = vsel %vm992, %v812, %v1092
  %v1193 = vsel %vm993, %v817, %v1093
  %v1194 = vsel %vm994, %v820, %v1094
  %v1195 = vsel %vm995, %v825, %v1095
  %v1196 = vsel %vm996, %v828, %v1096
  %v1197 = vsel %vm997, %v833, %v1097
  %v1198 = vsel %vm998, %v836, %v1098
  %v1199 = vsel %vm999, %v841, %v1099
  %v1200 = vsel %vm1000, %v844, %v1100
  %v1201 = vsel %vm1001, %v849, %v1101
  %v1202 = vsel %vm1002, %v852, %v1102
  %v1203 = vsel %vm1003, %v857, %v1103
  %v1204 = vsel %vm1004, %v860, %v1104
  %v1205 = vsel %vm1005, %v865, %v1105
  %v1206 = vsel %vm1006, %v868, %v1106
  %v1207 = vsel %vm1007, %v873, %v1107
  %v1208 = vsel %vm1008, %v876, %v1108
  %v1209 = vsel %vm1009, %v881, %v1109
  %v1210 = vsel %vm1010, %v884, %v1110
  %v1211 = vsel %vm1011, %v889, %v1111
  %v1212 = vsel %vm1012, %v892, %v1112
  %v1213 = vsel %vm1013, %v897, %v1113
  %v1214 = vsel %vm1014, %v900, %v1114
  %v1215 = vsel %vm1015, %v905, %v1115
  %v1216 = vsel %vm1016, %v908, %v1116
  %v1217 = vsel %vm1017, %v913, %v1117
  %v1218 = vsel %vm1018, %v916, %v1118
  %v1219 = vpack.c.bf16 %v1120, %v1119
  %v1220 = vpack.c.bf16 %v1122, %v1121
  %v1221 = vpack.c.bf16 %v1124, %v1123
  %v1222 = vpack.c.bf16 %v1126, %v1125
  %v1223 = vpack.c.bf16 %v1128, %v1127
  %v1224 = vpack.c.bf16 %v1130, %v1129
  %v1225 = vpack.c.bf16 %v1132, %v1131
  %v1226 = vpack.c.bf16 %v1134, %v1133
  %v1227 = vpack.c.bf16 %v1136, %v1135
  %v1228 = vpack.c.bf16 %v1138, %v1137
  %v1229 = vpack.c.bf16 %v1140, %v1139
  %v1230 = vpack.c.bf16 %v1142, %v1141
  %v1231 = vpack.c.bf16 %v1144, %v1143
  %v1232 = vpack.c.bf16 %v1146, %v1145
  %v1233 = vpack.c.bf16 %v1148, %v1147
  %v1234 = vpack.c.bf16 %v1150, %v1149
  %v1235 = vpack.c.bf16 %v1152, %v1151
  %v1236 = vpack.c.bf16 %v1154, %v1153
  %v1237 = vpack.c.bf16 %v1156, %v1155
  %v1238 = vpack.c.bf16 %v1158, %v1157
  %v1239 = vpack.c.bf16 %v1160, %v1159
  %v1240 = vpack.c.bf16 %v1162, %v1161
  %v1241 = vpack.c.bf16 %v1164, %v1163
  %v1242 = vpack.c.bf16 %v1166, %v1165
  %v1243 = vpack.c.bf16 %v1168, %v1167
  %v1244 = vpack.c.bf16 %v1170, %v1169
  %v1245 = vpack.c.bf16 %v1172, %v1171
  %v1246 = vpack.c.bf16 %v1174, %v1173
  %v1247 = vpack.c.bf16 %v1176, %v1175
  %v1248 = vpack.c.bf16 %v1178, %v1177
  %v1249 = vpack.c.bf16 %v1180, %v1179
  %v1250 = vpack.c.bf16 %v1182, %v1181
  %v1251 = vpack.c.bf16 %v1184, %v1183
  %v1252 = vpack.c.bf16 %v1186, %v1185
  %v1253 = vpack.c.bf16 %v1188, %v1187
  %v1254 = vpack.c.bf16 %v1190, %v1189
  %v1255 = vpack.c.bf16 %v1192, %v1191
  %v1256 = vpack.c.bf16 %v1194, %v1193
  %v1257 = vpack.c.bf16 %v1196, %v1195
  %v1258 = vpack.c.bf16 %v1198, %v1197
  %v1259 = vpack.c.bf16 %v1200, %v1199
  %v1260 = vpack.c.bf16 %v1202, %v1201
  %v1261 = vpack.c.bf16 %v1204, %v1203
  %v1262 = vpack.c.bf16 %v1206, %v1205
  %v1263 = vpack.c.bf16 %v1208, %v1207
  %v1264 = vpack.c.bf16 %v1210, %v1209
  %v1265 = vpack.c.bf16 %v1212, %v1211
  %v1266 = vpack.c.bf16 %v1214, %v1213
  %v1267 = vpack.c.bf16 %v1216, %v1215
  %v1268 = vpack.c.bf16 %v1218, %v1217
  %v1319 = vunpack.c.l.b16 %v1219
  %v1320 = vunpack.c.h.b16 %v1219
  %v1321 = vunpack.c.l.b16 %v1220
  %v1322 = vunpack.c.h.b16 %v1220
  %v1323 = vunpack.c.l.b16 %v1221
  %v1324 = vunpack.c.h.b16 %v1221
  %v1325 = vunpack.c.l.b16 %v1222
  %v1326 = vunpack.c.h.b16 %v1222
  %v1327 = vunpack.c.l.b16 %v1223
  %v1328 = vunpack.c.h.b16 %v1223
  %v1329 = vunpack.c.l.b16 %v1224
  %v1330 = vunpack.c.h.b16 %v1224
  %v1331 = vunpack.c.l.b16 %v1225
  %v1332 = vunpack.c.h.b16 %v1225
  %v1333 = vunpack.c.l.b16 %v1226
  %v1334 = vunpack.c.h.b16 %v1226
  %v1335 = vunpack.c.l.b16 %v1227
  %v1336 = vunpack.c.h.b16 %v1227
  %v1337 = vunpack.c.l.b16 %v1228
  %v1338 = vunpack.c.h.b16 %v1228
  %v1339 = vunpack.c.l.b16 %v1229
  %v1340 = vunpack.c.h.b16 %v1229
  %v1341 = vunpack.c.l.b16 %v1230
  %v1342 = vunpack.c.h.b16 %v1230
  %v1343 = vunpack.c.l.b16 %v1231
  %v1344 = vunpack.c.h.b16 %v1231
  %v1345 = vunpack.c.l.b16 %v1232
  %v1346 = vunpack.c.h.b16 %v1232
  %v1347 = vunpack.c.l.b16 %v1233
  %v1348 = vunpack.c.h.b16 %v1233
  %v1349 = vunpack.c.l.b16 %v1234
  %v1350 = vunpack.c.h.b16 %v1234
  %v1351 = vunpack.c.l.b16 %v1235
  %v1352 = vunpack.c.h.b16 %v1235
  %v1353 = vunpack.c.l.b16 %v1236
  %v1354 = vunpack.c.h.b16 %v1236
  %v1355 = vunpack.c.l.b16 %v1237
  %v1356 = vunpack.c.h.b16 %v1237
  %v1357 = vunpack.c.l.b16 %v1238
  %v1358 = vunpack.c.h.b16 %v1238
  %v1359 = vunpack.c.l.b16 %v1239
  %v1360 = vunpack.c.h.b16 %v1239
  %v1361 = vunpack.c.l.b16 %v1240
  %v1362 = vunpack.c.h.b16 %v1240
  %v1363 = vunpack.c.l.b16 %v1241
  %v1364 = vunpack.c.h.b16 %v1241
  %v1365 = vunpack.c.l.b16 %v1242
  %v1366 = vunpack.c.h.b16 %v1242
  %v1367 = vunpack.c.l.b16 %v1243
  %v1368 = vunpack.c.h.b16 %v1243
  %v1369 = vunpack.c.l.b16 %v1244
  %v1370 = vunpack.c.h.b16 %v1244
  %v1371 = vunpack.c.l.b16 %v1245
  %v1372 = vunpack.c.h.b16 %v1245
  %v1373 = vunpack.c.l.b16 %v1246
  %v1374 = vunpack.c.h.b16 %v1246
  %v1375 = vunpack.c.l.b16 %v1247
  %v1376 = vunpack.c.h.b16 %v1247
  %v1377 = vunpack.c.l.b16 %v1248
  %v1378 = vunpack.c.h.b16 %v1248
  %v1379 = vunpack.c.l.b16 %v1249
  %v1380 = vunpack.c.h.b16 %v1249
  %v1381 = vunpack.c.l.b16 %v1250
  %v1382 = vunpack.c.h.b16 %v1250
  %v1383 = vunpack.c.l.b16 %v1251
  %v1384 = vunpack.c.h.b16 %v1251
  %v1385 = vunpack.c.l.b16 %v1252
  %v1386 = vunpack.c.h.b16 %v1252
  %v1387 = vunpack.c.l.b16 %v1253
  %v1388 = vunpack.c.h.b16 %v1253
  %v1389 = vunpack.c.l.b16 %v1254
  %v1390 = vunpack.c.h.b16 %v1254
  %v1391 = vunpack.c.l.b16 %v1255
  %v1392 = vunpack.c.h.b16 %v1255
  %v1393 = vunpack.c.l.b16 %v1256
  %v1394 = vunpack.c.h.b16 %v1256
  %v1395 = vunpack.c.l.b16 %v1257
  %v1396 = vunpack.c.h.b16 %v1257
  %v1397 = vunpack.c.l.b16 %v1258
  %v1398 = vunpack.c.h.b16 %v1258
  %v1399 = vunpack.c.l.b16 %v1259
  %v1400 = vunpack.c.h.b16 %v1259
  %v1401 = vunpack.c.l.b16 %v1260
  %v1402 = vunpack.c.h.b16 %v1260
  %v1403 = vunpack.c.l.b16 %v1261
  %v1404 = vunpack.c.h.b16 %v1261
  %v1405 = vunpack.c.l.b16 %v1262
  %v1406 = vunpack.c.h.b16 %v1262
  %v1407 = vunpack.c.l.b16 %v1263
  %v1408 = vunpack.c.h.b16 %v1263
  %v1409 = vunpack.c.l.b16 %v1264
  %v1410 = vunpack.c.h.b16 %v1264
  %v1411 = vunpack.c.l.b16 %v1265
  %v1412 = vunpack.c.h.b16 %v1265
  %v1413 = vunpack.c.l.b16 %v1266
  %v1414 = vunpack.c.h.b16 %v1266
  %v1415 = vunpack.c.l.b16 %v1267
  %v1416 = vunpack.c.h.b16 %v1267
  %v1417 = vunpack.c.l.b16 %v1268
  %v1418 = vunpack.c.h.b16 %v1268
  %v1419 = vpack.c.b16 %v1319, %v1319
  %v1420 = vpack.c.b16 %v1320, %v1320
  %v1421 = vpack.c.b16 %v1321, %v1321
  %v1422 = vpack.c.b16 %v1322, %v1322
  %v1423 = vpack.c.b16 %v1323, %v1323
  %v1424 = vpack.c.b16 %v1324, %v1324
  %v1425 = vpack.c.b16 %v1325, %v1325
  %v1426 = vpack.c.b16 %v1326, %v1326
  %v1427 = vpack.c.b16 %v1327, %v1327
  %v1428 = vpack.c.b16 %v1328, %v1328
  %v1429 = vpack.c.b16 %v1329, %v1329
  %v1430 = vpack.c.b16 %v1330, %v1330
  %v1431 = vpack.c.b16 %v1331, %v1331
  %v1432 = vpack.c.b16 %v1332, %v1332
  %v1433 = vpack.c.b16 %v1333, %v1333
  %v1434 = vpack.c.b16 %v1334, %v1334
  %v1435 = vpack.c.b16 %v1335, %v1335
  %v1436 = vpack.c.b16 %v1336, %v1336
  %v1437 = vpack.c.b16 %v1337, %v1337
  %v1438 = vpack.c.b16 %v1338, %v1338
  %v1439 = vpack.c.b16 %v1339, %v1339
  %v1440 = vpack.c.b16 %v1340, %v1340
  %v1441 = vpack.c.b16 %v1341, %v1341
  %v1442 = vpack.c.b16 %v1342, %v1342
  %v1443 = vpack.c.b16 %v1343, %v1343
  %v1444 = vpack.c.b16 %v1344, %v1344
  %v1445 = vpack.c.b16 %v1345, %v1345
  %v1446 = vpack.c.b16 %v1346, %v1346
  %v1447 = vpack.c.b16 %v1347, %v1347
  %v1448 = vpack.c.b16 %v1348, %v1348
  %v1449 = vpack.c.b16 %v1349, %v1349
  %v1450 = vpack.c.b16 %v1350, %v1350
  %v1451 = vpack.c.b16 %v1351, %v1351
  %v1452 = vpack.c.b16 %v1352, %v1352
  %v1453 = vpack.c.b16 %v1353, %v1353
  %v1454 = vpack.c.b16 %v1354, %v1354
  %v1455 = vpack.c.b16 %v1355, %v1355
  %v1456 = vpack.c.b16 %v1356, %v1356
  %v1457 = vpack.c.b16 %v1357, %v1357
  %v1458 = vpack.c.b16 %v1358, %v1358
  %v1459 = vpack.c.b16 %v1359, %v1359
  %v1460 = vpack.c.b16 %v1360, %v1360
  %v1461 = vpack.c.b16 %v1361, %v1361
  %v1462 = vpack.c.b16 %v1362, %v1362
  %v1463 = vpack.c.b16 %v1363, %v1363
  %v1464 = vpack.c.b16 %v1364, %v1364
  %v1465 = vpack.c.b16 %v1365, %v1365
  %v1466 = vpack.c.b16 %v1366, %v1366
  %v1467 = vpack.c.b16 %v1367, %v1367
  %v1468 = vpack.c.b16 %v1368, %v1368
  %v1469 = vpack.c.b16 %v1369, %v1369
  %v1470 = vpack.c.b16 %v1370, %v1370
  %v1471 = vpack.c.b16 %v1371, %v1371
  %v1472 = vpack.c.b16 %v1372, %v1372
  %v1473 = vpack.c.b16 %v1373, %v1373
  %v1474 = vpack.c.b16 %v1374, %v1374
  %v1475 = vpack.c.b16 %v1375, %v1375
  %v1476 = vpack.c.b16 %v1376, %v1376
  %v1477 = vpack.c.b16 %v1377, %v1377
  %v1478 = vpack.c.b16 %v1378, %v1378
  %v1479 = vpack.c.b16 %v1379, %v1379
  %v1480 = vpack.c.b16 %v1380, %v1380
  %v1481 = vpack.c.b16 %v1381, %v1381
  %v1482 = vpack.c.b16 %v1382, %v1382
  %v1483 = vpack.c.b16 %v1383, %v1383
  %v1484 = vpack.c.b16 %v1384, %v1384
  %v1485 = vpack.c.b16 %v1385, %v1385
  %v1486 = vpack.c.b16 %v1386, %v1386
  %v1487 = vpack.c.b16 %v1387, %v1387
  %v1488 = vpack.c.b16 %v1388, %v1388
  %v1489 = vpack.c.b16 %v1389, %v1389
  %v1490 = vpack.c.b16 %v1390, %v1390
  %v1491 = vpack.c.b16 %v1391, %v1391
  %v1492 = vpack.c.b16 %v1392, %v1392
  %v1493 = vpack.c.b16 %v1393, %v1393
  %v1494 = vpack.c.b16 %v1394, %v1394
  %v1495 = vpack.c.b16 %v1395, %v1395
  %v1496 = vpack.c.b16 %v1396, %v1396
  %v1497 = vpack.c.b16 %v1397, %v1397
  %v1498 = vpack.c.b16 %v1398, %v1398
  %v1499 = vpack.c.b16 %v1399, %v1399
  %v1500 = vpack.c.b16 %v1400, %v1400
  %v1501 = vpack.c.b16 %v1401, %v1401
  %v1502 = vpack.c.b16 %v1402, %v1402
  %v1503 = vpack.c.b16 %v1403, %v1403
  %v1504 = vpack.c.b16 %v1404, %v1404
  %v1505 = vpack.c.b16 %v1405, %v1405
  %v1506 = vpack.c.b16 %v1406, %v1406
  %v1507 = vpack.c.b16 %v1407, %v1407
  %v1508 = vpack.c.b16 %v1408, %v1408
  %v1509 = vpack.c.b16 %v1409, %v1409
  %v1510 = vpack.c.b16 %v1410, %v1410
  %v1511 = vpack.c.b16 %v1411, %v1411
  %v1512 = vpack.c.b16 %v1412, %v1412
  %v1513 = vpack.c.b16 %v1413, %v1413
  %v1514 = vpack.c.b16 %v1414, %v1414
  %v1515 = vpack.c.b16 %v1415, %v1415
  %v1516 = vpack.c.b16 %v1416, %v1416
  %v1517 = vpack.c.b16 %v1417, %v1417
  %v1518 = vpack.c.b16 %v1418, %v1418
  %1619 = vst [vmem:[%s3] sm:$0xf] %v1419
  %1620 = vst [vmem:[%s3 + $0x4] sm:$0xf] %v1420
  %1621 = vst [vmem:[%s3 + $0x8] sm:$0xf] %v1421
  %1622 = vst [vmem:[%s3 + $0xc] sm:$0xf] %v1422
  %1623 = vst [vmem:[%s3 + $0x10] sm:$0xf] %v1423
  %1624 = vst [vmem:[%s3 + $0x14] sm:$0xf] %v1424
  %1625 = vst [vmem:[%s3 + $0x18] sm:$0xf] %v1425
  %1626 = vst [vmem:[%s3 + $0x1c] sm:$0xf] %v1426
  %1627 = vst [vmem:[%s3 + $0x20] sm:$0xf] %v1427
  %1628 = vst [vmem:[%s3 + $0x24] sm:$0xf] %v1428
  %1629 = vst [vmem:[%s3 + $0x28] sm:$0xf] %v1429
  %1630 = vst [vmem:[%s3 + $0x2c] sm:$0xf] %v1430
  %1631 = vst [vmem:[%s3 + $0x30] sm:$0xf] %v1431
  %1632 = vst [vmem:[%s3 + $0x34] sm:$0xf] %v1432
  %1633 = vst [vmem:[%s3 + $0x38] sm:$0xf] %v1433
  %1634 = vst [vmem:[%s3 + $0x3c] sm:$0xf] %v1434
  %1635 = vst [vmem:[%s3 + $0x40] sm:$0xf] %v1435
  %1636 = vst [vmem:[%s3 + $0x44] sm:$0xf] %v1436
  %1637 = vst [vmem:[%s3 + $0x48] sm:$0xf] %v1437
  %1638 = vst [vmem:[%s3 + $0x4c] sm:$0xf] %v1438
  %1639 = vst [vmem:[%s3 + $0x50] sm:$0xf] %v1439
  %1640 = vst [vmem:[%s3 + $0x54] sm:$0xf] %v1440
  %1641 = vst [vmem:[%s3 + $0x58] sm:$0xf] %v1441
  %1642 = vst [vmem:[%s3 + $0x5c] sm:$0xf] %v1442
  %1643 = vst [vmem:[%s3 + $0x60] sm:$0xf] %v1443
  %1644 = vst [vmem:[%s3 + $0x64] sm:$0xf] %v1444
  %1645 = vst [vmem:[%s3 + $0x68] sm:$0xf] %v1445
  %1646 = vst [vmem:[%s3 + $0x6c] sm:$0xf] %v1446
  %1647 = vst [vmem:[%s3 + $0x70] sm:$0xf] %v1447
  %1648 = vst [vmem:[%s3 + $0x74] sm:$0xf] %v1448
  %1649 = vst [vmem:[%s3 + $0x78] sm:$0xf] %v1449
  %1650 = vst [vmem:[%s3 + $0x7c] sm:$0xf] %v1450
  %1651 = vst [vmem:[%s3 + $0x80] sm:$0xf] %v1451
  %1652 = vst [vmem:[%s3 + $0x84] sm:$0xf] %v1452
  %1653 = vst [vmem:[%s3 + $0x88] sm:$0xf] %v1453
  %1654 = vst [vmem:[%s3 + $0x8c] sm:$0xf] %v1454
  %1655 = vst [vmem:[%s3 + $0x90] sm:$0xf] %v1455
  %1656 = vst [vmem:[%s3 + $0x94] sm:$0xf] %v1456
  %1657 = vst [vmem:[%s3 + $0x98] sm:$0xf] %v1457
  %1658 = vst [vmem:[%s3 + $0x9c] sm:$0xf] %v1458
  %1659 = vst [vmem:[%s3 + $0xa0] sm:$0xf] %v1459
  %1660 = vst [vmem:[%s3 + $0xa4] sm:$0xf] %v1460
  %1661 = vst [vmem:[%s3 + $0xa8] sm:$0xf] %v1461
  %1662 = vst [vmem:[%s3 + $0xac] sm:$0xf] %v1462
  %1663 = vst [vmem:[%s3 + $0xb0] sm:$0xf] %v1463
  %1664 = vst [vmem:[%s3 + $0xb4] sm:$0xf] %v1464
  %1665 = vst [vmem:[%s3 + $0xb8] sm:$0xf] %v1465
  %1666 = vst [vmem:[%s3 + $0xbc] sm:$0xf] %v1466
  %1667 = vst [vmem:[%s3 + $0xc0] sm:$0xf] %v1467
  %1668 = vst [vmem:[%s3 + $0xc4] sm:$0xf] %v1468
  %1669 = vst [vmem:[%s3 + $0xc8] sm:$0xf] %v1469
  %1670 = vst [vmem:[%s3 + $0xcc] sm:$0xf] %v1470
  %1671 = vst [vmem:[%s3 + $0xd0] sm:$0xf] %v1471
  %1672 = vst [vmem:[%s3 + $0xd4] sm:$0xf] %v1472
  %1673 = vst [vmem:[%s3 + $0xd8] sm:$0xf] %v1473
  %1674 = vst [vmem:[%s3 + $0xdc] sm:$0xf] %v1474
  %1675 = vst [vmem:[%s3 + $0xe0] sm:$0xf] %v1475
  %1676 = vst [vmem:[%s3 + $0xe4] sm:$0xf] %v1476
  %1677 = vst [vmem:[%s3 + $0xe8] sm:$0xf] %v1477
  %1678 = vst [vmem:[%s3 + $0xec] sm:$0xf] %v1478
  %1679 = vst [vmem:[%s3 + $0xf0] sm:$0xf] %v1479
  %1680 = vst [vmem:[%s3 + $0xf4] sm:$0xf] %v1480
  %1681 = vst [vmem:[%s3 + $0xf8] sm:$0xf] %v1481
  %1682 = vst [vmem:[%s3 + $0xfc] sm:$0xf] %v1482
  %1683 = vst [vmem:[%s3 + $0x100] sm:$0xf] %v1483
  %1684 = vst [vmem:[%s3 + $0x104] sm:$0xf] %v1484
  %1685 = vst [vmem:[%s3 + $0x108] sm:$0xf] %v1485
  %1686 = vst [vmem:[%s3 + $0x10c] sm:$0xf] %v1486
  %1687 = vst [vmem:[%s3 + $0x110] sm:$0xf] %v1487
  %1688 = vst [vmem:[%s3 + $0x114] sm:$0xf] %v1488
  %1689 = vst [vmem:[%s3 + $0x118] sm:$0xf] %v1489
  %1690 = vst [vmem:[%s3 + $0x11c] sm:$0xf] %v1490
  %1691 = vst [vmem:[%s3 + $0x120] sm:$0xf] %v1491
  %1692 = vst [vmem:[%s3 + $0x124] sm:$0xf] %v1492
  %1693 = vst [vmem:[%s3 + $0x128] sm:$0xf] %v1493
  %1694 = vst [vmem:[%s3 + $0x12c] sm:$0xf] %v1494
  %1695 = vst [vmem:[%s3 + $0x130] sm:$0xf] %v1495
  %1696 = vst [vmem:[%s3 + $0x134] sm:$0xf] %v1496
  %1697 = vst [vmem:[%s3 + $0x138] sm:$0xf] %v1497
  %1698 = vst [vmem:[%s3 + $0x13c] sm:$0xf] %v1498
  %1699 = vst [vmem:[%s3 + $0x140] sm:$0xf] %v1499
  %1700 = vst [vmem:[%s3 + $0x144] sm:$0xf] %v1500
  %1701 = vst [vmem:[%s3 + $0x148] sm:$0xf] %v1501
  %1702 = vst [vmem:[%s3 + $0x14c] sm:$0xf] %v1502
  %1703 = vst [vmem:[%s3 + $0x150] sm:$0xf] %v1503
  %1704 = vst [vmem:[%s3 + $0x154] sm:$0xf] %v1504
  %1705 = vst [vmem:[%s3 + $0x158] sm:$0xf] %v1505
  %1706 = vst [vmem:[%s3 + $0x15c] sm:$0xf] %v1506
  %1707 = vst [vmem:[%s3 + $0x160] sm:$0xf] %v1507
  %1708 = vst [vmem:[%s3 + $0x164] sm:$0xf] %v1508
  %1709 = vst [vmem:[%s3 + $0x168] sm:$0xf] %v1509
  %1710 = vst [vmem:[%s3 + $0x16c] sm:$0xf] %v1510
  %1711 = vst [vmem:[%s3 + $0x170] sm:$0xf] %v1511
  %1712 = vst [vmem:[%s3 + $0x174] sm:$0xf] %v1512
  %1713 = vst [vmem:[%s3 + $0x178] sm:$0xf] %v1513
  %1714 = vst [vmem:[%s3 + $0x17c] sm:$0xf] %v1514
  %1715 = vst [vmem:[%s3 + $0x180] sm:$0xf] %v1515
  %1716 = vst [vmem:[%s3 + $0x184] sm:$0xf] %v1516
  %1717 = vst [vmem:[%s3 + $0x188] sm:$0xf] %v1517
  %1718 = vst [vmem:[%s3 + $0x18c] sm:$0xf] %v1518
  // Predicated region
  $region14: #{vae_forward.6} parent=0 // pred_check
    _
  $region15: #{vae_forward.6} parent=0 // pred_check_branch
    %1720 = sbr.rel (0) target = $region17
  $region16: #{vae_forward.6} parent=0 // pred_region
    _
  $region17: #{vae_forward.6} parent=0 // pred_fallthru
    _
  // Predicated region
  $region18: #{vae_forward.6} parent=0 // pred_check
    _
  $region19: #{vae_forward.6} parent=0 // pred_check_branch
    %1722 = sbr.rel (0) target = $region21
  $region20: #{vae_forward.6} parent=0 // pred_region
    _
  $region21: #{vae_forward.6} parent=0 // pred_fallthru
    _

// kernel: vae_forward.7
$region0: #{vae_forward.7}
  #allocation0 [shape = 'u32[]', space=smem, size = 0x4, offset = 0x4, fixed_abs, tag = 'smem constant byte address 0x4 - core index']
  #allocation1 [shape = 'u32[144,128]{1,0:T(1,128)}', space=vmem, size = 0x12000, scoped, tag = 'internal scratch']
  %s0 = inlined_call_operand.vmem [shape: bf16[162,512], index: 0, kind: input, shape index: {}]
  %s1 = inlined_call_operand.vmem [shape: bf16[512,128], index: 1, kind: input, shape index: {}]
  %s2 = inlined_call_operand.vmem [shape: f32[1,128], index: 2, kind: input, shape index: {}]
  %s3 = inlined_call_operand.vmem [shape: bf16[162,128], index: 3, kind: output, shape index: {}]
  %s4 = sld [smem:[#allocation0]]
  $region22: #{vae_forward.7} parent=0
    _
  %s6 = ssub.s32 1, %s4
  %s7 = scalar_select 0, %s6, %s4
  // Predicated region
  $region2: #{vae_forward.7} parent=0 // pred_check
    _
  $region3: #{vae_forward.7} parent=0 // pred_check_branch
    %9 = sbr.rel (0) target = $region5
  $region4: #{vae_forward.7} parent=0 // pred_region
    _
  $region5: #{vae_forward.7} parent=0 // pred_fallthru
    _
  // Predicated region
  $region6: #{vae_forward.7} parent=0 // pred_check
    _
  $region7: #{vae_forward.7} parent=0 // pred_check_branch
    %11 = sbr.rel (0) target = $region9
  $region8: #{vae_forward.7} parent=0 // pred_region
    _
  $region9: #{vae_forward.7} parent=0 // pred_fallthru
    _
  // Predicated region
  $region10: #{vae_forward.7} parent=0 // pred_check
    _
  $region11: #{vae_forward.7} parent=0 // pred_check_branch
    %13 = sbr.rel (0) target = $region13
  $region12: #{vae_forward.7} parent=0 // pred_region
    _
  $region13: #{vae_forward.7} parent=0 // pred_fallthru
    _
  %v15 = vld [vmem:[%s0] sm:$0xff]
  %v16 = vld [vmem:[%s0 + $0x8] sm:$0xff]
  %v17 = vld [vmem:[%s0 + $0x10] sm:$0xff]
  %v18 = vld [vmem:[%s0 + $0x18] sm:$0xff]
  %v19 = vld [vmem:[%s0 + $0x20] sm:$0xff]
  %v20 = vld [vmem:[%s0 + $0x28] sm:$0xff]
  %v21 = vld [vmem:[%s0 + $0x30] sm:$0xff]
  %v22 = vld [vmem:[%s0 + $0x38] sm:$0xff]
  %v23 = vld [vmem:[%s0 + $0x40] sm:$0xff]
  %v24 = vld [vmem:[%s0 + $0x48] sm:$0xff]
  %v25 = vld [vmem:[%s0 + $0x50] sm:$0xff]
  %v26 = vld [vmem:[%s0 + $0x58] sm:$0xff]
  %v27 = vld [vmem:[%s0 + $0x60] sm:$0xff]
  %v28 = vld [vmem:[%s0 + $0x68] sm:$0xff]
  %v29 = vld [vmem:[%s0 + $0x70] sm:$0xff]
  %v30 = vld [vmem:[%s0 + $0x78] sm:$0xff]
  %v31 = vld [vmem:[%s0 + $0x80] sm:$0xff]
  %v32 = vld [vmem:[%s0 + $0x88] sm:$0xff]
  %v33 = vld [vmem:[%s0 + $0x90] sm:$0xff]
  %v34 = vld [vmem:[%s0 + $0x98] sm:$0xff]
  %v35 = vld [vmem:[%s0 + $0xa0] sm:$0xff]
  %v36 = vld [vmem:[%s0 + $0xa8] sm:$0xff]
  %v37 = vld [vmem:[%s0 + $0xb0] sm:$0xff]
  %v38 = vld [vmem:[%s0 + $0xb8] sm:$0xff]
  %v39 = vld [vmem:[%s0 + $0xc0] sm:$0xff]
  %v40 = vld [vmem:[%s0 + $0xc8] sm:$0xff]
  %v41 = vld [vmem:[%s0 + $0xd0] sm:$0xff]
  %v42 = vld [vmem:[%s0 + $0xd8] sm:$0xff]
  %v43 = vld [vmem:[%s0 + $0xe0] sm:$0xff]
  %v44 = vld [vmem:[%s0 + $0xe8] sm:$0xff]
  %v45 = vld [vmem:[%s0 + $0xf0] sm:$0xff]
  %v46 = vld [vmem:[%s0 + $0xf8] sm:$0xff]
  %v47 = vld [vmem:[%s0 + $0x100] sm:$0xff]
  %v48 = vld [vmem:[%s0 + $0x108] sm:$0xff]
  %v49 = vld [vmem:[%s0 + $0x110] sm:$0xff]
  %v50 = vld [vmem:[%s0 + $0x118] sm:$0xff]
  %v51 = vld [vmem:[%s0 + $0x120] sm:$0xff]
  %v52 = vld [vmem:[%s0 + $0x128] sm:$0xff]
  %v53 = vld [vmem:[%s0 + $0x130] sm:$0xff]
  %v54 = vld [vmem:[%s0 + $0x138] sm:$0xff]
  %v55 = vld [vmem:[%s0 + $0x140] sm:$0x11]
  %v56 = vld [vmem:[%s0 + $0x148] sm:$0x11]
  %v57 = vld [vmem:[%s1] sm:$0xf]
  %v58 = vld [vmem:[%s1 + $0x4] sm:$0xf]
  %v59 = vld [vmem:[%s1 + $0x8] sm:$0xf]
  %v60 = vld [vmem:[%s1 + $0xc] sm:$0xf]
  %v61 = vld [vmem:[%s1 + $0x10] sm:$0xf]
  %v62 = vld [vmem:[%s1 + $0x14] sm:$0xf]
  %v63 = vld [vmem:[%s1 + $0x18] sm:$0xf]
  %v64 = vld [vmem:[%s1 + $0x1c] sm:$0xf]
  %v65 = vld [vmem:[%s1 + $0x20] sm:$0xf]
  %v66 = vld [vmem:[%s1 + $0x24] sm:$0xf]
  %v67 = vld [vmem:[%s1 + $0x28] sm:$0xf]
  %v68 = vld [vmem:[%s1 + $0x2c] sm:$0xf]
  %v69 = vld [vmem:[%s1 + $0x30] sm:$0xf]
  %v70 = vld [vmem:[%s1 + $0x34] sm:$0xf]
  %v71 = vld [vmem:[%s1 + $0x38] sm:$0xf]
  %v72 = vld [vmem:[%s1 + $0x3c] sm:$0xf]
  %v73 = vld [vmem:[%s1 + $0x40] sm:$0xf]
  %v74 = vld [vmem:[%s1 + $0x44] sm:$0xf]
  %v75 = vld [vmem:[%s1 + $0x48] sm:$0xf]
  %v76 = vld [vmem:[%s1 + $0x4c] sm:$0xf]
  %v77 = vld [vmem:[%s1 + $0x50] sm:$0xf]
  %v78 = vld [vmem:[%s1 + $0x54] sm:$0xf]
  %v79 = vld [vmem:[%s1 + $0x58] sm:$0xf]
  %v80 = vld [vmem:[%s1 + $0x5c] sm:$0xf]
  %v81 = vld [vmem:[%s1 + $0x60] sm:$0xf]
  %v82 = vld [vmem:[%s1 + $0x64] sm:$0xf]
  %v83 = vld [vmem:[%s1 + $0x68] sm:$0xf]
  %v84 = vld [vmem:[%s1 + $0x6c] sm:$0xf]
  %v85 = vld [vmem:[%s1 + $0x70] sm:$0xf]
  %v86 = vld [vmem:[%s1 + $0x74] sm:$0xf]
  %v87 = vld [vmem:[%s1 + $0x78] sm:$0xf]
  %v88 = vld [vmem:[%s1 + $0x7c] sm:$0xf]
  %v89 = vld [vmem:[%s1 + $0x80] sm:$0xf]
  %v90 = vld [vmem:[%s1 + $0x84] sm:$0xf]
  %v91 = vld [vmem:[%s1 + $0x88] sm:$0xf]
  %v92 = vld [vmem:[%s1 + $0x8c] sm:$0xf]
  %v93 = vld [vmem:[%s1 + $0x90] sm:$0xf]
  %v94 = vld [vmem:[%s1 + $0x94] sm:$0xf]
  %v95 = vld [vmem:[%s1 + $0x98] sm:$0xf]
  %v96 = vld [vmem:[%s1 + $0x9c] sm:$0xf]
  %v97 = vld [vmem:[%s1 + $0xa0] sm:$0xf]
  %v98 = vld [vmem:[%s1 + $0xa4] sm:$0xf]
  %v99 = vld [vmem:[%s1 + $0xa8] sm:$0xf]
  %v100 = vld [vmem:[%s1 + $0xac] sm:$0xf]
  %v101 = vld [vmem:[%s1 + $0xb0] sm:$0xf]
  %v102 = vld [vmem:[%s1 + $0xb4] sm:$0xf]
  %v103 = vld [vmem:[%s1 + $0xb8] sm:$0xf]
  %v104 = vld [vmem:[%s1 + $0xbc] sm:$0xf]
  %v105 = vld [vmem:[%s1 + $0xc0] sm:$0xf]
  %v106 = vld [vmem:[%s1 + $0xc4] sm:$0xf]
  %v107 = vld [vmem:[%s1 + $0xc8] sm:$0xf]
  %v108 = vld [vmem:[%s1 + $0xcc] sm:$0xf]
  %v109 = vld [vmem:[%s1 + $0xd0] sm:$0xf]
  %v110 = vld [vmem:[%s1 + $0xd4] sm:$0xf]
  %v111 = vld [vmem:[%s1 + $0xd8] sm:$0xf]
  %v112 = vld [vmem:[%s1 + $0xdc] sm:$0xf]
  %v113 = vld [vmem:[%s1 + $0xe0] sm:$0xf]
  %v114 = vld [vmem:[%s1 + $0xe4] sm:$0xf]
  %v115 = vld [vmem:[%s1 + $0xe8] sm:$0xf]
  %v116 = vld [vmem:[%s1 + $0xec] sm:$0xf]
  %v117 = vld [vmem:[%s1 + $0xf0] sm:$0xf]
  %v118 = vld [vmem:[%s1 + $0xf4] sm:$0xf]
  %v119 = vld [vmem:[%s1 + $0xf8] sm:$0xf]
  %v120 = vld [vmem:[%s1 + $0xfc] sm:$0xf]
  %v121 = vld [vmem:[%s2] sm:$0x1]
  %v123 = vlaneseq
  %v124 = vshrl.u32 %v123, 7
  %v125 = vsub.s32 0, %v124
  %v126 = vrot.slane %v121, %v125
  %v170 = vunpack.c.l.b16 %v15
  %v171 = vunpack.c.h.b16 %v15
  %v172 = vunpack.c.l.b16 %v16
  %v173 = vunpack.c.h.b16 %v16
  %v174 = vunpack.c.l.b16 %v17
  %v175 = vunpack.c.h.b16 %v17
  %v176 = vunpack.c.l.b16 %v18
  %v177 = vunpack.c.h.b16 %v18
  %v178 = vunpack.c.l.b16 %v19
  %v179 = vunpack.c.h.b16 %v19
  %v180 = vunpack.c.l.b16 %v20
  %v181 = vunpack.c.h.b16 %v20
  %v182 = vunpack.c.l.b16 %v21
  %v183 = vunpack.c.h.b16 %v21
  %v184 = vunpack.c.l.b16 %v22
  %v185 = vunpack.c.h.b16 %v22
  %v186 = vunpack.c.l.b16 %v23
  %v187 = vunpack.c.h.b16 %v23
  %v188 = vunpack.c.l.b16 %v24
  %v189 = vunpack.c.h.b16 %v24
  %v190 = vunpack.c.l.b16 %v25
  %v191 = vunpack.c.h.b16 %v25
  %v192 = vunpack.c.l.b16 %v26
  %v193 = vunpack.c.h.b16 %v26
  %v194 = vunpack.c.l.b16 %v27
  %v195 = vunpack.c.h.b16 %v27
  %v196 = vunpack.c.l.b16 %v28
  %v197 = vunpack.c.h.b16 %v28
  %v198 = vunpack.c.l.b16 %v29
  %v199 = vunpack.c.h.b16 %v29
  %v200 = vunpack.c.l.b16 %v30
  %v201 = vunpack.c.h.b16 %v30
  %v202 = vunpack.c.l.b16 %v31
  %v203 = vunpack.c.h.b16 %v31
  %v204 = vunpack.c.l.b16 %v32
  %v205 = vunpack.c.h.b16 %v32
  %v206 = vunpack.c.l.b16 %v33
  %v207 = vunpack.c.h.b16 %v33
  %v208 = vunpack.c.l.b16 %v34
  %v209 = vunpack.c.h.b16 %v34
  %v210 = vunpack.c.l.b16 %v35
  %v211 = vunpack.c.h.b16 %v35
  %v212 = vunpack.c.l.b16 %v36
  %v213 = vunpack.c.h.b16 %v36
  %v214 = vunpack.c.l.b16 %v37
  %v215 = vunpack.c.h.b16 %v37
  %v216 = vunpack.c.l.b16 %v38
  %v217 = vunpack.c.h.b16 %v38
  %v218 = vunpack.c.l.b16 %v39
  %v219 = vunpack.c.h.b16 %v39
  %v220 = vunpack.c.l.b16 %v40
  %v221 = vunpack.c.h.b16 %v40
  %v222 = vunpack.c.l.b16 %v41
  %v223 = vunpack.c.h.b16 %v41
  %v224 = vunpack.c.l.b16 %v42
  %v225 = vunpack.c.h.b16 %v42
  %v226 = vunpack.c.l.b16 %v43
  %v227 = vunpack.c.h.b16 %v43
  %v228 = vunpack.c.l.b16 %v44
  %v229 = vunpack.c.h.b16 %v44
  %v230 = vunpack.c.l.b16 %v45
  %v231 = vunpack.c.h.b16 %v45
  %v232 = vunpack.c.l.b16 %v46
  %v233 = vunpack.c.h.b16 %v46
  %v234 = vunpack.c.l.b16 %v47
  %v235 = vunpack.c.h.b16 %v47
  %v236 = vunpack.c.l.b16 %v48
  %v237 = vunpack.c.h.b16 %v48
  %v238 = vunpack.c.l.b16 %v49
  %v239 = vunpack.c.h.b16 %v49
  %v240 = vunpack.c.l.b16 %v50
  %v241 = vunpack.c.h.b16 %v50
  %v242 = vunpack.c.l.b16 %v51
  %v243 = vunpack.c.h.b16 %v51
  %v244 = vunpack.c.l.b16 %v52
  %v245 = vunpack.c.h.b16 %v52
  %v246 = vunpack.c.l.b16 %v53
  %v247 = vunpack.c.h.b16 %v53
  %v248 = vunpack.c.l.b16 %v54
  %v249 = vunpack.c.h.b16 %v54
  %v250 = vunpack.c.l.b16 %v55
  %v251 = vunpack.c.h.b16 %v55
  %v252 = vunpack.c.l.b16 %v56
  %v253 = vunpack.c.h.b16 %v56
  %v254 = vpack.c.b16 %v174, %v170
  %v255 = vpack.c.b16 %v175, %v171
  %v256 = vpack.c.b16 %v176, %v172
  %v257 = vpack.c.b16 %v177, %v173
  %v258 = vpack.c.b16 %v182, %v178
  %v259 = vpack.c.b16 %v183, %v179
  %v260 = vpack.c.b16 %v184, %v180
  %v261 = vpack.c.b16 %v185, %v181
  %v262 = vpack.c.b16 %v190, %v186
  %v263 = vpack.c.b16 %v191, %v187
  %v264 = vpack.c.b16 %v192, %v188
  %v265 = vpack.c.b16 %v193, %v189
  %v266 = vpack.c.b16 %v198, %v194
  %v267 = vpack.c.b16 %v199, %v195
  %v268 = vpack.c.b16 %v200, %v196
  %v269 = vpack.c.b16 %v201, %v197
  %v270 = vpack.c.b16 %v206, %v202
  %v271 = vpack.c.b16 %v207, %v203
  %v272 = vpack.c.b16 %v208, %v204
  %v273 = vpack.c.b16 %v209, %v205
  %v274 = vpack.c.b16 %v214, %v210
  %v275 = vpack.c.b16 %v215, %v211
  %v276 = vpack.c.b16 %v216, %v212
  %v277 = vpack.c.b16 %v217, %v213
  %v278 = vpack.c.b16 %v222, %v218
  %v279 = vpack.c.b16 %v223, %v219
  %v280 = vpack.c.b16 %v224, %v220
  %v281 = vpack.c.b16 %v225, %v221
  %v282 = vpack.c.b16 %v230, %v226
  %v283 = vpack.c.b16 %v231, %v227
  %v284 = vpack.c.b16 %v232, %v228
  %v285 = vpack.c.b16 %v233, %v229
  %v286 = vpack.c.b16 %v238, %v234
  %v287 = vpack.c.b16 %v239, %v235
  %v288 = vpack.c.b16 %v240, %v236
  %v289 = vpack.c.b16 %v241, %v237
  %v290 = vpack.c.b16 %v246, %v242
  %v291 = vpack.c.b16 %v247, %v243
  %v292 = vpack.c.b16 %v248, %v244
  %v293 = vpack.c.b16 %v249, %v245
  %v294 = vpack.c.b16 %v250, %v250
  %v295 = vpack.c.b16 %v251, %v251
  %v296 = vpack.c.b16 %v252, %v252
  %v297 = vpack.c.b16 %v253, %v253
  %v406 = vunpack.c.l.b16 %v57
  %v407 = vunpack.c.l.b16 %v58
  %v408 = vunpack.c.l.b16 %v59
  %v409 = vunpack.c.l.b16 %v60
  %v410 = vunpack.c.l.b16 %v61
  %v411 = vunpack.c.l.b16 %v62
  %v412 = vunpack.c.l.b16 %v63
  %v413 = vunpack.c.l.b16 %v64
  %v414 = vunpack.c.l.b16 %v65
  %v415 = vunpack.c.l.b16 %v66
  %v416 = vunpack.c.l.b16 %v67
  %v417 = vunpack.c.l.b16 %v68
  %v418 = vunpack.c.l.b16 %v69
  %v419 = vunpack.c.l.b16 %v70
  %v420 = vunpack.c.l.b16 %v71
  %v421 = vunpack.c.l.b16 %v72
  %v422 = vunpack.c.l.b16 %v73
  %v423 = vunpack.c.l.b16 %v74
  %v424 = vunpack.c.l.b16 %v75
  %v425 = vunpack.c.l.b16 %v76
  %v426 = vunpack.c.l.b16 %v77
  %v427 = vunpack.c.l.b16 %v78
  %v428 = vunpack.c.l.b16 %v79
  %v429 = vunpack.c.l.b16 %v80
  %v430 = vunpack.c.l.b16 %v81
  %v431 = vunpack.c.l.b16 %v82
  %v432 = vunpack.c.l.b16 %v83
  %v433 = vunpack.c.l.b16 %v84
  %v434 = vunpack.c.l.b16 %v85
  %v435 = vunpack.c.l.b16 %v86
  %v436 = vunpack.c.l.b16 %v87
  %v437 = vunpack.c.l.b16 %v88
  %v438 = vunpack.c.l.b16 %v89
  %v439 = vunpack.c.l.b16 %v90
  %v440 = vunpack.c.l.b16 %v91
  %v441 = vunpack.c.l.b16 %v92
  %v442 = vunpack.c.l.b16 %v93
  %v443 = vunpack.c.l.b16 %v94
  %v444 = vunpack.c.l.b16 %v95
  %v445 = vunpack.c.l.b16 %v96
  %v446 = vunpack.c.l.b16 %v97
  %v447 = vunpack.c.l.b16 %v98
  %v448 = vunpack.c.l.b16 %v99
  %v449 = vunpack.c.l.b16 %v100
  %v450 = vunpack.c.l.b16 %v101
  %v451 = vunpack.c.l.b16 %v102
  %v452 = vunpack.c.l.b16 %v103
  %v453 = vunpack.c.l.b16 %v104
  %v454 = vunpack.c.l.b16 %v105
  %v455 = vunpack.c.l.b16 %v106
  %v456 = vunpack.c.l.b16 %v107
  %v457 = vunpack.c.l.b16 %v108
  %v458 = vunpack.c.l.b16 %v109
  %v459 = vunpack.c.l.b16 %v110
  %v460 = vunpack.c.l.b16 %v111
  %v461 = vunpack.c.l.b16 %v112
  %v462 = vunpack.c.l.b16 %v113
  %v463 = vunpack.c.l.b16 %v114
  %v464 = vunpack.c.l.b16 %v115
  %v465 = vunpack.c.l.b16 %v116
  %v466 = vunpack.c.l.b16 %v117
  %v467 = vunpack.c.l.b16 %v118
  %v468 = vunpack.c.l.b16 %v119
  %v469 = vunpack.c.l.b16 %v120
  %v470 = vpack.c.b16 %v407, %v406
  %v471 = vpack.c.b16 %v409, %v408
  %v472 = vpack.c.b16 %v411, %v410
  %v473 = vpack.c.b16 %v413, %v412
  %v474 = vpack.c.b16 %v415, %v414
  %v475 = vpack.c.b16 %v417, %v416
  %v476 = vpack.c.b16 %v419, %v418
  %v477 = vpack.c.b16 %v421, %v420
  %v478 = vpack.c.b16 %v423, %v422
  %v479 = vpack.c.b16 %v425, %v424
  %v480 = vpack.c.b16 %v427, %v426
  %v481 = vpack.c.b16 %v429, %v428
  %v482 = vpack.c.b16 %v431, %v430
  %v483 = vpack.c.b16 %v433, %v432
  %v484 = vpack.c.b16 %v435, %v434
  %v485 = vpack.c.b16 %v437, %v436
  %v486 = vpack.c.b16 %v439, %v438
  %v487 = vpack.c.b16 %v441, %v440
  %v488 = vpack.c.b16 %v443, %v442
  %v489 = vpack.c.b16 %v445, %v444
  %v490 = vpack.c.b16 %v447, %v446
  %v491 = vpack.c.b16 %v449, %v448
  %v492 = vpack.c.b16 %v451, %v450
  %v493 = vpack.c.b16 %v453, %v452
  %v494 = vpack.c.b16 %v455, %v454
  %v495 = vpack.c.b16 %v457, %v456
  %v496 = vpack.c.b16 %v459, %v458
  %v497 = vpack.c.b16 %v461, %v460
  %v498 = vpack.c.b16 %v463, %v462
  %v499 = vpack.c.b16 %v465, %v464
  %v500 = vpack.c.b16 %v467, %v466
  %v501 = vpack.c.b16 %v469, %v468
  %534 = vmatprep.subr.bf16.mxu0 0
  %535 = vmatpush1.bf16.msra.mxu0 %v477
  %536 = vmatprep.subr.bf16.mxu0 0
  %537 = vmatpush1.bf16.msra.mxu0 %v476
  %538 = vmatprep.subr.bf16.mxu0 0
  %539 = vmatpush1.bf16.msra.mxu0 %v475
  %540 = vmatprep.subr.bf16.mxu0 0
  %541 = vmatpush1.bf16.msra.mxu0 %v474
  %542 = vmatprep.subr.bf16.mxu0 0
  %543 = vmatpush1.bf16.msra.mxu0 %v473
  %544 = vmatprep.subr.bf16.mxu0 0
  %545 = vmatpush1.bf16.msra.mxu0 %v472
  %546 = vmatprep.subr.bf16.mxu0 0
  %547 = vmatpush1.bf16.msra.mxu0 %v471
  %548 = vmatprep.subr.bf16.mxu0 0
  %549 = vmatpush1.bf16.msra.mxu0 %v470
  %550 = vmatprep.subr.bf16.mxu0 0
  %551 = vmatpush2.bf16.msra.mxu0 %v485
  %552 = vmatprep.subr.bf16.mxu0 0
  %553 = vmatpush2.bf16.msra.mxu0 %v484
  %554 = vmatprep.subr.bf16.mxu0 0
  %555 = vmatpush2.bf16.msra.mxu0 %v483
  %556 = vmatprep.subr.bf16.mxu0 0
  %557 = vmatpush2.bf16.msra.mxu0 %v482
  %558 = vmatprep.subr.bf16.mxu0 0
  %559 = vmatpush2.bf16.msra.mxu0 %v481
  %560 = vmatprep.subr.bf16.mxu0 0
  %561 = vmatpush2.bf16.msra.mxu0 %v480
  %562 = vmatprep.subr.bf16.mxu0 0
  %563 = vmatpush2.bf16.msra.mxu0 %v479
  %564 = vmatprep.subr.bf16.mxu0 0
  %565 = vmatpush2.bf16.msra.mxu0 %v478
  %566 = vmatprep.mubr.bf16.mxu0 %v255
  %567 = vmatmul.mubr.bf16.gmra.mxu0 %v254
  %v568 = vpop.f32.mrf.mxu0
  %v569 = vadd.f32 %v126, %v568
  %v570 = vpop.f32.mrf.mxu0
  %v571 = vpop.f32.mrf.mxu0
  %v572 = vadd.f32 %v126, %v571
  %v573 = vpop.f32.mrf.mxu0
  %574 = vmatprep.mubr.bf16.mxu0 %v259
  %575 = vmatmul.mubr.bf16.gmra.mxu0 %v258
  %v576 = vpop.f32.mrf.mxu0
  %v577 = vadd.f32 %v126, %v576
  %v578 = vpop.f32.mrf.mxu0
  %v579 = vpop.f32.mrf.mxu0
  %v580 = vadd.f32 %v126, %v579
  %v581 = vpop.f32.mrf.mxu0
  %582 = vmatprep.mubr.bf16.mxu0 %v263
  %583 = vmatmul.mubr.bf16.gmra.mxu0 %v262
  %v584 = vpop.f32.mrf.mxu0
  %v585 = vadd.f32 %v126, %v584
  %v586 = vpop.f32.mrf.mxu0
  %v587 = vpop.f32.mrf.mxu0
  %v588 = vadd.f32 %v126, %v587
  %v589 = vpop.f32.mrf.mxu0
  %590 = vmatprep.mubr.bf16.mxu0 %v267
  %591 = vmatmul.mubr.bf16.gmra.mxu0 %v266
  %v592 = vpop.f32.mrf.mxu0
  %v593 = vadd.f32 %v126, %v592
  %v594 = vpop.f32.mrf.mxu0
  %v595 = vpop.f32.mrf.mxu0
  %v596 = vadd.f32 %v126, %v595
  %v597 = vpop.f32.mrf.mxu0
  %598 = vmatprep.mubr.bf16.mxu0 %v271
  %599 = vmatmul.mubr.bf16.gmra.mxu0 %v270
  %v600 = vpop.f32.mrf.mxu0
  %v601 = vadd.f32 %v126, %v600
  %v602 = vpop.f32.mrf.mxu0
  %v603 = vpop.f32.mrf.mxu0
  %v604 = vadd.f32 %v126, %v603
  %v605 = vpop.f32.mrf.mxu0
  %606 = vmatprep.mubr.bf16.mxu0 %v275
  %607 = vmatmul.mubr.bf16.gmra.mxu0 %v274
  %v608 = vpop.f32.mrf.mxu0
  %v609 = vadd.f32 %v126, %v608
  %v610 = vpop.f32.mrf.mxu0
  %v611 = vpop.f32.mrf.mxu0
  %v612 = vadd.f32 %v126, %v611
  %v613 = vpop.f32.mrf.mxu0
  %614 = vmatprep.mubr.bf16.mxu0 %v279
  %615 = vmatmul.mubr.bf16.gmra.mxu0 %v278
  %v616 = vpop.f32.mrf.mxu0
  %v617 = vadd.f32 %v126, %v616
  %v618 = vpop.f32.mrf.mxu0
  %v619 = vpop.f32.mrf.mxu0
  %v620 = vadd.f32 %v126, %v619
  %v621 = vpop.f32.mrf.mxu0
  %622 = vmatprep.mubr.bf16.mxu0 %v283
  %623 = vmatmul.mubr.bf16.gmra.mxu0 %v282
  %v624 = vpop.f32.mrf.mxu0
  %v625 = vadd.f32 %v126, %v624
  %v626 = vpop.f32.mrf.mxu0
  %v627 = vpop.f32.mrf.mxu0
  %v628 = vadd.f32 %v126, %v627
  %v629 = vpop.f32.mrf.mxu0
  %630 = vmatprep.mubr.bf16.mxu0 %v287
  %631 = vmatmul.mubr.bf16.gmra.mxu0 %v286
  %v632 = vpop.f32.mrf.mxu0
  %v633 = vadd.f32 %v126, %v632
  %v634 = vpop.f32.mrf.mxu0
  %v635 = vpop.f32.mrf.mxu0
  %v636 = vadd.f32 %v126, %v635
  %v637 = vpop.f32.mrf.mxu0
  %638 = vmatprep.mubr.bf16.mxu0 %v291
  %639 = vmatmul.mubr.bf16.gmra.mxu0 %v290
  %v640 = vpop.f32.mrf.mxu0
  %v641 = vadd.f32 %v126, %v640
  %v642 = vpop.f32.mrf.mxu0
  %v643 = vpop.f32.mrf.mxu0
  %v644 = vadd.f32 %v126, %v643
  %v645 = vpop.f32.mrf.mxu0
  %646 = vmatprep.mubr.bf16.mxu0 %v295
  %647 = vmatmul.mubr.bf16.gmra.mxu0 %v294
  %v648 = vpop.f32.mrf.mxu0
  %v649 = vadd.f32 %v126, %v648
  %v650 = vpop.f32.mrf.mxu0
  %v651 = vpop.f32.mrf.mxu0
  %v652 = vpop.f32.mrf.mxu0
  %653 = vdwg.mxu0
  %654 = vmatprep.subr.bf16.mxu0 0
  %655 = vmatpush1.bf16.msra.mxu0 %v493
  %656 = vmatprep.subr.bf16.mxu0 0
  %657 = vmatpush1.bf16.msra.mxu0 %v492
  %658 = vmatprep.subr.bf16.mxu0 0
  %659 = vmatpush1.bf16.msra.mxu0 %v491
  %660 = vmatprep.subr.bf16.mxu0 0
  %661 = vmatpush1.bf16.msra.mxu0 %v490
  %662 = vmatprep.subr.bf16.mxu0 0
  %663 = vmatpush1.bf16.msra.mxu0 %v489
  %664 = vmatprep.subr.bf16.mxu0 0
  %665 = vmatpush1.bf16.msra.mxu0 %v488
  %666 = vmatprep.subr.bf16.mxu0 0
  %667 = vmatpush1.bf16.msra.mxu0 %v487
  %668 = vmatprep.subr.bf16.mxu0 0
  %669 = vmatpush1.bf16.msra.mxu0 %v486
  %670 = vmatprep.subr.bf16.mxu0 0
  %671 = vmatpush2.bf16.msra.mxu0 %v501
  %672 = vmatprep.subr.bf16.mxu0 0
  %673 = vmatpush2.bf16.msra.mxu0 %v500
  %674 = vmatprep.subr.bf16.mxu0 0
  %675 = vmatpush2.bf16.msra.mxu0 %v499
  %676 = vmatprep.subr.bf16.mxu0 0
  %677 = vmatpush2.bf16.msra.mxu0 %v498
  %678 = vmatprep.subr.bf16.mxu0 0
  %679 = vmatpush2.bf16.msra.mxu0 %v497
  %680 = vmatprep.subr.bf16.mxu0 0
  %681 = vmatpush2.bf16.msra.mxu0 %v496
  %682 = vmatprep.subr.bf16.mxu0 0
  %683 = vmatpush2.bf16.msra.mxu0 %v495
  %684 = vmatprep.subr.bf16.mxu0 0
  %685 = vmatpush2.bf16.msra.mxu0 %v494
  %686 = vmatprep.mubr.bf16.mxu0 %v257
  %687 = vmatmul.mubr.bf16.gmra.mxu0 %v256
  %v688 = vpop.f32.mrf.mxu0
  %v689 = vadd.f32 %v569, %v688
  %v690 = vpop.f32.mrf.mxu0
  %v691 = vpop.f32.mrf.mxu0
  %v692 = vadd.f32 %v572, %v691
  %v693 = vpop.f32.mrf.mxu0
  %694 = vmatprep.mubr.bf16.mxu0 %v261
  %695 = vmatmul.mubr.bf16.gmra.mxu0 %v260
  %v696 = vpop.f32.mrf.mxu0
  %v697 = vadd.f32 %v577, %v696
  %v698 = vpop.f32.mrf.mxu0
  %v699 = vpop.f32.mrf.mxu0
  %v700 = vadd.f32 %v580, %v699
  %v701 = vpop.f32.mrf.mxu0
  %702 = vmatprep.mubr.bf16.mxu0 %v265
  %703 = vmatmul.mubr.bf16.gmra.mxu0 %v264
  %v704 = vpop.f32.mrf.mxu0
  %v705 = vadd.f32 %v585, %v704
  %v706 = vpop.f32.mrf.mxu0
  %v707 = vpop.f32.mrf.mxu0
  %v708 = vadd.f32 %v588, %v707
  %v709 = vpop.f32.mrf.mxu0
  %710 = vmatprep.mubr.bf16.mxu0 %v269
  %711 = vmatmul.mubr.bf16.gmra.mxu0 %v268
  %v712 = vpop.f32.mrf.mxu0
  %v713 = vadd.f32 %v593, %v712
  %v714 = vpop.f32.mrf.mxu0
  %v715 = vpop.f32.mrf.mxu0
  %v716 = vadd.f32 %v596, %v715
  %v717 = vpop.f32.mrf.mxu0
  %718 = vmatprep.mubr.bf16.mxu0 %v273
  %719 = vmatmul.mubr.bf16.gmra.mxu0 %v272
  %v720 = vpop.f32.mrf.mxu0
  %v721 = vadd.f32 %v601, %v720
  %v722 = vpop.f32.mrf.mxu0
  %v723 = vpop.f32.mrf.mxu0
  %v724 = vadd.f32 %v604, %v723
  %v725 = vpop.f32.mrf.mxu0
  %726 = vmatprep.mubr.bf16.mxu0 %v277
  %727 = vmatmul.mubr.bf16.gmra.mxu0 %v276
  %v728 = vpop.f32.mrf.mxu0
  %v729 = vadd.f32 %v609, %v728
  %v730 = vpop.f32.mrf.mxu0
  %v731 = vpop.f32.mrf.mxu0
  %v732 = vadd.f32 %v612, %v731
  %v733 = vpop.f32.mrf.mxu0
  %734 = vmatprep.mubr.bf16.mxu0 %v281
  %735 = vmatmul.mubr.bf16.gmra.mxu0 %v280
  %v736 = vpop.f32.mrf.mxu0
  %v737 = vadd.f32 %v617, %v736
  %v738 = vpop.f32.mrf.mxu0
  %v739 = vpop.f32.mrf.mxu0
  %v740 = vadd.f32 %v620, %v739
  %v741 = vpop.f32.mrf.mxu0
  %742 = vmatprep.mubr.bf16.mxu0 %v285
  %743 = vmatmul.mubr.bf16.gmra.mxu0 %v284
  %v744 = vpop.f32.mrf.mxu0
  %v745 = vadd.f32 %v625, %v744
  %v746 = vpop.f32.mrf.mxu0
  %v747 = vpop.f32.mrf.mxu0
  %v748 = vadd.f32 %v628, %v747
  %v749 = vpop.f32.mrf.mxu0
  %750 = vmatprep.mubr.bf16.mxu0 %v289
  %751 = vmatmul.mubr.bf16.gmra.mxu0 %v288
  %v752 = vpop.f32.mrf.mxu0
  %v753 = vadd.f32 %v633, %v752
  %v754 = vpop.f32.mrf.mxu0
  %v755 = vpop.f32.mrf.mxu0
  %v756 = vadd.f32 %v636, %v755
  %v757 = vpop.f32.mrf.mxu0
  %758 = vmatprep.mubr.bf16.mxu0 %v293
  %759 = vmatmul.mubr.bf16.gmra.mxu0 %v292
  %v760 = vpop.f32.mrf.mxu0
  %v761 = vadd.f32 %v641, %v760
  %v762 = vpop.f32.mrf.mxu0
  %v763 = vpop.f32.mrf.mxu0
  %v764 = vadd.f32 %v644, %v763
  %v765 = vpop.f32.mrf.mxu0
  %766 = vmatprep.mubr.bf16.mxu0 %v297
  %767 = vmatmul.mubr.bf16.gmra.mxu0 %v296
  %v768 = vpop.f32.mrf.mxu0
  %v769 = vadd.f32 %v649, %v768
  %v770 = vpop.f32.mrf.mxu0
  %v771 = vpop.f32.mrf.mxu0
  %v772 = vpop.f32.mrf.mxu0
  %773 = vdwg.mxu0
  %vm774 = vcmp.ge.f32.partialorder %v689, 0.0
  %vm775 = vcmp.ge.f32.partialorder %v692, 0.0
  %vm776 = vcmp.ge.f32.partialorder %v697, 0.0
  %vm777 = vcmp.ge.f32.partialorder %v700, 0.0
  %vm778 = vcmp.ge.f32.partialorder %v705, 0.0
  %vm779 = vcmp.ge.f32.partialorder %v708, 0.0
  %vm780 = vcmp.ge.f32.partialorder %v713, 0.0
  %vm781 = vcmp.ge.f32.partialorder %v716, 0.0
  %vm782 = vcmp.ge.f32.partialorder %v721, 0.0
  %vm783 = vcmp.ge.f32.partialorder %v724, 0.0
  %vm784 = vcmp.ge.f32.partialorder %v729, 0.0
  %vm785 = vcmp.ge.f32.partialorder %v732, 0.0
  %vm786 = vcmp.ge.f32.partialorder %v737, 0.0
  %vm787 = vcmp.ge.f32.partialorder %v740, 0.0
  %vm788 = vcmp.ge.f32.partialorder %v745, 0.0
  %vm789 = vcmp.ge.f32.partialorder %v748, 0.0
  %vm790 = vcmp.ge.f32.partialorder %v753, 0.0
  %vm791 = vcmp.ge.f32.partialorder %v756, 0.0
  %vm792 = vcmp.ge.f32.partialorder %v761, 0.0
  %vm793 = vcmp.ge.f32.partialorder %v764, 0.0
  %vm794 = vcmp.ge.f32.partialorder %v769, 0.0
  %v795 = vmul.f32 %v689, 0.01
  %v796 = vmul.f32 %v692, 0.01
  %v797 = vmul.f32 %v697, 0.01
  %v798 = vmul.f32 %v700, 0.01
  %v799 = vmul.f32 %v705, 0.01
  %v800 = vmul.f32 %v708, 0.01
  %v801 = vmul.f32 %v713, 0.01
  %v802 = vmul.f32 %v716, 0.01
  %v803 = vmul.f32 %v721, 0.01
  %v804 = vmul.f32 %v724, 0.01
  %v805 = vmul.f32 %v729, 0.01
  %v806 = vmul.f32 %v732, 0.01
  %v807 = vmul.f32 %v737, 0.01
  %v808 = vmul.f32 %v740, 0.01
  %v809 = vmul.f32 %v745, 0.01
  %v810 = vmul.f32 %v748, 0.01
  %v811 = vmul.f32 %v753, 0.01
  %v812 = vmul.f32 %v756, 0.01
  %v813 = vmul.f32 %v761, 0.01
  %v814 = vmul.f32 %v764, 0.01
  %v815 = vmul.f32 %v769, 0.01
  %v816 = vsel %vm774, %v689, %v795
  %v817 = vsel %vm775, %v692, %v796
  %v818 = vsel %vm776, %v697, %v797
  %v819 = vsel %vm777, %v700, %v798
  %v820 = vsel %vm778, %v705, %v799
  %v821 = vsel %vm779, %v708, %v800
  %v822 = vsel %vm780, %v713, %v801
  %v823 = vsel %vm781, %v716, %v802
  %v824 = vsel %vm782, %v721, %v803
  %v825 = vsel %vm783, %v724, %v804
  %v826 = vsel %vm784, %v729, %v805
  %v827 = vsel %vm785, %v732, %v806
  %v828 = vsel %vm786, %v737, %v807
  %v829 = vsel %vm787, %v740, %v808
  %v830 = vsel %vm788, %v745, %v809
  %v831 = vsel %vm789, %v748, %v810
  %v832 = vsel %vm790, %v753, %v811
  %v833 = vsel %vm791, %v756, %v812
  %v834 = vsel %vm792, %v761, %v813
  %v835 = vsel %vm793, %v764, %v814
  %v836 = vsel %vm794, %v769, %v815
  %v837 = vpack.c.bf16 %v817, %v816
  %v838 = vpack.c.bf16 %v819, %v818
  %v839 = vpack.c.bf16 %v821, %v820
  %v840 = vpack.c.bf16 %v823, %v822
  %v841 = vpack.c.bf16 %v825, %v824
  %v842 = vpack.c.bf16 %v827, %v826
  %v843 = vpack.c.bf16 %v829, %v828
  %v844 = vpack.c.bf16 %v831, %v830
  %v845 = vpack.c.bf16 %v833, %v832
  %v846 = vpack.c.bf16 %v835, %v834
  %v847 = vpack.c.bf16 %v836, %v836
  %v859 = vunpack.c.l.b16 %v837
  %v860 = vunpack.c.h.b16 %v837
  %v861 = vunpack.c.l.b16 %v838
  %v862 = vunpack.c.h.b16 %v838
  %v863 = vunpack.c.l.b16 %v839
  %v864 = vunpack.c.h.b16 %v839
  %v865 = vunpack.c.l.b16 %v840
  %v866 = vunpack.c.h.b16 %v840
  %v867 = vunpack.c.l.b16 %v841
  %v868 = vunpack.c.h.b16 %v841
  %v869 = vunpack.c.l.b16 %v842
  %v870 = vunpack.c.h.b16 %v842
  %v871 = vunpack.c.l.b16 %v843
  %v872 = vunpack.c.h.b16 %v843
  %v873 = vunpack.c.l.b16 %v844
  %v874 = vunpack.c.h.b16 %v844
  %v875 = vunpack.c.l.b16 %v845
  %v876 = vunpack.c.h.b16 %v845
  %v877 = vunpack.c.l.b16 %v846
  %v878 = vunpack.c.h.b16 %v846
  %v879 = vunpack.c.l.b16 %v847
  %v880 = vpack.c.b16 %v859, %v859
  %v881 = vpack.c.b16 %v860, %v860
  %v882 = vpack.c.b16 %v861, %v861
  %v883 = vpack.c.b16 %v862, %v862
  %v884 = vpack.c.b16 %v863, %v863
  %v885 = vpack.c.b16 %v864, %v864
  %v886 = vpack.c.b16 %v865, %v865
  %v887 = vpack.c.b16 %v866, %v866
  %v888 = vpack.c.b16 %v867, %v867
  %v889 = vpack.c.b16 %v868, %v868
  %v890 = vpack.c.b16 %v869, %v869
  %v891 = vpack.c.b16 %v870, %v870
  %v892 = vpack.c.b16 %v871, %v871
  %v893 = vpack.c.b16 %v872, %v872
  %v894 = vpack.c.b16 %v873, %v873
  %v895 = vpack.c.b16 %v874, %v874
  %v896 = vpack.c.b16 %v875, %v875
  %v897 = vpack.c.b16 %v876, %v876
  %v898 = vpack.c.b16 %v877, %v877
  %v899 = vpack.c.b16 %v878, %v878
  %v900 = vpack.c.b16 %v879, %v879
  %922 = vst [vmem:[%s3] sm:$0xf] %v880
  %923 = vst [vmem:[%s3 + $0x4] sm:$0xf] %v881
  %924 = vst [vmem:[%s3 + $0x8] sm:$0xf] %v882
  %925 = vst [vmem:[%s3 + $0xc] sm:$0xf] %v883
  %926 = vst [vmem:[%s3 + $0x10] sm:$0xf] %v884
  %927 = vst [vmem:[%s3 + $0x14] sm:$0xf] %v885
  %928 = vst [vmem:[%s3 + $0x18] sm:$0xf] %v886
  %929 = vst [vmem:[%s3 + $0x1c] sm:$0xf] %v887
  %930 = vst [vmem:[%s3 + $0x20] sm:$0xf] %v888
  %931 = vst [vmem:[%s3 + $0x24] sm:$0xf] %v889
  %932 = vst [vmem:[%s3 + $0x28] sm:$0xf] %v890
  %933 = vst [vmem:[%s3 + $0x2c] sm:$0xf] %v891
  %934 = vst [vmem:[%s3 + $0x30] sm:$0xf] %v892
  %935 = vst [vmem:[%s3 + $0x34] sm:$0xf] %v893
  %936 = vst [vmem:[%s3 + $0x38] sm:$0xf] %v894
  %937 = vst [vmem:[%s3 + $0x3c] sm:$0xf] %v895
  %938 = vst [vmem:[%s3 + $0x40] sm:$0xf] %v896
  %939 = vst [vmem:[%s3 + $0x44] sm:$0xf] %v897
  %940 = vst [vmem:[%s3 + $0x48] sm:$0xf] %v898
  %941 = vst [vmem:[%s3 + $0x4c] sm:$0xf] %v899
  %942 = vst [vmem:[%s3 + $0x50] sm:$0x1] %v900
  // Predicated region
  $region14: #{vae_forward.7} parent=0 // pred_check
    _
  $region15: #{vae_forward.7} parent=0 // pred_check_branch
    %944 = sbr.rel (0) target = $region17
  $region16: #{vae_forward.7} parent=0 // pred_region
    _
  $region17: #{vae_forward.7} parent=0 // pred_fallthru
    _
  // Predicated region
  $region18: #{vae_forward.7} parent=0 // pred_check
    _
  $region19: #{vae_forward.7} parent=0 // pred_check_branch
    %946 = sbr.rel (0) target = $region21
  $region20: #{vae_forward.7} parent=0 // pred_region
    _
  $region21: #{vae_forward.7} parent=0 // pred_fallthru
    _

// kernel: vae_forward.8
$region0: #{vae_forward.8}
  #allocation0 [shape = 'u32[]', space=smem, size = 0x4, offset = 0x4, fixed_abs, tag = 'smem constant byte address 0x4 - core index']
  #allocation1 [shape = 'u32[144,128]{1,0:T(1,128)}', space=vmem, size = 0x12000, scoped, tag = 'internal scratch']
  %s0 = inlined_call_operand.vmem [shape: bf16[98,576], index: 0, kind: input, shape index: {}]
  %s1 = inlined_call_operand.vmem [shape: bf16[576,128], index: 1, kind: input, shape index: {}]
  %s2 = inlined_call_operand.vmem [shape: f32[1,128], index: 2, kind: input, shape index: {}]
  %s3 = inlined_call_operand.vmem [shape: bf16[98,128], index: 3, kind: output, shape index: {}]
  %s4 = sld [smem:[#allocation0]]
  $region22: #{vae_forward.8} parent=0
    _
  %s6 = ssub.s32 1, %s4
  %s7 = scalar_select 0, %s6, %s4
  // Predicated region
  $region2: #{vae_forward.8} parent=0 // pred_check
    _
  $region3: #{vae_forward.8} parent=0 // pred_check_branch
    %9 = sbr.rel (0) target = $region5
  $region4: #{vae_forward.8} parent=0 // pred_region
    _
  $region5: #{vae_forward.8} parent=0 // pred_fallthru
    _
  // Predicated region
  $region6: #{vae_forward.8} parent=0 // pred_check
    _
  $region7: #{vae_forward.8} parent=0 // pred_check_branch
    %11 = sbr.rel (0) target = $region9
  $region8: #{vae_forward.8} parent=0 // pred_region
    _
  $region9: #{vae_forward.8} parent=0 // pred_fallthru
    _
  // Predicated region
  $region10: #{vae_forward.8} parent=0 // pred_check
    _
  $region11: #{vae_forward.8} parent=0 // pred_check_branch
    %13 = sbr.rel (0) target = $region13
  $region12: #{vae_forward.8} parent=0 // pred_region
    _
  $region13: #{vae_forward.8} parent=0 // pred_fallthru
    _
  %v15 = vld [vmem:[%s0] sm:$0xff]
  %v16 = vld [vmem:[%s0 + $0x8] sm:$0xff]
  %v17 = vld [vmem:[%s0 + $0x10] sm:$0xf]
  %v18 = vld [vmem:[%s0 + $0x14] sm:$0xff]
  %v19 = vld [vmem:[%s0 + $0x1c] sm:$0xff]
  %v20 = vld [vmem:[%s0 + $0x24] sm:$0xf]
  %v21 = vld [vmem:[%s0 + $0x28] sm:$0xff]
  %v22 = vld [vmem:[%s0 + $0x30] sm:$0xff]
  %v23 = vld [vmem:[%s0 + $0x38] sm:$0xf]
  %v24 = vld [vmem:[%s0 + $0x3c] sm:$0xff]
  %v25 = vld [vmem:[%s0 + $0x44] sm:$0xff]
  %v26 = vld [vmem:[%s0 + $0x4c] sm:$0xf]
  %v27 = vld [vmem:[%s0 + $0x50] sm:$0xff]
  %v28 = vld [vmem:[%s0 + $0x58] sm:$0xff]
  %v29 = vld [vmem:[%s0 + $0x60] sm:$0xf]
  %v30 = vld [vmem:[%s0 + $0x64] sm:$0xff]
  %v31 = vld [vmem:[%s0 + $0x6c] sm:$0xff]
  %v32 = vld [vmem:[%s0 + $0x74] sm:$0xf]
  %v33 = vld [vmem:[%s0 + $0x78] sm:$0xff]
  %v34 = vld [vmem:[%s0 + $0x80] sm:$0xff]
  %v35 = vld [vmem:[%s0 + $0x88] sm:$0xf]
  %v36 = vld [vmem:[%s0 + $0x8c] sm:$0xff]
  %v37 = vld [vmem:[%s0 + $0x94] sm:$0xff]
  %v38 = vld [vmem:[%s0 + $0x9c] sm:$0xf]
  %v39 = vld [vmem:[%s0 + $0xa0] sm:$0xff]
  %v40 = vld [vmem:[%s0 + $0xa8] sm:$0xff]
  %v41 = vld [vmem:[%s0 + $0xb0] sm:$0xf]
  %v42 = vld [vmem:[%s0 + $0xb4] sm:$0xff]
  %v43 = vld [vmem:[%s0 + $0xbc] sm:$0xff]
  %v44 = vld [vmem:[%s0 + $0xc4] sm:$0xf]
  %v45 = vld [vmem:[%s0 + $0xc8] sm:$0xff]
  %v46 = vld [vmem:[%s0 + $0xd0] sm:$0xff]
  %v47 = vld [vmem:[%s0 + $0xd8] sm:$0xf]
  %v48 = vld [vmem:[%s0 + $0xdc] sm:$0xff]
  %v49 = vld [vmem:[%s0 + $0xe4] sm:$0xff]
  %v50 = vld [vmem:[%s0 + $0xec] sm:$0xf]
  %v51 = vld [vmem:[%s0 + $0xf0] sm:$0x11]
  %v52 = vld [vmem:[%s0 + $0xf8] sm:$0x11]
  %v53 = vld [vmem:[%s0 + $0x100] sm:$0x1]
  %v54 = vld [vmem:[%s1] sm:$0xf]
  %v55 = vld [vmem:[%s1 + $0x4] sm:$0xf]
  %v56 = vld [vmem:[%s1 + $0x8] sm:$0xf]
  %v57 = vld [vmem:[%s1 + $0xc] sm:$0xf]
  %v58 = vld [vmem:[%s1 + $0x10] sm:$0xf]
  %v59 = vld [vmem:[%s1 + $0x14] sm:$0xf]
  %v60 = vld [vmem:[%s1 + $0x18] sm:$0xf]
  %v61 = vld [vmem:[%s1 + $0x1c] sm:$0xf]
  %v62 = vld [vmem:[%s1 + $0x20] sm:$0xf]
  %v63 = vld [vmem:[%s1 + $0x24] sm:$0xf]
  %v64 = vld [vmem:[%s1 + $0x28] sm:$0xf]
  %v65 = vld [vmem:[%s1 + $0x2c] sm:$0xf]
  %v66 = vld [vmem:[%s1 + $0x30] sm:$0xf]
  %v67 = vld [vmem:[%s1 + $0x34] sm:$0xf]
  %v68 = vld [vmem:[%s1 + $0x38] sm:$0xf]
  %v69 = vld [vmem:[%s1 + $0x3c] sm:$0xf]
  %v70 = vld [vmem:[%s1 + $0x40] sm:$0xf]
  %v71 = vld [vmem:[%s1 + $0x44] sm:$0xf]
  %v72 = vld [vmem:[%s1 + $0x48] sm:$0xf]
  %v73 = vld [vmem:[%s1 + $0x4c] sm:$0xf]
  %v74 = vld [vmem:[%s1 + $0x50] sm:$0xf]
  %v75 = vld [vmem:[%s1 + $0x54] sm:$0xf]
  %v76 = vld [vmem:[%s1 + $0x58] sm:$0xf]
  %v77 = vld [vmem:[%s1 + $0x5c] sm:$0xf]
  %v78 = vld [vmem:[%s1 + $0x60] sm:$0xf]
  %v79 = vld [vmem:[%s1 + $0x64] sm:$0xf]
  %v80 = vld [vmem:[%s1 + $0x68] sm:$0xf]
  %v81 = vld [vmem:[%s1 + $0x6c] sm:$0xf]
  %v82 = vld [vmem:[%s1 + $0x70] sm:$0xf]
  %v83 = vld [vmem:[%s1 + $0x74] sm:$0xf]
  %v84 = vld [vmem:[%s1 + $0x78] sm:$0xf]
  %v85 = vld [vmem:[%s1 + $0x7c] sm:$0xf]
  %v86 = vld [vmem:[%s1 + $0x80] sm:$0xf]
  %v87 = vld [vmem:[%s1 + $0x84] sm:$0xf]
  %v88 = vld [vmem:[%s1 + $0x88] sm:$0xf]
  %v89 = vld [vmem:[%s1 + $0x8c] sm:$0xf]
  %v90 = vld [vmem:[%s1 + $0x90] sm:$0xf]
  %v91 = vld [vmem:[%s1 + $0x94] sm:$0xf]
  %v92 = vld [vmem:[%s1 + $0x98] sm:$0xf]
  %v93 = vld [vmem:[%s1 + $0x9c] sm:$0xf]
  %v94 = vld [vmem:[%s1 + $0xa0] sm:$0xf]
  %v95 = vld [vmem:[%s1 + $0xa4] sm:$0xf]
  %v96 = vld [vmem:[%s1 + $0xa8] sm:$0xf]
  %v97 = vld [vmem:[%s1 + $0xac] sm:$0xf]
  %v98 = vld [vmem:[%s1 + $0xb0] sm:$0xf]
  %v99 = vld [vmem:[%s1 + $0xb4] sm:$0xf]
  %v100 = vld [vmem:[%s1 + $0xb8] sm:$0xf]
  %v101 = vld [vmem:[%s1 + $0xbc] sm:$0xf]
  %v102 = vld [vmem:[%s1 + $0xc0] sm:$0xf]
  %v103 = vld [vmem:[%s1 + $0xc4] sm:$0xf]
  %v104 = vld [vmem:[%s1 + $0xc8] sm:$0xf]
  %v105 = vld [vmem:[%s1 + $0xcc] sm:$0xf]
  %v106 = vld [vmem:[%s1 + $0xd0] sm:$0xf]
  %v107 = vld [vmem:[%s1 + $0xd4] sm:$0xf]
  %v108 = vld [vmem:[%s1 + $0xd8] sm:$0xf]
  %v109 = vld [vmem:[%s1 + $0xdc] sm:$0xf]
  %v110 = vld [vmem:[%s1 + $0xe0] sm:$0xf]
  %v111 = vld [vmem:[%s1 + $0xe4] sm:$0xf]
  %v112 = vld [vmem:[%s1 + $0xe8] sm:$0xf]
  %v113 = vld [vmem:[%s1 + $0xec] sm:$0xf]
  %v114 = vld [vmem:[%s1 + $0xf0] sm:$0xf]
  %v115 = vld [vmem:[%s1 + $0xf4] sm:$0xf]
  %v116 = vld [vmem:[%s1 + $0xf8] sm:$0xf]
  %v117 = vld [vmem:[%s1 + $0xfc] sm:$0xf]
  %v118 = vld [vmem:[%s1 + $0x100] sm:$0xf]
  %v119 = vld [vmem:[%s1 + $0x104] sm:$0xf]
  %v120 = vld [vmem:[%s1 + $0x108] sm:$0xf]
  %v121 = vld [vmem:[%s1 + $0x10c] sm:$0xf]
  %v122 = vld [vmem:[%s1 + $0x110] sm:$0xf]
  %v123 = vld [vmem:[%s1 + $0x114] sm:$0xf]
  %v124 = vld [vmem:[%s1 + $0x118] sm:$0xf]
  %v125 = vld [vmem:[%s1 + $0x11c] sm:$0xf]
  %v126 = vld [vmem:[%s2] sm:$0x1]
  %v128 = vlaneseq
  %v129 = vshrl.u32 %v128, 7
  %v130 = vsub.s32 0, %v129
  %v131 = vrot.slane %v126, %v130
  %v172 = vunpack.c.l.b16 %v15
  %v173 = vunpack.c.h.b16 %v15
  %v174 = vunpack.c.l.b16 %v16
  %v175 = vunpack.c.h.b16 %v16
  %v176 = vunpack.c.l.b16 %v17
  %v177 = vunpack.c.l.b16 %v18
  %v178 = vunpack.c.h.b16 %v18
  %v179 = vunpack.c.l.b16 %v19
  %v180 = vunpack.c.h.b16 %v19
  %v181 = vunpack.c.l.b16 %v20
  %v182 = vunpack.c.l.b16 %v21
  %v183 = vunpack.c.h.b16 %v21
  %v184 = vunpack.c.l.b16 %v22
  %v185 = vunpack.c.h.b16 %v22
  %v186 = vunpack.c.l.b16 %v23
  %v187 = vunpack.c.l.b16 %v24
  %v188 = vunpack.c.h.b16 %v24
  %v189 = vunpack.c.l.b16 %v25
  %v190 = vunpack.c.h.b16 %v25
  %v191 = vunpack.c.l.b16 %v26
  %v192 = vunpack.c.l.b16 %v27
  %v193 = vunpack.c.h.b16 %v27
  %v194 = vunpack.c.l.b16 %v28
  %v195 = vunpack.c.h.b16 %v28
  %v196 = vunpack.c.l.b16 %v29
  %v197 = vunpack.c.l.b16 %v30
  %v198 = vunpack.c.h.b16 %v30
  %v199 = vunpack.c.l.b16 %v31
  %v200 = vunpack.c.h.b16 %v31
  %v201 = vunpack.c.l.b16 %v32
  %v202 = vunpack.c.l.b16 %v33
  %v203 = vunpack.c.h.b16 %v33
  %v204 = vunpack.c.l.b16 %v34
  %v205 = vunpack.c.h.b16 %v34
  %v206 = vunpack.c.l.b16 %v35
  %v207 = vunpack.c.l.b16 %v36
  %v208 = vunpack.c.h.b16 %v36
  %v209 = vunpack.c.l.b16 %v37
  %v210 = vunpack.c.h.b16 %v37
  %v211 = vunpack.c.l.b16 %v38
  %v212 = vunpack.c.l.b16 %v39
  %v213 = vunpack.c.h.b16 %v39
  %v214 = vunpack.c.l.b16 %v40
  %v215 = vunpack.c.h.b16 %v40
  %v216 = vunpack.c.l.b16 %v41
  %v217 = vunpack.c.l.b16 %v42
  %v218 = vunpack.c.h.b16 %v42
  %v219 = vunpack.c.l.b16 %v43
  %v220 = vunpack.c.h.b16 %v43
  %v221 = vunpack.c.l.b16 %v44
  %v222 = vunpack.c.l.b16 %v45
  %v223 = vunpack.c.h.b16 %v45
  %v224 = vunpack.c.l.b16 %v46
  %v225 = vunpack.c.h.b16 %v46
  %v226 = vunpack.c.l.b16 %v47
  %v227 = vunpack.c.l.b16 %v48
  %v228 = vunpack.c.h.b16 %v48
  %v229 = vunpack.c.l.b16 %v49
  %v230 = vunpack.c.h.b16 %v49
  %v231 = vunpack.c.l.b16 %v50
  %v232 = vunpack.c.l.b16 %v51
  %v233 = vunpack.c.h.b16 %v51
  %v234 = vunpack.c.l.b16 %v52
  %v235 = vunpack.c.h.b16 %v52
  %v236 = vunpack.c.l.b16 %v53
  %v237 = vpack.c.b16 %v177, %v172
  %v238 = vpack.c.b16 %v178, %v173
  %v239 = vpack.c.b16 %v179, %v174
  %v240 = vpack.c.b16 %v180, %v175
  %v241 = vpack.c.b16 %v181, %v176
  %v242 = vpack.c.b16 %v187, %v182
  %v243 = vpack.c.b16 %v188, %v183
  %v244 = vpack.c.b16 %v189, %v184
  %v245 = vpack.c.b16 %v190, %v185
  %v246 = vpack.c.b16 %v191, %v186
  %v247 = vpack.c.b16 %v197, %v192
  %v248 = vpack.c.b16 %v198, %v193
  %v249 = vpack.c.b16 %v199, %v194
  %v250 = vpack.c.b16 %v200, %v195
  %v251 = vpack.c.b16 %v201, %v196
  %v252 = vpack.c.b16 %v207, %v202
  %v253 = vpack.c.b16 %v208, %v203
  %v254 = vpack.c.b16 %v209, %v204
  %v255 = vpack.c.b16 %v210, %v205
  %v256 = vpack.c.b16 %v211, %v206
  %v257 = vpack.c.b16 %v217, %v212
  %v258 = vpack.c.b16 %v218, %v213
  %v259 = vpack.c.b16 %v219, %v214
  %v260 = vpack.c.b16 %v220, %v215
  %v261 = vpack.c.b16 %v221, %v216
  %v262 = vpack.c.b16 %v227, %v222
  %v263 = vpack.c.b16 %v228, %v223
  %v264 = vpack.c.b16 %v229, %v224
  %v265 = vpack.c.b16 %v230, %v225
  %v266 = vpack.c.b16 %v231, %v226
  %v267 = vpack.c.b16 %v232, %v232
  %v268 = vpack.c.b16 %v233, %v233
  %v269 = vpack.c.b16 %v234, %v234
  %v270 = vpack.c.b16 %v235, %v235
  %v271 = vpack.c.b16 %v236, %v236
  %v372 = vunpack.c.l.b16 %v54
  %v373 = vunpack.c.l.b16 %v55
  %v374 = vunpack.c.l.b16 %v56
  %v375 = vunpack.c.l.b16 %v57
  %v376 = vunpack.c.l.b16 %v58
  %v377 = vunpack.c.l.b16 %v59
  %v378 = vunpack.c.l.b16 %v60
  %v379 = vunpack.c.l.b16 %v61
  %v380 = vunpack.c.l.b16 %v62
  %v381 = vunpack.c.l.b16 %v63
  %v382 = vunpack.c.l.b16 %v64
  %v383 = vunpack.c.l.b16 %v65
  %v384 = vunpack.c.l.b16 %v66
  %v385 = vunpack.c.l.b16 %v67
  %v386 = vunpack.c.l.b16 %v68
  %v387 = vunpack.c.l.b16 %v69
  %v388 = vunpack.c.l.b16 %v70
  %v389 = vunpack.c.l.b16 %v71
  %v390 = vunpack.c.l.b16 %v72
  %v391 = vunpack.c.l.b16 %v73
  %v392 = vunpack.c.l.b16 %v74
  %v393 = vunpack.c.l.b16 %v75
  %v394 = vunpack.c.l.b16 %v76
  %v395 = vunpack.c.l.b16 %v77
  %v396 = vunpack.c.l.b16 %v78
  %v397 = vunpack.c.l.b16 %v79
  %v398 = vunpack.c.l.b16 %v80
  %v399 = vunpack.c.l.b16 %v81
  %v400 = vunpack.c.l.b16 %v82
  %v401 = vunpack.c.l.b16 %v83
  %v402 = vunpack.c.l.b16 %v84
  %v403 = vunpack.c.l.b16 %v85
  %v404 = vunpack.c.l.b16 %v86
  %v405 = vunpack.c.l.b16 %v87
  %v406 = vunpack.c.l.b16 %v88
  %v407 = vunpack.c.l.b16 %v89
  %v408 = vunpack.c.l.b16 %v90
  %v409 = vunpack.c.l.b16 %v91
  %v410 = vunpack.c.l.b16 %v92
  %v411 = vunpack.c.l.b16 %v93
  %v412 = vunpack.c.l.b16 %v94
  %v413 = vunpack.c.l.b16 %v95
  %v414 = vunpack.c.l.b16 %v96
  %v415 = vunpack.c.l.b16 %v97
  %v416 = vunpack.c.l.b16 %v98
  %v417 = vunpack.c.l.b16 %v99
  %v418 = vunpack.c.l.b16 %v100
  %v419 = vunpack.c.l.b16 %v101
  %v420 = vunpack.c.l.b16 %v102
  %v421 = vunpack.c.l.b16 %v103
  %v422 = vunpack.c.l.b16 %v104
  %v423 = vunpack.c.l.b16 %v105
  %v424 = vunpack.c.l.b16 %v106
  %v425 = vunpack.c.l.b16 %v107
  %v426 = vunpack.c.l.b16 %v108
  %v427 = vunpack.c.l.b16 %v109
  %v428 = vunpack.c.l.b16 %v110
  %v429 = vunpack.c.l.b16 %v111
  %v430 = vunpack.c.l.b16 %v112
  %v431 = vunpack.c.l.b16 %v113
  %v432 = vunpack.c.l.b16 %v114
  %v433 = vunpack.c.l.b16 %v115
  %v434 = vunpack.c.l.b16 %v116
  %v435 = vunpack.c.l.b16 %v117
  %v436 = vunpack.c.l.b16 %v118
  %v437 = vunpack.c.l.b16 %v119
  %v438 = vunpack.c.l.b16 %v120
  %v439 = vunpack.c.l.b16 %v121
  %v440 = vunpack.c.l.b16 %v122
  %v441 = vunpack.c.l.b16 %v123
  %v442 = vunpack.c.l.b16 %v124
  %v443 = vunpack.c.l.b16 %v125
  %v444 = vpack.c.b16 %v373, %v372
  %v445 = vpack.c.b16 %v375, %v374
  %v446 = vpack.c.b16 %v377, %v376
  %v447 = vpack.c.b16 %v379, %v378
  %v448 = vpack.c.b16 %v381, %v380
  %v449 = vpack.c.b16 %v383, %v382
  %v450 = vpack.c.b16 %v385, %v384
  %v451 = vpack.c.b16 %v387, %v386
  %v452 = vpack.c.b16 %v389, %v388
  %v453 = vpack.c.b16 %v391, %v390
  %v454 = vpack.c.b16 %v393, %v392
  %v455 = vpack.c.b16 %v395, %v394
  %v456 = vpack.c.b16 %v397, %v396
  %v457 = vpack.c.b16 %v399, %v398
  %v458 = vpack.c.b16 %v401, %v400
  %v459 = vpack.c.b16 %v403, %v402
  %v460 = vpack.c.b16 %v405, %v404
  %v461 = vpack.c.b16 %v407, %v406
  %v462 = vpack.c.b16 %v409, %v408
  %v463 = vpack.c.b16 %v411, %v410
  %v464 = vpack.c.b16 %v413, %v412
  %v465 = vpack.c.b16 %v415, %v414
  %v466 = vpack.c.b16 %v417, %v416
  %v467 = vpack.c.b16 %v419, %v418
  %v468 = vpack.c.b16 %v421, %v420
  %v469 = vpack.c.b16 %v423, %v422
  %v470 = vpack.c.b16 %v425, %v424
  %v471 = vpack.c.b16 %v427, %v426
  %v472 = vpack.c.b16 %v429, %v428
  %v473 = vpack.c.b16 %v431, %v430
  %v474 = vpack.c.b16 %v433, %v432
  %v475 = vpack.c.b16 %v435, %v434
  %v476 = vpack.c.b16 %v437, %v436
  %v477 = vpack.c.b16 %v439, %v438
  %v478 = vpack.c.b16 %v441, %v440
  %v479 = vpack.c.b16 %v443, %v442
  %vm516 = vcmask 523264
  %v518 = vsel %vm516, %v241, 0
  %v521 = vsel %vm516, %v246, 0
  %v524 = vsel %vm516, %v251, 0
  %v527 = vsel %vm516, %v256, 0
  %v530 = vsel %vm516, %v261, 0
  %v533 = vsel %vm516, %v266, 0
  %v536 = vsel %vm516, %v271, 0
  %538 = vmatprep.subr.bf16.mxu0 0
  %539 = vmatpush1.bf16.msra.mxu0 %v451
  %540 = vmatprep.subr.bf16.mxu0 0
  %541 = vmatpush1.bf16.msra.mxu0 %v450
  %542 = vmatprep.subr.bf16.mxu0 0
  %543 = vmatpush1.bf16.msra.mxu0 %v449
  %544 = vmatprep.subr.bf16.mxu0 0
  %545 = vmatpush1.bf16.msra.mxu0 %v448
  %546 = vmatprep.subr.bf16.mxu0 0
  %547 = vmatpush1.bf16.msra.mxu0 %v447
  %548 = vmatprep.subr.bf16.mxu0 0
  %549 = vmatpush1.bf16.msra.mxu0 %v446
  %550 = vmatprep.subr.bf16.mxu0 0
  %551 = vmatpush1.bf16.msra.mxu0 %v445
  %552 = vmatprep.subr.bf16.mxu0 0
  %553 = vmatpush1.bf16.msra.mxu0 %v444
  %554 = vmatprep.subr.bf16.mxu0 0
  %555 = vmatpush2.bf16.msra.mxu0 %v459
  %556 = vmatprep.subr.bf16.mxu0 0
  %557 = vmatpush2.bf16.msra.mxu0 %v458
  %558 = vmatprep.subr.bf16.mxu0 0
  %559 = vmatpush2.bf16.msra.mxu0 %v457
  %560 = vmatprep.subr.bf16.mxu0 0
  %561 = vmatpush2.bf16.msra.mxu0 %v456
  %562 = vmatprep.subr.bf16.mxu0 0
  %563 = vmatpush2.bf16.msra.mxu0 %v455
  %564 = vmatprep.subr.bf16.mxu0 0
  %565 = vmatpush2.bf16.msra.mxu0 %v454
  %566 = vmatprep.subr.bf16.mxu0 0
  %567 = vmatpush2.bf16.msra.mxu0 %v453
  %568 = vmatprep.subr.bf16.mxu0 0
  %569 = vmatpush2.bf16.msra.mxu0 %v452
  %570 = vmatprep.mubr.bf16.mxu0 %v238
  %571 = vmatmul.mubr.bf16.gmra.mxu0 %v237
  %v572 = vpop.f32.mrf.mxu0
  %v573 = vadd.f32 %v131, %v572
  %v574 = vpop.f32.mrf.mxu0
  %v575 = vpop.f32.mrf.mxu0
  %v576 = vadd.f32 %v131, %v575
  %v577 = vpop.f32.mrf.mxu0
  %578 = vmatprep.mubr.bf16.mxu0 %v243
  %579 = vmatmul.mubr.bf16.gmra.mxu0 %v242
  %v580 = vpop.f32.mrf.mxu0
  %v581 = vadd.f32 %v131, %v580
  %v582 = vpop.f32.mrf.mxu0
  %v583 = vpop.f32.mrf.mxu0
  %v584 = vadd.f32 %v131, %v583
  %v585 = vpop.f32.mrf.mxu0
  %586 = vmatprep.mubr.bf16.mxu0 %v248
  %587 = vmatmul.mubr.bf16.gmra.mxu0 %v247
  %v588 = vpop.f32.mrf.mxu0
  %v589 = vadd.f32 %v131, %v588
  %v590 = vpop.f32.mrf.mxu0
  %v591 = vpop.f32.mrf.mxu0
  %v592 = vadd.f32 %v131, %v591
  %v593 = vpop.f32.mrf.mxu0
  %594 = vmatprep.mubr.bf16.mxu0 %v253
  %595 = vmatmul.mubr.bf16.gmra.mxu0 %v252
  %v596 = vpop.f32.mrf.mxu0
  %v597 = vadd.f32 %v131, %v596
  %v598 = vpop.f32.mrf.mxu0
  %v599 = vpop.f32.mrf.mxu0
  %v600 = vadd.f32 %v131, %v599
  %v601 = vpop.f32.mrf.mxu0
  %602 = vmatprep.mubr.bf16.mxu0 %v258
  %603 = vmatmul.mubr.bf16.gmra.mxu0 %v257
  %v604 = vpop.f32.mrf.mxu0
  %v605 = vadd.f32 %v131, %v604
  %v606 = vpop.f32.mrf.mxu0
  %v607 = vpop.f32.mrf.mxu0
  %v608 = vadd.f32 %v131, %v607
  %v609 = vpop.f32.mrf.mxu0
  %610 = vmatprep.mubr.bf16.mxu0 %v263
  %611 = vmatmul.mubr.bf16.gmra.mxu0 %v262
  %v612 = vpop.f32.mrf.mxu0
  %v613 = vadd.f32 %v131, %v612
  %v614 = vpop.f32.mrf.mxu0
  %v615 = vpop.f32.mrf.mxu0
  %v616 = vadd.f32 %v131, %v615
  %v617 = vpop.f32.mrf.mxu0
  %618 = vmatprep.mubr.bf16.mxu0 %v268
  %619 = vmatmul.mubr.bf16.gmra.mxu0 %v267
  %v620 = vpop.f32.mrf.mxu0
  %v621 = vadd.f32 %v131, %v620
  %v622 = vpop.f32.mrf.mxu0
  %v623 = vpop.f32.mrf.mxu0
  %v624 = vpop.f32.mrf.mxu0
  %625 = vdwg.mxu0
  %626 = vmatprep.subr.bf16.mxu0 0
  %627 = vmatpush1.bf16.msra.mxu0 %v467
  %628 = vmatprep.subr.bf16.mxu0 0
  %629 = vmatpush1.bf16.msra.mxu0 %v466
  %630 = vmatprep.subr.bf16.mxu0 0
  %631 = vmatpush1.bf16.msra.mxu0 %v465
  %632 = vmatprep.subr.bf16.mxu0 0
  %633 = vmatpush1.bf16.msra.mxu0 %v464
  %634 = vmatprep.subr.bf16.mxu0 0
  %635 = vmatpush1.bf16.msra.mxu0 %v463
  %636 = vmatprep.subr.bf16.mxu0 0
  %637 = vmatpush1.bf16.msra.mxu0 %v462
  %638 = vmatprep.subr.bf16.mxu0 0
  %639 = vmatpush1.bf16.msra.mxu0 %v461
  %640 = vmatprep.subr.bf16.mxu0 0
  %641 = vmatpush1.bf16.msra.mxu0 %v460
  %642 = vmatprep.subr.bf16.mxu0 0
  %643 = vmatpush2.bf16.msra.mxu0 %v475
  %644 = vmatprep.subr.bf16.mxu0 0
  %645 = vmatpush2.bf16.msra.mxu0 %v474
  %646 = vmatprep.subr.bf16.mxu0 0
  %647 = vmatpush2.bf16.msra.mxu0 %v473
  %648 = vmatprep.subr.bf16.mxu0 0
  %649 = vmatpush2.bf16.msra.mxu0 %v472
  %650 = vmatprep.subr.bf16.mxu0 0
  %651 = vmatpush2.bf16.msra.mxu0 %v471
  %652 = vmatprep.subr.bf16.mxu0 0
  %653 = vmatpush2.bf16.msra.mxu0 %v470
  %654 = vmatprep.subr.bf16.mxu0 0
  %655 = vmatpush2.bf16.msra.mxu0 %v469
  %656 = vmatprep.subr.bf16.mxu0 0
  %657 = vmatpush2.bf16.msra.mxu0 %v468
  %658 = vmatprep.mubr.bf16.mxu0 %v240
  %659 = vmatmul.mubr.bf16.gmra.mxu0 %v239
  %v660 = vpop.f32.mrf.mxu0
  %v661 = vadd.f32 %v573, %v660
  %v662 = vpop.f32.mrf.mxu0
  %v663 = vpop.f32.mrf.mxu0
  %v664 = vadd.f32 %v576, %v663
  %v665 = vpop.f32.mrf.mxu0
  %666 = vmatprep.mubr.bf16.mxu0 %v245
  %667 = vmatmul.mubr.bf16.gmra.mxu0 %v244
  %v668 = vpop.f32.mrf.mxu0
  %v669 = vadd.f32 %v581, %v668
  %v670 = vpop.f32.mrf.mxu0
  %v671 = vpop.f32.mrf.mxu0
  %v672 = vadd.f32 %v584, %v671
  %v673 = vpop.f32.mrf.mxu0
  %674 = vmatprep.mubr.bf16.mxu0 %v250
  %675 = vmatmul.mubr.bf16.gmra.mxu0 %v249
  %v676 = vpop.f32.mrf.mxu0
  %v677 = vadd.f32 %v589, %v676
  %v678 = vpop.f32.mrf.mxu0
  %v679 = vpop.f32.mrf.mxu0
  %v680 = vadd.f32 %v592, %v679
  %v681 = vpop.f32.mrf.mxu0
  %682 = vmatprep.mubr.bf16.mxu0 %v255
  %683 = vmatmul.mubr.bf16.gmra.mxu0 %v254
  %v684 = vpop.f32.mrf.mxu0
  %v685 = vadd.f32 %v597, %v684
  %v686 = vpop.f32.mrf.mxu0
  %v687 = vpop.f32.mrf.mxu0
  %v688 = vadd.f32 %v600, %v687
  %v689 = vpop.f32.mrf.mxu0
  %690 = vmatprep.mubr.bf16.mxu0 %v260
  %691 = vmatmul.mubr.bf16.gmra.mxu0 %v259
  %v692 = vpop.f32.mrf.mxu0
  %v693 = vadd.f32 %v605, %v692
  %v694 = vpop.f32.mrf.mxu0
  %v695 = vpop.f32.mrf.mxu0
  %v696 = vadd.f32 %v608, %v695
  %v697 = vpop.f32.mrf.mxu0
  %698 = vmatprep.mubr.bf16.mxu0 %v265
  %699 = vmatmul.mubr.bf16.gmra.mxu0 %v264
  %v700 = vpop.f32.mrf.mxu0
  %v701 = vadd.f32 %v613, %v700
  %v702 = vpop.f32.mrf.mxu0
  %v703 = vpop.f32.mrf.mxu0
  %v704 = vadd.f32 %v616, %v703
  %v705 = vpop.f32.mrf.mxu0
  %706 = vmatprep.mubr.bf16.mxu0 %v270
  %707 = vmatmul.mubr.bf16.gmra.mxu0 %v269
  %v708 = vpop.f32.mrf.mxu0
  %v709 = vadd.f32 %v621, %v708
  %v710 = vpop.f32.mrf.mxu0
  %v711 = vpop.f32.mrf.mxu0
  %v712 = vpop.f32.mrf.mxu0
  %713 = vdwg.mxu0
  %714 = vmatprep.subr.bf16.mxu0 0
  %715 = vmatpush1.bf16.msra.mxu0 0
  %716 = vmatprep.subr.bf16.mxu0 0
  %717 = vmatpush1.bf16.msra.mxu0 0
  %718 = vmatprep.subr.bf16.mxu0 0
  %719 = vmatpush1.bf16.msra.mxu0 0
  %720 = vmatprep.subr.bf16.mxu0 0
  %721 = vmatpush1.bf16.msra.mxu0 0
  %722 = vmatprep.subr.bf16.mxu0 0
  %723 = vmatpush1.bf16.msra.mxu0 %v479
  %724 = vmatprep.subr.bf16.mxu0 0
  %725 = vmatpush1.bf16.msra.mxu0 %v478
  %726 = vmatprep.subr.bf16.mxu0 0
  %727 = vmatpush1.bf16.msra.mxu0 %v477
  %728 = vmatprep.subr.bf16.mxu0 0
  %729 = vmatpush1.bf16.msra.mxu0 %v476
  %730 = vmatprep.subr.bf16.mxu0 0
  %731 = vmatpush2.bf16.msra.mxu0 0
  %732 = vmatprep.subr.bf16.mxu0 0
  %733 = vmatpush2.bf16.msra.mxu0 0
  %734 = vmatprep.subr.bf16.mxu0 0
  %735 = vmatpush2.bf16.msra.mxu0 0
  %736 = vmatprep.subr.bf16.mxu0 0
  %737 = vmatpush2.bf16.msra.mxu0 0
  %738 = vmatprep.subr.bf16.mxu0 0
  %739 = vmatpush2.bf16.msra.mxu0 0
  %740 = vmatprep.subr.bf16.mxu0 0
  %741 = vmatpush2.bf16.msra.mxu0 0
  %742 = vmatprep.subr.bf16.mxu0 0
  %743 = vmatpush2.bf16.msra.mxu0 0
  %744 = vmatprep.subr.bf16.mxu0 0
  %745 = vmatpush2.bf16.msra.mxu0 0
  %746 = vmatprep.mubr.bf16.mxu0 0
  %747 = vmatmul.mubr.bf16.gmra.mxu0 %v518
  %v748 = vpop.f32.mrf.mxu0
  %v749 = vadd.f32 %v661, %v748
  %v750 = vpop.f32.mrf.mxu0
  %v751 = vpop.f32.mrf.mxu0
  %v752 = vadd.f32 %v664, %v751
  %v753 = vpop.f32.mrf.mxu0
  %754 = vmatprep.mubr.bf16.mxu0 0
  %755 = vmatmul.mubr.bf16.gmra.mxu0 %v521
  %v756 = vpop.f32.mrf.mxu0
  %v757 = vadd.f32 %v669, %v756
  %v758 = vpop.f32.mrf.mxu0
  %v759 = vpop.f32.mrf.mxu0
  %v760 = vadd.f32 %v672, %v759
  %v761 = vpop.f32.mrf.mxu0
  %762 = vmatprep.mubr.bf16.mxu0 0
  %763 = vmatmul.mubr.bf16.gmra.mxu0 %v524
  %v764 = vpop.f32.mrf.mxu0
  %v765 = vadd.f32 %v677, %v764
  %v766 = vpop.f32.mrf.mxu0
  %v767 = vpop.f32.mrf.mxu0
  %v768 = vadd.f32 %v680, %v767
  %v769 = vpop.f32.mrf.mxu0
  %770 = vmatprep.mubr.bf16.mxu0 0
  %771 = vmatmul.mubr.bf16.gmra.mxu0 %v527
  %v772 = vpop.f32.mrf.mxu0
  %v773 = vadd.f32 %v685, %v772
  %v774 = vpop.f32.mrf.mxu0
  %v775 = vpop.f32.mrf.mxu0
  %v776 = vadd.f32 %v688, %v775
  %v777 = vpop.f32.mrf.mxu0
  %778 = vmatprep.mubr.bf16.mxu0 0
  %779 = vmatmul.mubr.bf16.gmra.mxu0 %v530
  %v780 = vpop.f32.mrf.mxu0
  %v781 = vadd.f32 %v693, %v780
  %v782 = vpop.f32.mrf.mxu0
  %v783 = vpop.f32.mrf.mxu0
  %v784 = vadd.f32 %v696, %v783
  %v785 = vpop.f32.mrf.mxu0
  %786 = vmatprep.mubr.bf16.mxu0 0
  %787 = vmatmul.mubr.bf16.gmra.mxu0 %v533
  %v788 = vpop.f32.mrf.mxu0
  %v789 = vadd.f32 %v701, %v788
  %v790 = vpop.f32.mrf.mxu0
  %v791 = vpop.f32.mrf.mxu0
  %v792 = vadd.f32 %v704, %v791
  %v793 = vpop.f32.mrf.mxu0
  %794 = vmatprep.mubr.bf16.mxu0 0
  %795 = vmatmul.mubr.bf16.gmra.mxu0 %v536
  %v796 = vpop.f32.mrf.mxu0
  %v797 = vadd.f32 %v709, %v796
  %v798 = vpop.f32.mrf.mxu0
  %v799 = vpop.f32.mrf.mxu0
  %v800 = vpop.f32.mrf.mxu0
  %801 = vdwg.mxu0
  %vm802 = vcmp.ge.f32.partialorder %v749, 0.0
  %vm803 = vcmp.ge.f32.partialorder %v752, 0.0
  %vm804 = vcmp.ge.f32.partialorder %v757, 0.0
  %vm805 = vcmp.ge.f32.partialorder %v760, 0.0
  %vm806 = vcmp.ge.f32.partialorder %v765, 0.0
  %vm807 = vcmp.ge.f32.partialorder %v768, 0.0
  %vm808 = vcmp.ge.f32.partialorder %v773, 0.0
  %vm809 = vcmp.ge.f32.partialorder %v776, 0.0
  %vm810 = vcmp.ge.f32.partialorder %v781, 0.0
  %vm811 = vcmp.ge.f32.partialorder %v784, 0.0
  %vm812 = vcmp.ge.f32.partialorder %v789, 0.0
  %vm813 = vcmp.ge.f32.partialorder %v792, 0.0
  %vm814 = vcmp.ge.f32.partialorder %v797, 0.0
  %v815 = vmul.f32 %v749, 0.01
  %v816 = vmul.f32 %v752, 0.01
  %v817 = vmul.f32 %v757, 0.01
  %v818 = vmul.f32 %v760, 0.01
  %v819 = vmul.f32 %v765, 0.01
  %v820 = vmul.f32 %v768, 0.01
  %v821 = vmul.f32 %v773, 0.01
  %v822 = vmul.f32 %v776, 0.01
  %v823 = vmul.f32 %v781, 0.01
  %v824 = vmul.f32 %v784, 0.01
  %v825 = vmul.f32 %v789, 0.01
  %v826 = vmul.f32 %v792, 0.01
  %v827 = vmul.f32 %v797, 0.01
  %v828 = vsel %vm802, %v749, %v815
  %v829 = vsel %vm803, %v752, %v816
  %v830 = vsel %vm804, %v757, %v817
  %v831 = vsel %vm805, %v760, %v818
  %v832 = vsel %vm806, %v765, %v819
  %v833 = vsel %vm807, %v768, %v820
  %v834 = vsel %vm808, %v773, %v821
  %v835 = vsel %vm809, %v776, %v822
  %v836 = vsel %vm810, %v781, %v823
  %v837 = vsel %vm811, %v784, %v824
  %v838 = vsel %vm812, %v789, %v825
  %v839 = vsel %vm813, %v792, %v826
  %v840 = vsel %vm814, %v797, %v827
  %v841 = vpack.c.bf16 %v829, %v828
  %v842 = vpack.c.bf16 %v831, %v830
  %v843 = vpack.c.bf16 %v833, %v832
  %v844 = vpack.c.bf16 %v835, %v834
  %v845 = vpack.c.bf16 %v837, %v836
  %v846 = vpack.c.bf16 %v839, %v838
  %v847 = vpack.c.bf16 %v840, %v840
  %v855 = vunpack.c.l.b16 %v841
  %v856 = vunpack.c.h.b16 %v841
  %v857 = vunpack.c.l.b16 %v842
  %v858 = vunpack.c.h.b16 %v842
  %v859 = vunpack.c.l.b16 %v843
  %v860 = vunpack.c.h.b16 %v843
  %v861 = vunpack.c.l.b16 %v844
  %v862 = vunpack.c.h.b16 %v844
  %v863 = vunpack.c.l.b16 %v845
  %v864 = vunpack.c.h.b16 %v845
  %v865 = vunpack.c.l.b16 %v846
  %v866 = vunpack.c.h.b16 %v846
  %v867 = vunpack.c.l.b16 %v847
  %v868 = vpack.c.b16 %v855, %v855
  %v869 = vpack.c.b16 %v856, %v856
  %v870 = vpack.c.b16 %v857, %v857
  %v871 = vpack.c.b16 %v858, %v858
  %v872 = vpack.c.b16 %v859, %v859
  %v873 = vpack.c.b16 %v860, %v860
  %v874 = vpack.c.b16 %v861, %v861
  %v875 = vpack.c.b16 %v862, %v862
  %v876 = vpack.c.b16 %v863, %v863
  %v877 = vpack.c.b16 %v864, %v864
  %v878 = vpack.c.b16 %v865, %v865
  %v879 = vpack.c.b16 %v866, %v866
  %v880 = vpack.c.b16 %v867, %v867
  %894 = vst [vmem:[%s3] sm:$0xf] %v868
  %895 = vst [vmem:[%s3 + $0x4] sm:$0xf] %v869
  %896 = vst [vmem:[%s3 + $0x8] sm:$0xf] %v870
  %897 = vst [vmem:[%s3 + $0xc] sm:$0xf] %v871
  %898 = vst [vmem:[%s3 + $0x10] sm:$0xf] %v872
  %899 = vst [vmem:[%s3 + $0x14] sm:$0xf] %v873
  %900 = vst [vmem:[%s3 + $0x18] sm:$0xf] %v874
  %901 = vst [vmem:[%s3 + $0x1c] sm:$0xf] %v875
  %902 = vst [vmem:[%s3 + $0x20] sm:$0xf] %v876
  %903 = vst [vmem:[%s3 + $0x24] sm:$0xf] %v877
  %904 = vst [vmem:[%s3 + $0x28] sm:$0xf] %v878
  %905 = vst [vmem:[%s3 + $0x2c] sm:$0xf] %v879
  %906 = vst [vmem:[%s3 + $0x30] sm:$0x1] %v880
  // Predicated region
  $region14: #{vae_forward.8} parent=0 // pred_check
    _
  $region15: #{vae_forward.8} parent=0 // pred_check_branch
    %908 = sbr.rel (0) target = $region17
  $region16: #{vae_forward.8} parent=0 // pred_region
    _
  $region17: #{vae_forward.8} parent=0 // pred_fallthru
    _
  // Predicated region
  $region18: #{vae_forward.8} parent=0 // pred_check
    _
  $region19: #{vae_forward.8} parent=0 // pred_check_branch
    %910 = sbr.rel (0) target = $region21
  $region20: #{vae_forward.8} parent=0 // pred_region
    _
  $region21: #{vae_forward.8} parent=0 // pred_fallthru
    _

// kernel: vae_forward.9
$region0: #{vae_forward.9}
  #allocation0 [shape = 'u32[]', space=smem, size = 0x4, offset = 0x4, fixed_abs, tag = 'smem constant byte address 0x4 - core index']
  #allocation1 [shape = 'u32[144,128]{1,0:T(1,128)}', space=vmem, size = 0x12000, scoped, tag = 'internal scratch']
  %s0 = inlined_call_operand.vmem [shape: bf16[2,1568], index: 0, kind: input, shape index: {}]
  %s1 = inlined_call_operand.vmem [shape: bf16[1568,256], index: 1, kind: input, shape index: {}]
  %s2 = inlined_call_operand.vmem [shape: f32[1,256], index: 2, kind: input, shape index: {}]
  %s3 = inlined_call_operand.vmem [shape: bf16[256,256], index: 3, kind: input, shape index: {}]
  %s4 = inlined_call_operand.vmem [shape: f32[1,256], index: 4, kind: input, shape index: {}]
  %s5 = inlined_call_operand.vmem [shape: bf16[256,256], index: 5, kind: input, shape index: {}]
  %s6 = inlined_call_operand.vmem [shape: f32[1,256], index: 6, kind: input, shape index: {}]
  %s7 = inlined_call_operand.vmem [shape: bf16[256,1664], index: 7, kind: input, shape index: {}]
  %s8 = inlined_call_operand.vmem [shape: f32[1,1664], index: 8, kind: input, shape index: {}]
  %s9 = inlined_call_operand.vmem [shape: f32[2,256], index: 9, kind: output, shape index: {0}]
  %s10 = inlined_call_operand.vmem [shape: bf16[2,1664], index: 10, kind: output, shape index: {1}]
  %11 = xla_tuple %s9, %s10
  %s12 = sld [smem:[#allocation0]]
  $region54: #{vae_forward.9} parent=0
    _
  %s14 = ssub.s32 1, %s12
  %s15 = scalar_select 0, %s14, %s12
  // Predicated region
  $region2: #{vae_forward.9} parent=0 // pred_check
    _
  $region3: #{vae_forward.9} parent=0 // pred_check_branch
    %17 = sbr.rel (0) target = $region5
  $region4: #{vae_forward.9} parent=0 // pred_region
    _
  $region5: #{vae_forward.9} parent=0 // pred_fallthru
    _
  // Predicated region
  $region6: #{vae_forward.9} parent=0 // pred_check
    _
  $region7: #{vae_forward.9} parent=0 // pred_check_branch
    %19 = sbr.rel (0) target = $region9
  $region8: #{vae_forward.9} parent=0 // pred_region
    _
  $region9: #{vae_forward.9} parent=0 // pred_fallthru
    _
  // Predicated region
  $region10: #{vae_forward.9} parent=0 // pred_check
    _
  $region11: #{vae_forward.9} parent=0 // pred_check_branch
    %21 = sbr.rel (0) target = $region13
  $region12: #{vae_forward.9} parent=0 // pred_region
    _
  $region13: #{vae_forward.9} parent=0 // pred_fallthru
    _
  // Predicated region
  $region14: #{vae_forward.9} parent=0 // pred_check
    _
  $region15: #{vae_forward.9} parent=0 // pred_check_branch
    %23 = sbr.rel (0) target = $region17
  $region16: #{vae_forward.9} parent=0 // pred_region
    _
  $region17: #{vae_forward.9} parent=0 // pred_fallthru
    _
  // Predicated region
  $region18: #{vae_forward.9} parent=0 // pred_check
    _
  $region19: #{vae_forward.9} parent=0 // pred_check_branch
    %25 = sbr.rel (0) target = $region21
  $region20: #{vae_forward.9} parent=0 // pred_region
    _
  $region21: #{vae_forward.9} parent=0 // pred_fallthru
    _
  // Predicated region
  $region22: #{vae_forward.9} parent=0 // pred_check
    _
  $region23: #{vae_forward.9} parent=0 // pred_check_branch
    %27 = sbr.rel (0) target = $region25
  $region24: #{vae_forward.9} parent=0 // pred_region
    _
  $region25: #{vae_forward.9} parent=0 // pred_fallthru
    _
  // Predicated region
  $region26: #{vae_forward.9} parent=0 // pred_check
    _
  $region27: #{vae_forward.9} parent=0 // pred_check_branch
    %29 = sbr.rel (0) target = $region29
  $region28: #{vae_forward.9} parent=0 // pred_region
    _
  $region29: #{vae_forward.9} parent=0 // pred_fallthru
    _
  // Predicated region
  $region30: #{vae_forward.9} parent=0 // pred_check
    _
  $region31: #{vae_forward.9} parent=0 // pred_check_branch
    %31 = sbr.rel (0) target = $region33
  $region32: #{vae_forward.9} parent=0 // pred_region
    _
  $region33: #{vae_forward.9} parent=0 // pred_fallthru
    _
  // Predicated region
  $region34: #{vae_forward.9} parent=0 // pred_check
    _
  $region35: #{vae_forward.9} parent=0 // pred_check_branch
    %33 = sbr.rel (0) target = $region37
  $region36: #{vae_forward.9} parent=0 // pred_region
    _
  $region37: #{vae_forward.9} parent=0 // pred_fallthru
    _
  %v35 = vld [vmem:[%s0] sm:$0xff]
  %v36 = vld [vmem:[%s0 + $0x8] sm:$0x1f]
  %v37 = vld [vmem:[%s1] sm:$0xff]
  %v38 = vld [vmem:[%s1 + $0x8] sm:$0xff]
  %v39 = vld [vmem:[%s1 + $0x10] sm:$0xff]
  %v40 = vld [vmem:[%s1 + $0x18] sm:$0xff]
  %v41 = vld [vmem:[%s1 + $0x20] sm:$0xff]
  %v42 = vld [vmem:[%s1 + $0x28] sm:$0xff]
  %v43 = vld [vmem:[%s1 + $0x30] sm:$0xff]
  %v44 = vld [vmem:[%s1 + $0x38] sm:$0xff]
  %v45 = vld [vmem:[%s1 + $0x40] sm:$0xff]
  %v46 = vld [vmem:[%s1 + $0x48] sm:$0xff]
  %v47 = vld [vmem:[%s1 + $0x50] sm:$0xff]
  %v48 = vld [vmem:[%s1 + $0x58] sm:$0xff]
  %v49 = vld [vmem:[%s1 + $0x60] sm:$0xff]
  %v50 = vld [vmem:[%s1 + $0x68] sm:$0xff]
  %v51 = vld [vmem:[%s1 + $0x70] sm:$0xff]
  %v52 = vld [vmem:[%s1 + $0x78] sm:$0xff]
  %v53 = vld [vmem:[%s1 + $0x80] sm:$0xff]
  %v54 = vld [vmem:[%s1 + $0x88] sm:$0xff]
  %v55 = vld [vmem:[%s1 + $0x90] sm:$0xff]
  %v56 = vld [vmem:[%s1 + $0x98] sm:$0xff]
  %v57 = vld [vmem:[%s1 + $0xa0] sm:$0xff]
  %v58 = vld [vmem:[%s1 + $0xa8] sm:$0xff]
  %v59 = vld [vmem:[%s1 + $0xb0] sm:$0xff]
  %v60 = vld [vmem:[%s1 + $0xb8] sm:$0xff]
  %v61 = vld [vmem:[%s1 + $0xc0] sm:$0xff]
  %v62 = vld [vmem:[%s1 + $0xc8] sm:$0xff]
  %v63 = vld [vmem:[%s1 + $0xd0] sm:$0xff]
  %v64 = vld [vmem:[%s1 + $0xd8] sm:$0xff]
  %v65 = vld [vmem:[%s1 + $0xe0] sm:$0xff]
  %v66 = vld [vmem:[%s1 + $0xe8] sm:$0xff]
  %v67 = vld [vmem:[%s1 + $0xf0] sm:$0xff]
  %v68 = vld [vmem:[%s1 + $0xf8] sm:$0xff]
  %v69 = vld [vmem:[%s1 + $0x100] sm:$0xff]
  %v70 = vld [vmem:[%s1 + $0x108] sm:$0xff]
  %v71 = vld [vmem:[%s1 + $0x110] sm:$0xff]
  %v72 = vld [vmem:[%s1 + $0x118] sm:$0xff]
  %v73 = vld [vmem:[%s1 + $0x120] sm:$0xff]
  %v74 = vld [vmem:[%s1 + $0x128] sm:$0xff]
  %v75 = vld [vmem:[%s1 + $0x130] sm:$0xff]
  %v76 = vld [vmem:[%s1 + $0x138] sm:$0xff]
  %v77 = vld [vmem:[%s1 + $0x140] sm:$0xff]
  %v78 = vld [vmem:[%s1 + $0x148] sm:$0xff]
  %v79 = vld [vmem:[%s1 + $0x150] sm:$0xff]
  %v80 = vld [vmem:[%s1 + $0x158] sm:$0xff]
  %v81 = vld [vmem:[%s1 + $0x160] sm:$0xff]
  %v82 = vld [vmem:[%s1 + $0x168] sm:$0xff]
  %v83 = vld [vmem:[%s1 + $0x170] sm:$0xff]
  %v84 = vld [vmem:[%s1 + $0x178] sm:$0xff]
  %v85 = vld [vmem:[%s1 + $0x180] sm:$0xff]
  %v86 = vld [vmem:[%s1 + $0x188] sm:$0xff]
  %v87 = vld [vmem:[%s1 + $0x190] sm:$0xff]
  %v88 = vld [vmem:[%s1 + $0x198] sm:$0xff]
  %v89 = vld [vmem:[%s1 + $0x1a0] sm:$0xff]
  %v90 = vld [vmem:[%s1 + $0x1a8] sm:$0xff]
  %v91 = vld [vmem:[%s1 + $0x1b0] sm:$0xff]
  %v92 = vld [vmem:[%s1 + $0x1b8] sm:$0xff]
  %v93 = vld [vmem:[%s1 + $0x1c0] sm:$0xff]
  %v94 = vld [vmem:[%s1 + $0x1c8] sm:$0xff]
  %v95 = vld [vmem:[%s1 + $0x1d0] sm:$0xff]
  %v96 = vld [vmem:[%s1 + $0x1d8] sm:$0xff]
  %v97 = vld [vmem:[%s1 + $0x1e0] sm:$0xff]
  %v98 = vld [vmem:[%s1 + $0x1e8] sm:$0xff]
  %v99 = vld [vmem:[%s1 + $0x1f0] sm:$0xff]
  %v100 = vld [vmem:[%s1 + $0x1f8] sm:$0xff]
  %v101 = vld [vmem:[%s1 + $0x200] sm:$0xff]
  %v102 = vld [vmem:[%s1 + $0x208] sm:$0xff]
  %v103 = vld [vmem:[%s1 + $0x210] sm:$0xff]
  %v104 = vld [vmem:[%s1 + $0x218] sm:$0xff]
  %v105 = vld [vmem:[%s1 + $0x220] sm:$0xff]
  %v106 = vld [vmem:[%s1 + $0x228] sm:$0xff]
  %v107 = vld [vmem:[%s1 + $0x230] sm:$0xff]
  %v108 = vld [vmem:[%s1 + $0x238] sm:$0xff]
  %v109 = vld [vmem:[%s1 + $0x240] sm:$0xff]
  %v110 = vld [vmem:[%s1 + $0x248] sm:$0xff]
  %v111 = vld [vmem:[%s1 + $0x250] sm:$0xff]
  %v112 = vld [vmem:[%s1 + $0x258] sm:$0xff]
  %v113 = vld [vmem:[%s1 + $0x260] sm:$0xff]
  %v114 = vld [vmem:[%s1 + $0x268] sm:$0xff]
  %v115 = vld [vmem:[%s1 + $0x270] sm:$0xff]
  %v116 = vld [vmem:[%s1 + $0x278] sm:$0xff]
  %v117 = vld [vmem:[%s1 + $0x280] sm:$0xff]
  %v118 = vld [vmem:[%s1 + $0x288] sm:$0xff]
  %v119 = vld [vmem:[%s1 + $0x290] sm:$0xff]
  %v120 = vld [vmem:[%s1 + $0x298] sm:$0xff]
  %v121 = vld [vmem:[%s1 + $0x2a0] sm:$0xff]
  %v122 = vld [vmem:[%s1 + $0x2a8] sm:$0xff]
  %v123 = vld [vmem:[%s1 + $0x2b0] sm:$0xff]
  %v124 = vld [vmem:[%s1 + $0x2b8] sm:$0xff]
  %v125 = vld [vmem:[%s1 + $0x2c0] sm:$0xff]
  %v126 = vld [vmem:[%s1 + $0x2c8] sm:$0xff]
  %v127 = vld [vmem:[%s1 + $0x2d0] sm:$0xff]
  %v128 = vld [vmem:[%s1 + $0x2d8] sm:$0xff]
  %v129 = vld [vmem:[%s1 + $0x2e0] sm:$0xff]
  %v130 = vld [vmem:[%s1 + $0x2e8] sm:$0xff]
  %v131 = vld [vmem:[%s1 + $0x2f0] sm:$0xff]
  %v132 = vld [vmem:[%s1 + $0x2f8] sm:$0xff]
  %v133 = vld [vmem:[%s1 + $0x300] sm:$0xff]
  %v134 = vld [vmem:[%s1 + $0x308] sm:$0xff]
  %v135 = vld [vmem:[%s1 + $0x310] sm:$0xff]
  %v136 = vld [vmem:[%s1 + $0x318] sm:$0xff]
  %v137 = vld [vmem:[%s1 + $0x320] sm:$0xff]
  %v138 = vld [vmem:[%s1 + $0x328] sm:$0xff]
  %v139 = vld [vmem:[%s1 + $0x330] sm:$0xff]
  %v140 = vld [vmem:[%s1 + $0x338] sm:$0xff]
  %v141 = vld [vmem:[%s1 + $0x340] sm:$0xff]
  %v142 = vld [vmem:[%s1 + $0x348] sm:$0xff]
  %v143 = vld [vmem:[%s1 + $0x350] sm:$0xff]
  %v144 = vld [vmem:[%s1 + $0x358] sm:$0xff]
  %v145 = vld [vmem:[%s1 + $0x360] sm:$0xff]
  %v146 = vld [vmem:[%s1 + $0x368] sm:$0xff]
  %v147 = vld [vmem:[%s1 + $0x370] sm:$0xff]
  %v148 = vld [vmem:[%s1 + $0x378] sm:$0xff]
  %v149 = vld [vmem:[%s1 + $0x380] sm:$0xff]
  %v150 = vld [vmem:[%s1 + $0x388] sm:$0xff]
  %v151 = vld [vmem:[%s1 + $0x390] sm:$0xff]
  %v152 = vld [vmem:[%s1 + $0x398] sm:$0xff]
  %v153 = vld [vmem:[%s1 + $0x3a0] sm:$0xff]
  %v154 = vld [vmem:[%s1 + $0x3a8] sm:$0xff]
  %v155 = vld [vmem:[%s1 + $0x3b0] sm:$0xff]
  %v156 = vld [vmem:[%s1 + $0x3b8] sm:$0xff]
  %v157 = vld [vmem:[%s1 + $0x3c0] sm:$0xff]
  %v158 = vld [vmem:[%s1 + $0x3c8] sm:$0xff]
  %v159 = vld [vmem:[%s1 + $0x3d0] sm:$0xff]
  %v160 = vld [vmem:[%s1 + $0x3d8] sm:$0xff]
  %v161 = vld [vmem:[%s1 + $0x3e0] sm:$0xff]
  %v162 = vld [vmem:[%s1 + $0x3e8] sm:$0xff]
  %v163 = vld [vmem:[%s1 + $0x3f0] sm:$0xff]
  %v164 = vld [vmem:[%s1 + $0x3f8] sm:$0xff]
  %v165 = vld [vmem:[%s1 + $0x400] sm:$0xff]
  %v166 = vld [vmem:[%s1 + $0x408] sm:$0xff]
  %v167 = vld [vmem:[%s1 + $0x410] sm:$0xff]
  %v168 = vld [vmem:[%s1 + $0x418] sm:$0xff]
  %v169 = vld [vmem:[%s1 + $0x420] sm:$0xff]
  %v170 = vld [vmem:[%s1 + $0x428] sm:$0xff]
  %v171 = vld [vmem:[%s1 + $0x430] sm:$0xff]
  %v172 = vld [vmem:[%s1 + $0x438] sm:$0xff]
  %v173 = vld [vmem:[%s1 + $0x440] sm:$0xff]
  %v174 = vld [vmem:[%s1 + $0x448] sm:$0xff]
  %v175 = vld [vmem:[%s1 + $0x450] sm:$0xff]
  %v176 = vld [vmem:[%s1 + $0x458] sm:$0xff]
  %v177 = vld [vmem:[%s1 + $0x460] sm:$0xff]
  %v178 = vld [vmem:[%s1 + $0x468] sm:$0xff]
  %v179 = vld [vmem:[%s1 + $0x470] sm:$0xff]
  %v180 = vld [vmem:[%s1 + $0x478] sm:$0xff]
  %v181 = vld [vmem:[%s1 + $0x480] sm:$0xff]
  %v182 = vld [vmem:[%s1 + $0x488] sm:$0xff]
  %v183 = vld [vmem:[%s1 + $0x490] sm:$0xff]
  %v184 = vld [vmem:[%s1 + $0x498] sm:$0xff]
  %v185 = vld [vmem:[%s1 + $0x4a0] sm:$0xff]
  %v186 = vld [vmem:[%s1 + $0x4a8] sm:$0xff]
  %v187 = vld [vmem:[%s1 + $0x4b0] sm:$0xff]
  %v188 = vld [vmem:[%s1 + $0x4b8] sm:$0xff]
  %v189 = vld [vmem:[%s1 + $0x4c0] sm:$0xff]
  %v190 = vld [vmem:[%s1 + $0x4c8] sm:$0xff]
  %v191 = vld [vmem:[%s1 + $0x4d0] sm:$0xff]
  %v192 = vld [vmem:[%s1 + $0x4d8] sm:$0xff]
  %v193 = vld [vmem:[%s1 + $0x4e0] sm:$0xff]
  %v194 = vld [vmem:[%s1 + $0x4e8] sm:$0xff]
  %v195 = vld [vmem:[%s1 + $0x4f0] sm:$0xff]
  %v196 = vld [vmem:[%s1 + $0x4f8] sm:$0xff]
  %v197 = vld [vmem:[%s1 + $0x500] sm:$0xff]
  %v198 = vld [vmem:[%s1 + $0x508] sm:$0xff]
  %v199 = vld [vmem:[%s1 + $0x510] sm:$0xff]
  %v200 = vld [vmem:[%s1 + $0x518] sm:$0xff]
  %v201 = vld [vmem:[%s1 + $0x520] sm:$0xff]
  %v202 = vld [vmem:[%s1 + $0x528] sm:$0xff]
  %v203 = vld [vmem:[%s1 + $0x530] sm:$0xff]
  %v204 = vld [vmem:[%s1 + $0x538] sm:$0xff]
  %v205 = vld [vmem:[%s1 + $0x540] sm:$0xff]
  %v206 = vld [vmem:[%s1 + $0x548] sm:$0xff]
  %v207 = vld [vmem:[%s1 + $0x550] sm:$0xff]
  %v208 = vld [vmem:[%s1 + $0x558] sm:$0xff]
  %v209 = vld [vmem:[%s1 + $0x560] sm:$0xff]
  %v210 = vld [vmem:[%s1 + $0x568] sm:$0xff]
  %v211 = vld [vmem:[%s1 + $0x570] sm:$0xff]
  %v212 = vld [vmem:[%s1 + $0x578] sm:$0xff]
  %v213 = vld [vmem:[%s1 + $0x580] sm:$0xff]
  %v214 = vld [vmem:[%s1 + $0x588] sm:$0xff]
  %v215 = vld [vmem:[%s1 + $0x590] sm:$0xff]
  %v216 = vld [vmem:[%s1 + $0x598] sm:$0xff]
  %v217 = vld [vmem:[%s1 + $0x5a0] sm:$0xff]
  %v218 = vld [vmem:[%s1 + $0x5a8] sm:$0xff]
  %v219 = vld [vmem:[%s1 + $0x5b0] sm:$0xff]
  %v220 = vld [vmem:[%s1 + $0x5b8] sm:$0xff]
  %v221 = vld [vmem:[%s1 + $0x5c0] sm:$0xff]
  %v222 = vld [vmem:[%s1 + $0x5c8] sm:$0xff]
  %v223 = vld [vmem:[%s1 + $0x5d0] sm:$0xff]
  %v224 = vld [vmem:[%s1 + $0x5d8] sm:$0xff]
  %v225 = vld [vmem:[%s1 + $0x5e0] sm:$0xff]
  %v226 = vld [vmem:[%s1 + $0x5e8] sm:$0xff]
  %v227 = vld [vmem:[%s1 + $0x5f0] sm:$0xff]
  %v228 = vld [vmem:[%s1 + $0x5f8] sm:$0xff]
  %v229 = vld [vmem:[%s1 + $0x600] sm:$0xff]
  %v230 = vld [vmem:[%s1 + $0x608] sm:$0xff]
  %v231 = vld [vmem:[%s1 + $0x610] sm:$0xff]
  %v232 = vld [vmem:[%s1 + $0x618] sm:$0xff]
  %v233 = vld [vmem:[%s2] sm:$0x3]
  %v235 = vlaneseq
  %v236 = vshrl.u32 %v235, 7
  %v237 = vsub.s32 0, %v236
  %v238 = vrot.slane %v233, %v237
  %v239 = vlaneseq
  %v240 = vshrl.u32 %v239, 7
  %v241 = vsub.s32 1, %v240
  %v242 = vrot.slane %v233, %v241
  %v247 = vcombine.high %v35, %v35
  %v249 = vunpack.c.l.s4 1966171168
  %v250 = vunpack.c.0.s8 %v249
  %v251 = vlaneseq
  %v252 = vshrl.u32 %v251, 7
  %v253 = vsub.s32 %v250, %v252
  %v254 = vrot.slane %v35, %v253
  %v256 = vunpack.c.l.s4 1966171168
  %v257 = vunpack.c.0.s8 %v256
  %v258 = vlaneseq
  %v259 = vshrl.u32 %v258, 7
  %v260 = vsub.s32 %v257, %v259
  %v261 = vrot.slane %v247, %v260
  %v262 = vcombine.high %v254, %v254
  %v263 = vcombine.high %v261, %v261
  %v265 = vunpack.c.l.s4 1966171168
  %v266 = vunpack.c.0.s8 %v265
  %v267 = vlaneseq
  %v268 = vshrl.u32 %v267, 7
  %v269 = vsub.s32 %v266, %v268
  %v270 = vrot.slane %v254, %v269
  %v272 = vunpack.c.l.s4 1966171168
  %v273 = vunpack.c.0.s8 %v272
  %v274 = vlaneseq
  %v275 = vshrl.u32 %v274, 7
  %v276 = vsub.s32 %v273, %v275
  %v277 = vrot.slane %v261, %v276
  %v279 = vunpack.c.l.s4 1966171168
  %v280 = vunpack.c.0.s8 %v279
  %v281 = vlaneseq
  %v282 = vshrl.u32 %v281, 7
  %v283 = vsub.s32 %v280, %v282
  %v284 = vrot.slane %v262, %v283
  %v286 = vunpack.c.l.s4 1966171168
  %v287 = vunpack.c.0.s8 %v286
  %v288 = vlaneseq
  %v289 = vshrl.u32 %v288, 7
  %v290 = vsub.s32 %v287, %v289
  %v291 = vrot.slane %v263, %v290
  %v292 = vcombine.high %v270, %v270
  %v293 = vcombine.high %v277, %v277
  %v294 = vcombine.high %v284, %v284
  %v295 = vcombine.high %v291, %v291
  %v296 = vcombine.high %v36, %v36
  %v298 = vunpack.c.l.s4 1966171168
  %v299 = vunpack.c.0.s8 %v298
  %v300 = vlaneseq
  %v301 = vshrl.u32 %v300, 7
  %v302 = vsub.s32 %v299, %v301
  %v303 = vrot.slane %v36, %v302
  %v305 = vunpack.c.l.s4 1966171168
  %v306 = vunpack.c.0.s8 %v305
  %v307 = vlaneseq
  %v308 = vshrl.u32 %v307, 7
  %v309 = vsub.s32 %v306, %v308
  %v310 = vrot.slane %v296, %v309
  %v311 = vcombine.high %v303, %v303
  %v313 = vunpack.c.l.s4 1966171168
  %v314 = vunpack.c.0.s8 %v313
  %v315 = vlaneseq
  %v316 = vshrl.u32 %v315, 7
  %v317 = vsub.s32 %v314, %v316
  %v318 = vrot.slane %v303, %v317
  %v320 = vunpack.c.l.s4 1966171168
  %v321 = vunpack.c.0.s8 %v320
  %v322 = vlaneseq
  %v323 = vshrl.u32 %v322, 7
  %v324 = vsub.s32 %v321, %v323
  %v325 = vrot.slane %v310, %v324
  %v327 = vunpack.c.l.s4 1966171168
  %v328 = vunpack.c.0.s8 %v327
  %v329 = vlaneseq
  %v330 = vshrl.u32 %v329, 7
  %v331 = vsub.s32 %v328, %v330
  %v332 = vrot.slane %v311, %v331
  %v333 = vcombine.high %v318, %v318
  %v334 = vcombine.high %v332, %v332
  %v543 = vunpack.c.l.b16 %v37
  %v544 = vunpack.c.h.b16 %v37
  %v545 = vunpack.c.l.b16 %v38
  %v546 = vunpack.c.h.b16 %v38
  %v547 = vunpack.c.l.b16 %v39
  %v548 = vunpack.c.h.b16 %v39
  %v549 = vunpack.c.l.b16 %v40
  %v550 = vunpack.c.h.b16 %v40
  %v551 = vunpack.c.l.b16 %v41
  %v552 = vunpack.c.h.b16 %v41
  %v553 = vunpack.c.l.b16 %v42
  %v554 = vunpack.c.h.b16 %v42
  %v555 = vunpack.c.l.b16 %v43
  %v556 = vunpack.c.h.b16 %v43
  %v557 = vunpack.c.l.b16 %v44
  %v558 = vunpack.c.h.b16 %v44
  %v559 = vunpack.c.l.b16 %v45
  %v560 = vunpack.c.h.b16 %v45
  %v561 = vunpack.c.l.b16 %v46
  %v562 = vunpack.c.h.b16 %v46
  %v563 = vunpack.c.l.b16 %v47
  %v564 = vunpack.c.h.b16 %v47
  %v565 = vunpack.c.l.b16 %v48
  %v566 = vunpack.c.h.b16 %v48
  %v567 = vunpack.c.l.b16 %v49
  %v568 = vunpack.c.h.b16 %v49
  %v569 = vunpack.c.l.b16 %v50
  %v570 = vunpack.c.h.b16 %v50
  %v571 = vunpack.c.l.b16 %v51
  %v572 = vunpack.c.h.b16 %v51
  %v573 = vunpack.c.l.b16 %v52
  %v574 = vunpack.c.h.b16 %v52
  %v575 = vunpack.c.l.b16 %v53
  %v576 = vunpack.c.h.b16 %v53
  %v577 = vunpack.c.l.b16 %v54
  %v578 = vunpack.c.h.b16 %v54
  %v579 = vunpack.c.l.b16 %v55
  %v580 = vunpack.c.h.b16 %v55
  %v581 = vunpack.c.l.b16 %v56
  %v582 = vunpack.c.h.b16 %v56
  %v583 = vunpack.c.l.b16 %v57
  %v584 = vunpack.c.h.b16 %v57
  %v585 = vunpack.c.l.b16 %v58
  %v586 = vunpack.c.h.b16 %v58
  %v587 = vunpack.c.l.b16 %v59
  %v588 = vunpack.c.h.b16 %v59
  %v589 = vunpack.c.l.b16 %v60
  %v590 = vunpack.c.h.b16 %v60
  %v591 = vunpack.c.l.b16 %v61
  %v592 = vunpack.c.h.b16 %v61
  %v593 = vunpack.c.l.b16 %v62
  %v594 = vunpack.c.h.b16 %v62
  %v595 = vunpack.c.l.b16 %v63
  %v596 = vunpack.c.h.b16 %v63
  %v597 = vunpack.c.l.b16 %v64
  %v598 = vunpack.c.h.b16 %v64
  %v599 = vunpack.c.l.b16 %v65
  %v600 = vunpack.c.h.b16 %v65
  %v601 = vunpack.c.l.b16 %v66
  %v602 = vunpack.c.h.b16 %v66
  %v603 = vunpack.c.l.b16 %v67
  %v604 = vunpack.c.h.b16 %v67
  %v605 = vunpack.c.l.b16 %v68
  %v606 = vunpack.c.h.b16 %v68
  %v607 = vunpack.c.l.b16 %v69
  %v608 = vunpack.c.h.b16 %v69
  %v609 = vunpack.c.l.b16 %v70
  %v610 = vunpack.c.h.b16 %v70
  %v611 = vunpack.c.l.b16 %v71
  %v612 = vunpack.c.h.b16 %v71
  %v613 = vunpack.c.l.b16 %v72
  %v614 = vunpack.c.h.b16 %v72
  %v615 = vunpack.c.l.b16 %v73
  %v616 = vunpack.c.h.b16 %v73
  %v617 = vunpack.c.l.b16 %v74
  %v618 = vunpack.c.h.b16 %v74
  %v619 = vunpack.c.l.b16 %v75
  %v620 = vunpack.c.h.b16 %v75
  %v621 = vunpack.c.l.b16 %v76
  %v622 = vunpack.c.h.b16 %v76
  %v623 = vunpack.c.l.b16 %v77
  %v624 = vunpack.c.h.b16 %v77
  %v625 = vunpack.c.l.b16 %v78
  %v626 = vunpack.c.h.b16 %v78
  %v627 = vunpack.c.l.b16 %v79
  %v628 = vunpack.c.h.b16 %v79
  %v629 = vunpack.c.l.b16 %v80
  %v630 = vunpack.c.h.b16 %v80
  %v631 = vunpack.c.l.b16 %v81
  %v632 = vunpack.c.h.b16 %v81
  %v633 = vunpack.c.l.b16 %v82
  %v634 = vunpack.c.h.b16 %v82
  %v635 = vunpack.c.l.b16 %v83
  %v636 = vunpack.c.h.b16 %v83
  %v637 = vunpack.c.l.b16 %v84
  %v638 = vunpack.c.h.b16 %v84
  %v639 = vunpack.c.l.b16 %v85
  %v640 = vunpack.c.h.b16 %v85
  %v641 = vunpack.c.l.b16 %v86
  %v642 = vunpack.c.h.b16 %v86
  %v643 = vunpack.c.l.b16 %v87
  %v644 = vunpack.c.h.b16 %v87
  %v645 = vunpack.c.l.b16 %v88
  %v646 = vunpack.c.h.b16 %v88
  %v647 = vunpack.c.l.b16 %v89
  %v648 = vunpack.c.h.b16 %v89
  %v649 = vunpack.c.l.b16 %v90
  %v650 = vunpack.c.h.b16 %v90
  %v651 = vunpack.c.l.b16 %v91
  %v652 = vunpack.c.h.b16 %v91
  %v653 = vunpack.c.l.b16 %v92
  %v654 = vunpack.c.h.b16 %v92
  %v655 = vunpack.c.l.b16 %v93
  %v656 = vunpack.c.h.b16 %v93
  %v657 = vunpack.c.l.b16 %v94
  %v658 = vunpack.c.h.b16 %v94
  %v659 = vunpack.c.l.b16 %v95
  %v660 = vunpack.c.h.b16 %v95
  %v661 = vunpack.c.l.b16 %v96
  %v662 = vunpack.c.h.b16 %v96
  %v663 = vunpack.c.l.b16 %v97
  %v664 = vunpack.c.h.b16 %v97
  %v665 = vunpack.c.l.b16 %v98
  %v666 = vunpack.c.h.b16 %v98
  %v667 = vunpack.c.l.b16 %v99
  %v668 = vunpack.c.h.b16 %v99
  %v669 = vunpack.c.l.b16 %v100
  %v670 = vunpack.c.h.b16 %v100
  %v671 = vunpack.c.l.b16 %v101
  %v672 = vunpack.c.h.b16 %v101
  %v673 = vunpack.c.l.b16 %v102
  %v674 = vunpack.c.h.b16 %v102
  %v675 = vunpack.c.l.b16 %v103
  %v676 = vunpack.c.h.b16 %v103
  %v677 = vunpack.c.l.b16 %v104
  %v678 = vunpack.c.h.b16 %v104
  %v679 = vunpack.c.l.b16 %v105
  %v680 = vunpack.c.h.b16 %v105
  %v681 = vunpack.c.l.b16 %v106
  %v682 = vunpack.c.h.b16 %v106
  %v683 = vunpack.c.l.b16 %v107
  %v684 = vunpack.c.h.b16 %v107
  %v685 = vunpack.c.l.b16 %v108
  %v686 = vunpack.c.h.b16 %v108
  %v687 = vunpack.c.l.b16 %v109
  %v688 = vunpack.c.h.b16 %v109
  %v689 = vunpack.c.l.b16 %v110
  %v690 = vunpack.c.h.b16 %v110
  %v691 = vunpack.c.l.b16 %v111
  %v692 = vunpack.c.h.b16 %v111
  %v693 = vunpack.c.l.b16 %v112
  %v694 = vunpack.c.h.b16 %v112
  %v695 = vunpack.c.l.b16 %v113
  %v696 = vunpack.c.h.b16 %v113
  %v697 = vunpack.c.l.b16 %v114
  %v698 = vunpack.c.h.b16 %v114
  %v699 = vunpack.c.l.b16 %v115
  %v700 = vunpack.c.h.b16 %v115
  %v701 = vunpack.c.l.b16 %v116
  %v702 = vunpack.c.h.b16 %v116
  %v703 = vunpack.c.l.b16 %v117
  %v704 = vunpack.c.h.b16 %v117
  %v705 = vunpack.c.l.b16 %v118
  %v706 = vunpack.c.h.b16 %v118
  %v707 = vunpack.c.l.b16 %v119
  %v708 = vunpack.c.h.b16 %v119
  %v709 = vunpack.c.l.b16 %v120
  %v710 = vunpack.c.h.b16 %v120
  %v711 = vunpack.c.l.b16 %v121
  %v712 = vunpack.c.h.b16 %v121
  %v713 = vunpack.c.l.b16 %v122
  %v714 = vunpack.c.h.b16 %v122
  %v715 = vunpack.c.l.b16 %v123
  %v716 = vunpack.c.h.b16 %v123
  %v717 = vunpack.c.l.b16 %v124
  %v718 = vunpack.c.h.b16 %v124
  %v719 = vunpack.c.l.b16 %v125
  %v720 = vunpack.c.h.b16 %v125
  %v721 = vunpack.c.l.b16 %v126
  %v722 = vunpack.c.h.b16 %v126
  %v723 = vunpack.c.l.b16 %v127
  %v724 = vunpack.c.h.b16 %v127
  %v725 = vunpack.c.l.b16 %v128
  %v726 = vunpack.c.h.b16 %v128
  %v727 = vunpack.c.l.b16 %v129
  %v728 = vunpack.c.h.b16 %v129
  %v729 = vunpack.c.l.b16 %v130
  %v730 = vunpack.c.h.b16 %v130
  %v731 = vunpack.c.l.b16 %v131
  %v732 = vunpack.c.h.b16 %v131
  %v733 = vunpack.c.l.b16 %v132
  %v734 = vunpack.c.h.b16 %v132
  %v735 = vunpack.c.l.b16 %v133
  %v736 = vunpack.c.h.b16 %v133
  %v737 = vunpack.c.l.b16 %v134
  %v738 = vunpack.c.h.b16 %v134
  %v739 = vunpack.c.l.b16 %v135
  %v740 = vunpack.c.h.b16 %v135
  %v741 = vunpack.c.l.b16 %v136
  %v742 = vunpack.c.h.b16 %v136
  %v743 = vunpack.c.l.b16 %v137
  %v744 = vunpack.c.h.b16 %v137
  %v745 = vunpack.c.l.b16 %v138
  %v746 = vunpack.c.h.b16 %v138
  %v747 = vunpack.c.l.b16 %v139
  %v748 = vunpack.c.h.b16 %v139
  %v749 = vunpack.c.l.b16 %v140
  %v750 = vunpack.c.h.b16 %v140
  %v751 = vunpack.c.l.b16 %v141
  %v752 = vunpack.c.h.b16 %v141
  %v753 = vunpack.c.l.b16 %v142
  %v754 = vunpack.c.h.b16 %v142
  %v755 = vunpack.c.l.b16 %v143
  %v756 = vunpack.c.h.b16 %v143
  %v757 = vunpack.c.l.b16 %v144
  %v758 = vunpack.c.h.b16 %v144
  %v759 = vunpack.c.l.b16 %v145
  %v760 = vunpack.c.h.b16 %v145
  %v761 = vunpack.c.l.b16 %v146
  %v762 = vunpack.c.h.b16 %v146
  %v763 = vunpack.c.l.b16 %v147
  %v764 = vunpack.c.h.b16 %v147
  %v765 = vunpack.c.l.b16 %v148
  %v766 = vunpack.c.h.b16 %v148
  %v767 = vunpack.c.l.b16 %v149
  %v768 = vunpack.c.h.b16 %v149
  %v769 = vunpack.c.l.b16 %v150
  %v770 = vunpack.c.h.b16 %v150
  %v771 = vunpack.c.l.b16 %v151
  %v772 = vunpack.c.h.b16 %v151
  %v773 = vunpack.c.l.b16 %v152
  %v774 = vunpack.c.h.b16 %v152
  %v775 = vunpack.c.l.b16 %v153
  %v776 = vunpack.c.h.b16 %v153
  %v777 = vunpack.c.l.b16 %v154
  %v778 = vunpack.c.h.b16 %v154
  %v779 = vunpack.c.l.b16 %v155
  %v780 = vunpack.c.h.b16 %v155
  %v781 = vunpack.c.l.b16 %v156
  %v782 = vunpack.c.h.b16 %v156
  %v783 = vunpack.c.l.b16 %v157
  %v784 = vunpack.c.h.b16 %v157
  %v785 = vunpack.c.l.b16 %v158
  %v786 = vunpack.c.h.b16 %v158
  %v787 = vunpack.c.l.b16 %v159
  %v788 = vunpack.c.h.b16 %v159
  %v789 = vunpack.c.l.b16 %v160
  %v790 = vunpack.c.h.b16 %v160
  %v791 = vunpack.c.l.b16 %v161
  %v792 = vunpack.c.h.b16 %v161
  %v793 = vunpack.c.l.b16 %v162
  %v794 = vunpack.c.h.b16 %v162
  %v795 = vunpack.c.l.b16 %v163
  %v796 = vunpack.c.h.b16 %v163
  %v797 = vunpack.c.l.b16 %v164
  %v798 = vunpack.c.h.b16 %v164
  %v799 = vunpack.c.l.b16 %v165
  %v800 = vunpack.c.h.b16 %v165
  %v801 = vunpack.c.l.b16 %v166
  %v802 = vunpack.c.h.b16 %v166
  %v803 = vunpack.c.l.b16 %v167
  %v804 = vunpack.c.h.b16 %v167
  %v805 = vunpack.c.l.b16 %v168
  %v806 = vunpack.c.h.b16 %v168
  %v807 = vunpack.c.l.b16 %v169
  %v808 = vunpack.c.h.b16 %v169
  %v809 = vunpack.c.l.b16 %v170
  %v810 = vunpack.c.h.b16 %v170
  %v811 = vunpack.c.l.b16 %v171
  %v812 = vunpack.c.h.b16 %v171
  %v813 = vunpack.c.l.b16 %v172
  %v814 = vunpack.c.h.b16 %v172
  %v815 = vunpack.c.l.b16 %v173
  %v816 = vunpack.c.h.b16 %v173
  %v817 = vunpack.c.l.b16 %v174
  %v818 = vunpack.c.h.b16 %v174
  %v819 = vunpack.c.l.b16 %v175
  %v820 = vunpack.c.h.b16 %v175
  %v821 = vunpack.c.l.b16 %v176
  %v822 = vunpack.c.h.b16 %v176
  %v823 = vunpack.c.l.b16 %v177
  %v824 = vunpack.c.h.b16 %v177
  %v825 = vunpack.c.l.b16 %v178
  %v826 = vunpack.c.h.b16 %v178
  %v827 = vunpack.c.l.b16 %v179
  %v828 = vunpack.c.h.b16 %v179
  %v829 = vunpack.c.l.b16 %v180
  %v830 = vunpack.c.h.b16 %v180
  %v831 = vunpack.c.l.b16 %v181
  %v832 = vunpack.c.h.b16 %v181
  %v833 = vunpack.c.l.b16 %v182
  %v834 = vunpack.c.h.b16 %v182
  %v835 = vunpack.c.l.b16 %v183
  %v836 = vunpack.c.h.b16 %v183
  %v837 = vunpack.c.l.b16 %v184
  %v838 = vunpack.c.h.b16 %v184
  %v839 = vunpack.c.l.b16 %v185
  %v840 = vunpack.c.h.b16 %v185
  %v841 = vunpack.c.l.b16 %v186
  %v842 = vunpack.c.h.b16 %v186
  %v843 = vunpack.c.l.b16 %v187
  %v844 = vunpack.c.h.b16 %v187
  %v845 = vunpack.c.l.b16 %v188
  %v846 = vunpack.c.h.b16 %v188
  %v847 = vunpack.c.l.b16 %v189
  %v848 = vunpack.c.h.b16 %v189
  %v849 = vunpack.c.l.b16 %v190
  %v850 = vunpack.c.h.b16 %v190
  %v851 = vunpack.c.l.b16 %v191
  %v852 = vunpack.c.h.b16 %v191
  %v853 = vunpack.c.l.b16 %v192
  %v854 = vunpack.c.h.b16 %v192
  %v855 = vunpack.c.l.b16 %v193
  %v856 = vunpack.c.h.b16 %v193
  %v857 = vunpack.c.l.b16 %v194
  %v858 = vunpack.c.h.b16 %v194
  %v859 = vunpack.c.l.b16 %v195
  %v860 = vunpack.c.h.b16 %v195
  %v861 = vunpack.c.l.b16 %v196
  %v862 = vunpack.c.h.b16 %v196
  %v863 = vunpack.c.l.b16 %v197
  %v864 = vunpack.c.h.b16 %v197
  %v865 = vunpack.c.l.b16 %v198
  %v866 = vunpack.c.h.b16 %v198
  %v867 = vunpack.c.l.b16 %v199
  %v868 = vunpack.c.h.b16 %v199
  %v869 = vunpack.c.l.b16 %v200
  %v870 = vunpack.c.h.b16 %v200
  %v871 = vunpack.c.l.b16 %v201
  %v872 = vunpack.c.h.b16 %v201
  %v873 = vunpack.c.l.b16 %v202
  %v874 = vunpack.c.h.b16 %v202
  %v875 = vunpack.c.l.b16 %v203
  %v876 = vunpack.c.h.b16 %v203
  %v877 = vunpack.c.l.b16 %v204
  %v878 = vunpack.c.h.b16 %v204
  %v879 = vunpack.c.l.b16 %v205
  %v880 = vunpack.c.h.b16 %v205
  %v881 = vunpack.c.l.b16 %v206
  %v882 = vunpack.c.h.b16 %v206
  %v883 = vunpack.c.l.b16 %v207
  %v884 = vunpack.c.h.b16 %v207
  %v885 = vunpack.c.l.b16 %v208
  %v886 = vunpack.c.h.b16 %v208
  %v887 = vunpack.c.l.b16 %v209
  %v888 = vunpack.c.h.b16 %v209
  %v889 = vunpack.c.l.b16 %v210
  %v890 = vunpack.c.h.b16 %v210
  %v891 = vunpack.c.l.b16 %v211
  %v892 = vunpack.c.h.b16 %v211
  %v893 = vunpack.c.l.b16 %v212
  %v894 = vunpack.c.h.b16 %v212
  %v895 = vunpack.c.l.b16 %v213
  %v896 = vunpack.c.h.b16 %v213
  %v897 = vunpack.c.l.b16 %v214
  %v898 = vunpack.c.h.b16 %v214
  %v899 = vunpack.c.l.b16 %v215
  %v900 = vunpack.c.h.b16 %v215
  %v901 = vunpack.c.l.b16 %v216
  %v902 = vunpack.c.h.b16 %v216
  %v903 = vunpack.c.l.b16 %v217
  %v904 = vunpack.c.h.b16 %v217
  %v905 = vunpack.c.l.b16 %v218
  %v906 = vunpack.c.h.b16 %v218
  %v907 = vunpack.c.l.b16 %v219
  %v908 = vunpack.c.h.b16 %v219
  %v909 = vunpack.c.l.b16 %v220
  %v910 = vunpack.c.h.b16 %v220
  %v911 = vunpack.c.l.b16 %v221
  %v912 = vunpack.c.h.b16 %v221
  %v913 = vunpack.c.l.b16 %v222
  %v914 = vunpack.c.h.b16 %v222
  %v915 = vunpack.c.l.b16 %v223
  %v916 = vunpack.c.h.b16 %v223
  %v917 = vunpack.c.l.b16 %v224
  %v918 = vunpack.c.h.b16 %v224
  %v919 = vunpack.c.l.b16 %v225
  %v920 = vunpack.c.h.b16 %v225
  %v921 = vunpack.c.l.b16 %v226
  %v922 = vunpack.c.h.b16 %v226
  %v923 = vunpack.c.l.b16 %v227
  %v924 = vunpack.c.h.b16 %v227
  %v925 = vunpack.c.l.b16 %v228
  %v926 = vunpack.c.h.b16 %v228
  %v927 = vunpack.c.l.b16 %v229
  %v928 = vunpack.c.h.b16 %v229
  %v929 = vunpack.c.l.b16 %v230
  %v930 = vunpack.c.h.b16 %v230
  %v931 = vunpack.c.l.b16 %v231
  %v932 = vunpack.c.h.b16 %v231
  %v933 = vunpack.c.l.b16 %v232
  %v934 = vunpack.c.h.b16 %v232
  %v935 = vpack.c.b16 %v545, %v543
  %v936 = vpack.c.b16 %v546, %v544
  %v937 = vpack.c.b16 %v549, %v547
  %v938 = vpack.c.b16 %v550, %v548
  %v939 = vpack.c.b16 %v553, %v551
  %v940 = vpack.c.b16 %v554, %v552
  %v941 = vpack.c.b16 %v557, %v555
  %v942 = vpack.c.b16 %v558, %v556
  %v943 = vpack.c.b16 %v561, %v559
  %v944 = vpack.c.b16 %v562, %v560
  %v945 = vpack.c.b16 %v565, %v563
  %v946 = vpack.c.b16 %v566, %v564
  %v947 = vpack.c.b16 %v569, %v567
  %v948 = vpack.c.b16 %v570, %v568
  %v949 = vpack.c.b16 %v573, %v571
  %v950 = vpack.c.b16 %v574, %v572
  %v951 = vpack.c.b16 %v577, %v575
  %v952 = vpack.c.b16 %v578, %v576
  %v953 = vpack.c.b16 %v581, %v579
  %v954 = vpack.c.b16 %v582, %v580
  %v955 = vpack.c.b16 %v585, %v583
  %v956 = vpack.c.b16 %v586, %v584
  %v957 = vpack.c.b16 %v589, %v587
  %v958 = vpack.c.b16 %v590, %v588
  %v959 = vpack.c.b16 %v593, %v591
  %v960 = vpack.c.b16 %v594, %v592
  %v961 = vpack.c.b16 %v597, %v595
  %v962 = vpack.c.b16 %v598, %v596
  %v963 = vpack.c.b16 %v601, %v599
  %v964 = vpack.c.b16 %v602, %v600
  %v965 = vpack.c.b16 %v605, %v603
  %v966 = vpack.c.b16 %v606, %v604
  %v967 = vpack.c.b16 %v609, %v607
  %v968 = vpack.c.b16 %v610, %v608
  %v969 = vpack.c.b16 %v613, %v611
  %v970 = vpack.c.b16 %v614, %v612
  %v971 = vpack.c.b16 %v617, %v615
  %v972 = vpack.c.b16 %v618, %v616
  %v973 = vpack.c.b16 %v621, %v619
  %v974 = vpack.c.b16 %v622, %v620
  %v975 = vpack.c.b16 %v625, %v623
  %v976 = vpack.c.b16 %v626, %v624
  %v977 = vpack.c.b16 %v629, %v627
  %v978 = vpack.c.b16 %v630, %v628
  %v979 = vpack.c.b16 %v633, %v631
  %v980 = vpack.c.b16 %v634, %v632
  %v981 = vpack.c.b16 %v637, %v635
  %v982 = vpack.c.b16 %v638, %v636
  %v983 = vpack.c.b16 %v641, %v639
  %v984 = vpack.c.b16 %v642, %v640
  %v985 = vpack.c.b16 %v645, %v643
  %v986 = vpack.c.b16 %v646, %v644
  %v987 = vpack.c.b16 %v649, %v647
  %v988 = vpack.c.b16 %v650, %v648
  %v989 = vpack.c.b16 %v653, %v651
  %v990 = vpack.c.b16 %v654, %v652
  %v991 = vpack.c.b16 %v657, %v655
  %v992 = vpack.c.b16 %v658, %v656
  %v993 = vpack.c.b16 %v661, %v659
  %v994 = vpack.c.b16 %v662, %v660
  %v995 = vpack.c.b16 %v665, %v663
  %v996 = vpack.c.b16 %v666, %v664
  %v997 = vpack.c.b16 %v669, %v667
  %v998 = vpack.c.b16 %v670, %v668
  %v999 = vpack.c.b16 %v673, %v671
  %v1000 = vpack.c.b16 %v674, %v672
  %v1001 = vpack.c.b16 %v677, %v675
  %v1002 = vpack.c.b16 %v678, %v676
  %v1003 = vpack.c.b16 %v681, %v679
  %v1004 = vpack.c.b16 %v682, %v680
  %v1005 = vpack.c.b16 %v685, %v683
  %v1006 = vpack.c.b16 %v686, %v684
  %v1007 = vpack.c.b16 %v689, %v687
  %v1008 = vpack.c.b16 %v690, %v688
  %v1009 = vpack.c.b16 %v693, %v691
  %v1010 = vpack.c.b16 %v694, %v692
  %v1011 = vpack.c.b16 %v697, %v695
  %v1012 = vpack.c.b16 %v698, %v696
  %v1013 = vpack.c.b16 %v701, %v699
  %v1014 = vpack.c.b16 %v702, %v700
  %v1015 = vpack.c.b16 %v705, %v703
  %v1016 = vpack.c.b16 %v706, %v704
  %v1017 = vpack.c.b16 %v709, %v707
  %v1018 = vpack.c.b16 %v710, %v708
  %v1019 = vpack.c.b16 %v713, %v711
  %v1020 = vpack.c.b16 %v714, %v712
  %v1021 = vpack.c.b16 %v717, %v715
  %v1022 = vpack.c.b16 %v718, %v716
  %v1023 = vpack.c.b16 %v721, %v719
  %v1024 = vpack.c.b16 %v722, %v720
  %v1025 = vpack.c.b16 %v725, %v723
  %v1026 = vpack.c.b16 %v726, %v724
  %v1027 = vpack.c.b16 %v729, %v727
  %v1028 = vpack.c.b16 %v730, %v728
  %v1029 = vpack.c.b16 %v733, %v731
  %v1030 = vpack.c.b16 %v734, %v732
  %v1031 = vpack.c.b16 %v737, %v735
  %v1032 = vpack.c.b16 %v738, %v736
  %v1033 = vpack.c.b16 %v741, %v739
  %v1034 = vpack.c.b16 %v742, %v740
  %v1035 = vpack.c.b16 %v745, %v743
  %v1036 = vpack.c.b16 %v746, %v744
  %v1037 = vpack.c.b16 %v749, %v747
  %v1038 = vpack.c.b16 %v750, %v748
  %v1039 = vpack.c.b16 %v753, %v751
  %v1040 = vpack.c.b16 %v754, %v752
  %v1041 = vpack.c.b16 %v757, %v755
  %v1042 = vpack.c.b16 %v758, %v756
  %v1043 = vpack.c.b16 %v761, %v759
  %v1044 = vpack.c.b16 %v762, %v760
  %v1045 = vpack.c.b16 %v765, %v763
  %v1046 = vpack.c.b16 %v766, %v764
  %v1047 = vpack.c.b16 %v769, %v767
  %v1048 = vpack.c.b16 %v770, %v768
  %v1049 = vpack.c.b16 %v773, %v771
  %v1050 = vpack.c.b16 %v774, %v772
  %v1051 = vpack.c.b16 %v777, %v775
  %v1052 = vpack.c.b16 %v778, %v776
  %v1053 = vpack.c.b16 %v781, %v779
  %v1054 = vpack.c.b16 %v782, %v780
  %v1055 = vpack.c.b16 %v785, %v783
  %v1056 = vpack.c.b16 %v786, %v784
  %v1057 = vpack.c.b16 %v789, %v787
  %v1058 = vpack.c.b16 %v790, %v788
  %v1059 = vpack.c.b16 %v793, %v791
  %v1060 = vpack.c.b16 %v794, %v792
  %v1061 = vpack.c.b16 %v797, %v795
  %v1062 = vpack.c.b16 %v798, %v796
  %v1063 = vpack.c.b16 %v801, %v799
  %v1064 = vpack.c.b16 %v802, %v800
  %v1065 = vpack.c.b16 %v805, %v803
  %v1066 = vpack.c.b16 %v806, %v804
  %v1067 = vpack.c.b16 %v809, %v807
  %v1068 = vpack.c.b16 %v810, %v808
  %v1069 = vpack.c.b16 %v813, %v811
  %v1070 = vpack.c.b16 %v814, %v812
  %v1071 = vpack.c.b16 %v817, %v815
  %v1072 = vpack.c.b16 %v818, %v816
  %v1073 = vpack.c.b16 %v821, %v819
  %v1074 = vpack.c.b16 %v822, %v820
  %v1075 = vpack.c.b16 %v825, %v823
  %v1076 = vpack.c.b16 %v826, %v824
  %v1077 = vpack.c.b16 %v829, %v827
  %v1078 = vpack.c.b16 %v830, %v828
  %v1079 = vpack.c.b16 %v833, %v831
  %v1080 = vpack.c.b16 %v834, %v832
  %v1081 = vpack.c.b16 %v837, %v835
  %v1082 = vpack.c.b16 %v838, %v836
  %v1083 = vpack.c.b16 %v841, %v839
  %v1084 = vpack.c.b16 %v842, %v840
  %v1085 = vpack.c.b16 %v845, %v843
  %v1086 = vpack.c.b16 %v846, %v844
  %v1087 = vpack.c.b16 %v849, %v847
  %v1088 = vpack.c.b16 %v850, %v848
  %v1089 = vpack.c.b16 %v853, %v851
  %v1090 = vpack.c.b16 %v854, %v852
  %v1091 = vpack.c.b16 %v857, %v855
  %v1092 = vpack.c.b16 %v858, %v856
  %v1093 = vpack.c.b16 %v861, %v859
  %v1094 = vpack.c.b16 %v862, %v860
  %v1095 = vpack.c.b16 %v865, %v863
  %v1096 = vpack.c.b16 %v866, %v864
  %v1097 = vpack.c.b16 %v869, %v867
  %v1098 = vpack.c.b16 %v870, %v868
  %v1099 = vpack.c.b16 %v873, %v871
  %v1100 = vpack.c.b16 %v874, %v872
  %v1101 = vpack.c.b16 %v877, %v875
  %v1102 = vpack.c.b16 %v878, %v876
  %v1103 = vpack.c.b16 %v881, %v879
  %v1104 = vpack.c.b16 %v882, %v880
  %v1105 = vpack.c.b16 %v885, %v883
  %v1106 = vpack.c.b16 %v886, %v884
  %v1107 = vpack.c.b16 %v889, %v887
  %v1108 = vpack.c.b16 %v890, %v888
  %v1109 = vpack.c.b16 %v893, %v891
  %v1110 = vpack.c.b16 %v894, %v892
  %v1111 = vpack.c.b16 %v897, %v895
  %v1112 = vpack.c.b16 %v898, %v896
  %v1113 = vpack.c.b16 %v901, %v899
  %v1114 = vpack.c.b16 %v902, %v900
  %v1115 = vpack.c.b16 %v905, %v903
  %v1116 = vpack.c.b16 %v906, %v904
  %v1117 = vpack.c.b16 %v909, %v907
  %v1118 = vpack.c.b16 %v910, %v908
  %v1119 = vpack.c.b16 %v913, %v911
  %v1120 = vpack.c.b16 %v914, %v912
  %v1121 = vpack.c.b16 %v917, %v915
  %v1122 = vpack.c.b16 %v918, %v916
  %v1123 = vpack.c.b16 %v921, %v919
  %v1124 = vpack.c.b16 %v922, %v920
  %v1125 = vpack.c.b16 %v925, %v923
  %v1126 = vpack.c.b16 %v926, %v924
  %v1127 = vpack.c.b16 %v929, %v927
  %v1128 = vpack.c.b16 %v930, %v928
  %v1129 = vpack.c.b16 %v933, %v931
  %v1130 = vpack.c.b16 %v934, %v932
  %vm1327 = vcmask 261120
  %v1329 = vsel %vm1327, %v325, 0
  %1331 = vmatprep.subr.bf16.mxu0 %v950
  %1332 = vmatpush1.bf16.msra.mxu0 %v949
  %1333 = vmatprep.subr.bf16.mxu0 %v948
  %1334 = vmatpush1.bf16.msra.mxu0 %v947
  %1335 = vmatprep.subr.bf16.mxu0 %v946
  %1336 = vmatpush1.bf16.msra.mxu0 %v945
  %1337 = vmatprep.subr.bf16.mxu0 %v944
  %1338 = vmatpush1.bf16.msra.mxu0 %v943
  %1339 = vmatprep.subr.bf16.mxu0 %v942
  %1340 = vmatpush1.bf16.msra.mxu0 %v941
  %1341 = vmatprep.subr.bf16.mxu0 %v940
  %1342 = vmatpush1.bf16.msra.mxu0 %v939
  %1343 = vmatprep.subr.bf16.mxu0 %v938
  %1344 = vmatpush1.bf16.msra.mxu0 %v937
  %1345 = vmatprep.subr.bf16.mxu0 %v936
  %1346 = vmatpush1.bf16.msra.mxu0 %v935
  %1347 = vmatprep.subr.bf16.mxu0 %v966
  %1348 = vmatpush2.bf16.msra.mxu0 %v965
  %1349 = vmatprep.subr.bf16.mxu0 %v964
  %1350 = vmatpush2.bf16.msra.mxu0 %v963
  %1351 = vmatprep.subr.bf16.mxu0 %v962
  %1352 = vmatpush2.bf16.msra.mxu0 %v961
  %1353 = vmatprep.subr.bf16.mxu0 %v960
  %1354 = vmatpush2.bf16.msra.mxu0 %v959
  %1355 = vmatprep.subr.bf16.mxu0 %v958
  %1356 = vmatpush2.bf16.msra.mxu0 %v957
  %1357 = vmatprep.subr.bf16.mxu0 %v956
  %1358 = vmatpush2.bf16.msra.mxu0 %v955
  %1359 = vmatprep.subr.bf16.mxu0 %v954
  %1360 = vmatpush2.bf16.msra.mxu0 %v953
  %1361 = vmatprep.subr.bf16.mxu0 %v952
  %1362 = vmatpush2.bf16.msra.mxu0 %v951
  %1363 = vmatprep.mubr.bf16.mxu0 %v284
  %1364 = vmatmul.mubr.bf16.gmra.mxu0 %v270
  %v1365 = vpop.f32.mrf.mxu0
  %v1366 = vadd.f32 %v238, %v1365
  %v1367 = vpop.f32.mrf.mxu0
  %v1368 = vadd.f32 %v242, %v1367
  %v1369 = vpop.f32.mrf.mxu0
  %v1370 = vpop.f32.mrf.mxu0
  %1371 = vdwg.mxu0
  %1372 = vmatprep.subr.bf16.mxu0 %v982
  %1373 = vmatpush1.bf16.msra.mxu0 %v981
  %1374 = vmatprep.subr.bf16.mxu0 %v980
  %1375 = vmatpush1.bf16.msra.mxu0 %v979
  %1376 = vmatprep.subr.bf16.mxu0 %v978
  %1377 = vmatpush1.bf16.msra.mxu0 %v977
  %1378 = vmatprep.subr.bf16.mxu0 %v976
  %1379 = vmatpush1.bf16.msra.mxu0 %v975
  %1380 = vmatprep.subr.bf16.mxu0 %v974
  %1381 = vmatpush1.bf16.msra.mxu0 %v973
  %1382 = vmatprep.subr.bf16.mxu0 %v972
  %1383 = vmatpush1.bf16.msra.mxu0 %v971
  %1384 = vmatprep.subr.bf16.mxu0 %v970
  %1385 = vmatpush1.bf16.msra.mxu0 %v969
  %1386 = vmatprep.subr.bf16.mxu0 %v968
  %1387 = vmatpush1.bf16.msra.mxu0 %v967
  %1388 = vmatprep.subr.bf16.mxu0 %v998
  %1389 = vmatpush2.bf16.msra.mxu0 %v997
  %1390 = vmatprep.subr.bf16.mxu0 %v996
  %1391 = vmatpush2.bf16.msra.mxu0 %v995
  %1392 = vmatprep.subr.bf16.mxu0 %v994
  %1393 = vmatpush2.bf16.msra.mxu0 %v993
  %1394 = vmatprep.subr.bf16.mxu0 %v992
  %1395 = vmatpush2.bf16.msra.mxu0 %v991
  %1396 = vmatprep.subr.bf16.mxu0 %v990
  %1397 = vmatpush2.bf16.msra.mxu0 %v989
  %1398 = vmatprep.subr.bf16.mxu0 %v988
  %1399 = vmatpush2.bf16.msra.mxu0 %v987
  %1400 = vmatprep.subr.bf16.mxu0 %v986
  %1401 = vmatpush2.bf16.msra.mxu0 %v985
  %1402 = vmatprep.subr.bf16.mxu0 %v984
  %1403 = vmatpush2.bf16.msra.mxu0 %v983
  %1404 = vmatprep.mubr.bf16.mxu0 %v294
  %1405 = vmatmul.mubr.bf16.gmra.mxu0 %v292
  %v1406 = vpop.f32.mrf.mxu0
  %v1407 = vadd.f32 %v1366, %v1406
  %v1408 = vpop.f32.mrf.mxu0
  %v1409 = vadd.f32 %v1368, %v1408
  %v1410 = vpop.f32.mrf.mxu0
  %v1411 = vpop.f32.mrf.mxu0
  %1412 = vdwg.mxu0
  %1413 = vmatprep.subr.bf16.mxu0 %v1014
  %1414 = vmatpush1.bf16.msra.mxu0 %v1013
  %1415 = vmatprep.subr.bf16.mxu0 %v1012
  %1416 = vmatpush1.bf16.msra.mxu0 %v1011
  %1417 = vmatprep.subr.bf16.mxu0 %v1010
  %1418 = vmatpush1.bf16.msra.mxu0 %v1009
  %1419 = vmatprep.subr.bf16.mxu0 %v1008
  %1420 = vmatpush1.bf16.msra.mxu0 %v1007
  %1421 = vmatprep.subr.bf16.mxu0 %v1006
  %1422 = vmatpush1.bf16.msra.mxu0 %v1005
  %1423 = vmatprep.subr.bf16.mxu0 %v1004
  %1424 = vmatpush1.bf16.msra.mxu0 %v1003
  %1425 = vmatprep.subr.bf16.mxu0 %v1002
  %1426 = vmatpush1.bf16.msra.mxu0 %v1001
  %1427 = vmatprep.subr.bf16.mxu0 %v1000
  %1428 = vmatpush1.bf16.msra.mxu0 %v999
  %1429 = vmatprep.subr.bf16.mxu0 %v1030
  %1430 = vmatpush2.bf16.msra.mxu0 %v1029
  %1431 = vmatprep.subr.bf16.mxu0 %v1028
  %1432 = vmatpush2.bf16.msra.mxu0 %v1027
  %1433 = vmatprep.subr.bf16.mxu0 %v1026
  %1434 = vmatpush2.bf16.msra.mxu0 %v1025
  %1435 = vmatprep.subr.bf16.mxu0 %v1024
  %1436 = vmatpush2.bf16.msra.mxu0 %v1023
  %1437 = vmatprep.subr.bf16.mxu0 %v1022
  %1438 = vmatpush2.bf16.msra.mxu0 %v1021
  %1439 = vmatprep.subr.bf16.mxu0 %v1020
  %1440 = vmatpush2.bf16.msra.mxu0 %v1019
  %1441 = vmatprep.subr.bf16.mxu0 %v1018
  %1442 = vmatpush2.bf16.msra.mxu0 %v1017
  %1443 = vmatprep.subr.bf16.mxu0 %v1016
  %1444 = vmatpush2.bf16.msra.mxu0 %v1015
  %1445 = vmatprep.mubr.bf16.mxu0 %v291
  %1446 = vmatmul.mubr.bf16.gmra.mxu0 %v277
  %v1447 = vpop.f32.mrf.mxu0
  %v1448 = vadd.f32 %v1407, %v1447
  %v1449 = vpop.f32.mrf.mxu0
  %v1450 = vadd.f32 %v1409, %v1449
  %v1451 = vpop.f32.mrf.mxu0
  %v1452 = vpop.f32.mrf.mxu0
  %1453 = vdwg.mxu0
  %1454 = vmatprep.subr.bf16.mxu0 %v1046
  %1455 = vmatpush1.bf16.msra.mxu0 %v1045
  %1456 = vmatprep.subr.bf16.mxu0 %v1044
  %1457 = vmatpush1.bf16.msra.mxu0 %v1043
  %1458 = vmatprep.subr.bf16.mxu0 %v1042
  %1459 = vmatpush1.bf16.msra.mxu0 %v1041
  %1460 = vmatprep.subr.bf16.mxu0 %v1040
  %1461 = vmatpush1.bf16.msra.mxu0 %v1039
  %1462 = vmatprep.subr.bf16.mxu0 %v1038
  %1463 = vmatpush1.bf16.msra.mxu0 %v1037
  %1464 = vmatprep.subr.bf16.mxu0 %v1036
  %1465 = vmatpush1.bf16.msra.mxu0 %v1035
  %1466 = vmatprep.subr.bf16.mxu0 %v1034
  %1467 = vmatpush1.bf16.msra.mxu0 %v1033
  %1468 = vmatprep.subr.bf16.mxu0 %v1032
  %1469 = vmatpush1.bf16.msra.mxu0 %v1031
  %1470 = vmatprep.subr.bf16.mxu0 %v1062
  %1471 = vmatpush2.bf16.msra.mxu0 %v1061
  %1472 = vmatprep.subr.bf16.mxu0 %v1060
  %1473 = vmatpush2.bf16.msra.mxu0 %v1059
  %1474 = vmatprep.subr.bf16.mxu0 %v1058
  %1475 = vmatpush2.bf16.msra.mxu0 %v1057
  %1476 = vmatprep.subr.bf16.mxu0 %v1056
  %1477 = vmatpush2.bf16.msra.mxu0 %v1055
  %1478 = vmatprep.subr.bf16.mxu0 %v1054
  %1479 = vmatpush2.bf16.msra.mxu0 %v1053
  %1480 = vmatprep.subr.bf16.mxu0 %v1052
  %1481 = vmatpush2.bf16.msra.mxu0 %v1051
  %1482 = vmatprep.subr.bf16.mxu0 %v1050
  %1483 = vmatpush2.bf16.msra.mxu0 %v1049
  %1484 = vmatprep.subr.bf16.mxu0 %v1048
  %1485 = vmatpush2.bf16.msra.mxu0 %v1047
  %1486 = vmatprep.mubr.bf16.mxu0 %v295
  %1487 = vmatmul.mubr.bf16.gmra.mxu0 %v293
  %v1488 = vpop.f32.mrf.mxu0
  %v1489 = vadd.f32 %v1448, %v1488
  %v1490 = vpop.f32.mrf.mxu0
  %v1491 = vadd.f32 %v1450, %v1490
  %v1492 = vpop.f32.mrf.mxu0
  %v1493 = vpop.f32.mrf.mxu0
  %1494 = vdwg.mxu0
  %1495 = vmatprep.subr.bf16.mxu0 %v1078
  %1496 = vmatpush1.bf16.msra.mxu0 %v1077
  %1497 = vmatprep.subr.bf16.mxu0 %v1076
  %1498 = vmatpush1.bf16.msra.mxu0 %v1075
  %1499 = vmatprep.subr.bf16.mxu0 %v1074
  %1500 = vmatpush1.bf16.msra.mxu0 %v1073
  %1501 = vmatprep.subr.bf16.mxu0 %v1072
  %1502 = vmatpush1.bf16.msra.mxu0 %v1071
  %1503 = vmatprep.subr.bf16.mxu0 %v1070
  %1504 = vmatpush1.bf16.msra.mxu0 %v1069
  %1505 = vmatprep.subr.bf16.mxu0 %v1068
  %1506 = vmatpush1.bf16.msra.mxu0 %v1067
  %1507 = vmatprep.subr.bf16.mxu0 %v1066
  %1508 = vmatpush1.bf16.msra.mxu0 %v1065
  %1509 = vmatprep.subr.bf16.mxu0 %v1064
  %1510 = vmatpush1.bf16.msra.mxu0 %v1063
  %1511 = vmatprep.subr.bf16.mxu0 %v1094
  %1512 = vmatpush2.bf16.msra.mxu0 %v1093
  %1513 = vmatprep.subr.bf16.mxu0 %v1092
  %1514 = vmatpush2.bf16.msra.mxu0 %v1091
  %1515 = vmatprep.subr.bf16.mxu0 %v1090
  %1516 = vmatpush2.bf16.msra.mxu0 %v1089
  %1517 = vmatprep.subr.bf16.mxu0 %v1088
  %1518 = vmatpush2.bf16.msra.mxu0 %v1087
  %1519 = vmatprep.subr.bf16.mxu0 %v1086
  %1520 = vmatpush2.bf16.msra.mxu0 %v1085
  %1521 = vmatprep.subr.bf16.mxu0 %v1084
  %1522 = vmatpush2.bf16.msra.mxu0 %v1083
  %1523 = vmatprep.subr.bf16.mxu0 %v1082
  %1524 = vmatpush2.bf16.msra.mxu0 %v1081
  %1525 = vmatprep.subr.bf16.mxu0 %v1080
  %1526 = vmatpush2.bf16.msra.mxu0 %v1079
  %1527 = vmatprep.mubr.bf16.mxu0 %v332
  %1528 = vmatmul.mubr.bf16.gmra.mxu0 %v318
  %v1529 = vpop.f32.mrf.mxu0
  %v1530 = vadd.f32 %v1489, %v1529
  %v1531 = vpop.f32.mrf.mxu0
  %v1532 = vadd.f32 %v1491, %v1531
  %v1533 = vpop.f32.mrf.mxu0
  %v1534 = vpop.f32.mrf.mxu0
  %1535 = vdwg.mxu0
  %1536 = vmatprep.subr.bf16.mxu0 %v1110
  %1537 = vmatpush1.bf16.msra.mxu0 %v1109
  %1538 = vmatprep.subr.bf16.mxu0 %v1108
  %1539 = vmatpush1.bf16.msra.mxu0 %v1107
  %1540 = vmatprep.subr.bf16.mxu0 %v1106
  %1541 = vmatpush1.bf16.msra.mxu0 %v1105
  %1542 = vmatprep.subr.bf16.mxu0 %v1104
  %1543 = vmatpush1.bf16.msra.mxu0 %v1103
  %1544 = vmatprep.subr.bf16.mxu0 %v1102
  %1545 = vmatpush1.bf16.msra.mxu0 %v1101
  %1546 = vmatprep.subr.bf16.mxu0 %v1100
  %1547 = vmatpush1.bf16.msra.mxu0 %v1099
  %1548 = vmatprep.subr.bf16.mxu0 %v1098
  %1549 = vmatpush1.bf16.msra.mxu0 %v1097
  %1550 = vmatprep.subr.bf16.mxu0 %v1096
  %1551 = vmatpush1.bf16.msra.mxu0 %v1095
  %1552 = vmatprep.subr.bf16.mxu0 %v1126
  %1553 = vmatpush2.bf16.msra.mxu0 %v1125
  %1554 = vmatprep.subr.bf16.mxu0 %v1124
  %1555 = vmatpush2.bf16.msra.mxu0 %v1123
  %1556 = vmatprep.subr.bf16.mxu0 %v1122
  %1557 = vmatpush2.bf16.msra.mxu0 %v1121
  %1558 = vmatprep.subr.bf16.mxu0 %v1120
  %1559 = vmatpush2.bf16.msra.mxu0 %v1119
  %1560 = vmatprep.subr.bf16.mxu0 %v1118
  %1561 = vmatpush2.bf16.msra.mxu0 %v1117
  %1562 = vmatprep.subr.bf16.mxu0 %v1116
  %1563 = vmatpush2.bf16.msra.mxu0 %v1115
  %1564 = vmatprep.subr.bf16.mxu0 %v1114
  %1565 = vmatpush2.bf16.msra.mxu0 %v1113
  %1566 = vmatprep.subr.bf16.mxu0 %v1112
  %1567 = vmatpush2.bf16.msra.mxu0 %v1111
  %1568 = vmatprep.mubr.bf16.mxu0 %v334
  %1569 = vmatmul.mubr.bf16.gmra.mxu0 %v333
  %v1570 = vpop.f32.mrf.mxu0
  %v1571 = vadd.f32 %v1530, %v1570
  %v1572 = vpop.f32.mrf.mxu0
  %v1573 = vadd.f32 %v1532, %v1572
  %v1574 = vpop.f32.mrf.mxu0
  %v1575 = vpop.f32.mrf.mxu0
  %1576 = vdwg.mxu0
  %1577 = vmatprep.subr.bf16.mxu0 0
  %1578 = vmatpush1.bf16.msra.mxu0 0
  %1579 = vmatprep.subr.bf16.mxu0 0
  %1580 = vmatpush1.bf16.msra.mxu0 0
  %1581 = vmatprep.subr.bf16.mxu0 0
  %1582 = vmatpush1.bf16.msra.mxu0 0
  %1583 = vmatprep.subr.bf16.mxu0 0
  %1584 = vmatpush1.bf16.msra.mxu0 0
  %1585 = vmatprep.subr.bf16.mxu0 0
  %1586 = vmatpush1.bf16.msra.mxu0 0
  %1587 = vmatprep.subr.bf16.mxu0 0
  %1588 = vmatpush1.bf16.msra.mxu0 0
  %1589 = vmatprep.subr.bf16.mxu0 %v1130
  %1590 = vmatpush1.bf16.msra.mxu0 %v1129
  %1591 = vmatprep.subr.bf16.mxu0 %v1128
  %1592 = vmatpush1.bf16.msra.mxu0 %v1127
  %1593 = vmatprep.subr.bf16.mxu0 0
  %1594 = vmatpush2.bf16.msra.mxu0 0
  %1595 = vmatprep.subr.bf16.mxu0 0
  %1596 = vmatpush2.bf16.msra.mxu0 0
  %1597 = vmatprep.subr.bf16.mxu0 0
  %1598 = vmatpush2.bf16.msra.mxu0 0
  %1599 = vmatprep.subr.bf16.mxu0 0
  %1600 = vmatpush2.bf16.msra.mxu0 0
  %1601 = vmatprep.subr.bf16.mxu0 0
  %1602 = vmatpush2.bf16.msra.mxu0 0
  %1603 = vmatprep.subr.bf16.mxu0 0
  %1604 = vmatpush2.bf16.msra.mxu0 0
  %1605 = vmatprep.subr.bf16.mxu0 0
  %1606 = vmatpush2.bf16.msra.mxu0 0
  %1607 = vmatprep.subr.bf16.mxu0 0
  %1608 = vmatpush2.bf16.msra.mxu0 0
  %1609 = vmatprep.mubr.bf16.mxu0 0
  %1610 = vmatmul.mubr.bf16.gmra.mxu0 %v1329
  %v1611 = vpop.f32.mrf.mxu0
  %v1612 = vadd.f32 %v1571, %v1611
  %v1613 = vpop.f32.mrf.mxu0
  %v1614 = vadd.f32 %v1573, %v1613
  %v1615 = vpop.f32.mrf.mxu0
  %v1616 = vpop.f32.mrf.mxu0
  %1617 = vdwg.mxu0
  %vm1618 = vcmp.ge.f32.partialorder %v1612, 0.0
  %vm1619 = vcmp.ge.f32.partialorder %v1614, 0.0
  %v1620 = vmul.f32 %v1612, 0.01
  %v1621 = vmul.f32 %v1614, 0.01
  %v1622 = vsel %vm1618, %v1612, %v1620
  %v1623 = vsel %vm1619, %v1614, %v1621
  %v1624 = vpack.c.bf16 %v1622, %v1622
  %v1625 = vpack.c.bf16 %v1623, %v1623
  %v1626 = vld [vmem:[%s3] sm:$0xff]
  %v1627 = vld [vmem:[%s3 + $0x8] sm:$0xff]
  %v1628 = vld [vmem:[%s3 + $0x10] sm:$0xff]
  %v1629 = vld [vmem:[%s3 + $0x18] sm:$0xff]
  %v1630 = vld [vmem:[%s3 + $0x20] sm:$0xff]
  %v1631 = vld [vmem:[%s3 + $0x28] sm:$0xff]
  %v1632 = vld [vmem:[%s3 + $0x30] sm:$0xff]
  %v1633 = vld [vmem:[%s3 + $0x38] sm:$0xff]
  %v1634 = vld [vmem:[%s3 + $0x40] sm:$0xff]
  %v1635 = vld [vmem:[%s3 + $0x48] sm:$0xff]
  %v1636 = vld [vmem:[%s3 + $0x50] sm:$0xff]
  %v1637 = vld [vmem:[%s3 + $0x58] sm:$0xff]
  %v1638 = vld [vmem:[%s3 + $0x60] sm:$0xff]
  %v1639 = vld [vmem:[%s3 + $0x68] sm:$0xff]
  %v1640 = vld [vmem:[%s3 + $0x70] sm:$0xff]
  %v1641 = vld [vmem:[%s3 + $0x78] sm:$0xff]
  %v1642 = vld [vmem:[%s3 + $0x80] sm:$0xff]
  %v1643 = vld [vmem:[%s3 + $0x88] sm:$0xff]
  %v1644 = vld [vmem:[%s3 + $0x90] sm:$0xff]
  %v1645 = vld [vmem:[%s3 + $0x98] sm:$0xff]
  %v1646 = vld [vmem:[%s3 + $0xa0] sm:$0xff]
  %v1647 = vld [vmem:[%s3 + $0xa8] sm:$0xff]
  %v1648 = vld [vmem:[%s3 + $0xb0] sm:$0xff]
  %v1649 = vld [vmem:[%s3 + $0xb8] sm:$0xff]
  %v1650 = vld [vmem:[%s3 + $0xc0] sm:$0xff]
  %v1651 = vld [vmem:[%s3 + $0xc8] sm:$0xff]
  %v1652 = vld [vmem:[%s3 + $0xd0] sm:$0xff]
  %v1653 = vld [vmem:[%s3 + $0xd8] sm:$0xff]
  %v1654 = vld [vmem:[%s3 + $0xe0] sm:$0xff]
  %v1655 = vld [vmem:[%s3 + $0xe8] sm:$0xff]
  %v1656 = vld [vmem:[%s3 + $0xf0] sm:$0xff]
  %v1657 = vld [vmem:[%s3 + $0xf8] sm:$0xff]
  %v1658 = vld [vmem:[%s4] sm:$0x3]
  %v1660 = vlaneseq
  %v1661 = vshrl.u32 %v1660, 7
  %v1662 = vsub.s32 0, %v1661
  %v1663 = vrot.slane %v1658, %v1662
  %v1664 = vlaneseq
  %v1665 = vshrl.u32 %v1664, 7
  %v1666 = vsub.s32 1, %v1665
  %v1667 = vrot.slane %v1658, %v1666
  %v1702 = vunpack.c.l.b16 %v1626
  %v1703 = vunpack.c.h.b16 %v1626
  %v1704 = vunpack.c.l.b16 %v1627
  %v1705 = vunpack.c.h.b16 %v1627
  %v1706 = vunpack.c.l.b16 %v1628
  %v1707 = vunpack.c.h.b16 %v1628
  %v1708 = vunpack.c.l.b16 %v1629
  %v1709 = vunpack.c.h.b16 %v1629
  %v1710 = vunpack.c.l.b16 %v1630
  %v1711 = vunpack.c.h.b16 %v1630
  %v1712 = vunpack.c.l.b16 %v1631
  %v1713 = vunpack.c.h.b16 %v1631
  %v1714 = vunpack.c.l.b16 %v1632
  %v1715 = vunpack.c.h.b16 %v1632
  %v1716 = vunpack.c.l.b16 %v1633
  %v1717 = vunpack.c.h.b16 %v1633
  %v1718 = vunpack.c.l.b16 %v1634
  %v1719 = vunpack.c.h.b16 %v1634
  %v1720 = vunpack.c.l.b16 %v1635
  %v1721 = vunpack.c.h.b16 %v1635
  %v1722 = vunpack.c.l.b16 %v1636
  %v1723 = vunpack.c.h.b16 %v1636
  %v1724 = vunpack.c.l.b16 %v1637
  %v1725 = vunpack.c.h.b16 %v1637
  %v1726 = vunpack.c.l.b16 %v1638
  %v1727 = vunpack.c.h.b16 %v1638
  %v1728 = vunpack.c.l.b16 %v1639
  %v1729 = vunpack.c.h.b16 %v1639
  %v1730 = vunpack.c.l.b16 %v1640
  %v1731 = vunpack.c.h.b16 %v1640
  %v1732 = vunpack.c.l.b16 %v1641
  %v1733 = vunpack.c.h.b16 %v1641
  %v1734 = vunpack.c.l.b16 %v1642
  %v1735 = vunpack.c.h.b16 %v1642
  %v1736 = vunpack.c.l.b16 %v1643
  %v1737 = vunpack.c.h.b16 %v1643
  %v1738 = vunpack.c.l.b16 %v1644
  %v1739 = vunpack.c.h.b16 %v1644
  %v1740 = vunpack.c.l.b16 %v1645
  %v1741 = vunpack.c.h.b16 %v1645
  %v1742 = vunpack.c.l.b16 %v1646
  %v1743 = vunpack.c.h.b16 %v1646
  %v1744 = vunpack.c.l.b16 %v1647
  %v1745 = vunpack.c.h.b16 %v1647
  %v1746 = vunpack.c.l.b16 %v1648
  %v1747 = vunpack.c.h.b16 %v1648
  %v1748 = vunpack.c.l.b16 %v1649
  %v1749 = vunpack.c.h.b16 %v1649
  %v1750 = vunpack.c.l.b16 %v1650
  %v1751 = vunpack.c.h.b16 %v1650
  %v1752 = vunpack.c.l.b16 %v1651
  %v1753 = vunpack.c.h.b16 %v1651
  %v1754 = vunpack.c.l.b16 %v1652
  %v1755 = vunpack.c.h.b16 %v1652
  %v1756 = vunpack.c.l.b16 %v1653
  %v1757 = vunpack.c.h.b16 %v1653
  %v1758 = vunpack.c.l.b16 %v1654
  %v1759 = vunpack.c.h.b16 %v1654
  %v1760 = vunpack.c.l.b16 %v1655
  %v1761 = vunpack.c.h.b16 %v1655
  %v1762 = vunpack.c.l.b16 %v1656
  %v1763 = vunpack.c.h.b16 %v1656
  %v1764 = vunpack.c.l.b16 %v1657
  %v1765 = vunpack.c.h.b16 %v1657
  %v1766 = vpack.c.b16 %v1704, %v1702
  %v1767 = vpack.c.b16 %v1705, %v1703
  %v1768 = vpack.c.b16 %v1708, %v1706
  %v1769 = vpack.c.b16 %v1709, %v1707
  %v1770 = vpack.c.b16 %v1712, %v1710
  %v1771 = vpack.c.b16 %v1713, %v1711
  %v1772 = vpack.c.b16 %v1716, %v1714
  %v1773 = vpack.c.b16 %v1717, %v1715
  %v1774 = vpack.c.b16 %v1720, %v1718
  %v1775 = vpack.c.b16 %v1721, %v1719
  %v1776 = vpack.c.b16 %v1724, %v1722
  %v1777 = vpack.c.b16 %v1725, %v1723
  %v1778 = vpack.c.b16 %v1728, %v1726
  %v1779 = vpack.c.b16 %v1729, %v1727
  %v1780 = vpack.c.b16 %v1732, %v1730
  %v1781 = vpack.c.b16 %v1733, %v1731
  %v1782 = vpack.c.b16 %v1736, %v1734
  %v1783 = vpack.c.b16 %v1737, %v1735
  %v1784 = vpack.c.b16 %v1740, %v1738
  %v1785 = vpack.c.b16 %v1741, %v1739
  %v1786 = vpack.c.b16 %v1744, %v1742
  %v1787 = vpack.c.b16 %v1745, %v1743
  %v1788 = vpack.c.b16 %v1748, %v1746
  %v1789 = vpack.c.b16 %v1749, %v1747
  %v1790 = vpack.c.b16 %v1752, %v1750
  %v1791 = vpack.c.b16 %v1753, %v1751
  %v1792 = vpack.c.b16 %v1756, %v1754
  %v1793 = vpack.c.b16 %v1757, %v1755
  %v1794 = vpack.c.b16 %v1760, %v1758
  %v1795 = vpack.c.b16 %v1761, %v1759
  %v1796 = vpack.c.b16 %v1764, %v1762
  %v1797 = vpack.c.b16 %v1765, %v1763
  %1830 = vmatprep.subr.bf16.mxu0 %v1781
  %1831 = vmatpush1.bf16.msra.mxu0 %v1780
  %1832 = vmatprep.subr.bf16.mxu0 %v1779
  %1833 = vmatpush1.bf16.msra.mxu0 %v1778
  %1834 = vmatprep.subr.bf16.mxu0 %v1777
  %1835 = vmatpush1.bf16.msra.mxu0 %v1776
  %1836 = vmatprep.subr.bf16.mxu0 %v1775
  %1837 = vmatpush1.bf16.msra.mxu0 %v1774
  %1838 = vmatprep.subr.bf16.mxu0 %v1773
  %1839 = vmatpush1.bf16.msra.mxu0 %v1772
  %1840 = vmatprep.subr.bf16.mxu0 %v1771
  %1841 = vmatpush1.bf16.msra.mxu0 %v1770
  %1842 = vmatprep.subr.bf16.mxu0 %v1769
  %1843 = vmatpush1.bf16.msra.mxu0 %v1768
  %1844 = vmatprep.subr.bf16.mxu0 %v1767
  %1845 = vmatpush1.bf16.msra.mxu0 %v1766
  %1846 = vmatprep.subr.bf16.mxu0 %v1797
  %1847 = vmatpush2.bf16.msra.mxu0 %v1796
  %1848 = vmatprep.subr.bf16.mxu0 %v1795
  %1849 = vmatpush2.bf16.msra.mxu0 %v1794
  %1850 = vmatprep.subr.bf16.mxu0 %v1793
  %1851 = vmatpush2.bf16.msra.mxu0 %v1792
  %1852 = vmatprep.subr.bf16.mxu0 %v1791
  %1853 = vmatpush2.bf16.msra.mxu0 %v1790
  %1854 = vmatprep.subr.bf16.mxu0 %v1789
  %1855 = vmatpush2.bf16.msra.mxu0 %v1788
  %1856 = vmatprep.subr.bf16.mxu0 %v1787
  %1857 = vmatpush2.bf16.msra.mxu0 %v1786
  %1858 = vmatprep.subr.bf16.mxu0 %v1785
  %1859 = vmatpush2.bf16.msra.mxu0 %v1784
  %1860 = vmatprep.subr.bf16.mxu0 %v1783
  %1861 = vmatpush2.bf16.msra.mxu0 %v1782
  %1862 = vmatprep.mubr.bf16.mxu0 %v1625
  %1863 = vmatmul.mubr.bf16.gmra.mxu0 %v1624
  %v1864 = vpop.f32.mrf.mxu0
  %v1865 = vadd.f32 %v1663, %v1864
  %v1866 = vpop.f32.mrf.mxu0
  %v1867 = vadd.f32 %v1667, %v1866
  %v1868 = vpop.f32.mrf.mxu0
  %v1869 = vpop.f32.mrf.mxu0
  %1870 = vdwg.mxu0
  %v1871 = vlaneseq
  %v1872 = vand.u32 %v1871, 127
  %v1873 = vadd.s32 %v1872, 128
  %vm1874 = vcmp.ge.s32.totalorder %v1872, 100
  %vm1875 = vcmp.ge.s32.totalorder %v1873, 100
  %vm1876 = vcmp.lt.s32.totalorder %v1872, 200
  %vm1877 = vcmp.lt.s32.totalorder %v1873, 200
  %vm1878 = vmand %vm1874, %vm1876
  %vm1879 = vmand %vm1875, %vm1877
  %v1880 = vmax.f32 %v1865, -20.0
  %v1881 = vmax.f32 %v1867, -20.0
  %v1882 = vsel %vm1878, %v1880, %v1865
  %v1883 = vsel %vm1879, %v1881, %v1867
  %v1886 = vcombine.low %v1882, %v1883
  %v1888 = vunpack.c.l.s4 1983009808
  %v1889 = vunpack.c.0.s8 %v1888
  %v1890 = vlaneseq
  %v1891 = vshrl.u32 %v1890, 7
  %v1892 = vsub.s32 %v1889, %v1891
  %v1893 = vrot.slane %v1886, %v1892
  %1895 = vst [vmem:[%s9] sm:$0xf] %v1893
  %v1896 = vpack.c.bf16 %v1865, %v1865
  %v1897 = vpack.c.bf16 %v1867, %v1867
  %v1898 = vld [vmem:[%s5] sm:$0xff]
  %v1899 = vld [vmem:[%s5 + $0x8] sm:$0xff]
  %v1900 = vld [vmem:[%s5 + $0x10] sm:$0xff]
  %v1901 = vld [vmem:[%s5 + $0x18] sm:$0xff]
  %v1902 = vld [vmem:[%s5 + $0x20] sm:$0xff]
  %v1903 = vld [vmem:[%s5 + $0x28] sm:$0xff]
  %v1904 = vld [vmem:[%s5 + $0x30] sm:$0xff]
  %v1905 = vld [vmem:[%s5 + $0x38] sm:$0xff]
  %v1906 = vld [vmem:[%s5 + $0x40] sm:$0xff]
  %v1907 = vld [vmem:[%s5 + $0x48] sm:$0xff]
  %v1908 = vld [vmem:[%s5 + $0x50] sm:$0xff]
  %v1909 = vld [vmem:[%s5 + $0x58] sm:$0xff]
  %v1910 = vld [vmem:[%s5 + $0x60] sm:$0xff]
  %v1911 = vld [vmem:[%s5 + $0x68] sm:$0xff]
  %v1912 = vld [vmem:[%s5 + $0x70] sm:$0xff]
  %v1913 = vld [vmem:[%s5 + $0x78] sm:$0xff]
  %v1914 = vld [vmem:[%s5 + $0x80] sm:$0xff]
  %v1915 = vld [vmem:[%s5 + $0x88] sm:$0xff]
  %v1916 = vld [vmem:[%s5 + $0x90] sm:$0xff]
  %v1917 = vld [vmem:[%s5 + $0x98] sm:$0xff]
  %v1918 = vld [vmem:[%s5 + $0xa0] sm:$0xff]
  %v1919 = vld [vmem:[%s5 + $0xa8] sm:$0xff]
  %v1920 = vld [vmem:[%s5 + $0xb0] sm:$0xff]
  %v1921 = vld [vmem:[%s5 + $0xb8] sm:$0xff]
  %v1922 = vld [vmem:[%s5 + $0xc0] sm:$0xff]
  %v1923 = vld [vmem:[%s5 + $0xc8] sm:$0xff]
  %v1924 = vld [vmem:[%s5 + $0xd0] sm:$0xff]
  %v1925 = vld [vmem:[%s5 + $0xd8] sm:$0xff]
  %v1926 = vld [vmem:[%s5 + $0xe0] sm:$0xff]
  %v1927 = vld [vmem:[%s5 + $0xe8] sm:$0xff]
  %v1928 = vld [vmem:[%s5 + $0xf0] sm:$0xff]
  %v1929 = vld [vmem:[%s5 + $0xf8] sm:$0xff]
  %v1930 = vld [vmem:[%s6] sm:$0x3]
  %v1932 = vlaneseq
  %v1933 = vshrl.u32 %v1932, 7
  %v1934 = vsub.s32 0, %v1933
  %v1935 = vrot.slane %v1930, %v1934
  %v1936 = vlaneseq
  %v1937 = vshrl.u32 %v1936, 7
  %v1938 = vsub.s32 1, %v1937
  %v1939 = vrot.slane %v1930, %v1938
  %v1974 = vunpack.c.l.b16 %v1898
  %v1975 = vunpack.c.h.b16 %v1898
  %v1976 = vunpack.c.l.b16 %v1899
  %v1977 = vunpack.c.h.b16 %v1899
  %v1978 = vunpack.c.l.b16 %v1900
  %v1979 = vunpack.c.h.b16 %v1900
  %v1980 = vunpack.c.l.b16 %v1901
  %v1981 = vunpack.c.h.b16 %v1901
  %v1982 = vunpack.c.l.b16 %v1902
  %v1983 = vunpack.c.h.b16 %v1902
  %v1984 = vunpack.c.l.b16 %v1903
  %v1985 = vunpack.c.h.b16 %v1903
  %v1986 = vunpack.c.l.b16 %v1904
  %v1987 = vunpack.c.h.b16 %v1904
  %v1988 = vunpack.c.l.b16 %v1905
  %v1989 = vunpack.c.h.b16 %v1905
  %v1990 = vunpack.c.l.b16 %v1906
  %v1991 = vunpack.c.h.b16 %v1906
  %v1992 = vunpack.c.l.b16 %v1907
  %v1993 = vunpack.c.h.b16 %v1907
  %v1994 = vunpack.c.l.b16 %v1908
  %v1995 = vunpack.c.h.b16 %v1908
  %v1996 = vunpack.c.l.b16 %v1909
  %v1997 = vunpack.c.h.b16 %v1909
  %v1998 = vunpack.c.l.b16 %v1910
  %v1999 = vunpack.c.h.b16 %v1910
  %v2000 = vunpack.c.l.b16 %v1911
  %v2001 = vunpack.c.h.b16 %v1911
  %v2002 = vunpack.c.l.b16 %v1912
  %v2003 = vunpack.c.h.b16 %v1912
  %v2004 = vunpack.c.l.b16 %v1913
  %v2005 = vunpack.c.h.b16 %v1913
  %v2006 = vunpack.c.l.b16 %v1914
  %v2007 = vunpack.c.h.b16 %v1914
  %v2008 = vunpack.c.l.b16 %v1915
  %v2009 = vunpack.c.h.b16 %v1915
  %v2010 = vunpack.c.l.b16 %v1916
  %v2011 = vunpack.c.h.b16 %v1916
  %v2012 = vunpack.c.l.b16 %v1917
  %v2013 = vunpack.c.h.b16 %v1917
  %v2014 = vunpack.c.l.b16 %v1918
  %v2015 = vunpack.c.h.b16 %v1918
  %v2016 = vunpack.c.l.b16 %v1919
  %v2017 = vunpack.c.h.b16 %v1919
  %v2018 = vunpack.c.l.b16 %v1920
  %v2019 = vunpack.c.h.b16 %v1920
  %v2020 = vunpack.c.l.b16 %v1921
  %v2021 = vunpack.c.h.b16 %v1921
  %v2022 = vunpack.c.l.b16 %v1922
  %v2023 = vunpack.c.h.b16 %v1922
  %v2024 = vunpack.c.l.b16 %v1923
  %v2025 = vunpack.c.h.b16 %v1923
  %v2026 = vunpack.c.l.b16 %v1924
  %v2027 = vunpack.c.h.b16 %v1924
  %v2028 = vunpack.c.l.b16 %v1925
  %v2029 = vunpack.c.h.b16 %v1925
  %v2030 = vunpack.c.l.b16 %v1926
  %v2031 = vunpack.c.h.b16 %v1926
  %v2032 = vunpack.c.l.b16 %v1927
  %v2033 = vunpack.c.h.b16 %v1927
  %v2034 = vunpack.c.l.b16 %v1928
  %v2035 = vunpack.c.h.b16 %v1928
  %v2036 = vunpack.c.l.b16 %v1929
  %v2037 = vunpack.c.h.b16 %v1929
  %v2038 = vpack.c.b16 %v1976, %v1974
  %v2039 = vpack.c.b16 %v1977, %v1975
  %v2040 = vpack.c.b16 %v1980, %v1978
  %v2041 = vpack.c.b16 %v1981, %v1979
  %v2042 = vpack.c.b16 %v1984, %v1982
  %v2043 = vpack.c.b16 %v1985, %v1983
  %v2044 = vpack.c.b16 %v1988, %v1986
  %v2045 = vpack.c.b16 %v1989, %v1987
  %v2046 = vpack.c.b16 %v1992, %v1990
  %v2047 = vpack.c.b16 %v1993, %v1991
  %v2048 = vpack.c.b16 %v1996, %v1994
  %v2049 = vpack.c.b16 %v1997, %v1995
  %v2050 = vpack.c.b16 %v2000, %v1998
  %v2051 = vpack.c.b16 %v2001, %v1999
  %v2052 = vpack.c.b16 %v2004, %v2002
  %v2053 = vpack.c.b16 %v2005, %v2003
  %v2054 = vpack.c.b16 %v2008, %v2006
  %v2055 = vpack.c.b16 %v2009, %v2007
  %v2056 = vpack.c.b16 %v2012, %v2010
  %v2057 = vpack.c.b16 %v2013, %v2011
  %v2058 = vpack.c.b16 %v2016, %v2014
  %v2059 = vpack.c.b16 %v2017, %v2015
  %v2060 = vpack.c.b16 %v2020, %v2018
  %v2061 = vpack.c.b16 %v2021, %v2019
  %v2062 = vpack.c.b16 %v2024, %v2022
  %v2063 = vpack.c.b16 %v2025, %v2023
  %v2064 = vpack.c.b16 %v2028, %v2026
  %v2065 = vpack.c.b16 %v2029, %v2027
  %v2066 = vpack.c.b16 %v2032, %v2030
  %v2067 = vpack.c.b16 %v2033, %v2031
  %v2068 = vpack.c.b16 %v2036, %v2034
  %v2069 = vpack.c.b16 %v2037, %v2035
  %2102 = vmatprep.subr.bf16.mxu0 %v2053
  %2103 = vmatpush1.bf16.msra.mxu0 %v2052
  %2104 = vmatprep.subr.bf16.mxu0 %v2051
  %2105 = vmatpush1.bf16.msra.mxu0 %v2050
  %2106 = vmatprep.subr.bf16.mxu0 %v2049
  %2107 = vmatpush1.bf16.msra.mxu0 %v2048
  %2108 = vmatprep.subr.bf16.mxu0 %v2047
  %2109 = vmatpush1.bf16.msra.mxu0 %v2046
  %2110 = vmatprep.subr.bf16.mxu0 %v2045
  %2111 = vmatpush1.bf16.msra.mxu0 %v2044
  %2112 = vmatprep.subr.bf16.mxu0 %v2043
  %2113 = vmatpush1.bf16.msra.mxu0 %v2042
  %2114 = vmatprep.subr.bf16.mxu0 %v2041
  %2115 = vmatpush1.bf16.msra.mxu0 %v2040
  %2116 = vmatprep.subr.bf16.mxu0 %v2039
  %2117 = vmatpush1.bf16.msra.mxu0 %v2038
  %2118 = vmatprep.subr.bf16.mxu0 %v2069
  %2119 = vmatpush2.bf16.msra.mxu0 %v2068
  %2120 = vmatprep.subr.bf16.mxu0 %v2067
  %2121 = vmatpush2.bf16.msra.mxu0 %v2066
  %2122 = vmatprep.subr.bf16.mxu0 %v2065
  %2123 = vmatpush2.bf16.msra.mxu0 %v2064
  %2124 = vmatprep.subr.bf16.mxu0 %v2063
  %2125 = vmatpush2.bf16.msra.mxu0 %v2062
  %2126 = vmatprep.subr.bf16.mxu0 %v2061
  %2127 = vmatpush2.bf16.msra.mxu0 %v2060
  %2128 = vmatprep.subr.bf16.mxu0 %v2059
  %2129 = vmatpush2.bf16.msra.mxu0 %v2058
  %2130 = vmatprep.subr.bf16.mxu0 %v2057
  %2131 = vmatpush2.bf16.msra.mxu0 %v2056
  %2132 = vmatprep.subr.bf16.mxu0 %v2055
  %2133 = vmatpush2.bf16.msra.mxu0 %v2054
  %2134 = vmatprep.mubr.bf16.mxu0 %v1897
  %2135 = vmatmul.mubr.bf16.gmra.mxu0 %v1896
  %v2136 = vpop.f32.mrf.mxu0
  %v2137 = vadd.f32 %v1935, %v2136
  %v2138 = vpop.f32.mrf.mxu0
  %v2139 = vadd.f32 %v1939, %v2138
  %v2140 = vpop.f32.mrf.mxu0
  %v2141 = vpop.f32.mrf.mxu0
  %2142 = vdwg.mxu0
  %vm2143 = vcmp.ge.f32.partialorder %v2137, 0.0
  %vm2144 = vcmp.ge.f32.partialorder %v2139, 0.0
  %v2145 = vmul.f32 %v2137, 0.01
  %v2146 = vmul.f32 %v2139, 0.01
  %v2147 = vsel %vm2143, %v2137, %v2145
  %v2148 = vsel %vm2144, %v2139, %v2146
  %v2149 = vpack.c.bf16 %v2147, %v2147
  %v2150 = vpack.c.bf16 %v2148, %v2148
  %v2151 = vld [vmem:[%s7] sm:$0xff]
  %v2152 = vld [vmem:[%s7 + $0x8] sm:$0xff]
  %v2153 = vld [vmem:[%s7 + $0x10] sm:$0xff]
  %v2154 = vld [vmem:[%s7 + $0x18] sm:$0xff]
  %v2155 = vld [vmem:[%s7 + $0x20] sm:$0xff]
  %v2156 = vld [vmem:[%s7 + $0x28] sm:$0xff]
  %v2157 = vld [vmem:[%s7 + $0x30] sm:$0xf]
  %v2158 = vld [vmem:[%s7 + $0x34] sm:$0xff]
  %v2159 = vld [vmem:[%s7 + $0x3c] sm:$0xff]
  %v2160 = vld [vmem:[%s7 + $0x44] sm:$0xff]
  %v2161 = vld [vmem:[%s7 + $0x4c] sm:$0xff]
  %v2162 = vld [vmem:[%s7 + $0x54] sm:$0xff]
  %v2163 = vld [vmem:[%s7 + $0x5c] sm:$0xff]
  %v2164 = vld [vmem:[%s7 + $0x64] sm:$0xf]
  %v2165 = vld [vmem:[%s7 + $0x68] sm:$0xff]
  %v2166 = vld [vmem:[%s7 + $0x70] sm:$0xff]
  %v2167 = vld [vmem:[%s7 + $0x78] sm:$0xff]
  %v2168 = vld [vmem:[%s7 + $0x80] sm:$0xff]
  %v2169 = vld [vmem:[%s7 + $0x88] sm:$0xff]
  %v2170 = vld [vmem:[%s7 + $0x90] sm:$0xff]
  %v2171 = vld [vmem:[%s7 + $0x98] sm:$0xf]
  %v2172 = vld [vmem:[%s7 + $0x9c] sm:$0xff]
  %v2173 = vld [vmem:[%s7 + $0xa4] sm:$0xff]
  %v2174 = vld [vmem:[%s7 + $0xac] sm:$0xff]
  %v2175 = vld [vmem:[%s7 + $0xb4] sm:$0xff]
  %v2176 = vld [vmem:[%s7 + $0xbc] sm:$0xff]
  %v2177 = vld [vmem:[%s7 + $0xc4] sm:$0xff]
  %v2178 = vld [vmem:[%s7 + $0xcc] sm:$0xf]
  %v2179 = vld [vmem:[%s7 + $0xd0] sm:$0xff]
  %v2180 = vld [vmem:[%s7 + $0xd8] sm:$0xff]
  %v2181 = vld [vmem:[%s7 + $0xe0] sm:$0xff]
  %v2182 = vld [vmem:[%s7 + $0xe8] sm:$0xff]
  %v2183 = vld [vmem:[%s7 + $0xf0] sm:$0xff]
  %v2184 = vld [vmem:[%s7 + $0xf8] sm:$0xff]
  %v2185 = vld [vmem:[%s7 + $0x100] sm:$0xf]
  %v2186 = vld [vmem:[%s7 + $0x104] sm:$0xff]
  %v2187 = vld [vmem:[%s7 + $0x10c] sm:$0xff]
  %v2188 = vld [vmem:[%s7 + $0x114] sm:$0xff]
  %v2189 = vld [vmem:[%s7 + $0x11c] sm:$0xff]
  %v2190 = vld [vmem:[%s7 + $0x124] sm:$0xff]
  %v2191 = vld [vmem:[%s7 + $0x12c] sm:$0xff]
  %v2192 = vld [vmem:[%s7 + $0x134] sm:$0xf]
  %v2193 = vld [vmem:[%s7 + $0x138] sm:$0xff]
  %v2194 = vld [vmem:[%s7 + $0x140] sm:$0xff]
  %v2195 = vld [vmem:[%s7 + $0x148] sm:$0xff]
  %v2196 = vld [vmem:[%s7 + $0x150] sm:$0xff]
  %v2197 = vld [vmem:[%s7 + $0x158] sm:$0xff]
  %v2198 = vld [vmem:[%s7 + $0x160] sm:$0xff]
  %v2199 = vld [vmem:[%s7 + $0x168] sm:$0xf]
  %v2200 = vld [vmem:[%s7 + $0x16c] sm:$0xff]
  %v2201 = vld [vmem:[%s7 + $0x174] sm:$0xff]
  %v2202 = vld [vmem:[%s7 + $0x17c] sm:$0xff]
  %v2203 = vld [vmem:[%s7 + $0x184] sm:$0xff]
  %v2204 = vld [vmem:[%s7 + $0x18c] sm:$0xff]
  %v2205 = vld [vmem:[%s7 + $0x194] sm:$0xff]
  %v2206 = vld [vmem:[%s7 + $0x19c] sm:$0xf]
  %v2207 = vld [vmem:[%s7 + $0x1a0] sm:$0xff]
  %v2208 = vld [vmem:[%s7 + $0x1a8] sm:$0xff]
  %v2209 = vld [vmem:[%s7 + $0x1b0] sm:$0xff]
  %v2210 = vld [vmem:[%s7 + $0x1b8] sm:$0xff]
  %v2211 = vld [vmem:[%s7 + $0x1c0] sm:$0xff]
  %v2212 = vld [vmem:[%s7 + $0x1c8] sm:$0xff]
  %v2213 = vld [vmem:[%s7 + $0x1d0] sm:$0xf]
  %v2214 = vld [vmem:[%s7 + $0x1d4] sm:$0xff]
  %v2215 = vld [vmem:[%s7 + $0x1dc] sm:$0xff]
  %v2216 = vld [vmem:[%s7 + $0x1e4] sm:$0xff]
  %v2217 = vld [vmem:[%s7 + $0x1ec] sm:$0xff]
  %v2218 = vld [vmem:[%s7 + $0x1f4] sm:$0xff]
  %v2219 = vld [vmem:[%s7 + $0x1fc] sm:$0xff]
  %v2220 = vld [vmem:[%s7 + $0x204] sm:$0xf]
  %v2221 = vld [vmem:[%s7 + $0x208] sm:$0xff]
  %v2222 = vld [vmem:[%s7 + $0x210] sm:$0xff]
  %v2223 = vld [vmem:[%s7 + $0x218] sm:$0xff]
  %v2224 = vld [vmem:[%s7 + $0x220] sm:$0xff]
  %v2225 = vld [vmem:[%s7 + $0x228] sm:$0xff]
  %v2226 = vld [vmem:[%s7 + $0x230] sm:$0xff]
  %v2227 = vld [vmem:[%s7 + $0x238] sm:$0xf]
  %v2228 = vld [vmem:[%s7 + $0x23c] sm:$0xff]
  %v2229 = vld [vmem:[%s7 + $0x244] sm:$0xff]
  %v2230 = vld [vmem:[%s7 + $0x24c] sm:$0xff]
  %v2231 = vld [vmem:[%s7 + $0x254] sm:$0xff]
  %v2232 = vld [vmem:[%s7 + $0x25c] sm:$0xff]
  %v2233 = vld [vmem:[%s7 + $0x264] sm:$0xff]
  %v2234 = vld [vmem:[%s7 + $0x26c] sm:$0xf]
  %v2235 = vld [vmem:[%s7 + $0x270] sm:$0xff]
  %v2236 = vld [vmem:[%s7 + $0x278] sm:$0xff]
  %v2237 = vld [vmem:[%s7 + $0x280] sm:$0xff]
  %v2238 = vld [vmem:[%s7 + $0x288] sm:$0xff]
  %v2239 = vld [vmem:[%s7 + $0x290] sm:$0xff]
  %v2240 = vld [vmem:[%s7 + $0x298] sm:$0xff]
  %v2241 = vld [vmem:[%s7 + $0x2a0] sm:$0xf]
  %v2242 = vld [vmem:[%s7 + $0x2a4] sm:$0xff]
  %v2243 = vld [vmem:[%s7 + $0x2ac] sm:$0xff]
  %v2244 = vld [vmem:[%s7 + $0x2b4] sm:$0xff]
  %v2245 = vld [vmem:[%s7 + $0x2bc] sm:$0xff]
  %v2246 = vld [vmem:[%s7 + $0x2c4] sm:$0xff]
  %v2247 = vld [vmem:[%s7 + $0x2cc] sm:$0xff]
  %v2248 = vld [vmem:[%s7 + $0x2d4] sm:$0xf]
  %v2249 = vld [vmem:[%s7 + $0x2d8] sm:$0xff]
  %v2250 = vld [vmem:[%s7 + $0x2e0] sm:$0xff]
  %v2251 = vld [vmem:[%s7 + $0x2e8] sm:$0xff]
  %v2252 = vld [vmem:[%s7 + $0x2f0] sm:$0xff]
  %v2253 = vld [vmem:[%s7 + $0x2f8] sm:$0xff]
  %v2254 = vld [vmem:[%s7 + $0x300] sm:$0xff]
  %v2255 = vld [vmem:[%s7 + $0x308] sm:$0xf]
  %v2256 = vld [vmem:[%s7 + $0x30c] sm:$0xff]
  %v2257 = vld [vmem:[%s7 + $0x314] sm:$0xff]
  %v2258 = vld [vmem:[%s7 + $0x31c] sm:$0xff]
  %v2259 = vld [vmem:[%s7 + $0x324] sm:$0xff]
  %v2260 = vld [vmem:[%s7 + $0x32c] sm:$0xff]
  %v2261 = vld [vmem:[%s7 + $0x334] sm:$0xff]
  %v2262 = vld [vmem:[%s7 + $0x33c] sm:$0xf]
  %v2263 = vld [vmem:[%s7 + $0x340] sm:$0xff]
  %v2264 = vld [vmem:[%s7 + $0x348] sm:$0xff]
  %v2265 = vld [vmem:[%s7 + $0x350] sm:$0xff]
  %v2266 = vld [vmem:[%s7 + $0x358] sm:$0xff]
  %v2267 = vld [vmem:[%s7 + $0x360] sm:$0xff]
  %v2268 = vld [vmem:[%s7 + $0x368] sm:$0xff]
  %v2269 = vld [vmem:[%s7 + $0x370] sm:$0xf]
  %v2270 = vld [vmem:[%s7 + $0x374] sm:$0xff]
  %v2271 = vld [vmem:[%s7 + $0x37c] sm:$0xff]
  %v2272 = vld [vmem:[%s7 + $0x384] sm:$0xff]
  %v2273 = vld [vmem:[%s7 + $0x38c] sm:$0xff]
  %v2274 = vld [vmem:[%s7 + $0x394] sm:$0xff]
  %v2275 = vld [vmem:[%s7 + $0x39c] sm:$0xff]
  %v2276 = vld [vmem:[%s7 + $0x3a4] sm:$0xf]
  %v2277 = vld [vmem:[%s7 + $0x3a8] sm:$0xff]
  %v2278 = vld [vmem:[%s7 + $0x3b0] sm:$0xff]
  %v2279 = vld [vmem:[%s7 + $0x3b8] sm:$0xff]
  %v2280 = vld [vmem:[%s7 + $0x3c0] sm:$0xff]
  %v2281 = vld [vmem:[%s7 + $0x3c8] sm:$0xff]
  %v2282 = vld [vmem:[%s7 + $0x3d0] sm:$0xff]
  %v2283 = vld [vmem:[%s7 + $0x3d8] sm:$0xf]
  %v2284 = vld [vmem:[%s7 + $0x3dc] sm:$0xff]
  %v2285 = vld [vmem:[%s7 + $0x3e4] sm:$0xff]
  %v2286 = vld [vmem:[%s7 + $0x3ec] sm:$0xff]
  %v2287 = vld [vmem:[%s7 + $0x3f4] sm:$0xff]
  %v2288 = vld [vmem:[%s7 + $0x3fc] sm:$0xff]
  %v2289 = vld [vmem:[%s7 + $0x404] sm:$0xff]
  %v2290 = vld [vmem:[%s7 + $0x40c] sm:$0xf]
  %v2291 = vld [vmem:[%s7 + $0x410] sm:$0xff]
  %v2292 = vld [vmem:[%s7 + $0x418] sm:$0xff]
  %v2293 = vld [vmem:[%s7 + $0x420] sm:$0xff]
  %v2294 = vld [vmem:[%s7 + $0x428] sm:$0xff]
  %v2295 = vld [vmem:[%s7 + $0x430] sm:$0xff]
  %v2296 = vld [vmem:[%s7 + $0x438] sm:$0xff]
  %v2297 = vld [vmem:[%s7 + $0x440] sm:$0xf]
  %v2298 = vld [vmem:[%s7 + $0x444] sm:$0xff]
  %v2299 = vld [vmem:[%s7 + $0x44c] sm:$0xff]
  %v2300 = vld [vmem:[%s7 + $0x454] sm:$0xff]
  %v2301 = vld [vmem:[%s7 + $0x45c] sm:$0xff]
  %v2302 = vld [vmem:[%s7 + $0x464] sm:$0xff]
  %v2303 = vld [vmem:[%s7 + $0x46c] sm:$0xff]
  %v2304 = vld [vmem:[%s7 + $0x474] sm:$0xf]
  %v2305 = vld [vmem:[%s7 + $0x478] sm:$0xff]
  %v2306 = vld [vmem:[%s7 + $0x480] sm:$0xff]
  %v2307 = vld [vmem:[%s7 + $0x488] sm:$0xff]
  %v2308 = vld [vmem:[%s7 + $0x490] sm:$0xff]
  %v2309 = vld [vmem:[%s7 + $0x498] sm:$0xff]
  %v2310 = vld [vmem:[%s7 + $0x4a0] sm:$0xff]
  %v2311 = vld [vmem:[%s7 + $0x4a8] sm:$0xf]
  %v2312 = vld [vmem:[%s7 + $0x4ac] sm:$0xff]
  %v2313 = vld [vmem:[%s7 + $0x4b4] sm:$0xff]
  %v2314 = vld [vmem:[%s7 + $0x4bc] sm:$0xff]
  %v2315 = vld [vmem:[%s7 + $0x4c4] sm:$0xff]
  %v2316 = vld [vmem:[%s7 + $0x4cc] sm:$0xff]
  %v2317 = vld [vmem:[%s7 + $0x4d4] sm:$0xff]
  %v2318 = vld [vmem:[%s7 + $0x4dc] sm:$0xf]
  %v2319 = vld [vmem:[%s7 + $0x4e0] sm:$0xff]
  %v2320 = vld [vmem:[%s7 + $0x4e8] sm:$0xff]
  %v2321 = vld [vmem:[%s7 + $0x4f0] sm:$0xff]
  %v2322 = vld [vmem:[%s7 + $0x4f8] sm:$0xff]
  %v2323 = vld [vmem:[%s7 + $0x500] sm:$0xff]
  %v2324 = vld [vmem:[%s7 + $0x508] sm:$0xff]
  %v2325 = vld [vmem:[%s7 + $0x510] sm:$0xf]
  %v2326 = vld [vmem:[%s7 + $0x514] sm:$0xff]
  %v2327 = vld [vmem:[%s7 + $0x51c] sm:$0xff]
  %v2328 = vld [vmem:[%s7 + $0x524] sm:$0xff]
  %v2329 = vld [vmem:[%s7 + $0x52c] sm:$0xff]
  %v2330 = vld [vmem:[%s7 + $0x534] sm:$0xff]
  %v2331 = vld [vmem:[%s7 + $0x53c] sm:$0xff]
  %v2332 = vld [vmem:[%s7 + $0x544] sm:$0xf]
  %v2333 = vld [vmem:[%s7 + $0x548] sm:$0xff]
  %v2334 = vld [vmem:[%s7 + $0x550] sm:$0xff]
  %v2335 = vld [vmem:[%s7 + $0x558] sm:$0xff]
  %v2336 = vld [vmem:[%s7 + $0x560] sm:$0xff]
  %v2337 = vld [vmem:[%s7 + $0x568] sm:$0xff]
  %v2338 = vld [vmem:[%s7 + $0x570] sm:$0xff]
  %v2339 = vld [vmem:[%s7 + $0x578] sm:$0xf]
  %v2340 = vld [vmem:[%s7 + $0x57c] sm:$0xff]
  %v2341 = vld [vmem:[%s7 + $0x584] sm:$0xff]
  %v2342 = vld [vmem:[%s7 + $0x58c] sm:$0xff]
  %v2343 = vld [vmem:[%s7 + $0x594] sm:$0xff]
  %v2344 = vld [vmem:[%s7 + $0x59c] sm:$0xff]
  %v2345 = vld [vmem:[%s7 + $0x5a4] sm:$0xff]
  %v2346 = vld [vmem:[%s7 + $0x5ac] sm:$0xf]
  %v2347 = vld [vmem:[%s7 + $0x5b0] sm:$0xff]
  %v2348 = vld [vmem:[%s7 + $0x5b8] sm:$0xff]
  %v2349 = vld [vmem:[%s7 + $0x5c0] sm:$0xff]
  %v2350 = vld [vmem:[%s7 + $0x5c8] sm:$0xff]
  %v2351 = vld [vmem:[%s7 + $0x5d0] sm:$0xff]
  %v2352 = vld [vmem:[%s7 + $0x5d8] sm:$0xff]
  %v2353 = vld [vmem:[%s7 + $0x5e0] sm:$0xf]
  %v2354 = vld [vmem:[%s7 + $0x5e4] sm:$0xff]
  %v2355 = vld [vmem:[%s7 + $0x5ec] sm:$0xff]
  %v2356 = vld [vmem:[%s7 + $0x5f4] sm:$0xff]
  %v2357 = vld [vmem:[%s7 + $0x5fc] sm:$0xff]
  %v2358 = vld [vmem:[%s7 + $0x604] sm:$0xff]
  %v2359 = vld [vmem:[%s7 + $0x60c] sm:$0xff]
  %v2360 = vld [vmem:[%s7 + $0x614] sm:$0xf]
  %v2361 = vld [vmem:[%s7 + $0x618] sm:$0xff]
  %v2362 = vld [vmem:[%s7 + $0x620] sm:$0xff]
  %v2363 = vld [vmem:[%s7 + $0x628] sm:$0xff]
  %v2364 = vld [vmem:[%s7 + $0x630] sm:$0xff]
  %v2365 = vld [vmem:[%s7 + $0x638] sm:$0xff]
  %v2366 = vld [vmem:[%s7 + $0x640] sm:$0xff]
  %v2367 = vld [vmem:[%s7 + $0x648] sm:$0xf]
  %v2368 = vld [vmem:[%s7 + $0x64c] sm:$0xff]
  %v2369 = vld [vmem:[%s7 + $0x654] sm:$0xff]
  %v2370 = vld [vmem:[%s7 + $0x65c] sm:$0xff]
  %v2371 = vld [vmem:[%s7 + $0x664] sm:$0xff]
  %v2372 = vld [vmem:[%s7 + $0x66c] sm:$0xff]
  %v2373 = vld [vmem:[%s7 + $0x674] sm:$0xff]
  %v2374 = vld [vmem:[%s7 + $0x67c] sm:$0xf]
  %v2375 = vld [vmem:[%s8] sm:$0xff]
  %v2376 = vld [vmem:[%s8 + $0x8] sm:$0x1f]
  %v2379 = vlaneseq
  %v2380 = vshrl.u32 %v2379, 7
  %v2381 = vsub.s32 0, %v2380
  %v2382 = vrot.slane %v2375, %v2381
  %v2383 = vlaneseq
  %v2384 = vshrl.u32 %v2383, 7
  %v2385 = vsub.s32 1, %v2384
  %v2386 = vrot.slane %v2375, %v2385
  %v2387 = vlaneseq
  %v2388 = vshrl.u32 %v2387, 7
  %v2389 = vsub.s32 2, %v2388
  %v2390 = vrot.slane %v2375, %v2389
  %v2391 = vlaneseq
  %v2392 = vshrl.u32 %v2391, 7
  %v2393 = vsub.s32 3, %v2392
  %v2394 = vrot.slane %v2375, %v2393
  %v2395 = vlaneseq
  %v2396 = vshrl.u32 %v2395, 7
  %v2397 = vsub.s32 4, %v2396
  %v2398 = vrot.slane %v2375, %v2397
  %v2399 = vlaneseq
  %v2400 = vshrl.u32 %v2399, 7
  %v2401 = vsub.s32 5, %v2400
  %v2402 = vrot.slane %v2375, %v2401
  %v2403 = vlaneseq
  %v2404 = vshrl.u32 %v2403, 7
  %v2405 = vsub.s32 6, %v2404
  %v2406 = vrot.slane %v2375, %v2405
  %v2407 = vlaneseq
  %v2408 = vshrl.u32 %v2407, 7
  %v2409 = vsub.s32 7, %v2408
  %v2410 = vrot.slane %v2375, %v2409
  %v2411 = vlaneseq
  %v2412 = vshrl.u32 %v2411, 7
  %v2413 = vsub.s32 0, %v2412
  %v2414 = vrot.slane %v2376, %v2413
  %v2415 = vlaneseq
  %v2416 = vshrl.u32 %v2415, 7
  %v2417 = vsub.s32 1, %v2416
  %v2418 = vrot.slane %v2376, %v2417
  %v2419 = vlaneseq
  %v2420 = vshrl.u32 %v2419, 7
  %v2421 = vsub.s32 2, %v2420
  %v2422 = vrot.slane %v2376, %v2421
  %v2423 = vlaneseq
  %v2424 = vshrl.u32 %v2423, 7
  %v2425 = vsub.s32 3, %v2424
  %v2426 = vrot.slane %v2376, %v2425
  %v2427 = vlaneseq
  %v2428 = vshrl.u32 %v2427, 7
  %v2429 = vsub.s32 4, %v2428
  %v2430 = vrot.slane %v2376, %v2429
  %v2668 = vunpack.c.l.b16 %v2151
  %v2669 = vunpack.c.h.b16 %v2151
  %v2670 = vunpack.c.l.b16 %v2152
  %v2671 = vunpack.c.h.b16 %v2152
  %v2672 = vunpack.c.l.b16 %v2153
  %v2673 = vunpack.c.h.b16 %v2153
  %v2674 = vunpack.c.l.b16 %v2154
  %v2675 = vunpack.c.h.b16 %v2154
  %v2676 = vunpack.c.l.b16 %v2155
  %v2677 = vunpack.c.h.b16 %v2155
  %v2678 = vunpack.c.l.b16 %v2156
  %v2679 = vunpack.c.h.b16 %v2156
  %v2680 = vunpack.c.l.b16 %v2157
  %v2681 = vunpack.c.l.b16 %v2158
  %v2682 = vunpack.c.h.b16 %v2158
  %v2683 = vunpack.c.l.b16 %v2159
  %v2684 = vunpack.c.h.b16 %v2159
  %v2685 = vunpack.c.l.b16 %v2160
  %v2686 = vunpack.c.h.b16 %v2160
  %v2687 = vunpack.c.l.b16 %v2161
  %v2688 = vunpack.c.h.b16 %v2161
  %v2689 = vunpack.c.l.b16 %v2162
  %v2690 = vunpack.c.h.b16 %v2162
  %v2691 = vunpack.c.l.b16 %v2163
  %v2692 = vunpack.c.h.b16 %v2163
  %v2693 = vunpack.c.l.b16 %v2164
  %v2694 = vunpack.c.l.b16 %v2165
  %v2695 = vunpack.c.h.b16 %v2165
  %v2696 = vunpack.c.l.b16 %v2166
  %v2697 = vunpack.c.h.b16 %v2166
  %v2698 = vunpack.c.l.b16 %v2167
  %v2699 = vunpack.c.h.b16 %v2167
  %v2700 = vunpack.c.l.b16 %v2168
  %v2701 = vunpack.c.h.b16 %v2168
  %v2702 = vunpack.c.l.b16 %v2169
  %v2703 = vunpack.c.h.b16 %v2169
  %v2704 = vunpack.c.l.b16 %v2170
  %v2705 = vunpack.c.h.b16 %v2170
  %v2706 = vunpack.c.l.b16 %v2171
  %v2707 = vunpack.c.l.b16 %v2172
  %v2708 = vunpack.c.h.b16 %v2172
  %v2709 = vunpack.c.l.b16 %v2173
  %v2710 = vunpack.c.h.b16 %v2173
  %v2711 = vunpack.c.l.b16 %v2174
  %v2712 = vunpack.c.h.b16 %v2174
  %v2713 = vunpack.c.l.b16 %v2175
  %v2714 = vunpack.c.h.b16 %v2175
  %v2715 = vunpack.c.l.b16 %v2176
  %v2716 = vunpack.c.h.b16 %v2176
  %v2717 = vunpack.c.l.b16 %v2177
  %v2718 = vunpack.c.h.b16 %v2177
  %v2719 = vunpack.c.l.b16 %v2178
  %v2720 = vunpack.c.l.b16 %v2179
  %v2721 = vunpack.c.h.b16 %v2179
  %v2722 = vunpack.c.l.b16 %v2180
  %v2723 = vunpack.c.h.b16 %v2180
  %v2724 = vunpack.c.l.b16 %v2181
  %v2725 = vunpack.c.h.b16 %v2181
  %v2726 = vunpack.c.l.b16 %v2182
  %v2727 = vunpack.c.h.b16 %v2182
  %v2728 = vunpack.c.l.b16 %v2183
  %v2729 = vunpack.c.h.b16 %v2183
  %v2730 = vunpack.c.l.b16 %v2184
  %v2731 = vunpack.c.h.b16 %v2184
  %v2732 = vunpack.c.l.b16 %v2185
  %v2733 = vunpack.c.l.b16 %v2186
  %v2734 = vunpack.c.h.b16 %v2186
  %v2735 = vunpack.c.l.b16 %v2187
  %v2736 = vunpack.c.h.b16 %v2187
  %v2737 = vunpack.c.l.b16 %v2188
  %v2738 = vunpack.c.h.b16 %v2188
  %v2739 = vunpack.c.l.b16 %v2189
  %v2740 = vunpack.c.h.b16 %v2189
  %v2741 = vunpack.c.l.b16 %v2190
  %v2742 = vunpack.c.h.b16 %v2190
  %v2743 = vunpack.c.l.b16 %v2191
  %v2744 = vunpack.c.h.b16 %v2191
  %v2745 = vunpack.c.l.b16 %v2192
  %v2746 = vunpack.c.l.b16 %v2193
  %v2747 = vunpack.c.h.b16 %v2193
  %v2748 = vunpack.c.l.b16 %v2194
  %v2749 = vunpack.c.h.b16 %v2194
  %v2750 = vunpack.c.l.b16 %v2195
  %v2751 = vunpack.c.h.b16 %v2195
  %v2752 = vunpack.c.l.b16 %v2196
  %v2753 = vunpack.c.h.b16 %v2196
  %v2754 = vunpack.c.l.b16 %v2197
  %v2755 = vunpack.c.h.b16 %v2197
  %v2756 = vunpack.c.l.b16 %v2198
  %v2757 = vunpack.c.h.b16 %v2198
  %v2758 = vunpack.c.l.b16 %v2199
  %v2759 = vunpack.c.l.b16 %v2200
  %v2760 = vunpack.c.h.b16 %v2200
  %v2761 = vunpack.c.l.b16 %v2201
  %v2762 = vunpack.c.h.b16 %v2201
  %v2763 = vunpack.c.l.b16 %v2202
  %v2764 = vunpack.c.h.b16 %v2202
  %v2765 = vunpack.c.l.b16 %v2203
  %v2766 = vunpack.c.h.b16 %v2203
  %v2767 = vunpack.c.l.b16 %v2204
  %v2768 = vunpack.c.h.b16 %v2204
  %v2769 = vunpack.c.l.b16 %v2205
  %v2770 = vunpack.c.h.b16 %v2205
  %v2771 = vunpack.c.l.b16 %v2206
  %v2772 = vunpack.c.l.b16 %v2207
  %v2773 = vunpack.c.h.b16 %v2207
  %v2774 = vunpack.c.l.b16 %v2208
  %v2775 = vunpack.c.h.b16 %v2208
  %v2776 = vunpack.c.l.b16 %v2209
  %v2777 = vunpack.c.h.b16 %v2209
  %v2778 = vunpack.c.l.b16 %v2210
  %v2779 = vunpack.c.h.b16 %v2210
  %v2780 = vunpack.c.l.b16 %v2211
  %v2781 = vunpack.c.h.b16 %v2211
  %v2782 = vunpack.c.l.b16 %v2212
  %v2783 = vunpack.c.h.b16 %v2212
  %v2784 = vunpack.c.l.b16 %v2213
  %v2785 = vunpack.c.l.b16 %v2214
  %v2786 = vunpack.c.h.b16 %v2214
  %v2787 = vunpack.c.l.b16 %v2215
  %v2788 = vunpack.c.h.b16 %v2215
  %v2789 = vunpack.c.l.b16 %v2216
  %v2790 = vunpack.c.h.b16 %v2216
  %v2791 = vunpack.c.l.b16 %v2217
  %v2792 = vunpack.c.h.b16 %v2217
  %v2793 = vunpack.c.l.b16 %v2218
  %v2794 = vunpack.c.h.b16 %v2218
  %v2795 = vunpack.c.l.b16 %v2219
  %v2796 = vunpack.c.h.b16 %v2219
  %v2797 = vunpack.c.l.b16 %v2220
  %v2798 = vunpack.c.l.b16 %v2221
  %v2799 = vunpack.c.h.b16 %v2221
  %v2800 = vunpack.c.l.b16 %v2222
  %v2801 = vunpack.c.h.b16 %v2222
  %v2802 = vunpack.c.l.b16 %v2223
  %v2803 = vunpack.c.h.b16 %v2223
  %v2804 = vunpack.c.l.b16 %v2224
  %v2805 = vunpack.c.h.b16 %v2224
  %v2806 = vunpack.c.l.b16 %v2225
  %v2807 = vunpack.c.h.b16 %v2225
  %v2808 = vunpack.c.l.b16 %v2226
  %v2809 = vunpack.c.h.b16 %v2226
  %v2810 = vunpack.c.l.b16 %v2227
  %v2811 = vunpack.c.l.b16 %v2228
  %v2812 = vunpack.c.h.b16 %v2228
  %v2813 = vunpack.c.l.b16 %v2229
  %v2814 = vunpack.c.h.b16 %v2229
  %v2815 = vunpack.c.l.b16 %v2230
  %v2816 = vunpack.c.h.b16 %v2230
  %v2817 = vunpack.c.l.b16 %v2231
  %v2818 = vunpack.c.h.b16 %v2231
  %v2819 = vunpack.c.l.b16 %v2232
  %v2820 = vunpack.c.h.b16 %v2232
  %v2821 = vunpack.c.l.b16 %v2233
  %v2822 = vunpack.c.h.b16 %v2233
  %v2823 = vunpack.c.l.b16 %v2234
  %v2824 = vunpack.c.l.b16 %v2235
  %v2825 = vunpack.c.h.b16 %v2235
  %v2826 = vunpack.c.l.b16 %v2236
  %v2827 = vunpack.c.h.b16 %v2236
  %v2828 = vunpack.c.l.b16 %v2237
  %v2829 = vunpack.c.h.b16 %v2237
  %v2830 = vunpack.c.l.b16 %v2238
  %v2831 = vunpack.c.h.b16 %v2238
  %v2832 = vunpack.c.l.b16 %v2239
  %v2833 = vunpack.c.h.b16 %v2239
  %v2834 = vunpack.c.l.b16 %v2240
  %v2835 = vunpack.c.h.b16 %v2240
  %v2836 = vunpack.c.l.b16 %v2241
  %v2837 = vunpack.c.l.b16 %v2242
  %v2838 = vunpack.c.h.b16 %v2242
  %v2839 = vunpack.c.l.b16 %v2243
  %v2840 = vunpack.c.h.b16 %v2243
  %v2841 = vunpack.c.l.b16 %v2244
  %v2842 = vunpack.c.h.b16 %v2244
  %v2843 = vunpack.c.l.b16 %v2245
  %v2844 = vunpack.c.h.b16 %v2245
  %v2845 = vunpack.c.l.b16 %v2246
  %v2846 = vunpack.c.h.b16 %v2246
  %v2847 = vunpack.c.l.b16 %v2247
  %v2848 = vunpack.c.h.b16 %v2247
  %v2849 = vunpack.c.l.b16 %v2248
  %v2850 = vunpack.c.l.b16 %v2249
  %v2851 = vunpack.c.h.b16 %v2249
  %v2852 = vunpack.c.l.b16 %v2250
  %v2853 = vunpack.c.h.b16 %v2250
  %v2854 = vunpack.c.l.b16 %v2251
  %v2855 = vunpack.c.h.b16 %v2251
  %v2856 = vunpack.c.l.b16 %v2252
  %v2857 = vunpack.c.h.b16 %v2252
  %v2858 = vunpack.c.l.b16 %v2253
  %v2859 = vunpack.c.h.b16 %v2253
  %v2860 = vunpack.c.l.b16 %v2254
  %v2861 = vunpack.c.h.b16 %v2254
  %v2862 = vunpack.c.l.b16 %v2255
  %v2863 = vunpack.c.l.b16 %v2256
  %v2864 = vunpack.c.h.b16 %v2256
  %v2865 = vunpack.c.l.b16 %v2257
  %v2866 = vunpack.c.h.b16 %v2257
  %v2867 = vunpack.c.l.b16 %v2258
  %v2868 = vunpack.c.h.b16 %v2258
  %v2869 = vunpack.c.l.b16 %v2259
  %v2870 = vunpack.c.h.b16 %v2259
  %v2871 = vunpack.c.l.b16 %v2260
  %v2872 = vunpack.c.h.b16 %v2260
  %v2873 = vunpack.c.l.b16 %v2261
  %v2874 = vunpack.c.h.b16 %v2261
  %v2875 = vunpack.c.l.b16 %v2262
  %v2876 = vunpack.c.l.b16 %v2263
  %v2877 = vunpack.c.h.b16 %v2263
  %v2878 = vunpack.c.l.b16 %v2264
  %v2879 = vunpack.c.h.b16 %v2264
  %v2880 = vunpack.c.l.b16 %v2265
  %v2881 = vunpack.c.h.b16 %v2265
  %v2882 = vunpack.c.l.b16 %v2266
  %v2883 = vunpack.c.h.b16 %v2266
  %v2884 = vunpack.c.l.b16 %v2267
  %v2885 = vunpack.c.h.b16 %v2267
  %v2886 = vunpack.c.l.b16 %v2268
  %v2887 = vunpack.c.h.b16 %v2268
  %v2888 = vunpack.c.l.b16 %v2269
  %v2889 = vunpack.c.l.b16 %v2270
  %v2890 = vunpack.c.h.b16 %v2270
  %v2891 = vunpack.c.l.b16 %v2271
  %v2892 = vunpack.c.h.b16 %v2271
  %v2893 = vunpack.c.l.b16 %v2272
  %v2894 = vunpack.c.h.b16 %v2272
  %v2895 = vunpack.c.l.b16 %v2273
  %v2896 = vunpack.c.h.b16 %v2273
  %v2897 = vunpack.c.l.b16 %v2274
  %v2898 = vunpack.c.h.b16 %v2274
  %v2899 = vunpack.c.l.b16 %v2275
  %v2900 = vunpack.c.h.b16 %v2275
  %v2901 = vunpack.c.l.b16 %v2276
  %v2902 = vunpack.c.l.b16 %v2277
  %v2903 = vunpack.c.h.b16 %v2277
  %v2904 = vunpack.c.l.b16 %v2278
  %v2905 = vunpack.c.h.b16 %v2278
  %v2906 = vunpack.c.l.b16 %v2279
  %v2907 = vunpack.c.h.b16 %v2279
  %v2908 = vunpack.c.l.b16 %v2280
  %v2909 = vunpack.c.h.b16 %v2280
  %v2910 = vunpack.c.l.b16 %v2281
  %v2911 = vunpack.c.h.b16 %v2281
  %v2912 = vunpack.c.l.b16 %v2282
  %v2913 = vunpack.c.h.b16 %v2282
  %v2914 = vunpack.c.l.b16 %v2283
  %v2915 = vunpack.c.l.b16 %v2284
  %v2916 = vunpack.c.h.b16 %v2284
  %v2917 = vunpack.c.l.b16 %v2285
  %v2918 = vunpack.c.h.b16 %v2285
  %v2919 = vunpack.c.l.b16 %v2286
  %v2920 = vunpack.c.h.b16 %v2286
  %v2921 = vunpack.c.l.b16 %v2287
  %v2922 = vunpack.c.h.b16 %v2287
  %v2923 = vunpack.c.l.b16 %v2288
  %v2924 = vunpack.c.h.b16 %v2288
  %v2925 = vunpack.c.l.b16 %v2289
  %v2926 = vunpack.c.h.b16 %v2289
  %v2927 = vunpack.c.l.b16 %v2290
  %v2928 = vunpack.c.l.b16 %v2291
  %v2929 = vunpack.c.h.b16 %v2291
  %v2930 = vunpack.c.l.b16 %v2292
  %v2931 = vunpack.c.h.b16 %v2292
  %v2932 = vunpack.c.l.b16 %v2293
  %v2933 = vunpack.c.h.b16 %v2293
  %v2934 = vunpack.c.l.b16 %v2294
  %v2935 = vunpack.c.h.b16 %v2294
  %v2936 = vunpack.c.l.b16 %v2295
  %v2937 = vunpack.c.h.b16 %v2295
  %v2938 = vunpack.c.l.b16 %v2296
  %v2939 = vunpack.c.h.b16 %v2296
  %v2940 = vunpack.c.l.b16 %v2297
  %v2941 = vunpack.c.l.b16 %v2298
  %v2942 = vunpack.c.h.b16 %v2298
  %v2943 = vunpack.c.l.b16 %v2299
  %v2944 = vunpack.c.h.b16 %v2299
  %v2945 = vunpack.c.l.b16 %v2300
  %v2946 = vunpack.c.h.b16 %v2300
  %v2947 = vunpack.c.l.b16 %v2301
  %v2948 = vunpack.c.h.b16 %v2301
  %v2949 = vunpack.c.l.b16 %v2302
  %v2950 = vunpack.c.h.b16 %v2302
  %v2951 = vunpack.c.l.b16 %v2303
  %v2952 = vunpack.c.h.b16 %v2303
  %v2953 = vunpack.c.l.b16 %v2304
  %v2954 = vunpack.c.l.b16 %v2305
  %v2955 = vunpack.c.h.b16 %v2305
  %v2956 = vunpack.c.l.b16 %v2306
  %v2957 = vunpack.c.h.b16 %v2306
  %v2958 = vunpack.c.l.b16 %v2307
  %v2959 = vunpack.c.h.b16 %v2307
  %v2960 = vunpack.c.l.b16 %v2308
  %v2961 = vunpack.c.h.b16 %v2308
  %v2962 = vunpack.c.l.b16 %v2309
  %v2963 = vunpack.c.h.b16 %v2309
  %v2964 = vunpack.c.l.b16 %v2310
  %v2965 = vunpack.c.h.b16 %v2310
  %v2966 = vunpack.c.l.b16 %v2311
  %v2967 = vunpack.c.l.b16 %v2312
  %v2968 = vunpack.c.h.b16 %v2312
  %v2969 = vunpack.c.l.b16 %v2313
  %v2970 = vunpack.c.h.b16 %v2313
  %v2971 = vunpack.c.l.b16 %v2314
  %v2972 = vunpack.c.h.b16 %v2314
  %v2973 = vunpack.c.l.b16 %v2315
  %v2974 = vunpack.c.h.b16 %v2315
  %v2975 = vunpack.c.l.b16 %v2316
  %v2976 = vunpack.c.h.b16 %v2316
  %v2977 = vunpack.c.l.b16 %v2317
  %v2978 = vunpack.c.h.b16 %v2317
  %v2979 = vunpack.c.l.b16 %v2318
  %v2980 = vunpack.c.l.b16 %v2319
  %v2981 = vunpack.c.h.b16 %v2319
  %v2982 = vunpack.c.l.b16 %v2320
  %v2983 = vunpack.c.h.b16 %v2320
  %v2984 = vunpack.c.l.b16 %v2321
  %v2985 = vunpack.c.h.b16 %v2321
  %v2986 = vunpack.c.l.b16 %v2322
  %v2987 = vunpack.c.h.b16 %v2322
  %v2988 = vunpack.c.l.b16 %v2323
  %v2989 = vunpack.c.h.b16 %v2323
  %v2990 = vunpack.c.l.b16 %v2324
  %v2991 = vunpack.c.h.b16 %v2324
  %v2992 = vunpack.c.l.b16 %v2325
  %v2993 = vunpack.c.l.b16 %v2326
  %v2994 = vunpack.c.h.b16 %v2326
  %v2995 = vunpack.c.l.b16 %v2327
  %v2996 = vunpack.c.h.b16 %v2327
  %v2997 = vunpack.c.l.b16 %v2328
  %v2998 = vunpack.c.h.b16 %v2328
  %v2999 = vunpack.c.l.b16 %v2329
  %v3000 = vunpack.c.h.b16 %v2329
  %v3001 = vunpack.c.l.b16 %v2330
  %v3002 = vunpack.c.h.b16 %v2330
  %v3003 = vunpack.c.l.b16 %v2331
  %v3004 = vunpack.c.h.b16 %v2331
  %v3005 = vunpack.c.l.b16 %v2332
  %v3006 = vunpack.c.l.b16 %v2333
  %v3007 = vunpack.c.h.b16 %v2333
  %v3008 = vunpack.c.l.b16 %v2334
  %v3009 = vunpack.c.h.b16 %v2334
  %v3010 = vunpack.c.l.b16 %v2335
  %v3011 = vunpack.c.h.b16 %v2335
  %v3012 = vunpack.c.l.b16 %v2336
  %v3013 = vunpack.c.h.b16 %v2336
  %v3014 = vunpack.c.l.b16 %v2337
  %v3015 = vunpack.c.h.b16 %v2337
  %v3016 = vunpack.c.l.b16 %v2338
  %v3017 = vunpack.c.h.b16 %v2338
  %v3018 = vunpack.c.l.b16 %v2339
  %v3019 = vunpack.c.l.b16 %v2340
  %v3020 = vunpack.c.h.b16 %v2340
  %v3021 = vunpack.c.l.b16 %v2341
  %v3022 = vunpack.c.h.b16 %v2341
  %v3023 = vunpack.c.l.b16 %v2342
  %v3024 = vunpack.c.h.b16 %v2342
  %v3025 = vunpack.c.l.b16 %v2343
  %v3026 = vunpack.c.h.b16 %v2343
  %v3027 = vunpack.c.l.b16 %v2344
  %v3028 = vunpack.c.h.b16 %v2344
  %v3029 = vunpack.c.l.b16 %v2345
  %v3030 = vunpack.c.h.b16 %v2345
  %v3031 = vunpack.c.l.b16 %v2346
  %v3032 = vunpack.c.l.b16 %v2347
  %v3033 = vunpack.c.h.b16 %v2347
  %v3034 = vunpack.c.l.b16 %v2348
  %v3035 = vunpack.c.h.b16 %v2348
  %v3036 = vunpack.c.l.b16 %v2349
  %v3037 = vunpack.c.h.b16 %v2349
  %v3038 = vunpack.c.l.b16 %v2350
  %v3039 = vunpack.c.h.b16 %v2350
  %v3040 = vunpack.c.l.b16 %v2351
  %v3041 = vunpack.c.h.b16 %v2351
  %v3042 = vunpack.c.l.b16 %v2352
  %v3043 = vunpack.c.h.b16 %v2352
  %v3044 = vunpack.c.l.b16 %v2353
  %v3045 = vunpack.c.l.b16 %v2354
  %v3046 = vunpack.c.h.b16 %v2354
  %v3047 = vunpack.c.l.b16 %v2355
  %v3048 = vunpack.c.h.b16 %v2355
  %v3049 = vunpack.c.l.b16 %v2356
  %v3050 = vunpack.c.h.b16 %v2356
  %v3051 = vunpack.c.l.b16 %v2357
  %v3052 = vunpack.c.h.b16 %v2357
  %v3053 = vunpack.c.l.b16 %v2358
  %v3054 = vunpack.c.h.b16 %v2358
  %v3055 = vunpack.c.l.b16 %v2359
  %v3056 = vunpack.c.h.b16 %v2359
  %v3057 = vunpack.c.l.b16 %v2360
  %v3058 = vunpack.c.l.b16 %v2361
  %v3059 = vunpack.c.h.b16 %v2361
  %v3060 = vunpack.c.l.b16 %v2362
  %v3061 = vunpack.c.h.b16 %v2362
  %v3062 = vunpack.c.l.b16 %v2363
  %v3063 = vunpack.c.h.b16 %v2363
  %v3064 = vunpack.c.l.b16 %v2364
  %v3065 = vunpack.c.h.b16 %v2364
  %v3066 = vunpack.c.l.b16 %v2365
  %v3067 = vunpack.c.h.b16 %v2365
  %v3068 = vunpack.c.l.b16 %v2366
  %v3069 = vunpack.c.h.b16 %v2366
  %v3070 = vunpack.c.l.b16 %v2367
  %v3071 = vunpack.c.l.b16 %v2368
  %v3072 = vunpack.c.h.b16 %v2368
  %v3073 = vunpack.c.l.b16 %v2369
  %v3074 = vunpack.c.h.b16 %v2369
  %v3075 = vunpack.c.l.b16 %v2370
  %v3076 = vunpack.c.h.b16 %v2370
  %v3077 = vunpack.c.l.b16 %v2371
  %v3078 = vunpack.c.h.b16 %v2371
  %v3079 = vunpack.c.l.b16 %v2372
  %v3080 = vunpack.c.h.b16 %v2372
  %v3081 = vunpack.c.l.b16 %v2373
  %v3082 = vunpack.c.h.b16 %v2373
  %v3083 = vunpack.c.l.b16 %v2374
  %v3084 = vpack.c.b16 %v2681, %v2668
  %v3085 = vpack.c.b16 %v2682, %v2669
  %v3086 = vpack.c.b16 %v2683, %v2670
  %v3087 = vpack.c.b16 %v2684, %v2671
  %v3088 = vpack.c.b16 %v2685, %v2672
  %v3089 = vpack.c.b16 %v2686, %v2673
  %v3090 = vpack.c.b16 %v2687, %v2674
  %v3091 = vpack.c.b16 %v2688, %v2675
  %v3092 = vpack.c.b16 %v2689, %v2676
  %v3093 = vpack.c.b16 %v2690, %v2677
  %v3094 = vpack.c.b16 %v2691, %v2678
  %v3095 = vpack.c.b16 %v2692, %v2679
  %v3096 = vpack.c.b16 %v2693, %v2680
  %v3097 = vpack.c.b16 %v2707, %v2694
  %v3098 = vpack.c.b16 %v2708, %v2695
  %v3099 = vpack.c.b16 %v2709, %v2696
  %v3100 = vpack.c.b16 %v2710, %v2697
  %v3101 = vpack.c.b16 %v2711, %v2698
  %v3102 = vpack.c.b16 %v2712, %v2699
  %v3103 = vpack.c.b16 %v2713, %v2700
  %v3104 = vpack.c.b16 %v2714, %v2701
  %v3105 = vpack.c.b16 %v2715, %v2702
  %v3106 = vpack.c.b16 %v2716, %v2703
  %v3107 = vpack.c.b16 %v2717, %v2704
  %v3108 = vpack.c.b16 %v2718, %v2705
  %v3109 = vpack.c.b16 %v2719, %v2706
  %v3110 = vpack.c.b16 %v2733, %v2720
  %v3111 = vpack.c.b16 %v2734, %v2721
  %v3112 = vpack.c.b16 %v2735, %v2722
  %v3113 = vpack.c.b16 %v2736, %v2723
  %v3114 = vpack.c.b16 %v2737, %v2724
  %v3115 = vpack.c.b16 %v2738, %v2725
  %v3116 = vpack.c.b16 %v2739, %v2726
  %v3117 = vpack.c.b16 %v2740, %v2727
  %v3118 = vpack.c.b16 %v2741, %v2728
  %v3119 = vpack.c.b16 %v2742, %v2729
  %v3120 = vpack.c.b16 %v2743, %v2730
  %v3121 = vpack.c.b16 %v2744, %v2731
  %v3122 = vpack.c.b16 %v2745, %v2732
  %v3123 = vpack.c.b16 %v2759, %v2746
  %v3124 = vpack.c.b16 %v2760, %v2747
  %v3125 = vpack.c.b16 %v2761, %v2748
  %v3126 = vpack.c.b16 %v2762, %v2749
  %v3127 = vpack.c.b16 %v2763, %v2750
  %v3128 = vpack.c.b16 %v2764, %v2751
  %v3129 = vpack.c.b16 %v2765, %v2752
  %v3130 = vpack.c.b16 %v2766, %v2753
  %v3131 = vpack.c.b16 %v2767, %v2754
  %v3132 = vpack.c.b16 %v2768, %v2755
  %v3133 = vpack.c.b16 %v2769, %v2756
  %v3134 = vpack.c.b16 %v2770, %v2757
  %v3135 = vpack.c.b16 %v2771, %v2758
  %v3136 = vpack.c.b16 %v2785, %v2772
  %v3137 = vpack.c.b16 %v2786, %v2773
  %v3138 = vpack.c.b16 %v2787, %v2774
  %v3139 = vpack.c.b16 %v2788, %v2775
  %v3140 = vpack.c.b16 %v2789, %v2776
  %v3141 = vpack.c.b16 %v2790, %v2777
  %v3142 = vpack.c.b16 %v2791, %v2778
  %v3143 = vpack.c.b16 %v2792, %v2779
  %v3144 = vpack.c.b16 %v2793, %v2780
  %v3145 = vpack.c.b16 %v2794, %v2781
  %v3146 = vpack.c.b16 %v2795, %v2782
  %v3147 = vpack.c.b16 %v2796, %v2783
  %v3148 = vpack.c.b16 %v2797, %v2784
  %v3149 = vpack.c.b16 %v2811, %v2798
  %v3150 = vpack.c.b16 %v2812, %v2799
  %v3151 = vpack.c.b16 %v2813, %v2800
  %v3152 = vpack.c.b16 %v2814, %v2801
  %v3153 = vpack.c.b16 %v2815, %v2802
  %v3154 = vpack.c.b16 %v2816, %v2803
  %v3155 = vpack.c.b16 %v2817, %v2804
  %v3156 = vpack.c.b16 %v2818, %v2805
  %v3157 = vpack.c.b16 %v2819, %v2806
  %v3158 = vpack.c.b16 %v2820, %v2807
  %v3159 = vpack.c.b16 %v2821, %v2808
  %v3160 = vpack.c.b16 %v2822, %v2809
  %v3161 = vpack.c.b16 %v2823, %v2810
  %v3162 = vpack.c.b16 %v2837, %v2824
  %v3163 = vpack.c.b16 %v2838, %v2825
  %v3164 = vpack.c.b16 %v2839, %v2826
  %v3165 = vpack.c.b16 %v2840, %v2827
  %v3166 = vpack.c.b16 %v2841, %v2828
  %v3167 = vpack.c.b16 %v2842, %v2829
  %v3168 = vpack.c.b16 %v2843, %v2830
  %v3169 = vpack.c.b16 %v2844, %v2831
  %v3170 = vpack.c.b16 %v2845, %v2832
  %v3171 = vpack.c.b16 %v2846, %v2833
  %v3172 = vpack.c.b16 %v2847, %v2834
  %v3173 = vpack.c.b16 %v2848, %v2835
  %v3174 = vpack.c.b16 %v2849, %v2836
  %v3175 = vpack.c.b16 %v2863, %v2850
  %v3176 = vpack.c.b16 %v2864, %v2851
  %v3177 = vpack.c.b16 %v2865, %v2852
  %v3178 = vpack.c.b16 %v2866, %v2853
  %v3179 = vpack.c.b16 %v2867, %v2854
  %v3180 = vpack.c.b16 %v2868, %v2855
  %v3181 = vpack.c.b16 %v2869, %v2856
  %v3182 = vpack.c.b16 %v2870, %v2857
  %v3183 = vpack.c.b16 %v2871, %v2858
  %v3184 = vpack.c.b16 %v2872, %v2859
  %v3185 = vpack.c.b16 %v2873, %v2860
  %v3186 = vpack.c.b16 %v2874, %v2861
  %v3187 = vpack.c.b16 %v2875, %v2862
  %v3188 = vpack.c.b16 %v2889, %v2876
  %v3189 = vpack.c.b16 %v2890, %v2877
  %v3190 = vpack.c.b16 %v2891, %v2878
  %v3191 = vpack.c.b16 %v2892, %v2879
  %v3192 = vpack.c.b16 %v2893, %v2880
  %v3193 = vpack.c.b16 %v2894, %v2881
  %v3194 = vpack.c.b16 %v2895, %v2882
  %v3195 = vpack.c.b16 %v2896, %v2883
  %v3196 = vpack.c.b16 %v2897, %v2884
  %v3197 = vpack.c.b16 %v2898, %v2885
  %v3198 = vpack.c.b16 %v2899, %v2886
  %v3199 = vpack.c.b16 %v2900, %v2887
  %v3200 = vpack.c.b16 %v2901, %v2888
  %v3201 = vpack.c.b16 %v2915, %v2902
  %v3202 = vpack.c.b16 %v2916, %v2903
  %v3203 = vpack.c.b16 %v2917, %v2904
  %v3204 = vpack.c.b16 %v2918, %v2905
  %v3205 = vpack.c.b16 %v2919, %v2906
  %v3206 = vpack.c.b16 %v2920, %v2907
  %v3207 = vpack.c.b16 %v2921, %v2908
  %v3208 = vpack.c.b16 %v2922, %v2909
  %v3209 = vpack.c.b16 %v2923, %v2910
  %v3210 = vpack.c.b16 %v2924, %v2911
  %v3211 = vpack.c.b16 %v2925, %v2912
  %v3212 = vpack.c.b16 %v2926, %v2913
  %v3213 = vpack.c.b16 %v2927, %v2914
  %v3214 = vpack.c.b16 %v2941, %v2928
  %v3215 = vpack.c.b16 %v2942, %v2929
  %v3216 = vpack.c.b16 %v2943, %v2930
  %v3217 = vpack.c.b16 %v2944, %v2931
  %v3218 = vpack.c.b16 %v2945, %v2932
  %v3219 = vpack.c.b16 %v2946, %v2933
  %v3220 = vpack.c.b16 %v2947, %v2934
  %v3221 = vpack.c.b16 %v2948, %v2935
  %v3222 = vpack.c.b16 %v2949, %v2936
  %v3223 = vpack.c.b16 %v2950, %v2937
  %v3224 = vpack.c.b16 %v2951, %v2938
  %v3225 = vpack.c.b16 %v2952, %v2939
  %v3226 = vpack.c.b16 %v2953, %v2940
  %v3227 = vpack.c.b16 %v2967, %v2954
  %v3228 = vpack.c.b16 %v2968, %v2955
  %v3229 = vpack.c.b16 %v2969, %v2956
  %v3230 = vpack.c.b16 %v2970, %v2957
  %v3231 = vpack.c.b16 %v2971, %v2958
  %v3232 = vpack.c.b16 %v2972, %v2959
  %v3233 = vpack.c.b16 %v2973, %v2960
  %v3234 = vpack.c.b16 %v2974, %v2961
  %v3235 = vpack.c.b16 %v2975, %v2962
  %v3236 = vpack.c.b16 %v2976, %v2963
  %v3237 = vpack.c.b16 %v2977, %v2964
  %v3238 = vpack.c.b16 %v2978, %v2965
  %v3239 = vpack.c.b16 %v2979, %v2966
  %v3240 = vpack.c.b16 %v2993, %v2980
  %v3241 = vpack.c.b16 %v2994, %v2981
  %v3242 = vpack.c.b16 %v2995, %v2982
  %v3243 = vpack.c.b16 %v2996, %v2983
  %v3244 = vpack.c.b16 %v2997, %v2984
  %v3245 = vpack.c.b16 %v2998, %v2985
  %v3246 = vpack.c.b16 %v2999, %v2986
  %v3247 = vpack.c.b16 %v3000, %v2987
  %v3248 = vpack.c.b16 %v3001, %v2988
  %v3249 = vpack.c.b16 %v3002, %v2989
  %v3250 = vpack.c.b16 %v3003, %v2990
  %v3251 = vpack.c.b16 %v3004, %v2991
  %v3252 = vpack.c.b16 %v3005, %v2992
  %v3253 = vpack.c.b16 %v3019, %v3006
  %v3254 = vpack.c.b16 %v3020, %v3007
  %v3255 = vpack.c.b16 %v3021, %v3008
  %v3256 = vpack.c.b16 %v3022, %v3009
  %v3257 = vpack.c.b16 %v3023, %v3010
  %v3258 = vpack.c.b16 %v3024, %v3011
  %v3259 = vpack.c.b16 %v3025, %v3012
  %v3260 = vpack.c.b16 %v3026, %v3013
  %v3261 = vpack.c.b16 %v3027, %v3014
  %v3262 = vpack.c.b16 %v3028, %v3015
  %v3263 = vpack.c.b16 %v3029, %v3016
  %v3264 = vpack.c.b16 %v3030, %v3017
  %v3265 = vpack.c.b16 %v3031, %v3018
  %v3266 = vpack.c.b16 %v3045, %v3032
  %v3267 = vpack.c.b16 %v3046, %v3033
  %v3268 = vpack.c.b16 %v3047, %v3034
  %v3269 = vpack.c.b16 %v3048, %v3035
  %v3270 = vpack.c.b16 %v3049, %v3036
  %v3271 = vpack.c.b16 %v3050, %v3037
  %v3272 = vpack.c.b16 %v3051, %v3038
  %v3273 = vpack.c.b16 %v3052, %v3039
  %v3274 = vpack.c.b16 %v3053, %v3040
  %v3275 = vpack.c.b16 %v3054, %v3041
  %v3276 = vpack.c.b16 %v3055, %v3042
  %v3277 = vpack.c.b16 %v3056, %v3043
  %v3278 = vpack.c.b16 %v3057, %v3044
  %v3279 = vpack.c.b16 %v3071, %v3058
  %v3280 = vpack.c.b16 %v3072, %v3059
  %v3281 = vpack.c.b16 %v3073, %v3060
  %v3282 = vpack.c.b16 %v3074, %v3061
  %v3283 = vpack.c.b16 %v3075, %v3062
  %v3284 = vpack.c.b16 %v3076, %v3063
  %v3285 = vpack.c.b16 %v3077, %v3064
  %v3286 = vpack.c.b16 %v3078, %v3065
  %v3287 = vpack.c.b16 %v3079, %v3066
  %v3288 = vpack.c.b16 %v3080, %v3067
  %v3289 = vpack.c.b16 %v3081, %v3068
  %v3290 = vpack.c.b16 %v3082, %v3069
  %v3291 = vpack.c.b16 %v3083, %v3070
  %3500 = vmatprep.subr.bf16.mxu0 %v3176
  %3501 = vmatpush1.bf16.msra.mxu0 %v3175
  %3502 = vmatprep.subr.bf16.mxu0 %v3163
  %3503 = vmatpush1.bf16.msra.mxu0 %v3162
  %3504 = vmatprep.subr.bf16.mxu0 %v3150
  %3505 = vmatpush1.bf16.msra.mxu0 %v3149
  %3506 = vmatprep.subr.bf16.mxu0 %v3137
  %3507 = vmatpush1.bf16.msra.mxu0 %v3136
  %3508 = vmatprep.subr.bf16.mxu0 %v3124
  %3509 = vmatpush1.bf16.msra.mxu0 %v3123
  %3510 = vmatprep.subr.bf16.mxu0 %v3111
  %3511 = vmatpush1.bf16.msra.mxu0 %v3110
  %3512 = vmatprep.subr.bf16.mxu0 %v3098
  %3513 = vmatpush1.bf16.msra.mxu0 %v3097
  %3514 = vmatprep.subr.bf16.mxu0 %v3085
  %3515 = vmatpush1.bf16.msra.mxu0 %v3084
  %3516 = vmatprep.subr.bf16.mxu0 %v3280
  %3517 = vmatpush2.bf16.msra.mxu0 %v3279
  %3518 = vmatprep.subr.bf16.mxu0 %v3267
  %3519 = vmatpush2.bf16.msra.mxu0 %v3266
  %3520 = vmatprep.subr.bf16.mxu0 %v3254
  %3521 = vmatpush2.bf16.msra.mxu0 %v3253
  %3522 = vmatprep.subr.bf16.mxu0 %v3241
  %3523 = vmatpush2.bf16.msra.mxu0 %v3240
  %3524 = vmatprep.subr.bf16.mxu0 %v3228
  %3525 = vmatpush2.bf16.msra.mxu0 %v3227
  %3526 = vmatprep.subr.bf16.mxu0 %v3215
  %3527 = vmatpush2.bf16.msra.mxu0 %v3214
  %3528 = vmatprep.subr.bf16.mxu0 %v3202
  %3529 = vmatpush2.bf16.msra.mxu0 %v3201
  %3530 = vmatprep.subr.bf16.mxu0 %v3189
  %3531 = vmatpush2.bf16.msra.mxu0 %v3188
  %3532 = vmatprep.mubr.bf16.mxu0 %v2150
  %3533 = vmatmul.mubr.bf16.gmra.mxu0 %v2149
  %v3534 = vpop.f32.mrf.mxu0
  %v3535 = vadd.f32 %v2382, %v3534
  %v3536 = vpop.f32.mrf.mxu0
  %v3537 = vadd.f32 %v2386, %v3536
  %v3538 = vpop.f32.mrf.mxu0
  %v3539 = vpop.f32.mrf.mxu0
  %3540 = vdwg.mxu0
  %3541 = vmatprep.subr.bf16.mxu0 %v3178
  %3542 = vmatpush1.bf16.msra.mxu0 %v3177
  %3543 = vmatprep.subr.bf16.mxu0 %v3165
  %3544 = vmatpush1.bf16.msra.mxu0 %v3164
  %3545 = vmatprep.subr.bf16.mxu0 %v3152
  %3546 = vmatpush1.bf16.msra.mxu0 %v3151
  %3547 = vmatprep.subr.bf16.mxu0 %v3139
  %3548 = vmatpush1.bf16.msra.mxu0 %v3138
  %3549 = vmatprep.subr.bf16.mxu0 %v3126
  %3550 = vmatpush1.bf16.msra.mxu0 %v3125
  %3551 = vmatprep.subr.bf16.mxu0 %v3113
  %3552 = vmatpush1.bf16.msra.mxu0 %v3112
  %3553 = vmatprep.subr.bf16.mxu0 %v3100
  %3554 = vmatpush1.bf16.msra.mxu0 %v3099
  %3555 = vmatprep.subr.bf16.mxu0 %v3087
  %3556 = vmatpush1.bf16.msra.mxu0 %v3086
  %3557 = vmatprep.subr.bf16.mxu0 %v3282
  %3558 = vmatpush2.bf16.msra.mxu0 %v3281
  %3559 = vmatprep.subr.bf16.mxu0 %v3269
  %3560 = vmatpush2.bf16.msra.mxu0 %v3268
  %3561 = vmatprep.subr.bf16.mxu0 %v3256
  %3562 = vmatpush2.bf16.msra.mxu0 %v3255
  %3563 = vmatprep.subr.bf16.mxu0 %v3243
  %3564 = vmatpush2.bf16.msra.mxu0 %v3242
  %3565 = vmatprep.subr.bf16.mxu0 %v3230
  %3566 = vmatpush2.bf16.msra.mxu0 %v3229
  %3567 = vmatprep.subr.bf16.mxu0 %v3217
  %3568 = vmatpush2.bf16.msra.mxu0 %v3216
  %3569 = vmatprep.subr.bf16.mxu0 %v3204
  %3570 = vmatpush2.bf16.msra.mxu0 %v3203
  %3571 = vmatprep.subr.bf16.mxu0 %v3191
  %3572 = vmatpush2.bf16.msra.mxu0 %v3190
  %3573 = vmatprep.mubr.bf16.mxu0 %v2150
  %3574 = vmatmul.mubr.bf16.gmra.mxu0 %v2149
  %v3575 = vpop.f32.mrf.mxu0
  %v3576 = vadd.f32 %v2390, %v3575
  %v3577 = vpop.f32.mrf.mxu0
  %v3578 = vadd.f32 %v2394, %v3577
  %v3579 = vpop.f32.mrf.mxu0
  %v3580 = vpop.f32.mrf.mxu0
  %3581 = vdwg.mxu0
  %3582 = vmatprep.subr.bf16.mxu0 %v3180
  %3583 = vmatpush1.bf16.msra.mxu0 %v3179
  %3584 = vmatprep.subr.bf16.mxu0 %v3167
  %3585 = vmatpush1.bf16.msra.mxu0 %v3166
  %3586 = vmatprep.subr.bf16.mxu0 %v3154
  %3587 = vmatpush1.bf16.msra.mxu0 %v3153
  %3588 = vmatprep.subr.bf16.mxu0 %v3141
  %3589 = vmatpush1.bf16.msra.mxu0 %v3140
  %3590 = vmatprep.subr.bf16.mxu0 %v3128
  %3591 = vmatpush1.bf16.msra.mxu0 %v3127
  %3592 = vmatprep.subr.bf16.mxu0 %v3115
  %3593 = vmatpush1.bf16.msra.mxu0 %v3114
  %3594 = vmatprep.subr.bf16.mxu0 %v3102
  %3595 = vmatpush1.bf16.msra.mxu0 %v3101
  %3596 = vmatprep.subr.bf16.mxu0 %v3089
  %3597 = vmatpush1.bf16.msra.mxu0 %v3088
  %3598 = vmatprep.subr.bf16.mxu0 %v3284
  %3599 = vmatpush2.bf16.msra.mxu0 %v3283
  %3600 = vmatprep.subr.bf16.mxu0 %v3271
  %3601 = vmatpush2.bf16.msra.mxu0 %v3270
  %3602 = vmatprep.subr.bf16.mxu0 %v3258
  %3603 = vmatpush2.bf16.msra.mxu0 %v3257
  %3604 = vmatprep.subr.bf16.mxu0 %v3245
  %3605 = vmatpush2.bf16.msra.mxu0 %v3244
  %3606 = vmatprep.subr.bf16.mxu0 %v3232
  %3607 = vmatpush2.bf16.msra.mxu0 %v3231
  %3608 = vmatprep.subr.bf16.mxu0 %v3219
  %3609 = vmatpush2.bf16.msra.mxu0 %v3218
  %3610 = vmatprep.subr.bf16.mxu0 %v3206
  %3611 = vmatpush2.bf16.msra.mxu0 %v3205
  %3612 = vmatprep.subr.bf16.mxu0 %v3193
  %3613 = vmatpush2.bf16.msra.mxu0 %v3192
  %3614 = vmatprep.mubr.bf16.mxu0 %v2150
  %3615 = vmatmul.mubr.bf16.gmra.mxu0 %v2149
  %v3616 = vpop.f32.mrf.mxu0
  %v3617 = vadd.f32 %v2398, %v3616
  %v3618 = vpop.f32.mrf.mxu0
  %v3619 = vadd.f32 %v2402, %v3618
  %v3620 = vpop.f32.mrf.mxu0
  %v3621 = vpop.f32.mrf.mxu0
  %3622 = vdwg.mxu0
  %3623 = vmatprep.subr.bf16.mxu0 %v3182
  %3624 = vmatpush1.bf16.msra.mxu0 %v3181
  %3625 = vmatprep.subr.bf16.mxu0 %v3169
  %3626 = vmatpush1.bf16.msra.mxu0 %v3168
  %3627 = vmatprep.subr.bf16.mxu0 %v3156
  %3628 = vmatpush1.bf16.msra.mxu0 %v3155
  %3629 = vmatprep.subr.bf16.mxu0 %v3143
  %3630 = vmatpush1.bf16.msra.mxu0 %v3142
  %3631 = vmatprep.subr.bf16.mxu0 %v3130
  %3632 = vmatpush1.bf16.msra.mxu0 %v3129
  %3633 = vmatprep.subr.bf16.mxu0 %v3117
  %3634 = vmatpush1.bf16.msra.mxu0 %v3116
  %3635 = vmatprep.subr.bf16.mxu0 %v3104
  %3636 = vmatpush1.bf16.msra.mxu0 %v3103
  %3637 = vmatprep.subr.bf16.mxu0 %v3091
  %3638 = vmatpush1.bf16.msra.mxu0 %v3090
  %3639 = vmatprep.subr.bf16.mxu0 %v3286
  %3640 = vmatpush2.bf16.msra.mxu0 %v3285
  %3641 = vmatprep.subr.bf16.mxu0 %v3273
  %3642 = vmatpush2.bf16.msra.mxu0 %v3272
  %3643 = vmatprep.subr.bf16.mxu0 %v3260
  %3644 = vmatpush2.bf16.msra.mxu0 %v3259
  %3645 = vmatprep.subr.bf16.mxu0 %v3247
  %3646 = vmatpush2.bf16.msra.mxu0 %v3246
  %3647 = vmatprep.subr.bf16.mxu0 %v3234
  %3648 = vmatpush2.bf16.msra.mxu0 %v3233
  %3649 = vmatprep.subr.bf16.mxu0 %v3221
  %3650 = vmatpush2.bf16.msra.mxu0 %v3220
  %3651 = vmatprep.subr.bf16.mxu0 %v3208
  %3652 = vmatpush2.bf16.msra.mxu0 %v3207
  %3653 = vmatprep.subr.bf16.mxu0 %v3195
  %3654 = vmatpush2.bf16.msra.mxu0 %v3194
  %3655 = vmatprep.mubr.bf16.mxu0 %v2150
  %3656 = vmatmul.mubr.bf16.gmra.mxu0 %v2149
  %v3657 = vpop.f32.mrf.mxu0
  %v3658 = vadd.f32 %v2406, %v3657
  %v3659 = vpop.f32.mrf.mxu0
  %v3660 = vadd.f32 %v2410, %v3659
  %v3661 = vpop.f32.mrf.mxu0
  %v3662 = vpop.f32.mrf.mxu0
  %3663 = vdwg.mxu0
  %3664 = vmatprep.subr.bf16.mxu0 %v3184
  %3665 = vmatpush1.bf16.msra.mxu0 %v3183
  %3666 = vmatprep.subr.bf16.mxu0 %v3171
  %3667 = vmatpush1.bf16.msra.mxu0 %v3170
  %3668 = vmatprep.subr.bf16.mxu0 %v3158
  %3669 = vmatpush1.bf16.msra.mxu0 %v3157
  %3670 = vmatprep.subr.bf16.mxu0 %v3145
  %3671 = vmatpush1.bf16.msra.mxu0 %v3144
  %3672 = vmatprep.subr.bf16.mxu0 %v3132
  %3673 = vmatpush1.bf16.msra.mxu0 %v3131
  %3674 = vmatprep.subr.bf16.mxu0 %v3119
  %3675 = vmatpush1.bf16.msra.mxu0 %v3118
  %3676 = vmatprep.subr.bf16.mxu0 %v3106
  %3677 = vmatpush1.bf16.msra.mxu0 %v3105
  %3678 = vmatprep.subr.bf16.mxu0 %v3093
  %3679 = vmatpush1.bf16.msra.mxu0 %v3092
  %3680 = vmatprep.subr.bf16.mxu0 %v3288
  %3681 = vmatpush2.bf16.msra.mxu0 %v3287
  %3682 = vmatprep.subr.bf16.mxu0 %v3275
  %3683 = vmatpush2.bf16.msra.mxu0 %v3274
  %3684 = vmatprep.subr.bf16.mxu0 %v3262
  %3685 = vmatpush2.bf16.msra.mxu0 %v3261
  %3686 = vmatprep.subr.bf16.mxu0 %v3249
  %3687 = vmatpush2.bf16.msra.mxu0 %v3248
  %3688 = vmatprep.subr.bf16.mxu0 %v3236
  %3689 = vmatpush2.bf16.msra.mxu0 %v3235
  %3690 = vmatprep.subr.bf16.mxu0 %v3223
  %3691 = vmatpush2.bf16.msra.mxu0 %v3222
  %3692 = vmatprep.subr.bf16.mxu0 %v3210
  %3693 = vmatpush2.bf16.msra.mxu0 %v3209
  %3694 = vmatprep.subr.bf16.mxu0 %v3197
  %3695 = vmatpush2.bf16.msra.mxu0 %v3196
  %3696 = vmatprep.mubr.bf16.mxu0 %v2150
  %3697 = vmatmul.mubr.bf16.gmra.mxu0 %v2149
  %v3698 = vpop.f32.mrf.mxu0
  %v3699 = vadd.f32 %v2414, %v3698
  %v3700 = vpop.f32.mrf.mxu0
  %v3701 = vadd.f32 %v2418, %v3700
  %v3702 = vpop.f32.mrf.mxu0
  %v3703 = vpop.f32.mrf.mxu0
  %3704 = vdwg.mxu0
  %3705 = vmatprep.subr.bf16.mxu0 %v3186
  %3706 = vmatpush1.bf16.msra.mxu0 %v3185
  %3707 = vmatprep.subr.bf16.mxu0 %v3173
  %3708 = vmatpush1.bf16.msra.mxu0 %v3172
  %3709 = vmatprep.subr.bf16.mxu0 %v3160
  %3710 = vmatpush1.bf16.msra.mxu0 %v3159
  %3711 = vmatprep.subr.bf16.mxu0 %v3147
  %3712 = vmatpush1.bf16.msra.mxu0 %v3146
  %3713 = vmatprep.subr.bf16.mxu0 %v3134
  %3714 = vmatpush1.bf16.msra.mxu0 %v3133
  %3715 = vmatprep.subr.bf16.mxu0 %v3121
  %3716 = vmatpush1.bf16.msra.mxu0 %v3120
  %3717 = vmatprep.subr.bf16.mxu0 %v3108
  %3718 = vmatpush1.bf16.msra.mxu0 %v3107
  %3719 = vmatprep.subr.bf16.mxu0 %v3095
  %3720 = vmatpush1.bf16.msra.mxu0 %v3094
  %3721 = vmatprep.subr.bf16.mxu0 %v3290
  %3722 = vmatpush2.bf16.msra.mxu0 %v3289
  %3723 = vmatprep.subr.bf16.mxu0 %v3277
  %3724 = vmatpush2.bf16.msra.mxu0 %v3276
  %3725 = vmatprep.subr.bf16.mxu0 %v3264
  %3726 = vmatpush2.bf16.msra.mxu0 %v3263
  %3727 = vmatprep.subr.bf16.mxu0 %v3251
  %3728 = vmatpush2.bf16.msra.mxu0 %v3250
  %3729 = vmatprep.subr.bf16.mxu0 %v3238
  %3730 = vmatpush2.bf16.msra.mxu0 %v3237
  %3731 = vmatprep.subr.bf16.mxu0 %v3225
  %3732 = vmatpush2.bf16.msra.mxu0 %v3224
  %3733 = vmatprep.subr.bf16.mxu0 %v3212
  %3734 = vmatpush2.bf16.msra.mxu0 %v3211
  %3735 = vmatprep.subr.bf16.mxu0 %v3199
  %3736 = vmatpush2.bf16.msra.mxu0 %v3198
  %3737 = vmatprep.mubr.bf16.mxu0 %v2150
  %3738 = vmatmul.mubr.bf16.gmra.mxu0 %v2149
  %v3739 = vpop.f32.mrf.mxu0
  %v3740 = vadd.f32 %v2422, %v3739
  %v3741 = vpop.f32.mrf.mxu0
  %v3742 = vadd.f32 %v2426, %v3741
  %v3743 = vpop.f32.mrf.mxu0
  %v3744 = vpop.f32.mrf.mxu0
  %3745 = vdwg.mxu0
  %3746 = vmatprep.subr.bf16.mxu0 0
  %3747 = vmatpush1.bf16.msra.mxu0 %v3187
  %3748 = vmatprep.subr.bf16.mxu0 0
  %3749 = vmatpush1.bf16.msra.mxu0 %v3174
  %3750 = vmatprep.subr.bf16.mxu0 0
  %3751 = vmatpush1.bf16.msra.mxu0 %v3161
  %3752 = vmatprep.subr.bf16.mxu0 0
  %3753 = vmatpush1.bf16.msra.mxu0 %v3148
  %3754 = vmatprep.subr.bf16.mxu0 0
  %3755 = vmatpush1.bf16.msra.mxu0 %v3135
  %3756 = vmatprep.subr.bf16.mxu0 0
  %3757 = vmatpush1.bf16.msra.mxu0 %v3122
  %3758 = vmatprep.subr.bf16.mxu0 0
  %3759 = vmatpush1.bf16.msra.mxu0 %v3109
  %3760 = vmatprep.subr.bf16.mxu0 0
  %3761 = vmatpush1.bf16.msra.mxu0 %v3096
  %3762 = vmatprep.subr.bf16.mxu0 0
  %3763 = vmatpush2.bf16.msra.mxu0 %v3291
  %3764 = vmatprep.subr.bf16.mxu0 0
  %3765 = vmatpush2.bf16.msra.mxu0 %v3278
  %3766 = vmatprep.subr.bf16.mxu0 0
  %3767 = vmatpush2.bf16.msra.mxu0 %v3265
  %3768 = vmatprep.subr.bf16.mxu0 0
  %3769 = vmatpush2.bf16.msra.mxu0 %v3252
  %3770 = vmatprep.subr.bf16.mxu0 0
  %3771 = vmatpush2.bf16.msra.mxu0 %v3239
  %3772 = vmatprep.subr.bf16.mxu0 0
  %3773 = vmatpush2.bf16.msra.mxu0 %v3226
  %3774 = vmatprep.subr.bf16.mxu0 0
  %3775 = vmatpush2.bf16.msra.mxu0 %v3213
  %3776 = vmatprep.subr.bf16.mxu0 0
  %3777 = vmatpush2.bf16.msra.mxu0 %v3200
  %3778 = vmatprep.mubr.bf16.mxu0 %v2150
  %3779 = vmatmul.mubr.bf16.gmra.mxu0 %v2149
  %v3780 = vpop.f32.mrf.mxu0
  %v3781 = vadd.f32 %v2430, %v3780
  %v3782 = vpop.f32.mrf.mxu0
  %v3783 = vpop.f32.mrf.mxu0
  %v3784 = vpop.f32.mrf.mxu0
  %3785 = vdwg.mxu0
  %vm3786 = vcmp.ge.f32.partialorder %v3535, 0.0
  %vm3787 = vcmp.ge.f32.partialorder %v3537, 0.0
  %vm3788 = vcmp.ge.f32.partialorder %v3576, 0.0
  %vm3789 = vcmp.ge.f32.partialorder %v3578, 0.0
  %vm3790 = vcmp.ge.f32.partialorder %v3617, 0.0
  %vm3791 = vcmp.ge.f32.partialorder %v3619, 0.0
  %vm3792 = vcmp.ge.f32.partialorder %v3658, 0.0
  %vm3793 = vcmp.ge.f32.partialorder %v3660, 0.0
  %vm3794 = vcmp.ge.f32.partialorder %v3699, 0.0
  %vm3795 = vcmp.ge.f32.partialorder %v3701, 0.0
  %vm3796 = vcmp.ge.f32.partialorder %v3740, 0.0
  %vm3797 = vcmp.ge.f32.partialorder %v3742, 0.0
  %vm3798 = vcmp.ge.f32.partialorder %v3781, 0.0
  %v3799 = vmul.f32 %v3535, 0.01
  %v3800 = vmul.f32 %v3537, 0.01
  %v3801 = vmul.f32 %v3576, 0.01
  %v3802 = vmul.f32 %v3578, 0.01
  %v3803 = vmul.f32 %v3617, 0.01
  %v3804 = vmul.f32 %v3619, 0.01
  %v3805 = vmul.f32 %v3658, 0.01
  %v3806 = vmul.f32 %v3660, 0.01
  %v3807 = vmul.f32 %v3699, 0.01
  %v3808 = vmul.f32 %v3701, 0.01
  %v3809 = vmul.f32 %v3740, 0.01
  %v3810 = vmul.f32 %v3742, 0.01
  %v3811 = vmul.f32 %v3781, 0.01
  %v3812 = vsel %vm3786, %v3535, %v3799
  %v3813 = vsel %vm3787, %v3537, %v3800
  %v3814 = vsel %vm3788, %v3576, %v3801
  %v3815 = vsel %vm3789, %v3578, %v3802
  %v3816 = vsel %vm3790, %v3617, %v3803
  %v3817 = vsel %vm3791, %v3619, %v3804
  %v3818 = vsel %vm3792, %v3658, %v3805
  %v3819 = vsel %vm3793, %v3660, %v3806
  %v3820 = vsel %vm3794, %v3699, %v3807
  %v3821 = vsel %vm3795, %v3701, %v3808
  %v3822 = vsel %vm3796, %v3740, %v3809
  %v3823 = vsel %vm3797, %v3742, %v3810
  %v3824 = vsel %vm3798, %v3781, %v3811
  %v3825 = vpack.c.bf16 %v3812, %v3812
  %v3826 = vpack.c.bf16 %v3813, %v3813
  %v3827 = vpack.c.bf16 %v3814, %v3814
  %v3828 = vpack.c.bf16 %v3815, %v3815
  %v3829 = vpack.c.bf16 %v3816, %v3816
  %v3830 = vpack.c.bf16 %v3817, %v3817
  %v3831 = vpack.c.bf16 %v3818, %v3818
  %v3832 = vpack.c.bf16 %v3819, %v3819
  %v3833 = vpack.c.bf16 %v3820, %v3820
  %v3834 = vpack.c.bf16 %v3821, %v3821
  %v3835 = vpack.c.bf16 %v3822, %v3822
  %v3836 = vpack.c.bf16 %v3823, %v3823
  %v3837 = vpack.c.bf16 %v3824, %v3824
  %v3851 = vcombine.low %v3825, %v3826
  %v3852 = vcombine.low %v3827, %v3828
  %v3853 = vcombine.low %v3829, %v3830
  %v3854 = vcombine.low %v3831, %v3832
  %v3856 = vunpack.c.l.s4 1966171168
  %v3857 = vunpack.c.0.s8 %v3856
  %v3858 = vlaneseq
  %v3859 = vshrl.u32 %v3858, 7
  %v3860 = vsub.s32 %v3857, %v3859
  %v3861 = vrot.slane %v3851, %v3860
  %v3863 = vunpack.c.l.s4 1966171168
  %v3864 = vunpack.c.0.s8 %v3863
  %v3865 = vlaneseq
  %v3866 = vshrl.u32 %v3865, 7
  %v3867 = vsub.s32 %v3864, %v3866
  %v3868 = vrot.slane %v3852, %v3867
  %v3870 = vunpack.c.l.s4 1966171168
  %v3871 = vunpack.c.0.s8 %v3870
  %v3872 = vlaneseq
  %v3873 = vshrl.u32 %v3872, 7
  %v3874 = vsub.s32 %v3871, %v3873
  %v3875 = vrot.slane %v3853, %v3874
  %v3877 = vunpack.c.l.s4 1966171168
  %v3878 = vunpack.c.0.s8 %v3877
  %v3879 = vlaneseq
  %v3880 = vshrl.u32 %v3879, 7
  %v3881 = vsub.s32 %v3878, %v3880
  %v3882 = vrot.slane %v3854, %v3881
  %v3883 = vcombine.low %v3861, %v3868
  %v3884 = vcombine.low %v3875, %v3882
  %v3886 = vunpack.c.l.s4 1966171168
  %v3887 = vunpack.c.0.s8 %v3886
  %v3888 = vlaneseq
  %v3889 = vshrl.u32 %v3888, 7
  %v3890 = vsub.s32 %v3887, %v3889
  %v3891 = vrot.slane %v3883, %v3890
  %v3893 = vunpack.c.l.s4 1966171168
  %v3894 = vunpack.c.0.s8 %v3893
  %v3895 = vlaneseq
  %v3896 = vshrl.u32 %v3895, 7
  %v3897 = vsub.s32 %v3894, %v3896
  %v3898 = vrot.slane %v3884, %v3897
  %v3899 = vcombine.low %v3891, %v3898
  %v3900 = vcombine.low %v3833, %v3834
  %v3901 = vcombine.low %v3835, %v3836
  %v3903 = vunpack.c.l.s4 1966171168
  %v3904 = vunpack.c.0.s8 %v3903
  %v3905 = vlaneseq
  %v3906 = vshrl.u32 %v3905, 7
  %v3907 = vsub.s32 %v3904, %v3906
  %v3908 = vrot.slane %v3900, %v3907
  %v3910 = vunpack.c.l.s4 1966171168
  %v3911 = vunpack.c.0.s8 %v3910
  %v3912 = vlaneseq
  %v3913 = vshrl.u32 %v3912, 7
  %v3914 = vsub.s32 %v3911, %v3913
  %v3915 = vrot.slane %v3901, %v3914
  %v3917 = vunpack.c.l.s4 1966171168
  %v3918 = vunpack.c.0.s8 %v3917
  %v3919 = vlaneseq
  %v3920 = vshrl.u32 %v3919, 7
  %v3921 = vsub.s32 %v3918, %v3920
  %v3922 = vrot.slane %v3837, %v3921
  %v3923 = vcombine.low %v3908, %v3915
  %v3925 = vunpack.c.l.s4 1966171168
  %v3926 = vunpack.c.0.s8 %v3925
  %v3927 = vlaneseq
  %v3928 = vshrl.u32 %v3927, 7
  %v3929 = vsub.s32 %v3926, %v3928
  %v3930 = vrot.slane %v3923, %v3929
  %v3932 = vunpack.c.l.s4 1966171168
  %v3933 = vunpack.c.0.s8 %v3932
  %v3934 = vlaneseq
  %v3935 = vshrl.u32 %v3934, 7
  %v3936 = vsub.s32 %v3933, %v3935
  %v3937 = vrot.slane %v3922, %v3936
  %v3938 = vcombine.low %v3930, %v3937
  %3941 = vst [vmem:[%s10] sm:$0xff] %v3899
  %3942 = vst [vmem:[%s10 + $0x8] sm:$0x1f] %v3938
  // Predicated region
  $region38: #{vae_forward.9} parent=0 // pred_check
    _
  $region39: #{vae_forward.9} parent=0 // pred_check_branch
    %3944 = sbr.rel (0) target = $region41
  $region40: #{vae_forward.9} parent=0 // pred_region
    _
  $region41: #{vae_forward.9} parent=0 // pred_fallthru
    _
  // Predicated region
  $region42: #{vae_forward.9} parent=0 // pred_check
    _
  $region43: #{vae_forward.9} parent=0 // pred_check_branch
    %3946 = sbr.rel (0) target = $region45
  $region44: #{vae_forward.9} parent=0 // pred_region
    _
  $region45: #{vae_forward.9} parent=0 // pred_fallthru
    _
  // Predicated region
  $region46: #{vae_forward.9} parent=0 // pred_check
    _
  $region47: #{vae_forward.9} parent=0 // pred_check_branch
    %3948 = sbr.rel (0) target = $region49
  $region48: #{vae_forward.9} parent=0 // pred_region
    _
  $region49: #{vae_forward.9} parent=0 // pred_fallthru
    _
  // Predicated region
  $region50: #{vae_forward.9} parent=0 // pred_check
    _
  $region51: #{vae_forward.9} parent=0 // pred_check_branch
    %3950 = sbr.rel (0) target = $region53
  $region52: #{vae_forward.9} parent=0 // pred_region
    _
  $region53: #{vae_forward.9} parent=0 // pred_fallthru
    _

// kernel: vae_forward.10
$region0: #{vae_forward.10}
  #allocation0 [shape = 'u32[]', space=smem, size = 0x4, offset = 0x4, fixed_abs, tag = 'smem constant byte address 0x4 - core index']
  #allocation1 [shape = 'u32[144,128]{1,0:T(1,128)}', space=vmem, size = 0x12000, scoped, tag = 'internal scratch']
  %s0 = inlined_call_operand.vmem [shape: bf16[162,288], index: 0, kind: input, shape index: {}]
  %s1 = inlined_call_operand.vmem [shape: bf16[288,128], index: 1, kind: input, shape index: {}]
  %s2 = inlined_call_operand.vmem [shape: f32[1,128], index: 2, kind: input, shape index: {}]
  %s3 = inlined_call_operand.vmem [shape: bf16[128,1024], index: 3, kind: input, shape index: {}]
  %s4 = inlined_call_operand.vmem [shape: bf16[162,1024], index: 4, kind: output, shape index: {}]
  %s5 = sld [smem:[#allocation0]]
  $region26: #{vae_forward.10} parent=0
    _
  %s7 = ssub.s32 1, %s5
  %s8 = scalar_select 0, %s7, %s5
  // Predicated region
  $region2: #{vae_forward.10} parent=0 // pred_check
    _
  $region3: #{vae_forward.10} parent=0 // pred_check_branch
    %10 = sbr.rel (0) target = $region5
  $region4: #{vae_forward.10} parent=0 // pred_region
    _
  $region5: #{vae_forward.10} parent=0 // pred_fallthru
    _
  // Predicated region
  $region6: #{vae_forward.10} parent=0 // pred_check
    _
  $region7: #{vae_forward.10} parent=0 // pred_check_branch
    %12 = sbr.rel (0) target = $region9
  $region8: #{vae_forward.10} parent=0 // pred_region
    _
  $region9: #{vae_forward.10} parent=0 // pred_fallthru
    _
  // Predicated region
  $region10: #{vae_forward.10} parent=0 // pred_check
    _
  $region11: #{vae_forward.10} parent=0 // pred_check_branch
    %14 = sbr.rel (0) target = $region13
  $region12: #{vae_forward.10} parent=0 // pred_region
    _
  $region13: #{vae_forward.10} parent=0 // pred_fallthru
    _
  // Predicated region
  $region14: #{vae_forward.10} parent=0 // pred_check
    _
  $region15: #{vae_forward.10} parent=0 // pred_check_branch
    %16 = sbr.rel (0) target = $region17
  $region16: #{vae_forward.10} parent=0 // pred_region
    _
  $region17: #{vae_forward.10} parent=0 // pred_fallthru
    _
  %v18 = vld [vmem:[%s0] sm:$0xff]
  %v19 = vld [vmem:[%s0 + $0x8] sm:$0xf]
  %v20 = vld [vmem:[%s0 + $0xc] sm:$0xff]
  %v21 = vld [vmem:[%s0 + $0x14] sm:$0xf]
  %v22 = vld [vmem:[%s0 + $0x18] sm:$0xff]
  %v23 = vld [vmem:[%s0 + $0x20] sm:$0xf]
  %v24 = vld [vmem:[%s0 + $0x24] sm:$0xff]
  %v25 = vld [vmem:[%s0 + $0x2c] sm:$0xf]
  %v26 = vld [vmem:[%s0 + $0x30] sm:$0xff]
  %v27 = vld [vmem:[%s0 + $0x38] sm:$0xf]
  %v28 = vld [vmem:[%s0 + $0x3c] sm:$0xff]
  %v29 = vld [vmem:[%s0 + $0x44] sm:$0xf]
  %v30 = vld [vmem:[%s0 + $0x48] sm:$0xff]
  %v31 = vld [vmem:[%s0 + $0x50] sm:$0xf]
  %v32 = vld [vmem:[%s0 + $0x54] sm:$0xff]
  %v33 = vld [vmem:[%s0 + $0x5c] sm:$0xf]
  %v34 = vld [vmem:[%s0 + $0x60] sm:$0xff]
  %v35 = vld [vmem:[%s0 + $0x68] sm:$0xf]
  %v36 = vld [vmem:[%s0 + $0x6c] sm:$0xff]
  %v37 = vld [vmem:[%s0 + $0x74] sm:$0xf]
  %v38 = vld [vmem:[%s0 + $0x78] sm:$0xff]
  %v39 = vld [vmem:[%s0 + $0x80] sm:$0xf]
  %v40 = vld [vmem:[%s0 + $0x84] sm:$0xff]
  %v41 = vld [vmem:[%s0 + $0x8c] sm:$0xf]
  %v42 = vld [vmem:[%s0 + $0x90] sm:$0xff]
  %v43 = vld [vmem:[%s0 + $0x98] sm:$0xf]
  %v44 = vld [vmem:[%s0 + $0x9c] sm:$0xff]
  %v45 = vld [vmem:[%s0 + $0xa4] sm:$0xf]
  %v46 = vld [vmem:[%s0 + $0xa8] sm:$0xff]
  %v47 = vld [vmem:[%s0 + $0xb0] sm:$0xf]
  %v48 = vld [vmem:[%s0 + $0xb4] sm:$0xff]
  %v49 = vld [vmem:[%s0 + $0xbc] sm:$0xf]
  %v50 = vld [vmem:[%s0 + $0xc0] sm:$0xff]
  %v51 = vld [vmem:[%s0 + $0xc8] sm:$0xf]
  %v52 = vld [vmem:[%s0 + $0xcc] sm:$0xff]
  %v53 = vld [vmem:[%s0 + $0xd4] sm:$0xf]
  %v54 = vld [vmem:[%s0 + $0xd8] sm:$0xff]
  %v55 = vld [vmem:[%s0 + $0xe0] sm:$0xf]
  %v56 = vld [vmem:[%s0 + $0xe4] sm:$0xff]
  %v57 = vld [vmem:[%s0 + $0xec] sm:$0xf]
  %v58 = vld [vmem:[%s0 + $0xf0] sm:$0x11]
  %v59 = vld [vmem:[%s0 + $0xf8] sm:$0x1]
  %v60 = vld [vmem:[%s1] sm:$0xf]
  %v61 = vld [vmem:[%s1 + $0x4] sm:$0xf]
  %v62 = vld [vmem:[%s1 + $0x8] sm:$0xf]
  %v63 = vld [vmem:[%s1 + $0xc] sm:$0xf]
  %v64 = vld [vmem:[%s1 + $0x10] sm:$0xf]
  %v65 = vld [vmem:[%s1 + $0x14] sm:$0xf]
  %v66 = vld [vmem:[%s1 + $0x18] sm:$0xf]
  %v67 = vld [vmem:[%s1 + $0x1c] sm:$0xf]
  %v68 = vld [vmem:[%s1 + $0x20] sm:$0xf]
  %v69 = vld [vmem:[%s1 + $0x24] sm:$0xf]
  %v70 = vld [vmem:[%s1 + $0x28] sm:$0xf]
  %v71 = vld [vmem:[%s1 + $0x2c] sm:$0xf]
  %v72 = vld [vmem:[%s1 + $0x30] sm:$0xf]
  %v73 = vld [vmem:[%s1 + $0x34] sm:$0xf]
  %v74 = vld [vmem:[%s1 + $0x38] sm:$0xf]
  %v75 = vld [vmem:[%s1 + $0x3c] sm:$0xf]
  %v76 = vld [vmem:[%s1 + $0x40] sm:$0xf]
  %v77 = vld [vmem:[%s1 + $0x44] sm:$0xf]
  %v78 = vld [vmem:[%s1 + $0x48] sm:$0xf]
  %v79 = vld [vmem:[%s1 + $0x4c] sm:$0xf]
  %v80 = vld [vmem:[%s1 + $0x50] sm:$0xf]
  %v81 = vld [vmem:[%s1 + $0x54] sm:$0xf]
  %v82 = vld [vmem:[%s1 + $0x58] sm:$0xf]
  %v83 = vld [vmem:[%s1 + $0x5c] sm:$0xf]
  %v84 = vld [vmem:[%s1 + $0x60] sm:$0xf]
  %v85 = vld [vmem:[%s1 + $0x64] sm:$0xf]
  %v86 = vld [vmem:[%s1 + $0x68] sm:$0xf]
  %v87 = vld [vmem:[%s1 + $0x6c] sm:$0xf]
  %v88 = vld [vmem:[%s1 + $0x70] sm:$0xf]
  %v89 = vld [vmem:[%s1 + $0x74] sm:$0xf]
  %v90 = vld [vmem:[%s1 + $0x78] sm:$0xf]
  %v91 = vld [vmem:[%s1 + $0x7c] sm:$0xf]
  %v92 = vld [vmem:[%s1 + $0x80] sm:$0xf]
  %v93 = vld [vmem:[%s1 + $0x84] sm:$0xf]
  %v94 = vld [vmem:[%s1 + $0x88] sm:$0xf]
  %v95 = vld [vmem:[%s1 + $0x8c] sm:$0xf]
  %v96 = vld [vmem:[%s2] sm:$0x1]
  %v98 = vlaneseq
  %v99 = vshrl.u32 %v98, 7
  %v100 = vsub.s32 0, %v99
  %v101 = vrot.slane %v96, %v100
  %v145 = vunpack.c.l.b16 %v18
  %v146 = vunpack.c.h.b16 %v18
  %v147 = vunpack.c.l.b16 %v19
  %v148 = vunpack.c.l.b16 %v20
  %v149 = vunpack.c.h.b16 %v20
  %v150 = vunpack.c.l.b16 %v21
  %v151 = vunpack.c.l.b16 %v22
  %v152 = vunpack.c.h.b16 %v22
  %v153 = vunpack.c.l.b16 %v23
  %v154 = vunpack.c.l.b16 %v24
  %v155 = vunpack.c.h.b16 %v24
  %v156 = vunpack.c.l.b16 %v25
  %v157 = vunpack.c.l.b16 %v26
  %v158 = vunpack.c.h.b16 %v26
  %v159 = vunpack.c.l.b16 %v27
  %v160 = vunpack.c.l.b16 %v28
  %v161 = vunpack.c.h.b16 %v28
  %v162 = vunpack.c.l.b16 %v29
  %v163 = vunpack.c.l.b16 %v30
  %v164 = vunpack.c.h.b16 %v30
  %v165 = vunpack.c.l.b16 %v31
  %v166 = vunpack.c.l.b16 %v32
  %v167 = vunpack.c.h.b16 %v32
  %v168 = vunpack.c.l.b16 %v33
  %v169 = vunpack.c.l.b16 %v34
  %v170 = vunpack.c.h.b16 %v34
  %v171 = vunpack.c.l.b16 %v35
  %v172 = vunpack.c.l.b16 %v36
  %v173 = vunpack.c.h.b16 %v36
  %v174 = vunpack.c.l.b16 %v37
  %v175 = vunpack.c.l.b16 %v38
  %v176 = vunpack.c.h.b16 %v38
  %v177 = vunpack.c.l.b16 %v39
  %v178 = vunpack.c.l.b16 %v40
  %v179 = vunpack.c.h.b16 %v40
  %v180 = vunpack.c.l.b16 %v41
  %v181 = vunpack.c.l.b16 %v42
  %v182 = vunpack.c.h.b16 %v42
  %v183 = vunpack.c.l.b16 %v43
  %v184 = vunpack.c.l.b16 %v44
  %v185 = vunpack.c.h.b16 %v44
  %v186 = vunpack.c.l.b16 %v45
  %v187 = vunpack.c.l.b16 %v46
  %v188 = vunpack.c.h.b16 %v46
  %v189 = vunpack.c.l.b16 %v47
  %v190 = vunpack.c.l.b16 %v48
  %v191 = vunpack.c.h.b16 %v48
  %v192 = vunpack.c.l.b16 %v49
  %v193 = vunpack.c.l.b16 %v50
  %v194 = vunpack.c.h.b16 %v50
  %v195 = vunpack.c.l.b16 %v51
  %v196 = vunpack.c.l.b16 %v52
  %v197 = vunpack.c.h.b16 %v52
  %v198 = vunpack.c.l.b16 %v53
  %v199 = vunpack.c.l.b16 %v54
  %v200 = vunpack.c.h.b16 %v54
  %v201 = vunpack.c.l.b16 %v55
  %v202 = vunpack.c.l.b16 %v56
  %v203 = vunpack.c.h.b16 %v56
  %v204 = vunpack.c.l.b16 %v57
  %v205 = vunpack.c.l.b16 %v58
  %v206 = vunpack.c.h.b16 %v58
  %v207 = vunpack.c.l.b16 %v59
  %v208 = vpack.c.b16 %v148, %v145
  %v209 = vpack.c.b16 %v149, %v146
  %v210 = vpack.c.b16 %v150, %v147
  %v211 = vpack.c.b16 %v154, %v151
  %v212 = vpack.c.b16 %v155, %v152
  %v213 = vpack.c.b16 %v156, %v153
  %v214 = vpack.c.b16 %v160, %v157
  %v215 = vpack.c.b16 %v161, %v158
  %v216 = vpack.c.b16 %v162, %v159
  %v217 = vpack.c.b16 %v166, %v163
  %v218 = vpack.c.b16 %v167, %v164
  %v219 = vpack.c.b16 %v168, %v165
  %v220 = vpack.c.b16 %v172, %v169
  %v221 = vpack.c.b16 %v173, %v170
  %v222 = vpack.c.b16 %v174, %v171
  %v223 = vpack.c.b16 %v178, %v175
  %v224 = vpack.c.b16 %v179, %v176
  %v225 = vpack.c.b16 %v180, %v177
  %v226 = vpack.c.b16 %v184, %v181
  %v227 = vpack.c.b16 %v185, %v182
  %v228 = vpack.c.b16 %v186, %v183
  %v229 = vpack.c.b16 %v190, %v187
  %v230 = vpack.c.b16 %v191, %v188
  %v231 = vpack.c.b16 %v192, %v189
  %v232 = vpack.c.b16 %v196, %v193
  %v233 = vpack.c.b16 %v197, %v194
  %v234 = vpack.c.b16 %v198, %v195
  %v235 = vpack.c.b16 %v202, %v199
  %v236 = vpack.c.b16 %v203, %v200
  %v237 = vpack.c.b16 %v204, %v201
  %v238 = vpack.c.b16 %v205, %v205
  %v239 = vpack.c.b16 %v206, %v206
  %v240 = vpack.c.b16 %v207, %v207
  %v299 = vunpack.c.l.b16 %v60
  %v300 = vunpack.c.l.b16 %v61
  %v301 = vunpack.c.l.b16 %v62
  %v302 = vunpack.c.l.b16 %v63
  %v303 = vunpack.c.l.b16 %v64
  %v304 = vunpack.c.l.b16 %v65
  %v305 = vunpack.c.l.b16 %v66
  %v306 = vunpack.c.l.b16 %v67
  %v307 = vunpack.c.l.b16 %v68
  %v308 = vunpack.c.l.b16 %v69
  %v309 = vunpack.c.l.b16 %v70
  %v310 = vunpack.c.l.b16 %v71
  %v311 = vunpack.c.l.b16 %v72
  %v312 = vunpack.c.l.b16 %v73
  %v313 = vunpack.c.l.b16 %v74
  %v314 = vunpack.c.l.b16 %v75
  %v315 = vunpack.c.l.b16 %v76
  %v316 = vunpack.c.l.b16 %v77
  %v317 = vunpack.c.l.b16 %v78
  %v318 = vunpack.c.l.b16 %v79
  %v319 = vunpack.c.l.b16 %v80
  %v320 = vunpack.c.l.b16 %v81
  %v321 = vunpack.c.l.b16 %v82
  %v322 = vunpack.c.l.b16 %v83
  %v323 = vunpack.c.l.b16 %v84
  %v324 = vunpack.c.l.b16 %v85
  %v325 = vunpack.c.l.b16 %v86
  %v326 = vunpack.c.l.b16 %v87
  %v327 = vunpack.c.l.b16 %v88
  %v328 = vunpack.c.l.b16 %v89
  %v329 = vunpack.c.l.b16 %v90
  %v330 = vunpack.c.l.b16 %v91
  %v331 = vunpack.c.l.b16 %v92
  %v332 = vunpack.c.l.b16 %v93
  %v333 = vunpack.c.l.b16 %v94
  %v334 = vunpack.c.l.b16 %v95
  %v335 = vpack.c.b16 %v300, %v299
  %v336 = vpack.c.b16 %v302, %v301
  %v337 = vpack.c.b16 %v304, %v303
  %v338 = vpack.c.b16 %v306, %v305
  %v339 = vpack.c.b16 %v308, %v307
  %v340 = vpack.c.b16 %v310, %v309
  %v341 = vpack.c.b16 %v312, %v311
  %v342 = vpack.c.b16 %v314, %v313
  %v343 = vpack.c.b16 %v316, %v315
  %v344 = vpack.c.b16 %v318, %v317
  %v345 = vpack.c.b16 %v320, %v319
  %v346 = vpack.c.b16 %v322, %v321
  %v347 = vpack.c.b16 %v324, %v323
  %v348 = vpack.c.b16 %v326, %v325
  %v349 = vpack.c.b16 %v328, %v327
  %v350 = vpack.c.b16 %v330, %v329
  %v351 = vpack.c.b16 %v332, %v331
  %v352 = vpack.c.b16 %v334, %v333
  %vm371 = vcmask 261120
  %v373 = vsel %vm371, %v210, 0
  %v376 = vsel %vm371, %v213, 0
  %v379 = vsel %vm371, %v216, 0
  %v382 = vsel %vm371, %v219, 0
  %v385 = vsel %vm371, %v222, 0
  %v388 = vsel %vm371, %v225, 0
  %v391 = vsel %vm371, %v228, 0
  %v394 = vsel %vm371, %v231, 0
  %v397 = vsel %vm371, %v234, 0
  %v400 = vsel %vm371, %v237, 0
  %v403 = vsel %vm371, %v240, 0
  %405 = vmatprep.subr.bf16.mxu0 0
  %406 = vmatpush1.bf16.msra.mxu0 %v342
  %407 = vmatprep.subr.bf16.mxu0 0
  %408 = vmatpush1.bf16.msra.mxu0 %v341
  %409 = vmatprep.subr.bf16.mxu0 0
  %410 = vmatpush1.bf16.msra.mxu0 %v340
  %411 = vmatprep.subr.bf16.mxu0 0
  %412 = vmatpush1.bf16.msra.mxu0 %v339
  %413 = vmatprep.subr.bf16.mxu0 0
  %414 = vmatpush1.bf16.msra.mxu0 %v338
  %415 = vmatprep.subr.bf16.mxu0 0
  %416 = vmatpush1.bf16.msra.mxu0 %v337
  %417 = vmatprep.subr.bf16.mxu0 0
  %418 = vmatpush1.bf16.msra.mxu0 %v336
  %419 = vmatprep.subr.bf16.mxu0 0
  %420 = vmatpush1.bf16.msra.mxu0 %v335
  %421 = vmatprep.subr.bf16.mxu0 0
  %422 = vmatpush2.bf16.msra.mxu0 %v350
  %423 = vmatprep.subr.bf16.mxu0 0
  %424 = vmatpush2.bf16.msra.mxu0 %v349
  %425 = vmatprep.subr.bf16.mxu0 0
  %426 = vmatpush2.bf16.msra.mxu0 %v348
  %427 = vmatprep.subr.bf16.mxu0 0
  %428 = vmatpush2.bf16.msra.mxu0 %v347
  %429 = vmatprep.subr.bf16.mxu0 0
  %430 = vmatpush2.bf16.msra.mxu0 %v346
  %431 = vmatprep.subr.bf16.mxu0 0
  %432 = vmatpush2.bf16.msra.mxu0 %v345
  %433 = vmatprep.subr.bf16.mxu0 0
  %434 = vmatpush2.bf16.msra.mxu0 %v344
  %435 = vmatprep.subr.bf16.mxu0 0
  %436 = vmatpush2.bf16.msra.mxu0 %v343
  %437 = vmatprep.mubr.bf16.mxu0 %v209
  %438 = vmatmul.mubr.bf16.gmra.mxu0 %v208
  %v439 = vpop.f32.mrf.mxu0
  %v440 = vadd.f32 %v101, %v439
  %v441 = vpop.f32.mrf.mxu0
  %v442 = vpop.f32.mrf.mxu0
  %v443 = vadd.f32 %v101, %v442
  %v444 = vpop.f32.mrf.mxu0
  %445 = vmatprep.mubr.bf16.mxu0 %v212
  %446 = vmatmul.mubr.bf16.gmra.mxu0 %v211
  %v447 = vpop.f32.mrf.mxu0
  %v448 = vadd.f32 %v101, %v447
  %v449 = vpop.f32.mrf.mxu0
  %v450 = vpop.f32.mrf.mxu0
  %v451 = vadd.f32 %v101, %v450
  %v452 = vpop.f32.mrf.mxu0
  %453 = vmatprep.mubr.bf16.mxu0 %v215
  %454 = vmatmul.mubr.bf16.gmra.mxu0 %v214
  %v455 = vpop.f32.mrf.mxu0
  %v456 = vadd.f32 %v101, %v455
  %v457 = vpop.f32.mrf.mxu0
  %v458 = vpop.f32.mrf.mxu0
  %v459 = vadd.f32 %v101, %v458
  %v460 = vpop.f32.mrf.mxu0
  %461 = vmatprep.mubr.bf16.mxu0 %v218
  %462 = vmatmul.mubr.bf16.gmra.mxu0 %v217
  %v463 = vpop.f32.mrf.mxu0
  %v464 = vadd.f32 %v101, %v463
  %v465 = vpop.f32.mrf.mxu0
  %v466 = vpop.f32.mrf.mxu0
  %v467 = vadd.f32 %v101, %v466
  %v468 = vpop.f32.mrf.mxu0
  %469 = vmatprep.mubr.bf16.mxu0 %v221
  %470 = vmatmul.mubr.bf16.gmra.mxu0 %v220
  %v471 = vpop.f32.mrf.mxu0
  %v472 = vadd.f32 %v101, %v471
  %v473 = vpop.f32.mrf.mxu0
  %v474 = vpop.f32.mrf.mxu0
  %v475 = vadd.f32 %v101, %v474
  %v476 = vpop.f32.mrf.mxu0
  %477 = vmatprep.mubr.bf16.mxu0 %v224
  %478 = vmatmul.mubr.bf16.gmra.mxu0 %v223
  %v479 = vpop.f32.mrf.mxu0
  %v480 = vadd.f32 %v101, %v479
  %v481 = vpop.f32.mrf.mxu0
  %v482 = vpop.f32.mrf.mxu0
  %v483 = vadd.f32 %v101, %v482
  %v484 = vpop.f32.mrf.mxu0
  %485 = vmatprep.mubr.bf16.mxu0 %v227
  %486 = vmatmul.mubr.bf16.gmra.mxu0 %v226
  %v487 = vpop.f32.mrf.mxu0
  %v488 = vadd.f32 %v101, %v487
  %v489 = vpop.f32.mrf.mxu0
  %v490 = vpop.f32.mrf.mxu0
  %v491 = vadd.f32 %v101, %v490
  %v492 = vpop.f32.mrf.mxu0
  %493 = vmatprep.mubr.bf16.mxu0 %v230
  %494 = vmatmul.mubr.bf16.gmra.mxu0 %v229
  %v495 = vpop.f32.mrf.mxu0
  %v496 = vadd.f32 %v101, %v495
  %v497 = vpop.f32.mrf.mxu0
  %v498 = vpop.f32.mrf.mxu0
  %v499 = vadd.f32 %v101, %v498
  %v500 = vpop.f32.mrf.mxu0
  %501 = vmatprep.mubr.bf16.mxu0 %v233
  %502 = vmatmul.mubr.bf16.gmra.mxu0 %v232
  %v503 = vpop.f32.mrf.mxu0
  %v504 = vadd.f32 %v101, %v503
  %v505 = vpop.f32.mrf.mxu0
  %v506 = vpop.f32.mrf.mxu0
  %v507 = vadd.f32 %v101, %v506
  %v508 = vpop.f32.mrf.mxu0
  %509 = vmatprep.mubr.bf16.mxu0 %v236
  %510 = vmatmul.mubr.bf16.gmra.mxu0 %v235
  %v511 = vpop.f32.mrf.mxu0
  %v512 = vadd.f32 %v101, %v511
  %v513 = vpop.f32.mrf.mxu0
  %v514 = vpop.f32.mrf.mxu0
  %v515 = vadd.f32 %v101, %v514
  %v516 = vpop.f32.mrf.mxu0
  %517 = vmatprep.mubr.bf16.mxu0 %v239
  %518 = vmatmul.mubr.bf16.gmra.mxu0 %v238
  %v519 = vpop.f32.mrf.mxu0
  %v520 = vadd.f32 %v101, %v519
  %v521 = vpop.f32.mrf.mxu0
  %v522 = vpop.f32.mrf.mxu0
  %v523 = vpop.f32.mrf.mxu0
  %524 = vdwg.mxu0
  %525 = vmatprep.subr.bf16.mxu0 0
  %526 = vmatpush1.bf16.msra.mxu0 0
  %527 = vmatprep.subr.bf16.mxu0 0
  %528 = vmatpush1.bf16.msra.mxu0 0
  %529 = vmatprep.subr.bf16.mxu0 0
  %530 = vmatpush1.bf16.msra.mxu0 0
  %531 = vmatprep.subr.bf16.mxu0 0
  %532 = vmatpush1.bf16.msra.mxu0 0
  %533 = vmatprep.subr.bf16.mxu0 0
  %534 = vmatpush1.bf16.msra.mxu0 0
  %535 = vmatprep.subr.bf16.mxu0 0
  %536 = vmatpush1.bf16.msra.mxu0 0
  %537 = vmatprep.subr.bf16.mxu0 0
  %538 = vmatpush1.bf16.msra.mxu0 %v352
  %539 = vmatprep.subr.bf16.mxu0 0
  %540 = vmatpush1.bf16.msra.mxu0 %v351
  %541 = vmatprep.subr.bf16.mxu0 0
  %542 = vmatpush2.bf16.msra.mxu0 0
  %543 = vmatprep.subr.bf16.mxu0 0
  %544 = vmatpush2.bf16.msra.mxu0 0
  %545 = vmatprep.subr.bf16.mxu0 0
  %546 = vmatpush2.bf16.msra.mxu0 0
  %547 = vmatprep.subr.bf16.mxu0 0
  %548 = vmatpush2.bf16.msra.mxu0 0
  %549 = vmatprep.subr.bf16.mxu0 0
  %550 = vmatpush2.bf16.msra.mxu0 0
  %551 = vmatprep.subr.bf16.mxu0 0
  %552 = vmatpush2.bf16.msra.mxu0 0
  %553 = vmatprep.subr.bf16.mxu0 0
  %554 = vmatpush2.bf16.msra.mxu0 0
  %555 = vmatprep.subr.bf16.mxu0 0
  %556 = vmatpush2.bf16.msra.mxu0 0
  %557 = vmatprep.mubr.bf16.mxu0 0
  %558 = vmatmul.mubr.bf16.gmra.mxu0 %v373
  %v559 = vpop.f32.mrf.mxu0
  %v560 = vadd.f32 %v440, %v559
  %v561 = vpop.f32.mrf.mxu0
  %v562 = vpop.f32.mrf.mxu0
  %v563 = vadd.f32 %v443, %v562
  %v564 = vpop.f32.mrf.mxu0
  %565 = vmatprep.mubr.bf16.mxu0 0
  %566 = vmatmul.mubr.bf16.gmra.mxu0 %v376
  %v567 = vpop.f32.mrf.mxu0
  %v568 = vadd.f32 %v448, %v567
  %v569 = vpop.f32.mrf.mxu0
  %v570 = vpop.f32.mrf.mxu0
  %v571 = vadd.f32 %v451, %v570
  %v572 = vpop.f32.mrf.mxu0
  %573 = vmatprep.mubr.bf16.mxu0 0
  %574 = vmatmul.mubr.bf16.gmra.mxu0 %v379
  %v575 = vpop.f32.mrf.mxu0
  %v576 = vadd.f32 %v456, %v575
  %v577 = vpop.f32.mrf.mxu0
  %v578 = vpop.f32.mrf.mxu0
  %v579 = vadd.f32 %v459, %v578
  %v580 = vpop.f32.mrf.mxu0
  %581 = vmatprep.mubr.bf16.mxu0 0
  %582 = vmatmul.mubr.bf16.gmra.mxu0 %v382
  %v583 = vpop.f32.mrf.mxu0
  %v584 = vadd.f32 %v464, %v583
  %v585 = vpop.f32.mrf.mxu0
  %v586 = vpop.f32.mrf.mxu0
  %v587 = vadd.f32 %v467, %v586
  %v588 = vpop.f32.mrf.mxu0
  %589 = vmatprep.mubr.bf16.mxu0 0
  %590 = vmatmul.mubr.bf16.gmra.mxu0 %v385
  %v591 = vpop.f32.mrf.mxu0
  %v592 = vadd.f32 %v472, %v591
  %v593 = vpop.f32.mrf.mxu0
  %v594 = vpop.f32.mrf.mxu0
  %v595 = vadd.f32 %v475, %v594
  %v596 = vpop.f32.mrf.mxu0
  %597 = vmatprep.mubr.bf16.mxu0 0
  %598 = vmatmul.mubr.bf16.gmra.mxu0 %v388
  %v599 = vpop.f32.mrf.mxu0
  %v600 = vadd.f32 %v480, %v599
  %v601 = vpop.f32.mrf.mxu0
  %v602 = vpop.f32.mrf.mxu0
  %v603 = vadd.f32 %v483, %v602
  %v604 = vpop.f32.mrf.mxu0
  %605 = vmatprep.mubr.bf16.mxu0 0
  %606 = vmatmul.mubr.bf16.gmra.mxu0 %v391
  %v607 = vpop.f32.mrf.mxu0
  %v608 = vadd.f32 %v488, %v607
  %v609 = vpop.f32.mrf.mxu0
  %v610 = vpop.f32.mrf.mxu0
  %v611 = vadd.f32 %v491, %v610
  %v612 = vpop.f32.mrf.mxu0
  %613 = vmatprep.mubr.bf16.mxu0 0
  %614 = vmatmul.mubr.bf16.gmra.mxu0 %v394
  %v615 = vpop.f32.mrf.mxu0
  %v616 = vadd.f32 %v496, %v615
  %v617 = vpop.f32.mrf.mxu0
  %v618 = vpop.f32.mrf.mxu0
  %v619 = vadd.f32 %v499, %v618
  %v620 = vpop.f32.mrf.mxu0
  %621 = vmatprep.mubr.bf16.mxu0 0
  %622 = vmatmul.mubr.bf16.gmra.mxu0 %v397
  %v623 = vpop.f32.mrf.mxu0
  %v624 = vadd.f32 %v504, %v623
  %v625 = vpop.f32.mrf.mxu0
  %v626 = vpop.f32.mrf.mxu0
  %v627 = vadd.f32 %v507, %v626
  %v628 = vpop.f32.mrf.mxu0
  %629 = vmatprep.mubr.bf16.mxu0 0
  %630 = vmatmul.mubr.bf16.gmra.mxu0 %v400
  %v631 = vpop.f32.mrf.mxu0
  %v632 = vadd.f32 %v512, %v631
  %v633 = vpop.f32.mrf.mxu0
  %v634 = vpop.f32.mrf.mxu0
  %v635 = vadd.f32 %v515, %v634
  %v636 = vpop.f32.mrf.mxu0
  %637 = vmatprep.mubr.bf16.mxu0 0
  %638 = vmatmul.mubr.bf16.gmra.mxu0 %v403
  %v639 = vpop.f32.mrf.mxu0
  %v640 = vadd.f32 %v520, %v639
  %v641 = vpop.f32.mrf.mxu0
  %v642 = vpop.f32.mrf.mxu0
  %v643 = vpop.f32.mrf.mxu0
  %644 = vdwg.mxu0
  %vm645 = vcmp.ge.f32.partialorder %v560, 0.0
  %vm646 = vcmp.ge.f32.partialorder %v563, 0.0
  %vm647 = vcmp.ge.f32.partialorder %v568, 0.0
  %vm648 = vcmp.ge.f32.partialorder %v571, 0.0
  %vm649 = vcmp.ge.f32.partialorder %v576, 0.0
  %vm650 = vcmp.ge.f32.partialorder %v579, 0.0
  %vm651 = vcmp.ge.f32.partialorder %v584, 0.0
  %vm652 = vcmp.ge.f32.partialorder %v587, 0.0
  %vm653 = vcmp.ge.f32.partialorder %v592, 0.0
  %vm654 = vcmp.ge.f32.partialorder %v595, 0.0
  %vm655 = vcmp.ge.f32.partialorder %v600, 0.0
  %vm656 = vcmp.ge.f32.partialorder %v603, 0.0
  %vm657 = vcmp.ge.f32.partialorder %v608, 0.0
  %vm658 = vcmp.ge.f32.partialorder %v611, 0.0
  %vm659 = vcmp.ge.f32.partialorder %v616, 0.0
  %vm660 = vcmp.ge.f32.partialorder %v619, 0.0
  %vm661 = vcmp.ge.f32.partialorder %v624, 0.0
  %vm662 = vcmp.ge.f32.partialorder %v627, 0.0
  %vm663 = vcmp.ge.f32.partialorder %v632, 0.0
  %vm664 = vcmp.ge.f32.partialorder %v635, 0.0
  %vm665 = vcmp.ge.f32.partialorder %v640, 0.0
  %v666 = vmul.f32 %v560, 0.01
  %v667 = vmul.f32 %v563, 0.01
  %v668 = vmul.f32 %v568, 0.01
  %v669 = vmul.f32 %v571, 0.01
  %v670 = vmul.f32 %v576, 0.01
  %v671 = vmul.f32 %v579, 0.01
  %v672 = vmul.f32 %v584, 0.01
  %v673 = vmul.f32 %v587, 0.01
  %v674 = vmul.f32 %v592, 0.01
  %v675 = vmul.f32 %v595, 0.01
  %v676 = vmul.f32 %v600, 0.01
  %v677 = vmul.f32 %v603, 0.01
  %v678 = vmul.f32 %v608, 0.01
  %v679 = vmul.f32 %v611, 0.01
  %v680 = vmul.f32 %v616, 0.01
  %v681 = vmul.f32 %v619, 0.01
  %v682 = vmul.f32 %v624, 0.01
  %v683 = vmul.f32 %v627, 0.01
  %v684 = vmul.f32 %v632, 0.01
  %v685 = vmul.f32 %v635, 0.01
  %v686 = vmul.f32 %v640, 0.01
  %v687 = vsel %vm645, %v560, %v666
  %v688 = vsel %vm646, %v563, %v667
  %v689 = vsel %vm647, %v568, %v668
  %v690 = vsel %vm648, %v571, %v669
  %v691 = vsel %vm649, %v576, %v670
  %v692 = vsel %vm650, %v579, %v671
  %v693 = vsel %vm651, %v584, %v672
  %v694 = vsel %vm652, %v587, %v673
  %v695 = vsel %vm653, %v592, %v674
  %v696 = vsel %vm654, %v595, %v675
  %v697 = vsel %vm655, %v600, %v676
  %v698 = vsel %vm656, %v603, %v677
  %v699 = vsel %vm657, %v608, %v678
  %v700 = vsel %vm658, %v611, %v679
  %v701 = vsel %vm659, %v616, %v680
  %v702 = vsel %vm660, %v619, %v681
  %v703 = vsel %vm661, %v624, %v682
  %v704 = vsel %vm662, %v627, %v683
  %v705 = vsel %vm663, %v632, %v684
  %v706 = vsel %vm664, %v635, %v685
  %v707 = vsel %vm665, %v640, %v686
  %v708 = vpack.c.bf16 %v688, %v687
  %v709 = vpack.c.bf16 %v690, %v689
  %v710 = vpack.c.bf16 %v692, %v691
  %v711 = vpack.c.bf16 %v694, %v693
  %v712 = vpack.c.bf16 %v696, %v695
  %v713 = vpack.c.bf16 %v698, %v697
  %v714 = vpack.c.bf16 %v700, %v699
  %v715 = vpack.c.bf16 %v702, %v701
  %v716 = vpack.c.bf16 %v704, %v703
  %v717 = vpack.c.bf16 %v706, %v705
  %v718 = vpack.c.bf16 %v707, %v707
  %v719 = vld [vmem:[%s3] sm:$0xff]
  %v720 = vld [vmem:[%s3 + $0x8] sm:$0xff]
  %v721 = vld [vmem:[%s3 + $0x10] sm:$0xff]
  %v722 = vld [vmem:[%s3 + $0x18] sm:$0xff]
  %v723 = vld [vmem:[%s3 + $0x20] sm:$0xff]
  %v724 = vld [vmem:[%s3 + $0x28] sm:$0xff]
  %v725 = vld [vmem:[%s3 + $0x30] sm:$0xff]
  %v726 = vld [vmem:[%s3 + $0x38] sm:$0xff]
  %v727 = vld [vmem:[%s3 + $0x40] sm:$0xff]
  %v728 = vld [vmem:[%s3 + $0x48] sm:$0xff]
  %v729 = vld [vmem:[%s3 + $0x50] sm:$0xff]
  %v730 = vld [vmem:[%s3 + $0x58] sm:$0xff]
  %v731 = vld [vmem:[%s3 + $0x60] sm:$0xff]
  %v732 = vld [vmem:[%s3 + $0x68] sm:$0xff]
  %v733 = vld [vmem:[%s3 + $0x70] sm:$0xff]
  %v734 = vld [vmem:[%s3 + $0x78] sm:$0xff]
  %v735 = vld [vmem:[%s3 + $0x80] sm:$0xff]
  %v736 = vld [vmem:[%s3 + $0x88] sm:$0xff]
  %v737 = vld [vmem:[%s3 + $0x90] sm:$0xff]
  %v738 = vld [vmem:[%s3 + $0x98] sm:$0xff]
  %v739 = vld [vmem:[%s3 + $0xa0] sm:$0xff]
  %v740 = vld [vmem:[%s3 + $0xa8] sm:$0xff]
  %v741 = vld [vmem:[%s3 + $0xb0] sm:$0xff]
  %v742 = vld [vmem:[%s3 + $0xb8] sm:$0xff]
  %v743 = vld [vmem:[%s3 + $0xc0] sm:$0xff]
  %v744 = vld [vmem:[%s3 + $0xc8] sm:$0xff]
  %v745 = vld [vmem:[%s3 + $0xd0] sm:$0xff]
  %v746 = vld [vmem:[%s3 + $0xd8] sm:$0xff]
  %v747 = vld [vmem:[%s3 + $0xe0] sm:$0xff]
  %v748 = vld [vmem:[%s3 + $0xe8] sm:$0xff]
  %v749 = vld [vmem:[%s3 + $0xf0] sm:$0xff]
  %v750 = vld [vmem:[%s3 + $0xf8] sm:$0xff]
  %v751 = vld [vmem:[%s3 + $0x100] sm:$0xff]
  %v752 = vld [vmem:[%s3 + $0x108] sm:$0xff]
  %v753 = vld [vmem:[%s3 + $0x110] sm:$0xff]
  %v754 = vld [vmem:[%s3 + $0x118] sm:$0xff]
  %v755 = vld [vmem:[%s3 + $0x120] sm:$0xff]
  %v756 = vld [vmem:[%s3 + $0x128] sm:$0xff]
  %v757 = vld [vmem:[%s3 + $0x130] sm:$0xff]
  %v758 = vld [vmem:[%s3 + $0x138] sm:$0xff]
  %v759 = vld [vmem:[%s3 + $0x140] sm:$0xff]
  %v760 = vld [vmem:[%s3 + $0x148] sm:$0xff]
  %v761 = vld [vmem:[%s3 + $0x150] sm:$0xff]
  %v762 = vld [vmem:[%s3 + $0x158] sm:$0xff]
  %v763 = vld [vmem:[%s3 + $0x160] sm:$0xff]
  %v764 = vld [vmem:[%s3 + $0x168] sm:$0xff]
  %v765 = vld [vmem:[%s3 + $0x170] sm:$0xff]
  %v766 = vld [vmem:[%s3 + $0x178] sm:$0xff]
  %v767 = vld [vmem:[%s3 + $0x180] sm:$0xff]
  %v768 = vld [vmem:[%s3 + $0x188] sm:$0xff]
  %v769 = vld [vmem:[%s3 + $0x190] sm:$0xff]
  %v770 = vld [vmem:[%s3 + $0x198] sm:$0xff]
  %v771 = vld [vmem:[%s3 + $0x1a0] sm:$0xff]
  %v772 = vld [vmem:[%s3 + $0x1a8] sm:$0xff]
  %v773 = vld [vmem:[%s3 + $0x1b0] sm:$0xff]
  %v774 = vld [vmem:[%s3 + $0x1b8] sm:$0xff]
  %v775 = vld [vmem:[%s3 + $0x1c0] sm:$0xff]
  %v776 = vld [vmem:[%s3 + $0x1c8] sm:$0xff]
  %v777 = vld [vmem:[%s3 + $0x1d0] sm:$0xff]
  %v778 = vld [vmem:[%s3 + $0x1d8] sm:$0xff]
  %v779 = vld [vmem:[%s3 + $0x1e0] sm:$0xff]
  %v780 = vld [vmem:[%s3 + $0x1e8] sm:$0xff]
  %v781 = vld [vmem:[%s3 + $0x1f0] sm:$0xff]
  %v782 = vld [vmem:[%s3 + $0x1f8] sm:$0xff]
  %v847 = vunpack.c.l.b16 %v719
  %v848 = vunpack.c.h.b16 %v719
  %v849 = vunpack.c.l.b16 %v720
  %v850 = vunpack.c.h.b16 %v720
  %v851 = vunpack.c.l.b16 %v721
  %v852 = vunpack.c.h.b16 %v721
  %v853 = vunpack.c.l.b16 %v722
  %v854 = vunpack.c.h.b16 %v722
  %v855 = vunpack.c.l.b16 %v723
  %v856 = vunpack.c.h.b16 %v723
  %v857 = vunpack.c.l.b16 %v724
  %v858 = vunpack.c.h.b16 %v724
  %v859 = vunpack.c.l.b16 %v725
  %v860 = vunpack.c.h.b16 %v725
  %v861 = vunpack.c.l.b16 %v726
  %v862 = vunpack.c.h.b16 %v726
  %v863 = vunpack.c.l.b16 %v727
  %v864 = vunpack.c.h.b16 %v727
  %v865 = vunpack.c.l.b16 %v728
  %v866 = vunpack.c.h.b16 %v728
  %v867 = vunpack.c.l.b16 %v729
  %v868 = vunpack.c.h.b16 %v729
  %v869 = vunpack.c.l.b16 %v730
  %v870 = vunpack.c.h.b16 %v730
  %v871 = vunpack.c.l.b16 %v731
  %v872 = vunpack.c.h.b16 %v731
  %v873 = vunpack.c.l.b16 %v732
  %v874 = vunpack.c.h.b16 %v732
  %v875 = vunpack.c.l.b16 %v733
  %v876 = vunpack.c.h.b16 %v733
  %v877 = vunpack.c.l.b16 %v734
  %v878 = vunpack.c.h.b16 %v734
  %v879 = vunpack.c.l.b16 %v735
  %v880 = vunpack.c.h.b16 %v735
  %v881 = vunpack.c.l.b16 %v736
  %v882 = vunpack.c.h.b16 %v736
  %v883 = vunpack.c.l.b16 %v737
  %v884 = vunpack.c.h.b16 %v737
  %v885 = vunpack.c.l.b16 %v738
  %v886 = vunpack.c.h.b16 %v738
  %v887 = vunpack.c.l.b16 %v739
  %v888 = vunpack.c.h.b16 %v739
  %v889 = vunpack.c.l.b16 %v740
  %v890 = vunpack.c.h.b16 %v740
  %v891 = vunpack.c.l.b16 %v741
  %v892 = vunpack.c.h.b16 %v741
  %v893 = vunpack.c.l.b16 %v742
  %v894 = vunpack.c.h.b16 %v742
  %v895 = vunpack.c.l.b16 %v743
  %v896 = vunpack.c.h.b16 %v743
  %v897 = vunpack.c.l.b16 %v744
  %v898 = vunpack.c.h.b16 %v744
  %v899 = vunpack.c.l.b16 %v745
  %v900 = vunpack.c.h.b16 %v745
  %v901 = vunpack.c.l.b16 %v746
  %v902 = vunpack.c.h.b16 %v746
  %v903 = vunpack.c.l.b16 %v747
  %v904 = vunpack.c.h.b16 %v747
  %v905 = vunpack.c.l.b16 %v748
  %v906 = vunpack.c.h.b16 %v748
  %v907 = vunpack.c.l.b16 %v749
  %v908 = vunpack.c.h.b16 %v749
  %v909 = vunpack.c.l.b16 %v750
  %v910 = vunpack.c.h.b16 %v750
  %v911 = vunpack.c.l.b16 %v751
  %v912 = vunpack.c.h.b16 %v751
  %v913 = vunpack.c.l.b16 %v752
  %v914 = vunpack.c.h.b16 %v752
  %v915 = vunpack.c.l.b16 %v753
  %v916 = vunpack.c.h.b16 %v753
  %v917 = vunpack.c.l.b16 %v754
  %v918 = vunpack.c.h.b16 %v754
  %v919 = vunpack.c.l.b16 %v755
  %v920 = vunpack.c.h.b16 %v755
  %v921 = vunpack.c.l.b16 %v756
  %v922 = vunpack.c.h.b16 %v756
  %v923 = vunpack.c.l.b16 %v757
  %v924 = vunpack.c.h.b16 %v757
  %v925 = vunpack.c.l.b16 %v758
  %v926 = vunpack.c.h.b16 %v758
  %v927 = vunpack.c.l.b16 %v759
  %v928 = vunpack.c.h.b16 %v759
  %v929 = vunpack.c.l.b16 %v760
  %v930 = vunpack.c.h.b16 %v760
  %v931 = vunpack.c.l.b16 %v761
  %v932 = vunpack.c.h.b16 %v761
  %v933 = vunpack.c.l.b16 %v762
  %v934 = vunpack.c.h.b16 %v762
  %v935 = vunpack.c.l.b16 %v763
  %v936 = vunpack.c.h.b16 %v763
  %v937 = vunpack.c.l.b16 %v764
  %v938 = vunpack.c.h.b16 %v764
  %v939 = vunpack.c.l.b16 %v765
  %v940 = vunpack.c.h.b16 %v765
  %v941 = vunpack.c.l.b16 %v766
  %v942 = vunpack.c.h.b16 %v766
  %v943 = vunpack.c.l.b16 %v767
  %v944 = vunpack.c.h.b16 %v767
  %v945 = vunpack.c.l.b16 %v768
  %v946 = vunpack.c.h.b16 %v768
  %v947 = vunpack.c.l.b16 %v769
  %v948 = vunpack.c.h.b16 %v769
  %v949 = vunpack.c.l.b16 %v770
  %v950 = vunpack.c.h.b16 %v770
  %v951 = vunpack.c.l.b16 %v771
  %v952 = vunpack.c.h.b16 %v771
  %v953 = vunpack.c.l.b16 %v772
  %v954 = vunpack.c.h.b16 %v772
  %v955 = vunpack.c.l.b16 %v773
  %v956 = vunpack.c.h.b16 %v773
  %v957 = vunpack.c.l.b16 %v774
  %v958 = vunpack.c.h.b16 %v774
  %v959 = vunpack.c.l.b16 %v775
  %v960 = vunpack.c.h.b16 %v775
  %v961 = vunpack.c.l.b16 %v776
  %v962 = vunpack.c.h.b16 %v776
  %v963 = vunpack.c.l.b16 %v777
  %v964 = vunpack.c.h.b16 %v777
  %v965 = vunpack.c.l.b16 %v778
  %v966 = vunpack.c.h.b16 %v778
  %v967 = vunpack.c.l.b16 %v779
  %v968 = vunpack.c.h.b16 %v779
  %v969 = vunpack.c.l.b16 %v780
  %v970 = vunpack.c.h.b16 %v780
  %v971 = vunpack.c.l.b16 %v781
  %v972 = vunpack.c.h.b16 %v781
  %v973 = vunpack.c.l.b16 %v782
  %v974 = vunpack.c.h.b16 %v782
  %v975 = vpack.c.b16 %v855, %v847
  %v976 = vpack.c.b16 %v856, %v848
  %v977 = vpack.c.b16 %v857, %v849
  %v978 = vpack.c.b16 %v858, %v850
  %v979 = vpack.c.b16 %v859, %v851
  %v980 = vpack.c.b16 %v860, %v852
  %v981 = vpack.c.b16 %v861, %v853
  %v982 = vpack.c.b16 %v862, %v854
  %v983 = vpack.c.b16 %v871, %v863
  %v984 = vpack.c.b16 %v872, %v864
  %v985 = vpack.c.b16 %v873, %v865
  %v986 = vpack.c.b16 %v874, %v866
  %v987 = vpack.c.b16 %v875, %v867
  %v988 = vpack.c.b16 %v876, %v868
  %v989 = vpack.c.b16 %v877, %v869
  %v990 = vpack.c.b16 %v878, %v870
  %v991 = vpack.c.b16 %v887, %v879
  %v992 = vpack.c.b16 %v888, %v880
  %v993 = vpack.c.b16 %v889, %v881
  %v994 = vpack.c.b16 %v890, %v882
  %v995 = vpack.c.b16 %v891, %v883
  %v996 = vpack.c.b16 %v892, %v884
  %v997 = vpack.c.b16 %v893, %v885
  %v998 = vpack.c.b16 %v894, %v886
  %v999 = vpack.c.b16 %v903, %v895
  %v1000 = vpack.c.b16 %v904, %v896
  %v1001 = vpack.c.b16 %v905, %v897
  %v1002 = vpack.c.b16 %v906, %v898
  %v1003 = vpack.c.b16 %v907, %v899
  %v1004 = vpack.c.b16 %v908, %v900
  %v1005 = vpack.c.b16 %v909, %v901
  %v1006 = vpack.c.b16 %v910, %v902
  %v1007 = vpack.c.b16 %v919, %v911
  %v1008 = vpack.c.b16 %v920, %v912
  %v1009 = vpack.c.b16 %v921, %v913
  %v1010 = vpack.c.b16 %v922, %v914
  %v1011 = vpack.c.b16 %v923, %v915
  %v1012 = vpack.c.b16 %v924, %v916
  %v1013 = vpack.c.b16 %v925, %v917
  %v1014 = vpack.c.b16 %v926, %v918
  %v1015 = vpack.c.b16 %v935, %v927
  %v1016 = vpack.c.b16 %v936, %v928
  %v1017 = vpack.c.b16 %v937, %v929
  %v1018 = vpack.c.b16 %v938, %v930
  %v1019 = vpack.c.b16 %v939, %v931
  %v1020 = vpack.c.b16 %v940, %v932
  %v1021 = vpack.c.b16 %v941, %v933
  %v1022 = vpack.c.b16 %v942, %v934
  %v1023 = vpack.c.b16 %v951, %v943
  %v1024 = vpack.c.b16 %v952, %v944
  %v1025 = vpack.c.b16 %v953, %v945
  %v1026 = vpack.c.b16 %v954, %v946
  %v1027 = vpack.c.b16 %v955, %v947
  %v1028 = vpack.c.b16 %v956, %v948
  %v1029 = vpack.c.b16 %v957, %v949
  %v1030 = vpack.c.b16 %v958, %v950
  %v1031 = vpack.c.b16 %v967, %v959
  %v1032 = vpack.c.b16 %v968, %v960
  %v1033 = vpack.c.b16 %v969, %v961
  %v1034 = vpack.c.b16 %v970, %v962
  %v1035 = vpack.c.b16 %v971, %v963
  %v1036 = vpack.c.b16 %v972, %v964
  %v1037 = vpack.c.b16 %v973, %v965
  %v1038 = vpack.c.b16 %v974, %v966
  %1103 = vmatprep.subr.bf16.mxu0 %v1032
  %1104 = vmatpush1.bf16.msra.mxu0 %v1031
  %1105 = vmatprep.subr.bf16.mxu0 %v1024
  %1106 = vmatpush1.bf16.msra.mxu0 %v1023
  %1107 = vmatprep.subr.bf16.mxu0 %v1016
  %1108 = vmatpush1.bf16.msra.mxu0 %v1015
  %1109 = vmatprep.subr.bf16.mxu0 %v1008
  %1110 = vmatpush1.bf16.msra.mxu0 %v1007
  %1111 = vmatprep.subr.bf16.mxu0 %v1000
  %1112 = vmatpush1.bf16.msra.mxu0 %v999
  %1113 = vmatprep.subr.bf16.mxu0 %v992
  %1114 = vmatpush1.bf16.msra.mxu0 %v991
  %1115 = vmatprep.subr.bf16.mxu0 %v984
  %1116 = vmatpush1.bf16.msra.mxu0 %v983
  %1117 = vmatprep.subr.bf16.mxu0 %v976
  %1118 = vmatpush1.bf16.msra.mxu0 %v975
  %1119 = vmatprep.subr.bf16.mxu0 0
  %1120 = vmatpush2.bf16.msra.mxu0 0
  %1121 = vmatprep.subr.bf16.mxu0 0
  %1122 = vmatpush2.bf16.msra.mxu0 0
  %1123 = vmatprep.subr.bf16.mxu0 0
  %1124 = vmatpush2.bf16.msra.mxu0 0
  %1125 = vmatprep.subr.bf16.mxu0 0
  %1126 = vmatpush2.bf16.msra.mxu0 0
  %1127 = vmatprep.subr.bf16.mxu0 0
  %1128 = vmatpush2.bf16.msra.mxu0 0
  %1129 = vmatprep.subr.bf16.mxu0 0
  %1130 = vmatpush2.bf16.msra.mxu0 0
  %1131 = vmatprep.subr.bf16.mxu0 0
  %1132 = vmatpush2.bf16.msra.mxu0 0
  %1133 = vmatprep.subr.bf16.mxu0 0
  %1134 = vmatpush2.bf16.msra.mxu0 0
  %1135 = vmatprep.mubr.bf16.mxu0 0
  %1136 = vmatmul.mubr.bf16.gmra.mxu0 %v708
  %v1137 = vpop.f32.mrf.mxu0
  %v1138 = vadd.f32 0.0, %v1137
  %v1139 = vpop.f32.mrf.mxu0
  %v1140 = vadd.f32 0.0, %v1139
  %v1141 = vpop.f32.mrf.mxu0
  %v1142 = vadd.f32 0.0, %v1141
  %v1143 = vpop.f32.mrf.mxu0
  %v1144 = vadd.f32 0.0, %v1143
  %1145 = vmatprep.mubr.bf16.mxu0 0
  %1146 = vmatmul.mubr.bf16.gmra.mxu0 %v709
  %v1147 = vpop.f32.mrf.mxu0
  %v1148 = vadd.f32 0.0, %v1147
  %v1149 = vpop.f32.mrf.mxu0
  %v1150 = vadd.f32 0.0, %v1149
  %v1151 = vpop.f32.mrf.mxu0
  %v1152 = vadd.f32 0.0, %v1151
  %v1153 = vpop.f32.mrf.mxu0
  %v1154 = vadd.f32 0.0, %v1153
  %1155 = vmatprep.mubr.bf16.mxu0 0
  %1156 = vmatmul.mubr.bf16.gmra.mxu0 %v710
  %v1157 = vpop.f32.mrf.mxu0
  %v1158 = vadd.f32 0.0, %v1157
  %v1159 = vpop.f32.mrf.mxu0
  %v1160 = vadd.f32 0.0, %v1159
  %v1161 = vpop.f32.mrf.mxu0
  %v1162 = vadd.f32 0.0, %v1161
  %v1163 = vpop.f32.mrf.mxu0
  %v1164 = vadd.f32 0.0, %v1163
  %1165 = vmatprep.mubr.bf16.mxu0 0
  %1166 = vmatmul.mubr.bf16.gmra.mxu0 %v711
  %v1167 = vpop.f32.mrf.mxu0
  %v1168 = vadd.f32 0.0, %v1167
  %v1169 = vpop.f32.mrf.mxu0
  %v1170 = vadd.f32 0.0, %v1169
  %v1171 = vpop.f32.mrf.mxu0
  %v1172 = vadd.f32 0.0, %v1171
  %v1173 = vpop.f32.mrf.mxu0
  %v1174 = vadd.f32 0.0, %v1173
  %1175 = vmatprep.mubr.bf16.mxu0 0
  %1176 = vmatmul.mubr.bf16.gmra.mxu0 %v712
  %v1177 = vpop.f32.mrf.mxu0
  %v1178 = vadd.f32 0.0, %v1177
  %v1179 = vpop.f32.mrf.mxu0
  %v1180 = vadd.f32 0.0, %v1179
  %v1181 = vpop.f32.mrf.mxu0
  %v1182 = vadd.f32 0.0, %v1181
  %v1183 = vpop.f32.mrf.mxu0
  %v1184 = vadd.f32 0.0, %v1183
  %1185 = vmatprep.mubr.bf16.mxu0 0
  %1186 = vmatmul.mubr.bf16.gmra.mxu0 %v713
  %v1187 = vpop.f32.mrf.mxu0
  %v1188 = vadd.f32 0.0, %v1187
  %v1189 = vpop.f32.mrf.mxu0
  %v1190 = vadd.f32 0.0, %v1189
  %v1191 = vpop.f32.mrf.mxu0
  %v1192 = vadd.f32 0.0, %v1191
  %v1193 = vpop.f32.mrf.mxu0
  %v1194 = vadd.f32 0.0, %v1193
  %1195 = vmatprep.mubr.bf16.mxu0 0
  %1196 = vmatmul.mubr.bf16.gmra.mxu0 %v714
  %v1197 = vpop.f32.mrf.mxu0
  %v1198 = vadd.f32 0.0, %v1197
  %v1199 = vpop.f32.mrf.mxu0
  %v1200 = vadd.f32 0.0, %v1199
  %v1201 = vpop.f32.mrf.mxu0
  %v1202 = vadd.f32 0.0, %v1201
  %v1203 = vpop.f32.mrf.mxu0
  %v1204 = vadd.f32 0.0, %v1203
  %1205 = vmatprep.mubr.bf16.mxu0 0
  %1206 = vmatmul.mubr.bf16.gmra.mxu0 %v715
  %v1207 = vpop.f32.mrf.mxu0
  %v1208 = vadd.f32 0.0, %v1207
  %v1209 = vpop.f32.mrf.mxu0
  %v1210 = vadd.f32 0.0, %v1209
  %v1211 = vpop.f32.mrf.mxu0
  %v1212 = vadd.f32 0.0, %v1211
  %v1213 = vpop.f32.mrf.mxu0
  %v1214 = vadd.f32 0.0, %v1213
  %1215 = vmatprep.mubr.bf16.mxu0 0
  %1216 = vmatmul.mubr.bf16.gmra.mxu0 %v716
  %v1217 = vpop.f32.mrf.mxu0
  %v1218 = vadd.f32 0.0, %v1217
  %v1219 = vpop.f32.mrf.mxu0
  %v1220 = vadd.f32 0.0, %v1219
  %v1221 = vpop.f32.mrf.mxu0
  %v1222 = vadd.f32 0.0, %v1221
  %v1223 = vpop.f32.mrf.mxu0
  %v1224 = vadd.f32 0.0, %v1223
  %1225 = vmatprep.mubr.bf16.mxu0 0
  %1226 = vmatmul.mubr.bf16.gmra.mxu0 %v717
  %v1227 = vpop.f32.mrf.mxu0
  %v1228 = vadd.f32 0.0, %v1227
  %v1229 = vpop.f32.mrf.mxu0
  %v1230 = vadd.f32 0.0, %v1229
  %v1231 = vpop.f32.mrf.mxu0
  %v1232 = vadd.f32 0.0, %v1231
  %v1233 = vpop.f32.mrf.mxu0
  %v1234 = vadd.f32 0.0, %v1233
  %1235 = vmatprep.mubr.bf16.mxu0 0
  %1236 = vmatmul.mubr.bf16.gmra.mxu0 %v718
  %v1237 = vpop.f32.mrf.mxu0
  %v1238 = vadd.f32 0.0, %v1237
  %v1239 = vpop.f32.mrf.mxu0
  %v1240 = vadd.f32 0.0, %v1239
  %v1241 = vpop.f32.mrf.mxu0
  %v1242 = vpop.f32.mrf.mxu0
  %1243 = vdwg.mxu0
  %1244 = vmatprep.subr.bf16.mxu0 %v1034
  %1245 = vmatpush1.bf16.msra.mxu0 %v1033
  %1246 = vmatprep.subr.bf16.mxu0 %v1026
  %1247 = vmatpush1.bf16.msra.mxu0 %v1025
  %1248 = vmatprep.subr.bf16.mxu0 %v1018
  %1249 = vmatpush1.bf16.msra.mxu0 %v1017
  %1250 = vmatprep.subr.bf16.mxu0 %v1010
  %1251 = vmatpush1.bf16.msra.mxu0 %v1009
  %1252 = vmatprep.subr.bf16.mxu0 %v1002
  %1253 = vmatpush1.bf16.msra.mxu0 %v1001
  %1254 = vmatprep.subr.bf16.mxu0 %v994
  %1255 = vmatpush1.bf16.msra.mxu0 %v993
  %1256 = vmatprep.subr.bf16.mxu0 %v986
  %1257 = vmatpush1.bf16.msra.mxu0 %v985
  %1258 = vmatprep.subr.bf16.mxu0 %v978
  %1259 = vmatpush1.bf16.msra.mxu0 %v977
  %1260 = vmatprep.subr.bf16.mxu0 0
  %1261 = vmatpush2.bf16.msra.mxu0 0
  %1262 = vmatprep.subr.bf16.mxu0 0
  %1263 = vmatpush2.bf16.msra.mxu0 0
  %1264 = vmatprep.subr.bf16.mxu0 0
  %1265 = vmatpush2.bf16.msra.mxu0 0
  %1266 = vmatprep.subr.bf16.mxu0 0
  %1267 = vmatpush2.bf16.msra.mxu0 0
  %1268 = vmatprep.subr.bf16.mxu0 0
  %1269 = vmatpush2.bf16.msra.mxu0 0
  %1270 = vmatprep.subr.bf16.mxu0 0
  %1271 = vmatpush2.bf16.msra.mxu0 0
  %1272 = vmatprep.subr.bf16.mxu0 0
  %1273 = vmatpush2.bf16.msra.mxu0 0
  %1274 = vmatprep.subr.bf16.mxu0 0
  %1275 = vmatpush2.bf16.msra.mxu0 0
  %1276 = vmatprep.mubr.bf16.mxu0 0
  %1277 = vmatmul.mubr.bf16.gmra.mxu0 %v708
  %v1278 = vpop.f32.mrf.mxu0
  %v1279 = vadd.f32 0.0, %v1278
  %v1280 = vpop.f32.mrf.mxu0
  %v1281 = vadd.f32 0.0, %v1280
  %v1282 = vpop.f32.mrf.mxu0
  %v1283 = vadd.f32 0.0, %v1282
  %v1284 = vpop.f32.mrf.mxu0
  %v1285 = vadd.f32 0.0, %v1284
  %1286 = vmatprep.mubr.bf16.mxu0 0
  %1287 = vmatmul.mubr.bf16.gmra.mxu0 %v709
  %v1288 = vpop.f32.mrf.mxu0
  %v1289 = vadd.f32 0.0, %v1288
  %v1290 = vpop.f32.mrf.mxu0
  %v1291 = vadd.f32 0.0, %v1290
  %v1292 = vpop.f32.mrf.mxu0
  %v1293 = vadd.f32 0.0, %v1292
  %v1294 = vpop.f32.mrf.mxu0
  %v1295 = vadd.f32 0.0, %v1294
  %1296 = vmatprep.mubr.bf16.mxu0 0
  %1297 = vmatmul.mubr.bf16.gmra.mxu0 %v710
  %v1298 = vpop.f32.mrf.mxu0
  %v1299 = vadd.f32 0.0, %v1298
  %v1300 = vpop.f32.mrf.mxu0
  %v1301 = vadd.f32 0.0, %v1300
  %v1302 = vpop.f32.mrf.mxu0
  %v1303 = vadd.f32 0.0, %v1302
  %v1304 = vpop.f32.mrf.mxu0
  %v1305 = vadd.f32 0.0, %v1304
  %1306 = vmatprep.mubr.bf16.mxu0 0
  %1307 = vmatmul.mubr.bf16.gmra.mxu0 %v711
  %v1308 = vpop.f32.mrf.mxu0
  %v1309 = vadd.f32 0.0, %v1308
  %v1310 = vpop.f32.mrf.mxu0
  %v1311 = vadd.f32 0.0, %v1310
  %v1312 = vpop.f32.mrf.mxu0
  %v1313 = vadd.f32 0.0, %v1312
  %v1314 = vpop.f32.mrf.mxu0
  %v1315 = vadd.f32 0.0, %v1314
  %1316 = vmatprep.mubr.bf16.mxu0 0
  %1317 = vmatmul.mubr.bf16.gmra.mxu0 %v712
  %v1318 = vpop.f32.mrf.mxu0
  %v1319 = vadd.f32 0.0, %v1318
  %v1320 = vpop.f32.mrf.mxu0
  %v1321 = vadd.f32 0.0, %v1320
  %v1322 = vpop.f32.mrf.mxu0
  %v1323 = vadd.f32 0.0, %v1322
  %v1324 = vpop.f32.mrf.mxu0
  %v1325 = vadd.f32 0.0, %v1324
  %1326 = vmatprep.mubr.bf16.mxu0 0
  %1327 = vmatmul.mubr.bf16.gmra.mxu0 %v713
  %v1328 = vpop.f32.mrf.mxu0
  %v1329 = vadd.f32 0.0, %v1328
  %v1330 = vpop.f32.mrf.mxu0
  %v1331 = vadd.f32 0.0, %v1330
  %v1332 = vpop.f32.mrf.mxu0
  %v1333 = vadd.f32 0.0, %v1332
  %v1334 = vpop.f32.mrf.mxu0
  %v1335 = vadd.f32 0.0, %v1334
  %1336 = vmatprep.mubr.bf16.mxu0 0
  %1337 = vmatmul.mubr.bf16.gmra.mxu0 %v714
  %v1338 = vpop.f32.mrf.mxu0
  %v1339 = vadd.f32 0.0, %v1338
  %v1340 = vpop.f32.mrf.mxu0
  %v1341 = vadd.f32 0.0, %v1340
  %v1342 = vpop.f32.mrf.mxu0
  %v1343 = vadd.f32 0.0, %v1342
  %v1344 = vpop.f32.mrf.mxu0
  %v1345 = vadd.f32 0.0, %v1344
  %1346 = vmatprep.mubr.bf16.mxu0 0
  %1347 = vmatmul.mubr.bf16.gmra.mxu0 %v715
  %v1348 = vpop.f32.mrf.mxu0
  %v1349 = vadd.f32 0.0, %v1348
  %v1350 = vpop.f32.mrf.mxu0
  %v1351 = vadd.f32 0.0, %v1350
  %v1352 = vpop.f32.mrf.mxu0
  %v1353 = vadd.f32 0.0, %v1352
  %v1354 = vpop.f32.mrf.mxu0
  %v1355 = vadd.f32 0.0, %v1354
  %1356 = vmatprep.mubr.bf16.mxu0 0
  %1357 = vmatmul.mubr.bf16.gmra.mxu0 %v716
  %v1358 = vpop.f32.mrf.mxu0
  %v1359 = vadd.f32 0.0, %v1358
  %v1360 = vpop.f32.mrf.mxu0
  %v1361 = vadd.f32 0.0, %v1360
  %v1362 = vpop.f32.mrf.mxu0
  %v1363 = vadd.f32 0.0, %v1362
  %v1364 = vpop.f32.mrf.mxu0
  %v1365 = vadd.f32 0.0, %v1364
  %1366 = vmatprep.mubr.bf16.mxu0 0
  %1367 = vmatmul.mubr.bf16.gmra.mxu0 %v717
  %v1368 = vpop.f32.mrf.mxu0
  %v1369 = vadd.f32 0.0, %v1368
  %v1370 = vpop.f32.mrf.mxu0
  %v1371 = vadd.f32 0.0, %v1370
  %v1372 = vpop.f32.mrf.mxu0
  %v1373 = vadd.f32 0.0, %v1372
  %v1374 = vpop.f32.mrf.mxu0
  %v1375 = vadd.f32 0.0, %v1374
  %1376 = vmatprep.mubr.bf16.mxu0 0
  %1377 = vmatmul.mubr.bf16.gmra.mxu0 %v718
  %v1378 = vpop.f32.mrf.mxu0
  %v1379 = vadd.f32 0.0, %v1378
  %v1380 = vpop.f32.mrf.mxu0
  %v1381 = vadd.f32 0.0, %v1380
  %v1382 = vpop.f32.mrf.mxu0
  %v1383 = vpop.f32.mrf.mxu0
  %1384 = vdwg.mxu0
  %1385 = vmatprep.subr.bf16.mxu0 %v1036
  %1386 = vmatpush1.bf16.msra.mxu0 %v1035
  %1387 = vmatprep.subr.bf16.mxu0 %v1028
  %1388 = vmatpush1.bf16.msra.mxu0 %v1027
  %1389 = vmatprep.subr.bf16.mxu0 %v1020
  %1390 = vmatpush1.bf16.msra.mxu0 %v1019
  %1391 = vmatprep.subr.bf16.mxu0 %v1012
  %1392 = vmatpush1.bf16.msra.mxu0 %v1011
  %1393 = vmatprep.subr.bf16.mxu0 %v1004
  %1394 = vmatpush1.bf16.msra.mxu0 %v1003
  %1395 = vmatprep.subr.bf16.mxu0 %v996
  %1396 = vmatpush1.bf16.msra.mxu0 %v995
  %1397 = vmatprep.subr.bf16.mxu0 %v988
  %1398 = vmatpush1.bf16.msra.mxu0 %v987
  %1399 = vmatprep.subr.bf16.mxu0 %v980
  %1400 = vmatpush1.bf16.msra.mxu0 %v979
  %1401 = vmatprep.subr.bf16.mxu0 0
  %1402 = vmatpush2.bf16.msra.mxu0 0
  %1403 = vmatprep.subr.bf16.mxu0 0
  %1404 = vmatpush2.bf16.msra.mxu0 0
  %1405 = vmatprep.subr.bf16.mxu0 0
  %1406 = vmatpush2.bf16.msra.mxu0 0
  %1407 = vmatprep.subr.bf16.mxu0 0
  %1408 = vmatpush2.bf16.msra.mxu0 0
  %1409 = vmatprep.subr.bf16.mxu0 0
  %1410 = vmatpush2.bf16.msra.mxu0 0
  %1411 = vmatprep.subr.bf16.mxu0 0
  %1412 = vmatpush2.bf16.msra.mxu0 0
  %1413 = vmatprep.subr.bf16.mxu0 0
  %1414 = vmatpush2.bf16.msra.mxu0 0
  %1415 = vmatprep.subr.bf16.mxu0 0
  %1416 = vmatpush2.bf16.msra.mxu0 0
  %1417 = vmatprep.mubr.bf16.mxu0 0
  %1418 = vmatmul.mubr.bf16.gmra.mxu0 %v708
  %v1419 = vpop.f32.mrf.mxu0
  %v1420 = vadd.f32 0.0, %v1419
  %v1421 = vpop.f32.mrf.mxu0
  %v1422 = vadd.f32 0.0, %v1421
  %v1423 = vpop.f32.mrf.mxu0
  %v1424 = vadd.f32 0.0, %v1423
  %v1425 = vpop.f32.mrf.mxu0
  %v1426 = vadd.f32 0.0, %v1425
  %1427 = vmatprep.mubr.bf16.mxu0 0
  %1428 = vmatmul.mubr.bf16.gmra.mxu0 %v709
  %v1429 = vpop.f32.mrf.mxu0
  %v1430 = vadd.f32 0.0, %v1429
  %v1431 = vpop.f32.mrf.mxu0
  %v1432 = vadd.f32 0.0, %v1431
  %v1433 = vpop.f32.mrf.mxu0
  %v1434 = vadd.f32 0.0, %v1433
  %v1435 = vpop.f32.mrf.mxu0
  %v1436 = vadd.f32 0.0, %v1435
  %1437 = vmatprep.mubr.bf16.mxu0 0
  %1438 = vmatmul.mubr.bf16.gmra.mxu0 %v710
  %v1439 = vpop.f32.mrf.mxu0
  %v1440 = vadd.f32 0.0, %v1439
  %v1441 = vpop.f32.mrf.mxu0
  %v1442 = vadd.f32 0.0, %v1441
  %v1443 = vpop.f32.mrf.mxu0
  %v1444 = vadd.f32 0.0, %v1443
  %v1445 = vpop.f32.mrf.mxu0
  %v1446 = vadd.f32 0.0, %v1445
  %1447 = vmatprep.mubr.bf16.mxu0 0
  %1448 = vmatmul.mubr.bf16.gmra.mxu0 %v711
  %v1449 = vpop.f32.mrf.mxu0
  %v1450 = vadd.f32 0.0, %v1449
  %v1451 = vpop.f32.mrf.mxu0
  %v1452 = vadd.f32 0.0, %v1451
  %v1453 = vpop.f32.mrf.mxu0
  %v1454 = vadd.f32 0.0, %v1453
  %v1455 = vpop.f32.mrf.mxu0
  %v1456 = vadd.f32 0.0, %v1455
  %1457 = vmatprep.mubr.bf16.mxu0 0
  %1458 = vmatmul.mubr.bf16.gmra.mxu0 %v712
  %v1459 = vpop.f32.mrf.mxu0
  %v1460 = vadd.f32 0.0, %v1459
  %v1461 = vpop.f32.mrf.mxu0
  %v1462 = vadd.f32 0.0, %v1461
  %v1463 = vpop.f32.mrf.mxu0
  %v1464 = vadd.f32 0.0, %v1463
  %v1465 = vpop.f32.mrf.mxu0
  %v1466 = vadd.f32 0.0, %v1465
  %1467 = vmatprep.mubr.bf16.mxu0 0
  %1468 = vmatmul.mubr.bf16.gmra.mxu0 %v713
  %v1469 = vpop.f32.mrf.mxu0
  %v1470 = vadd.f32 0.0, %v1469
  %v1471 = vpop.f32.mrf.mxu0
  %v1472 = vadd.f32 0.0, %v1471
  %v1473 = vpop.f32.mrf.mxu0
  %v1474 = vadd.f32 0.0, %v1473
  %v1475 = vpop.f32.mrf.mxu0
  %v1476 = vadd.f32 0.0, %v1475
  %1477 = vmatprep.mubr.bf16.mxu0 0
  %1478 = vmatmul.mubr.bf16.gmra.mxu0 %v714
  %v1479 = vpop.f32.mrf.mxu0
  %v1480 = vadd.f32 0.0, %v1479
  %v1481 = vpop.f32.mrf.mxu0
  %v1482 = vadd.f32 0.0, %v1481
  %v1483 = vpop.f32.mrf.mxu0
  %v1484 = vadd.f32 0.0, %v1483
  %v1485 = vpop.f32.mrf.mxu0
  %v1486 = vadd.f32 0.0, %v1485
  %1487 = vmatprep.mubr.bf16.mxu0 0
  %1488 = vmatmul.mubr.bf16.gmra.mxu0 %v715
  %v1489 = vpop.f32.mrf.mxu0
  %v1490 = vadd.f32 0.0, %v1489
  %v1491 = vpop.f32.mrf.mxu0
  %v1492 = vadd.f32 0.0, %v1491
  %v1493 = vpop.f32.mrf.mxu0
  %v1494 = vadd.f32 0.0, %v1493
  %v1495 = vpop.f32.mrf.mxu0
  %v1496 = vadd.f32 0.0, %v1495
  %1497 = vmatprep.mubr.bf16.mxu0 0
  %1498 = vmatmul.mubr.bf16.gmra.mxu0 %v716
  %v1499 = vpop.f32.mrf.mxu0
  %v1500 = vadd.f32 0.0, %v1499
  %v1501 = vpop.f32.mrf.mxu0
  %v1502 = vadd.f32 0.0, %v1501
  %v1503 = vpop.f32.mrf.mxu0
  %v1504 = vadd.f32 0.0, %v1503
  %v1505 = vpop.f32.mrf.mxu0
  %v1506 = vadd.f32 0.0, %v1505
  %1507 = vmatprep.mubr.bf16.mxu0 0
  %1508 = vmatmul.mubr.bf16.gmra.mxu0 %v717
  %v1509 = vpop.f32.mrf.mxu0
  %v1510 = vadd.f32 0.0, %v1509
  %v1511 = vpop.f32.mrf.mxu0
  %v1512 = vadd.f32 0.0, %v1511
  %v1513 = vpop.f32.mrf.mxu0
  %v1514 = vadd.f32 0.0, %v1513
  %v1515 = vpop.f32.mrf.mxu0
  %v1516 = vadd.f32 0.0, %v1515
  %1517 = vmatprep.mubr.bf16.mxu0 0
  %1518 = vmatmul.mubr.bf16.gmra.mxu0 %v718
  %v1519 = vpop.f32.mrf.mxu0
  %v1520 = vadd.f32 0.0, %v1519
  %v1521 = vpop.f32.mrf.mxu0
  %v1522 = vadd.f32 0.0, %v1521
  %v1523 = vpop.f32.mrf.mxu0
  %v1524 = vpop.f32.mrf.mxu0
  %1525 = vdwg.mxu0
  %1526 = vmatprep.subr.bf16.mxu0 %v1038
  %1527 = vmatpush1.bf16.msra.mxu0 %v1037
  %1528 = vmatprep.subr.bf16.mxu0 %v1030
  %1529 = vmatpush1.bf16.msra.mxu0 %v1029
  %1530 = vmatprep.subr.bf16.mxu0 %v1022
  %1531 = vmatpush1.bf16.msra.mxu0 %v1021
  %1532 = vmatprep.subr.bf16.mxu0 %v1014
  %1533 = vmatpush1.bf16.msra.mxu0 %v1013
  %1534 = vmatprep.subr.bf16.mxu0 %v1006
  %1535 = vmatpush1.bf16.msra.mxu0 %v1005
  %1536 = vmatprep.subr.bf16.mxu0 %v998
  %1537 = vmatpush1.bf16.msra.mxu0 %v997
  %1538 = vmatprep.subr.bf16.mxu0 %v990
  %1539 = vmatpush1.bf16.msra.mxu0 %v989
  %1540 = vmatprep.subr.bf16.mxu0 %v982
  %1541 = vmatpush1.bf16.msra.mxu0 %v981
  %1542 = vmatprep.subr.bf16.mxu0 0
  %1543 = vmatpush2.bf16.msra.mxu0 0
  %1544 = vmatprep.subr.bf16.mxu0 0
  %1545 = vmatpush2.bf16.msra.mxu0 0
  %1546 = vmatprep.subr.bf16.mxu0 0
  %1547 = vmatpush2.bf16.msra.mxu0 0
  %1548 = vmatprep.subr.bf16.mxu0 0
  %1549 = vmatpush2.bf16.msra.mxu0 0
  %1550 = vmatprep.subr.bf16.mxu0 0
  %1551 = vmatpush2.bf16.msra.mxu0 0
  %1552 = vmatprep.subr.bf16.mxu0 0
  %1553 = vmatpush2.bf16.msra.mxu0 0
  %1554 = vmatprep.subr.bf16.mxu0 0
  %1555 = vmatpush2.bf16.msra.mxu0 0
  %1556 = vmatprep.subr.bf16.mxu0 0
  %1557 = vmatpush2.bf16.msra.mxu0 0
  %1558 = vmatprep.mubr.bf16.mxu0 0
  %1559 = vmatmul.mubr.bf16.gmra.mxu0 %v708
  %v1560 = vpop.f32.mrf.mxu0
  %v1561 = vadd.f32 0.0, %v1560
  %v1562 = vpop.f32.mrf.mxu0
  %v1563 = vadd.f32 0.0, %v1562
  %v1564 = vpop.f32.mrf.mxu0
  %v1565 = vadd.f32 0.0, %v1564
  %v1566 = vpop.f32.mrf.mxu0
  %v1567 = vadd.f32 0.0, %v1566
  %1568 = vmatprep.mubr.bf16.mxu0 0
  %1569 = vmatmul.mubr.bf16.gmra.mxu0 %v709
  %v1570 = vpop.f32.mrf.mxu0
  %v1571 = vadd.f32 0.0, %v1570
  %v1572 = vpop.f32.mrf.mxu0
  %v1573 = vadd.f32 0.0, %v1572
  %v1574 = vpop.f32.mrf.mxu0
  %v1575 = vadd.f32 0.0, %v1574
  %v1576 = vpop.f32.mrf.mxu0
  %v1577 = vadd.f32 0.0, %v1576
  %1578 = vmatprep.mubr.bf16.mxu0 0
  %1579 = vmatmul.mubr.bf16.gmra.mxu0 %v710
  %v1580 = vpop.f32.mrf.mxu0
  %v1581 = vadd.f32 0.0, %v1580
  %v1582 = vpop.f32.mrf.mxu0
  %v1583 = vadd.f32 0.0, %v1582
  %v1584 = vpop.f32.mrf.mxu0
  %v1585 = vadd.f32 0.0, %v1584
  %v1586 = vpop.f32.mrf.mxu0
  %v1587 = vadd.f32 0.0, %v1586
  %1588 = vmatprep.mubr.bf16.mxu0 0
  %1589 = vmatmul.mubr.bf16.gmra.mxu0 %v711
  %v1590 = vpop.f32.mrf.mxu0
  %v1591 = vadd.f32 0.0, %v1590
  %v1592 = vpop.f32.mrf.mxu0
  %v1593 = vadd.f32 0.0, %v1592
  %v1594 = vpop.f32.mrf.mxu0
  %v1595 = vadd.f32 0.0, %v1594
  %v1596 = vpop.f32.mrf.mxu0
  %v1597 = vadd.f32 0.0, %v1596
  %1598 = vmatprep.mubr.bf16.mxu0 0
  %1599 = vmatmul.mubr.bf16.gmra.mxu0 %v712
  %v1600 = vpop.f32.mrf.mxu0
  %v1601 = vadd.f32 0.0, %v1600
  %v1602 = vpop.f32.mrf.mxu0
  %v1603 = vadd.f32 0.0, %v1602
  %v1604 = vpop.f32.mrf.mxu0
  %v1605 = vadd.f32 0.0, %v1604
  %v1606 = vpop.f32.mrf.mxu0
  %v1607 = vadd.f32 0.0, %v1606
  %1608 = vmatprep.mubr.bf16.mxu0 0
  %1609 = vmatmul.mubr.bf16.gmra.mxu0 %v713
  %v1610 = vpop.f32.mrf.mxu0
  %v1611 = vadd.f32 0.0, %v1610
  %v1612 = vpop.f32.mrf.mxu0
  %v1613 = vadd.f32 0.0, %v1612
  %v1614 = vpop.f32.mrf.mxu0
  %v1615 = vadd.f32 0.0, %v1614
  %v1616 = vpop.f32.mrf.mxu0
  %v1617 = vadd.f32 0.0, %v1616
  %1618 = vmatprep.mubr.bf16.mxu0 0
  %1619 = vmatmul.mubr.bf16.gmra.mxu0 %v714
  %v1620 = vpop.f32.mrf.mxu0
  %v1621 = vadd.f32 0.0, %v1620
  %v1622 = vpop.f32.mrf.mxu0
  %v1623 = vadd.f32 0.0, %v1622
  %v1624 = vpop.f32.mrf.mxu0
  %v1625 = vadd.f32 0.0, %v1624
  %v1626 = vpop.f32.mrf.mxu0
  %v1627 = vadd.f32 0.0, %v1626
  %1628 = vmatprep.mubr.bf16.mxu0 0
  %1629 = vmatmul.mubr.bf16.gmra.mxu0 %v715
  %v1630 = vpop.f32.mrf.mxu0
  %v1631 = vadd.f32 0.0, %v1630
  %v1632 = vpop.f32.mrf.mxu0
  %v1633 = vadd.f32 0.0, %v1632
  %v1634 = vpop.f32.mrf.mxu0
  %v1635 = vadd.f32 0.0, %v1634
  %v1636 = vpop.f32.mrf.mxu0
  %v1637 = vadd.f32 0.0, %v1636
  %1638 = vmatprep.mubr.bf16.mxu0 0
  %1639 = vmatmul.mubr.bf16.gmra.mxu0 %v716
  %v1640 = vpop.f32.mrf.mxu0
  %v1641 = vadd.f32 0.0, %v1640
  %v1642 = vpop.f32.mrf.mxu0
  %v1643 = vadd.f32 0.0, %v1642
  %v1644 = vpop.f32.mrf.mxu0
  %v1645 = vadd.f32 0.0, %v1644
  %v1646 = vpop.f32.mrf.mxu0
  %v1647 = vadd.f32 0.0, %v1646
  %1648 = vmatprep.mubr.bf16.mxu0 0
  %1649 = vmatmul.mubr.bf16.gmra.mxu0 %v717
  %v1650 = vpop.f32.mrf.mxu0
  %v1651 = vadd.f32 0.0, %v1650
  %v1652 = vpop.f32.mrf.mxu0
  %v1653 = vadd.f32 0.0, %v1652
  %v1654 = vpop.f32.mrf.mxu0
  %v1655 = vadd.f32 0.0, %v1654
  %v1656 = vpop.f32.mrf.mxu0
  %v1657 = vadd.f32 0.0, %v1656
  %1658 = vmatprep.mubr.bf16.mxu0 0
  %1659 = vmatmul.mubr.bf16.gmra.mxu0 %v718
  %v1660 = vpop.f32.mrf.mxu0
  %v1661 = vadd.f32 0.0, %v1660
  %v1662 = vpop.f32.mrf.mxu0
  %v1663 = vadd.f32 0.0, %v1662
  %v1664 = vpop.f32.mrf.mxu0
  %v1665 = vpop.f32.mrf.mxu0
  %1666 = vdwg.mxu0
  %v1667 = vpack.c.bf16 %v1142, %v1138
  %v1668 = vpack.c.bf16 %v1144, %v1140
  %v1669 = vpack.c.bf16 %v1283, %v1279
  %v1670 = vpack.c.bf16 %v1285, %v1281
  %v1671 = vpack.c.bf16 %v1424, %v1420
  %v1672 = vpack.c.bf16 %v1426, %v1422
  %v1673 = vpack.c.bf16 %v1565, %v1561
  %v1674 = vpack.c.bf16 %v1567, %v1563
  %v1675 = vpack.c.bf16 %v1152, %v1148
  %v1676 = vpack.c.bf16 %v1154, %v1150
  %v1677 = vpack.c.bf16 %v1293, %v1289
  %v1678 = vpack.c.bf16 %v1295, %v1291
  %v1679 = vpack.c.bf16 %v1434, %v1430
  %v1680 = vpack.c.bf16 %v1436, %v1432
  %v1681 = vpack.c.bf16 %v1575, %v1571
  %v1682 = vpack.c.bf16 %v1577, %v1573
  %v1683 = vpack.c.bf16 %v1162, %v1158
  %v1684 = vpack.c.bf16 %v1164, %v1160
  %v1685 = vpack.c.bf16 %v1303, %v1299
  %v1686 = vpack.c.bf16 %v1305, %v1301
  %v1687 = vpack.c.bf16 %v1444, %v1440
  %v1688 = vpack.c.bf16 %v1446, %v1442
  %v1689 = vpack.c.bf16 %v1585, %v1581
  %v1690 = vpack.c.bf16 %v1587, %v1583
  %v1691 = vpack.c.bf16 %v1172, %v1168
  %v1692 = vpack.c.bf16 %v1174, %v1170
  %v1693 = vpack.c.bf16 %v1313, %v1309
  %v1694 = vpack.c.bf16 %v1315, %v1311
  %v1695 = vpack.c.bf16 %v1454, %v1450
  %v1696 = vpack.c.bf16 %v1456, %v1452
  %v1697 = vpack.c.bf16 %v1595, %v1591
  %v1698 = vpack.c.bf16 %v1597, %v1593
  %v1699 = vpack.c.bf16 %v1182, %v1178
  %v1700 = vpack.c.bf16 %v1184, %v1180
  %v1701 = vpack.c.bf16 %v1323, %v1319
  %v1702 = vpack.c.bf16 %v1325, %v1321
  %v1703 = vpack.c.bf16 %v1464, %v1460
  %v1704 = vpack.c.bf16 %v1466, %v1462
  %v1705 = vpack.c.bf16 %v1605, %v1601
  %v1706 = vpack.c.bf16 %v1607, %v1603
  %v1707 = vpack.c.bf16 %v1192, %v1188
  %v1708 = vpack.c.bf16 %v1194, %v1190
  %v1709 = vpack.c.bf16 %v1333, %v1329
  %v1710 = vpack.c.bf16 %v1335, %v1331
  %v1711 = vpack.c.bf16 %v1474, %v1470
  %v1712 = vpack.c.bf16 %v1476, %v1472
  %v1713 = vpack.c.bf16 %v1615, %v1611
  %v1714 = vpack.c.bf16 %v1617, %v1613
  %v1715 = vpack.c.bf16 %v1202, %v1198
  %v1716 = vpack.c.bf16 %v1204, %v1200
  %v1717 = vpack.c.bf16 %v1343, %v1339
  %v1718 = vpack.c.bf16 %v1345, %v1341
  %v1719 = vpack.c.bf16 %v1484, %v1480
  %v1720 = vpack.c.bf16 %v1486, %v1482
  %v1721 = vpack.c.bf16 %v1625, %v1621
  %v1722 = vpack.c.bf16 %v1627, %v1623
  %v1723 = vpack.c.bf16 %v1212, %v1208
  %v1724 = vpack.c.bf16 %v1214, %v1210
  %v1725 = vpack.c.bf16 %v1353, %v1349
  %v1726 = vpack.c.bf16 %v1355, %v1351
  %v1727 = vpack.c.bf16 %v1494, %v1490
  %v1728 = vpack.c.bf16 %v1496, %v1492
  %v1729 = vpack.c.bf16 %v1635, %v1631
  %v1730 = vpack.c.bf16 %v1637, %v1633
  %v1731 = vpack.c.bf16 %v1222, %v1218
  %v1732 = vpack.c.bf16 %v1224, %v1220
  %v1733 = vpack.c.bf16 %v1363, %v1359
  %v1734 = vpack.c.bf16 %v1365, %v1361
  %v1735 = vpack.c.bf16 %v1504, %v1500
  %v1736 = vpack.c.bf16 %v1506, %v1502
  %v1737 = vpack.c.bf16 %v1645, %v1641
  %v1738 = vpack.c.bf16 %v1647, %v1643
  %v1739 = vpack.c.bf16 %v1232, %v1228
  %v1740 = vpack.c.bf16 %v1234, %v1230
  %v1741 = vpack.c.bf16 %v1373, %v1369
  %v1742 = vpack.c.bf16 %v1375, %v1371
  %v1743 = vpack.c.bf16 %v1514, %v1510
  %v1744 = vpack.c.bf16 %v1516, %v1512
  %v1745 = vpack.c.bf16 %v1655, %v1651
  %v1746 = vpack.c.bf16 %v1657, %v1653
  %v1747 = vpack.c.bf16 %v1238, %v1238
  %v1748 = vpack.c.bf16 %v1240, %v1240
  %v1749 = vpack.c.bf16 %v1379, %v1379
  %v1750 = vpack.c.bf16 %v1381, %v1381
  %v1751 = vpack.c.bf16 %v1520, %v1520
  %v1752 = vpack.c.bf16 %v1522, %v1522
  %v1753 = vpack.c.bf16 %v1661, %v1661
  %v1754 = vpack.c.bf16 %v1663, %v1663
  %v1843 = vunpack.c.l.b16 %v1667
  %v1844 = vunpack.c.l.b16 %v1668
  %v1845 = vunpack.c.l.b16 %v1669
  %v1846 = vunpack.c.l.b16 %v1670
  %v1847 = vunpack.c.l.b16 %v1671
  %v1848 = vunpack.c.l.b16 %v1672
  %v1849 = vunpack.c.l.b16 %v1673
  %v1850 = vunpack.c.l.b16 %v1674
  %v1851 = vunpack.c.h.b16 %v1667
  %v1852 = vunpack.c.h.b16 %v1668
  %v1853 = vunpack.c.h.b16 %v1669
  %v1854 = vunpack.c.h.b16 %v1670
  %v1855 = vunpack.c.h.b16 %v1671
  %v1856 = vunpack.c.h.b16 %v1672
  %v1857 = vunpack.c.h.b16 %v1673
  %v1858 = vunpack.c.h.b16 %v1674
  %v1859 = vunpack.c.l.b16 %v1675
  %v1860 = vunpack.c.l.b16 %v1676
  %v1861 = vunpack.c.l.b16 %v1677
  %v1862 = vunpack.c.l.b16 %v1678
  %v1863 = vunpack.c.l.b16 %v1679
  %v1864 = vunpack.c.l.b16 %v1680
  %v1865 = vunpack.c.l.b16 %v1681
  %v1866 = vunpack.c.l.b16 %v1682
  %v1867 = vunpack.c.h.b16 %v1675
  %v1868 = vunpack.c.h.b16 %v1676
  %v1869 = vunpack.c.h.b16 %v1677
  %v1870 = vunpack.c.h.b16 %v1678
  %v1871 = vunpack.c.h.b16 %v1679
  %v1872 = vunpack.c.h.b16 %v1680
  %v1873 = vunpack.c.h.b16 %v1681
  %v1874 = vunpack.c.h.b16 %v1682
  %v1875 = vunpack.c.l.b16 %v1683
  %v1876 = vunpack.c.l.b16 %v1684
  %v1877 = vunpack.c.l.b16 %v1685
  %v1878 = vunpack.c.l.b16 %v1686
  %v1879 = vunpack.c.l.b16 %v1687
  %v1880 = vunpack.c.l.b16 %v1688
  %v1881 = vunpack.c.l.b16 %v1689
  %v1882 = vunpack.c.l.b16 %v1690
  %v1883 = vunpack.c.h.b16 %v1683
  %v1884 = vunpack.c.h.b16 %v1684
  %v1885 = vunpack.c.h.b16 %v1685
  %v1886 = vunpack.c.h.b16 %v1686
  %v1887 = vunpack.c.h.b16 %v1687
  %v1888 = vunpack.c.h.b16 %v1688
  %v1889 = vunpack.c.h.b16 %v1689
  %v1890 = vunpack.c.h.b16 %v1690
  %v1891 = vunpack.c.l.b16 %v1691
  %v1892 = vunpack.c.l.b16 %v1692
  %v1893 = vunpack.c.l.b16 %v1693
  %v1894 = vunpack.c.l.b16 %v1694
  %v1895 = vunpack.c.l.b16 %v1695
  %v1896 = vunpack.c.l.b16 %v1696
  %v1897 = vunpack.c.l.b16 %v1697
  %v1898 = vunpack.c.l.b16 %v1698
  %v1899 = vunpack.c.h.b16 %v1691
  %v1900 = vunpack.c.h.b16 %v1692
  %v1901 = vunpack.c.h.b16 %v1693
  %v1902 = vunpack.c.h.b16 %v1694
  %v1903 = vunpack.c.h.b16 %v1695
  %v1904 = vunpack.c.h.b16 %v1696
  %v1905 = vunpack.c.h.b16 %v1697
  %v1906 = vunpack.c.h.b16 %v1698
  %v1907 = vunpack.c.l.b16 %v1699
  %v1908 = vunpack.c.l.b16 %v1700
  %v1909 = vunpack.c.l.b16 %v1701
  %v1910 = vunpack.c.l.b16 %v1702
  %v1911 = vunpack.c.l.b16 %v1703
  %v1912 = vunpack.c.l.b16 %v1704
  %v1913 = vunpack.c.l.b16 %v1705
  %v1914 = vunpack.c.l.b16 %v1706
  %v1915 = vunpack.c.h.b16 %v1699
  %v1916 = vunpack.c.h.b16 %v1700
  %v1917 = vunpack.c.h.b16 %v1701
  %v1918 = vunpack.c.h.b16 %v1702
  %v1919 = vunpack.c.h.b16 %v1703
  %v1920 = vunpack.c.h.b16 %v1704
  %v1921 = vunpack.c.h.b16 %v1705
  %v1922 = vunpack.c.h.b16 %v1706
  %v1923 = vunpack.c.l.b16 %v1707
  %v1924 = vunpack.c.l.b16 %v1708
  %v1925 = vunpack.c.l.b16 %v1709
  %v1926 = vunpack.c.l.b16 %v1710
  %v1927 = vunpack.c.l.b16 %v1711
  %v1928 = vunpack.c.l.b16 %v1712
  %v1929 = vunpack.c.l.b16 %v1713
  %v1930 = vunpack.c.l.b16 %v1714
  %v1931 = vunpack.c.h.b16 %v1707
  %v1932 = vunpack.c.h.b16 %v1708
  %v1933 = vunpack.c.h.b16 %v1709
  %v1934 = vunpack.c.h.b16 %v1710
  %v1935 = vunpack.c.h.b16 %v1711
  %v1936 = vunpack.c.h.b16 %v1712
  %v1937 = vunpack.c.h.b16 %v1713
  %v1938 = vunpack.c.h.b16 %v1714
  %v1939 = vunpack.c.l.b16 %v1715
  %v1940 = vunpack.c.l.b16 %v1716
  %v1941 = vunpack.c.l.b16 %v1717
  %v1942 = vunpack.c.l.b16 %v1718
  %v1943 = vunpack.c.l.b16 %v1719
  %v1944 = vunpack.c.l.b16 %v1720
  %v1945 = vunpack.c.l.b16 %v1721
  %v1946 = vunpack.c.l.b16 %v1722
  %v1947 = vunpack.c.h.b16 %v1715
  %v1948 = vunpack.c.h.b16 %v1716
  %v1949 = vunpack.c.h.b16 %v1717
  %v1950 = vunpack.c.h.b16 %v1718
  %v1951 = vunpack.c.h.b16 %v1719
  %v1952 = vunpack.c.h.b16 %v1720
  %v1953 = vunpack.c.h.b16 %v1721
  %v1954 = vunpack.c.h.b16 %v1722
  %v1955 = vunpack.c.l.b16 %v1723
  %v1956 = vunpack.c.l.b16 %v1724
  %v1957 = vunpack.c.l.b16 %v1725
  %v1958 = vunpack.c.l.b16 %v1726
  %v1959 = vunpack.c.l.b16 %v1727
  %v1960 = vunpack.c.l.b16 %v1728
  %v1961 = vunpack.c.l.b16 %v1729
  %v1962 = vunpack.c.l.b16 %v1730
  %v1963 = vunpack.c.h.b16 %v1723
  %v1964 = vunpack.c.h.b16 %v1724
  %v1965 = vunpack.c.h.b16 %v1725
  %v1966 = vunpack.c.h.b16 %v1726
  %v1967 = vunpack.c.h.b16 %v1727
  %v1968 = vunpack.c.h.b16 %v1728
  %v1969 = vunpack.c.h.b16 %v1729
  %v1970 = vunpack.c.h.b16 %v1730
  %v1971 = vunpack.c.l.b16 %v1731
  %v1972 = vunpack.c.l.b16 %v1732
  %v1973 = vunpack.c.l.b16 %v1733
  %v1974 = vunpack.c.l.b16 %v1734
  %v1975 = vunpack.c.l.b16 %v1735
  %v1976 = vunpack.c.l.b16 %v1736
  %v1977 = vunpack.c.l.b16 %v1737
  %v1978 = vunpack.c.l.b16 %v1738
  %v1979 = vunpack.c.h.b16 %v1731
  %v1980 = vunpack.c.h.b16 %v1732
  %v1981 = vunpack.c.h.b16 %v1733
  %v1982 = vunpack.c.h.b16 %v1734
  %v1983 = vunpack.c.h.b16 %v1735
  %v1984 = vunpack.c.h.b16 %v1736
  %v1985 = vunpack.c.h.b16 %v1737
  %v1986 = vunpack.c.h.b16 %v1738
  %v1987 = vunpack.c.l.b16 %v1739
  %v1988 = vunpack.c.l.b16 %v1740
  %v1989 = vunpack.c.l.b16 %v1741
  %v1990 = vunpack.c.l.b16 %v1742
  %v1991 = vunpack.c.l.b16 %v1743
  %v1992 = vunpack.c.l.b16 %v1744
  %v1993 = vunpack.c.l.b16 %v1745
  %v1994 = vunpack.c.l.b16 %v1746
  %v1995 = vunpack.c.h.b16 %v1739
  %v1996 = vunpack.c.h.b16 %v1740
  %v1997 = vunpack.c.h.b16 %v1741
  %v1998 = vunpack.c.h.b16 %v1742
  %v1999 = vunpack.c.h.b16 %v1743
  %v2000 = vunpack.c.h.b16 %v1744
  %v2001 = vunpack.c.h.b16 %v1745
  %v2002 = vunpack.c.h.b16 %v1746
  %v2003 = vunpack.c.l.b16 %v1747
  %v2004 = vunpack.c.l.b16 %v1748
  %v2005 = vunpack.c.l.b16 %v1749
  %v2006 = vunpack.c.l.b16 %v1750
  %v2007 = vunpack.c.l.b16 %v1751
  %v2008 = vunpack.c.l.b16 %v1752
  %v2009 = vunpack.c.l.b16 %v1753
  %v2010 = vunpack.c.l.b16 %v1754
  %v2011 = vpack.c.b16 %v1844, %v1843
  %v2012 = vpack.c.b16 %v1846, %v1845
  %v2013 = vpack.c.b16 %v1848, %v1847
  %v2014 = vpack.c.b16 %v1850, %v1849
  %v2015 = vpack.c.b16 %v1852, %v1851
  %v2016 = vpack.c.b16 %v1854, %v1853
  %v2017 = vpack.c.b16 %v1856, %v1855
  %v2018 = vpack.c.b16 %v1858, %v1857
  %v2019 = vpack.c.b16 %v1860, %v1859
  %v2020 = vpack.c.b16 %v1862, %v1861
  %v2021 = vpack.c.b16 %v1864, %v1863
  %v2022 = vpack.c.b16 %v1866, %v1865
  %v2023 = vpack.c.b16 %v1868, %v1867
  %v2024 = vpack.c.b16 %v1870, %v1869
  %v2025 = vpack.c.b16 %v1872, %v1871
  %v2026 = vpack.c.b16 %v1874, %v1873
  %v2027 = vpack.c.b16 %v1876, %v1875
  %v2028 = vpack.c.b16 %v1878, %v1877
  %v2029 = vpack.c.b16 %v1880, %v1879
  %v2030 = vpack.c.b16 %v1882, %v1881
  %v2031 = vpack.c.b16 %v1884, %v1883
  %v2032 = vpack.c.b16 %v1886, %v1885
  %v2033 = vpack.c.b16 %v1888, %v1887
  %v2034 = vpack.c.b16 %v1890, %v1889
  %v2035 = vpack.c.b16 %v1892, %v1891
  %v2036 = vpack.c.b16 %v1894, %v1893
  %v2037 = vpack.c.b16 %v1896, %v1895
  %v2038 = vpack.c.b16 %v1898, %v1897
  %v2039 = vpack.c.b16 %v1900, %v1899
  %v2040 = vpack.c.b16 %v1902, %v1901
  %v2041 = vpack.c.b16 %v1904, %v1903
  %v2042 = vpack.c.b16 %v1906, %v1905
  %v2043 = vpack.c.b16 %v1908, %v1907
  %v2044 = vpack.c.b16 %v1910, %v1909
  %v2045 = vpack.c.b16 %v1912, %v1911
  %v2046 = vpack.c.b16 %v1914, %v1913
  %v2047 = vpack.c.b16 %v1916, %v1915
  %v2048 = vpack.c.b16 %v1918, %v1917
  %v2049 = vpack.c.b16 %v1920, %v1919
  %v2050 = vpack.c.b16 %v1922, %v1921
  %v2051 = vpack.c.b16 %v1924, %v1923
  %v2052 = vpack.c.b16 %v1926, %v1925
  %v2053 = vpack.c.b16 %v1928, %v1927
  %v2054 = vpack.c.b16 %v1930, %v1929
  %v2055 = vpack.c.b16 %v1932, %v1931
  %v2056 = vpack.c.b16 %v1934, %v1933
  %v2057 = vpack.c.b16 %v1936, %v1935
  %v2058 = vpack.c.b16 %v1938, %v1937
  %v2059 = vpack.c.b16 %v1940, %v1939
  %v2060 = vpack.c.b16 %v1942, %v1941
  %v2061 = vpack.c.b16 %v1944, %v1943
  %v2062 = vpack.c.b16 %v1946, %v1945
  %v2063 = vpack.c.b16 %v1948, %v1947
  %v2064 = vpack.c.b16 %v1950, %v1949
  %v2065 = vpack.c.b16 %v1952, %v1951
  %v2066 = vpack.c.b16 %v1954, %v1953
  %v2067 = vpack.c.b16 %v1956, %v1955
  %v2068 = vpack.c.b16 %v1958, %v1957
  %v2069 = vpack.c.b16 %v1960, %v1959
  %v2070 = vpack.c.b16 %v1962, %v1961
  %v2071 = vpack.c.b16 %v1964, %v1963
  %v2072 = vpack.c.b16 %v1966, %v1965
  %v2073 = vpack.c.b16 %v1968, %v1967
  %v2074 = vpack.c.b16 %v1970, %v1969
  %v2075 = vpack.c.b16 %v1972, %v1971
  %v2076 = vpack.c.b16 %v1974, %v1973
  %v2077 = vpack.c.b16 %v1976, %v1975
  %v2078 = vpack.c.b16 %v1978, %v1977
  %v2079 = vpack.c.b16 %v1980, %v1979
  %v2080 = vpack.c.b16 %v1982, %v1981
  %v2081 = vpack.c.b16 %v1984, %v1983
  %v2082 = vpack.c.b16 %v1986, %v1985
  %v2083 = vpack.c.b16 %v1988, %v1987
  %v2084 = vpack.c.b16 %v1990, %v1989
  %v2085 = vpack.c.b16 %v1992, %v1991
  %v2086 = vpack.c.b16 %v1994, %v1993
  %v2087 = vpack.c.b16 %v1996, %v1995
  %v2088 = vpack.c.b16 %v1998, %v1997
  %v2089 = vpack.c.b16 %v2000, %v1999
  %v2090 = vpack.c.b16 %v2002, %v2001
  %v2091 = vpack.c.b16 %v2004, %v2003
  %v2092 = vpack.c.b16 %v2006, %v2005
  %v2093 = vpack.c.b16 %v2008, %v2007
  %v2094 = vpack.c.b16 %v2010, %v2009
  %2179 = vst [vmem:[%s4] sm:$0xff] %v2011
  %2180 = vst [vmem:[%s4 + $0x8] sm:$0xff] %v2012
  %2181 = vst [vmem:[%s4 + $0x10] sm:$0xff] %v2013
  %2182 = vst [vmem:[%s4 + $0x18] sm:$0xff] %v2014
  %2183 = vst [vmem:[%s4 + $0x20] sm:$0xff] %v2015
  %2184 = vst [vmem:[%s4 + $0x28] sm:$0xff] %v2016
  %2185 = vst [vmem:[%s4 + $0x30] sm:$0xff] %v2017
  %2186 = vst [vmem:[%s4 + $0x38] sm:$0xff] %v2018
  %2187 = vst [vmem:[%s4 + $0x40] sm:$0xff] %v2019
  %2188 = vst [vmem:[%s4 + $0x48] sm:$0xff] %v2020
  %2189 = vst [vmem:[%s4 + $0x50] sm:$0xff] %v2021
  %2190 = vst [vmem:[%s4 + $0x58] sm:$0xff] %v2022
  %2191 = vst [vmem:[%s4 + $0x60] sm:$0xff] %v2023
  %2192 = vst [vmem:[%s4 + $0x68] sm:$0xff] %v2024
  %2193 = vst [vmem:[%s4 + $0x70] sm:$0xff] %v2025
  %2194 = vst [vmem:[%s4 + $0x78] sm:$0xff] %v2026
  %2195 = vst [vmem:[%s4 + $0x80] sm:$0xff] %v2027
  %2196 = vst [vmem:[%s4 + $0x88] sm:$0xff] %v2028
  %2197 = vst [vmem:[%s4 + $0x90] sm:$0xff] %v2029
  %2198 = vst [vmem:[%s4 + $0x98] sm:$0xff] %v2030
  %2199 = vst [vmem:[%s4 + $0xa0] sm:$0xff] %v2031
  %2200 = vst [vmem:[%s4 + $0xa8] sm:$0xff] %v2032
  %2201 = vst [vmem:[%s4 + $0xb0] sm:$0xff] %v2033
  %2202 = vst [vmem:[%s4 + $0xb8] sm:$0xff] %v2034
  %2203 = vst [vmem:[%s4 + $0xc0] sm:$0xff] %v2035
  %2204 = vst [vmem:[%s4 + $0xc8] sm:$0xff] %v2036
  %2205 = vst [vmem:[%s4 + $0xd0] sm:$0xff] %v2037
  %2206 = vst [vmem:[%s4 + $0xd8] sm:$0xff] %v2038
  %2207 = vst [vmem:[%s4 + $0xe0] sm:$0xff] %v2039
  %2208 = vst [vmem:[%s4 + $0xe8] sm:$0xff] %v2040
  %2209 = vst [vmem:[%s4 + $0xf0] sm:$0xff] %v2041
  %2210 = vst [vmem:[%s4 + $0xf8] sm:$0xff] %v2042
  %2211 = vst [vmem:[%s4 + $0x100] sm:$0xff] %v2043
  %2212 = vst [vmem:[%s4 + $0x108] sm:$0xff] %v2044
  %2213 = vst [vmem:[%s4 + $0x110] sm:$0xff] %v2045
  %2214 = vst [vmem:[%s4 + $0x118] sm:$0xff] %v2046
  %2215 = vst [vmem:[%s4 + $0x120] sm:$0xff] %v2047
  %2216 = vst [vmem:[%s4 + $0x128] sm:$0xff] %v2048
  %2217 = vst [vmem:[%s4 + $0x130] sm:$0xff] %v2049
  %2218 = vst [vmem:[%s4 + $0x138] sm:$0xff] %v2050
  %2219 = vst [vmem:[%s4 + $0x140] sm:$0xff] %v2051
  %2220 = vst [vmem:[%s4 + $0x148] sm:$0xff] %v2052
  %2221 = vst [vmem:[%s4 + $0x150] sm:$0xff] %v2053
  %2222 = vst [vmem:[%s4 + $0x158] sm:$0xff] %v2054
  %2223 = vst [vmem:[%s4 + $0x160] sm:$0xff] %v2055
  %2224 = vst [vmem:[%s4 + $0x168] sm:$0xff] %v2056
  %2225 = vst [vmem:[%s4 + $0x170] sm:$0xff] %v2057
  %2226 = vst [vmem:[%s4 + $0x178] sm:$0xff] %v2058
  %2227 = vst [vmem:[%s4 + $0x180] sm:$0xff] %v2059
  %2228 = vst [vmem:[%s4 + $0x188] sm:$0xff] %v2060
  %2229 = vst [vmem:[%s4 + $0x190] sm:$0xff] %v2061
  %2230 = vst [vmem:[%s4 + $0x198] sm:$0xff] %v2062
  %2231 = vst [vmem:[%s4 + $0x1a0] sm:$0xff] %v2063
  %2232 = vst [vmem:[%s4 + $0x1a8] sm:$0xff] %v2064
  %2233 = vst [vmem:[%s4 + $0x1b0] sm:$0xff] %v2065
  %2234 = vst [vmem:[%s4 + $0x1b8] sm:$0xff] %v2066
  %2235 = vst [vmem:[%s4 + $0x1c0] sm:$0xff] %v2067
  %2236 = vst [vmem:[%s4 + $0x1c8] sm:$0xff] %v2068
  %2237 = vst [vmem:[%s4 + $0x1d0] sm:$0xff] %v2069
  %2238 = vst [vmem:[%s4 + $0x1d8] sm:$0xff] %v2070
  %2239 = vst [vmem:[%s4 + $0x1e0] sm:$0xff] %v2071
  %2240 = vst [vmem:[%s4 + $0x1e8] sm:$0xff] %v2072
  %2241 = vst [vmem:[%s4 + $0x1f0] sm:$0xff] %v2073
  %2242 = vst [vmem:[%s4 + $0x1f8] sm:$0xff] %v2074
  %2243 = vst [vmem:[%s4 + $0x200] sm:$0xff] %v2075
  %2244 = vst [vmem:[%s4 + $0x208] sm:$0xff] %v2076
  %2245 = vst [vmem:[%s4 + $0x210] sm:$0xff] %v2077
  %2246 = vst [vmem:[%s4 + $0x218] sm:$0xff] %v2078
  %2247 = vst [vmem:[%s4 + $0x220] sm:$0xff] %v2079
  %2248 = vst [vmem:[%s4 + $0x228] sm:$0xff] %v2080
  %2249 = vst [vmem:[%s4 + $0x230] sm:$0xff] %v2081
  %2250 = vst [vmem:[%s4 + $0x238] sm:$0xff] %v2082
  %2251 = vst [vmem:[%s4 + $0x240] sm:$0xff] %v2083
  %2252 = vst [vmem:[%s4 + $0x248] sm:$0xff] %v2084
  %2253 = vst [vmem:[%s4 + $0x250] sm:$0xff] %v2085
  %2254 = vst [vmem:[%s4 + $0x258] sm:$0xff] %v2086
  %2255 = vst [vmem:[%s4 + $0x260] sm:$0xff] %v2087
  %2256 = vst [vmem:[%s4 + $0x268] sm:$0xff] %v2088
  %2257 = vst [vmem:[%s4 + $0x270] sm:$0xff] %v2089
  %2258 = vst [vmem:[%s4 + $0x278] sm:$0xff] %v2090
  %2259 = vst [vmem:[%s4 + $0x280] sm:$0x11] %v2091
  %2260 = vst [vmem:[%s4 + $0x288] sm:$0x11] %v2092
  %2261 = vst [vmem:[%s4 + $0x290] sm:$0x11] %v2093
  %2262 = vst [vmem:[%s4 + $0x298] sm:$0x11] %v2094
  // Predicated region
  $region18: #{vae_forward.10} parent=0 // pred_check
    _
  $region19: #{vae_forward.10} parent=0 // pred_check_branch
    %2264 = sbr.rel (0) target = $region21
  $region20: #{vae_forward.10} parent=0 // pred_region
    _
  $region21: #{vae_forward.10} parent=0 // pred_fallthru
    _
  // Predicated region
  $region22: #{vae_forward.10} parent=0 // pred_check
    _
  $region23: #{vae_forward.10} parent=0 // pred_check_branch
    %2266 = sbr.rel (0) target = $region25
  $region24: #{vae_forward.10} parent=0 // pred_region
    _
  $region25: #{vae_forward.10} parent=0 // pred_fallthru
    _

// kernel: vae_forward.11
$region0: #{vae_forward.11}
  #allocation0 [shape = 'u32[]', space=smem, size = 0x4, offset = 0x4, fixed_abs, tag = 'smem constant byte address 0x4 - core index']
  #allocation1 [shape = 'u32[144,128]{1,0:T(1,128)}', space=vmem, size = 0x12000, scoped, tag = 'internal scratch']
  %s0 = inlined_call_operand.vmem [shape: bf16[800,64], index: 0, kind: input, shape index: {}]
  %s1 = inlined_call_operand.vmem [shape: bf16[64,128], index: 1, kind: input, shape index: {}]
  %s2 = inlined_call_operand.vmem [shape: f32[1,128], index: 2, kind: input, shape index: {}]
  %s3 = inlined_call_operand.vmem [shape: bf16[800,128], index: 3, kind: output, shape index: {}]
  %s4 = sld [smem:[#allocation0]]
  $region22: #{vae_forward.11} parent=0
    _
  %s6 = ssub.s32 1, %s4
  %s7 = scalar_select 0, %s6, %s4
  // Predicated region
  $region2: #{vae_forward.11} parent=0 // pred_check
    _
  $region3: #{vae_forward.11} parent=0 // pred_check_branch
    %9 = sbr.rel (0) target = $region5
  $region4: #{vae_forward.11} parent=0 // pred_region
    _
  $region5: #{vae_forward.11} parent=0 // pred_fallthru
    _
  // Predicated region
  $region6: #{vae_forward.11} parent=0 // pred_check
    _
  $region7: #{vae_forward.11} parent=0 // pred_check_branch
    %11 = sbr.rel (0) target = $region9
  $region8: #{vae_forward.11} parent=0 // pred_region
    _
  $region9: #{vae_forward.11} parent=0 // pred_fallthru
    _
  // Predicated region
  $region10: #{vae_forward.11} parent=0 // pred_check
    _
  $region11: #{vae_forward.11} parent=0 // pred_check_branch
    %13 = sbr.rel (0) target = $region13
  $region12: #{vae_forward.11} parent=0 // pred_region
    _
  $region13: #{vae_forward.11} parent=0 // pred_fallthru
    _
  %v15 = vld [vmem:[%s0] sm:$0xf]
  %v16 = vld [vmem:[%s0 + $0x4] sm:$0xf]
  %v17 = vld [vmem:[%s0 + $0x8] sm:$0xf]
  %v18 = vld [vmem:[%s0 + $0xc] sm:$0xf]
  %v19 = vld [vmem:[%s0 + $0x10] sm:$0xf]
  %v20 = vld [vmem:[%s0 + $0x14] sm:$0xf]
  %v21 = vld [vmem:[%s0 + $0x18] sm:$0xf]
  %v22 = vld [vmem:[%s0 + $0x1c] sm:$0xf]
  %v23 = vld [vmem:[%s0 + $0x20] sm:$0xf]
  %v24 = vld [vmem:[%s0 + $0x24] sm:$0xf]
  %v25 = vld [vmem:[%s0 + $0x28] sm:$0xf]
  %v26 = vld [vmem:[%s0 + $0x2c] sm:$0xf]
  %v27 = vld [vmem:[%s0 + $0x30] sm:$0xf]
  %v28 = vld [vmem:[%s0 + $0x34] sm:$0xf]
  %v29 = vld [vmem:[%s0 + $0x38] sm:$0xf]
  %v30 = vld [vmem:[%s0 + $0x3c] sm:$0xf]
  %v31 = vld [vmem:[%s0 + $0x40] sm:$0xf]
  %v32 = vld [vmem:[%s0 + $0x44] sm:$0xf]
  %v33 = vld [vmem:[%s0 + $0x48] sm:$0xf]
  %v34 = vld [vmem:[%s0 + $0x4c] sm:$0xf]
  %v35 = vld [vmem:[%s0 + $0x50] sm:$0xf]
  %v36 = vld [vmem:[%s0 + $0x54] sm:$0xf]
  %v37 = vld [vmem:[%s0 + $0x58] sm:$0xf]
  %v38 = vld [vmem:[%s0 + $0x5c] sm:$0xf]
  %v39 = vld [vmem:[%s0 + $0x60] sm:$0xf]
  %v40 = vld [vmem:[%s0 + $0x64] sm:$0xf]
  %v41 = vld [vmem:[%s0 + $0x68] sm:$0xf]
  %v42 = vld [vmem:[%s0 + $0x6c] sm:$0xf]
  %v43 = vld [vmem:[%s0 + $0x70] sm:$0xf]
  %v44 = vld [vmem:[%s0 + $0x74] sm:$0xf]
  %v45 = vld [vmem:[%s0 + $0x78] sm:$0xf]
  %v46 = vld [vmem:[%s0 + $0x7c] sm:$0xf]
  %v47 = vld [vmem:[%s0 + $0x80] sm:$0xf]
  %v48 = vld [vmem:[%s0 + $0x84] sm:$0xf]
  %v49 = vld [vmem:[%s0 + $0x88] sm:$0xf]
  %v50 = vld [vmem:[%s0 + $0x8c] sm:$0xf]
  %v51 = vld [vmem:[%s0 + $0x90] sm:$0xf]
  %v52 = vld [vmem:[%s0 + $0x94] sm:$0xf]
  %v53 = vld [vmem:[%s0 + $0x98] sm:$0xf]
  %v54 = vld [vmem:[%s0 + $0x9c] sm:$0xf]
  %v55 = vld [vmem:[%s0 + $0xa0] sm:$0xf]
  %v56 = vld [vmem:[%s0 + $0xa4] sm:$0xf]
  %v57 = vld [vmem:[%s0 + $0xa8] sm:$0xf]
  %v58 = vld [vmem:[%s0 + $0xac] sm:$0xf]
  %v59 = vld [vmem:[%s0 + $0xb0] sm:$0xf]
  %v60 = vld [vmem:[%s0 + $0xb4] sm:$0xf]
  %v61 = vld [vmem:[%s0 + $0xb8] sm:$0xf]
  %v62 = vld [vmem:[%s0 + $0xbc] sm:$0xf]
  %v63 = vld [vmem:[%s0 + $0xc0] sm:$0xf]
  %v64 = vld [vmem:[%s0 + $0xc4] sm:$0xf]
  %v65 = vld [vmem:[%s0 + $0xc8] sm:$0xf]
  %v66 = vld [vmem:[%s0 + $0xcc] sm:$0xf]
  %v67 = vld [vmem:[%s0 + $0xd0] sm:$0xf]
  %v68 = vld [vmem:[%s0 + $0xd4] sm:$0xf]
  %v69 = vld [vmem:[%s0 + $0xd8] sm:$0xf]
  %v70 = vld [vmem:[%s0 + $0xdc] sm:$0xf]
  %v71 = vld [vmem:[%s0 + $0xe0] sm:$0xf]
  %v72 = vld [vmem:[%s0 + $0xe4] sm:$0xf]
  %v73 = vld [vmem:[%s0 + $0xe8] sm:$0xf]
  %v74 = vld [vmem:[%s0 + $0xec] sm:$0xf]
  %v75 = vld [vmem:[%s0 + $0xf0] sm:$0xf]
  %v76 = vld [vmem:[%s0 + $0xf4] sm:$0xf]
  %v77 = vld [vmem:[%s0 + $0xf8] sm:$0xf]
  %v78 = vld [vmem:[%s0 + $0xfc] sm:$0xf]
  %v79 = vld [vmem:[%s0 + $0x100] sm:$0xf]
  %v80 = vld [vmem:[%s0 + $0x104] sm:$0xf]
  %v81 = vld [vmem:[%s0 + $0x108] sm:$0xf]
  %v82 = vld [vmem:[%s0 + $0x10c] sm:$0xf]
  %v83 = vld [vmem:[%s0 + $0x110] sm:$0xf]
  %v84 = vld [vmem:[%s0 + $0x114] sm:$0xf]
  %v85 = vld [vmem:[%s0 + $0x118] sm:$0xf]
  %v86 = vld [vmem:[%s0 + $0x11c] sm:$0xf]
  %v87 = vld [vmem:[%s0 + $0x120] sm:$0xf]
  %v88 = vld [vmem:[%s0 + $0x124] sm:$0xf]
  %v89 = vld [vmem:[%s0 + $0x128] sm:$0xf]
  %v90 = vld [vmem:[%s0 + $0x12c] sm:$0xf]
  %v91 = vld [vmem:[%s0 + $0x130] sm:$0xf]
  %v92 = vld [vmem:[%s0 + $0x134] sm:$0xf]
  %v93 = vld [vmem:[%s0 + $0x138] sm:$0xf]
  %v94 = vld [vmem:[%s0 + $0x13c] sm:$0xf]
  %v95 = vld [vmem:[%s0 + $0x140] sm:$0xf]
  %v96 = vld [vmem:[%s0 + $0x144] sm:$0xf]
  %v97 = vld [vmem:[%s0 + $0x148] sm:$0xf]
  %v98 = vld [vmem:[%s0 + $0x14c] sm:$0xf]
  %v99 = vld [vmem:[%s0 + $0x150] sm:$0xf]
  %v100 = vld [vmem:[%s0 + $0x154] sm:$0xf]
  %v101 = vld [vmem:[%s0 + $0x158] sm:$0xf]
  %v102 = vld [vmem:[%s0 + $0x15c] sm:$0xf]
  %v103 = vld [vmem:[%s0 + $0x160] sm:$0xf]
  %v104 = vld [vmem:[%s0 + $0x164] sm:$0xf]
  %v105 = vld [vmem:[%s0 + $0x168] sm:$0xf]
  %v106 = vld [vmem:[%s0 + $0x16c] sm:$0xf]
  %v107 = vld [vmem:[%s0 + $0x170] sm:$0xf]
  %v108 = vld [vmem:[%s0 + $0x174] sm:$0xf]
  %v109 = vld [vmem:[%s0 + $0x178] sm:$0xf]
  %v110 = vld [vmem:[%s0 + $0x17c] sm:$0xf]
  %v111 = vld [vmem:[%s0 + $0x180] sm:$0xf]
  %v112 = vld [vmem:[%s0 + $0x184] sm:$0xf]
  %v113 = vld [vmem:[%s0 + $0x188] sm:$0xf]
  %v114 = vld [vmem:[%s0 + $0x18c] sm:$0xf]
  %v115 = vld [vmem:[%s1] sm:$0xf]
  %v116 = vld [vmem:[%s1 + $0x4] sm:$0xf]
  %v117 = vld [vmem:[%s1 + $0x8] sm:$0xf]
  %v118 = vld [vmem:[%s1 + $0xc] sm:$0xf]
  %v119 = vld [vmem:[%s1 + $0x10] sm:$0xf]
  %v120 = vld [vmem:[%s1 + $0x14] sm:$0xf]
  %v121 = vld [vmem:[%s1 + $0x18] sm:$0xf]
  %v122 = vld [vmem:[%s1 + $0x1c] sm:$0xf]
  %v123 = vld [vmem:[%s2] sm:$0x1]
  %v125 = vlaneseq
  %v126 = vshrl.u32 %v125, 7
  %v127 = vsub.s32 0, %v126
  %v128 = vrot.slane %v123, %v127
  %v230 = vunpack.c.l.b16 %v15
  %v231 = vunpack.c.l.b16 %v16
  %v232 = vunpack.c.l.b16 %v17
  %v233 = vunpack.c.l.b16 %v18
  %v234 = vunpack.c.l.b16 %v19
  %v235 = vunpack.c.l.b16 %v20
  %v236 = vunpack.c.l.b16 %v21
  %v237 = vunpack.c.l.b16 %v22
  %v238 = vunpack.c.l.b16 %v23
  %v239 = vunpack.c.l.b16 %v24
  %v240 = vunpack.c.l.b16 %v25
  %v241 = vunpack.c.l.b16 %v26
  %v242 = vunpack.c.l.b16 %v27
  %v243 = vunpack.c.l.b16 %v28
  %v244 = vunpack.c.l.b16 %v29
  %v245 = vunpack.c.l.b16 %v30
  %v246 = vunpack.c.l.b16 %v31
  %v247 = vunpack.c.l.b16 %v32
  %v248 = vunpack.c.l.b16 %v33
  %v249 = vunpack.c.l.b16 %v34
  %v250 = vunpack.c.l.b16 %v35
  %v251 = vunpack.c.l.b16 %v36
  %v252 = vunpack.c.l.b16 %v37
  %v253 = vunpack.c.l.b16 %v38
  %v254 = vunpack.c.l.b16 %v39
  %v255 = vunpack.c.l.b16 %v40
  %v256 = vunpack.c.l.b16 %v41
  %v257 = vunpack.c.l.b16 %v42
  %v258 = vunpack.c.l.b16 %v43
  %v259 = vunpack.c.l.b16 %v44
  %v260 = vunpack.c.l.b16 %v45
  %v261 = vunpack.c.l.b16 %v46
  %v262 = vunpack.c.l.b16 %v47
  %v263 = vunpack.c.l.b16 %v48
  %v264 = vunpack.c.l.b16 %v49
  %v265 = vunpack.c.l.b16 %v50
  %v266 = vunpack.c.l.b16 %v51
  %v267 = vunpack.c.l.b16 %v52
  %v268 = vunpack.c.l.b16 %v53
  %v269 = vunpack.c.l.b16 %v54
  %v270 = vunpack.c.l.b16 %v55
  %v271 = vunpack.c.l.b16 %v56
  %v272 = vunpack.c.l.b16 %v57
  %v273 = vunpack.c.l.b16 %v58
  %v274 = vunpack.c.l.b16 %v59
  %v275 = vunpack.c.l.b16 %v60
  %v276 = vunpack.c.l.b16 %v61
  %v277 = vunpack.c.l.b16 %v62
  %v278 = vunpack.c.l.b16 %v63
  %v279 = vunpack.c.l.b16 %v64
  %v280 = vunpack.c.l.b16 %v65
  %v281 = vunpack.c.l.b16 %v66
  %v282 = vunpack.c.l.b16 %v67
  %v283 = vunpack.c.l.b16 %v68
  %v284 = vunpack.c.l.b16 %v69
  %v285 = vunpack.c.l.b16 %v70
  %v286 = vunpack.c.l.b16 %v71
  %v287 = vunpack.c.l.b16 %v72
  %v288 = vunpack.c.l.b16 %v73
  %v289 = vunpack.c.l.b16 %v74
  %v290 = vunpack.c.l.b16 %v75
  %v291 = vunpack.c.l.b16 %v76
  %v292 = vunpack.c.l.b16 %v77
  %v293 = vunpack.c.l.b16 %v78
  %v294 = vunpack.c.l.b16 %v79
  %v295 = vunpack.c.l.b16 %v80
  %v296 = vunpack.c.l.b16 %v81
  %v297 = vunpack.c.l.b16 %v82
  %v298 = vunpack.c.l.b16 %v83
  %v299 = vunpack.c.l.b16 %v84
  %v300 = vunpack.c.l.b16 %v85
  %v301 = vunpack.c.l.b16 %v86
  %v302 = vunpack.c.l.b16 %v87
  %v303 = vunpack.c.l.b16 %v88
  %v304 = vunpack.c.l.b16 %v89
  %v305 = vunpack.c.l.b16 %v90
  %v306 = vunpack.c.l.b16 %v91
  %v307 = vunpack.c.l.b16 %v92
  %v308 = vunpack.c.l.b16 %v93
  %v309 = vunpack.c.l.b16 %v94
  %v310 = vunpack.c.l.b16 %v95
  %v311 = vunpack.c.l.b16 %v96
  %v312 = vunpack.c.l.b16 %v97
  %v313 = vunpack.c.l.b16 %v98
  %v314 = vunpack.c.l.b16 %v99
  %v315 = vunpack.c.l.b16 %v100
  %v316 = vunpack.c.l.b16 %v101
  %v317 = vunpack.c.l.b16 %v102
  %v318 = vunpack.c.l.b16 %v103
  %v319 = vunpack.c.l.b16 %v104
  %v320 = vunpack.c.l.b16 %v105
  %v321 = vunpack.c.l.b16 %v106
  %v322 = vunpack.c.l.b16 %v107
  %v323 = vunpack.c.l.b16 %v108
  %v324 = vunpack.c.l.b16 %v109
  %v325 = vunpack.c.l.b16 %v110
  %v326 = vunpack.c.l.b16 %v111
  %v327 = vunpack.c.l.b16 %v112
  %v328 = vunpack.c.l.b16 %v113
  %v329 = vunpack.c.l.b16 %v114
  %v330 = vpack.c.b16 %v231, %v230
  %v331 = vpack.c.b16 %v233, %v232
  %v332 = vpack.c.b16 %v235, %v234
  %v333 = vpack.c.b16 %v237, %v236
  %v334 = vpack.c.b16 %v239, %v238
  %v335 = vpack.c.b16 %v241, %v240
  %v336 = vpack.c.b16 %v243, %v242
  %v337 = vpack.c.b16 %v245, %v244
  %v338 = vpack.c.b16 %v247, %v246
  %v339 = vpack.c.b16 %v249, %v248
  %v340 = vpack.c.b16 %v251, %v250
  %v341 = vpack.c.b16 %v253, %v252
  %v342 = vpack.c.b16 %v255, %v254
  %v343 = vpack.c.b16 %v257, %v256
  %v344 = vpack.c.b16 %v259, %v258
  %v345 = vpack.c.b16 %v261, %v260
  %v346 = vpack.c.b16 %v263, %v262
  %v347 = vpack.c.b16 %v265, %v264
  %v348 = vpack.c.b16 %v267, %v266
  %v349 = vpack.c.b16 %v269, %v268
  %v350 = vpack.c.b16 %v271, %v270
  %v351 = vpack.c.b16 %v273, %v272
  %v352 = vpack.c.b16 %v275, %v274
  %v353 = vpack.c.b16 %v277, %v276
  %v354 = vpack.c.b16 %v279, %v278
  %v355 = vpack.c.b16 %v281, %v280
  %v356 = vpack.c.b16 %v283, %v282
  %v357 = vpack.c.b16 %v285, %v284
  %v358 = vpack.c.b16 %v287, %v286
  %v359 = vpack.c.b16 %v289, %v288
  %v360 = vpack.c.b16 %v291, %v290
  %v361 = vpack.c.b16 %v293, %v292
  %v362 = vpack.c.b16 %v295, %v294
  %v363 = vpack.c.b16 %v297, %v296
  %v364 = vpack.c.b16 %v299, %v298
  %v365 = vpack.c.b16 %v301, %v300
  %v366 = vpack.c.b16 %v303, %v302
  %v367 = vpack.c.b16 %v305, %v304
  %v368 = vpack.c.b16 %v307, %v306
  %v369 = vpack.c.b16 %v309, %v308
  %v370 = vpack.c.b16 %v311, %v310
  %v371 = vpack.c.b16 %v313, %v312
  %v372 = vpack.c.b16 %v315, %v314
  %v373 = vpack.c.b16 %v317, %v316
  %v374 = vpack.c.b16 %v319, %v318
  %v375 = vpack.c.b16 %v321, %v320
  %v376 = vpack.c.b16 %v323, %v322
  %v377 = vpack.c.b16 %v325, %v324
  %v378 = vpack.c.b16 %v327, %v326
  %v379 = vpack.c.b16 %v329, %v328
  %v388 = vunpack.c.l.b16 %v115
  %v389 = vunpack.c.l.b16 %v116
  %v390 = vunpack.c.l.b16 %v117
  %v391 = vunpack.c.l.b16 %v118
  %v392 = vunpack.c.l.b16 %v119
  %v393 = vunpack.c.l.b16 %v120
  %v394 = vunpack.c.l.b16 %v121
  %v395 = vunpack.c.l.b16 %v122
  %v396 = vpack.c.b16 %v389, %v388
  %v397 = vpack.c.b16 %v391, %v390
  %v398 = vpack.c.b16 %v393, %v392
  %v399 = vpack.c.b16 %v395, %v394
  %vm404 = vcmask 523264
  %v406 = vsel %vm404, %v330, 0
  %v409 = vsel %vm404, %v331, 0
  %v412 = vsel %vm404, %v332, 0
  %v415 = vsel %vm404, %v333, 0
  %v418 = vsel %vm404, %v334, 0
  %v421 = vsel %vm404, %v335, 0
  %v424 = vsel %vm404, %v336, 0
  %v427 = vsel %vm404, %v337, 0
  %v430 = vsel %vm404, %v338, 0
  %v433 = vsel %vm404, %v339, 0
  %v436 = vsel %vm404, %v340, 0
  %v439 = vsel %vm404, %v341, 0
  %v442 = vsel %vm404, %v342, 0
  %v445 = vsel %vm404, %v343, 0
  %v448 = vsel %vm404, %v344, 0
  %v451 = vsel %vm404, %v345, 0
  %v454 = vsel %vm404, %v346, 0
  %v457 = vsel %vm404, %v347, 0
  %v460 = vsel %vm404, %v348, 0
  %v463 = vsel %vm404, %v349, 0
  %v466 = vsel %vm404, %v350, 0
  %v469 = vsel %vm404, %v351, 0
  %v472 = vsel %vm404, %v352, 0
  %v475 = vsel %vm404, %v353, 0
  %v478 = vsel %vm404, %v354, 0
  %v481 = vsel %vm404, %v355, 0
  %v484 = vsel %vm404, %v356, 0
  %v487 = vsel %vm404, %v357, 0
  %v490 = vsel %vm404, %v358, 0
  %v493 = vsel %vm404, %v359, 0
  %v496 = vsel %vm404, %v360, 0
  %v499 = vsel %vm404, %v361, 0
  %v502 = vsel %vm404, %v362, 0
  %v505 = vsel %vm404, %v363, 0
  %v508 = vsel %vm404, %v364, 0
  %v511 = vsel %vm404, %v365, 0
  %v514 = vsel %vm404, %v366, 0
  %v517 = vsel %vm404, %v367, 0
  %v520 = vsel %vm404, %v368, 0
  %v523 = vsel %vm404, %v369, 0
  %v526 = vsel %vm404, %v370, 0
  %v529 = vsel %vm404, %v371, 0
  %v532 = vsel %vm404, %v372, 0
  %v535 = vsel %vm404, %v373, 0
  %v538 = vsel %vm404, %v374, 0
  %v541 = vsel %vm404, %v375, 0
  %v544 = vsel %vm404, %v376, 0
  %v547 = vsel %vm404, %v377, 0
  %v550 = vsel %vm404, %v378, 0
  %v553 = vsel %vm404, %v379, 0
  %555 = vmatprep.subr.bf16.mxu0 0
  %556 = vmatpush1.bf16.msra.mxu0 0
  %557 = vmatprep.subr.bf16.mxu0 0
  %558 = vmatpush1.bf16.msra.mxu0 0
  %559 = vmatprep.subr.bf16.mxu0 0
  %560 = vmatpush1.bf16.msra.mxu0 0
  %561 = vmatprep.subr.bf16.mxu0 0
  %562 = vmatpush1.bf16.msra.mxu0 0
  %563 = vmatprep.subr.bf16.mxu0 0
  %564 = vmatpush1.bf16.msra.mxu0 %v399
  %565 = vmatprep.subr.bf16.mxu0 0
  %566 = vmatpush1.bf16.msra.mxu0 %v398
  %567 = vmatprep.subr.bf16.mxu0 0
  %568 = vmatpush1.bf16.msra.mxu0 %v397
  %569 = vmatprep.subr.bf16.mxu0 0
  %570 = vmatpush1.bf16.msra.mxu0 %v396
  %571 = vmatprep.subr.bf16.mxu0 0
  %572 = vmatpush2.bf16.msra.mxu0 0
  %573 = vmatprep.subr.bf16.mxu0 0
  %574 = vmatpush2.bf16.msra.mxu0 0
  %575 = vmatprep.subr.bf16.mxu0 0
  %576 = vmatpush2.bf16.msra.mxu0 0
  %577 = vmatprep.subr.bf16.mxu0 0
  %578 = vmatpush2.bf16.msra.mxu0 0
  %579 = vmatprep.subr.bf16.mxu0 0
  %580 = vmatpush2.bf16.msra.mxu0 0
  %581 = vmatprep.subr.bf16.mxu0 0
  %582 = vmatpush2.bf16.msra.mxu0 0
  %583 = vmatprep.subr.bf16.mxu0 0
  %584 = vmatpush2.bf16.msra.mxu0 0
  %585 = vmatprep.subr.bf16.mxu0 0
  %586 = vmatpush2.bf16.msra.mxu0 0
  %587 = vmatprep.mubr.bf16.mxu0 0
  %588 = vmatmul.mubr.bf16.gmra.mxu0 %v406
  %v589 = vpop.f32.mrf.mxu0
  %v590 = vadd.f32 %v128, %v589
  %v591 = vpop.f32.mrf.mxu0
  %v592 = vpop.f32.mrf.mxu0
  %v593 = vadd.f32 %v128, %v592
  %v594 = vpop.f32.mrf.mxu0
  %595 = vmatprep.mubr.bf16.mxu0 0
  %596 = vmatmul.mubr.bf16.gmra.mxu0 %v409
  %v597 = vpop.f32.mrf.mxu0
  %v598 = vadd.f32 %v128, %v597
  %v599 = vpop.f32.mrf.mxu0
  %v600 = vpop.f32.mrf.mxu0
  %v601 = vadd.f32 %v128, %v600
  %v602 = vpop.f32.mrf.mxu0
  %603 = vmatprep.mubr.bf16.mxu0 0
  %604 = vmatmul.mubr.bf16.gmra.mxu0 %v412
  %v605 = vpop.f32.mrf.mxu0
  %v606 = vadd.f32 %v128, %v605
  %v607 = vpop.f32.mrf.mxu0
  %v608 = vpop.f32.mrf.mxu0
  %v609 = vadd.f32 %v128, %v608
  %v610 = vpop.f32.mrf.mxu0
  %611 = vmatprep.mubr.bf16.mxu0 0
  %612 = vmatmul.mubr.bf16.gmra.mxu0 %v415
  %v613 = vpop.f32.mrf.mxu0
  %v614 = vadd.f32 %v128, %v613
  %v615 = vpop.f32.mrf.mxu0
  %v616 = vpop.f32.mrf.mxu0
  %v617 = vadd.f32 %v128, %v616
  %v618 = vpop.f32.mrf.mxu0
  %619 = vmatprep.mubr.bf16.mxu0 0
  %620 = vmatmul.mubr.bf16.gmra.mxu0 %v418
  %v621 = vpop.f32.mrf.mxu0
  %v622 = vadd.f32 %v128, %v621
  %v623 = vpop.f32.mrf.mxu0
  %v624 = vpop.f32.mrf.mxu0
  %v625 = vadd.f32 %v128, %v624
  %v626 = vpop.f32.mrf.mxu0
  %627 = vmatprep.mubr.bf16.mxu0 0
  %628 = vmatmul.mubr.bf16.gmra.mxu0 %v421
  %v629 = vpop.f32.mrf.mxu0
  %v630 = vadd.f32 %v128, %v629
  %v631 = vpop.f32.mrf.mxu0
  %v632 = vpop.f32.mrf.mxu0
  %v633 = vadd.f32 %v128, %v632
  %v634 = vpop.f32.mrf.mxu0
  %635 = vmatprep.mubr.bf16.mxu0 0
  %636 = vmatmul.mubr.bf16.gmra.mxu0 %v424
  %v637 = vpop.f32.mrf.mxu0
  %v638 = vadd.f32 %v128, %v637
  %v639 = vpop.f32.mrf.mxu0
  %v640 = vpop.f32.mrf.mxu0
  %v641 = vadd.f32 %v128, %v640
  %v642 = vpop.f32.mrf.mxu0
  %643 = vmatprep.mubr.bf16.mxu0 0
  %644 = vmatmul.mubr.bf16.gmra.mxu0 %v427
  %v645 = vpop.f32.mrf.mxu0
  %v646 = vadd.f32 %v128, %v645
  %v647 = vpop.f32.mrf.mxu0
  %v648 = vpop.f32.mrf.mxu0
  %v649 = vadd.f32 %v128, %v648
  %v650 = vpop.f32.mrf.mxu0
  %651 = vmatprep.mubr.bf16.mxu0 0
  %652 = vmatmul.mubr.bf16.gmra.mxu0 %v430
  %v653 = vpop.f32.mrf.mxu0
  %v654 = vadd.f32 %v128, %v653
  %v655 = vpop.f32.mrf.mxu0
  %v656 = vpop.f32.mrf.mxu0
  %v657 = vadd.f32 %v128, %v656
  %v658 = vpop.f32.mrf.mxu0
  %659 = vmatprep.mubr.bf16.mxu0 0
  %660 = vmatmul.mubr.bf16.gmra.mxu0 %v433
  %v661 = vpop.f32.mrf.mxu0
  %v662 = vadd.f32 %v128, %v661
  %v663 = vpop.f32.mrf.mxu0
  %v664 = vpop.f32.mrf.mxu0
  %v665 = vadd.f32 %v128, %v664
  %v666 = vpop.f32.mrf.mxu0
  %667 = vmatprep.mubr.bf16.mxu0 0
  %668 = vmatmul.mubr.bf16.gmra.mxu0 %v436
  %v669 = vpop.f32.mrf.mxu0
  %v670 = vadd.f32 %v128, %v669
  %v671 = vpop.f32.mrf.mxu0
  %v672 = vpop.f32.mrf.mxu0
  %v673 = vadd.f32 %v128, %v672
  %v674 = vpop.f32.mrf.mxu0
  %675 = vmatprep.mubr.bf16.mxu0 0
  %676 = vmatmul.mubr.bf16.gmra.mxu0 %v439
  %v677 = vpop.f32.mrf.mxu0
  %v678 = vadd.f32 %v128, %v677
  %v679 = vpop.f32.mrf.mxu0
  %v680 = vpop.f32.mrf.mxu0
  %v681 = vadd.f32 %v128, %v680
  %v682 = vpop.f32.mrf.mxu0
  %683 = vmatprep.mubr.bf16.mxu0 0
  %684 = vmatmul.mubr.bf16.gmra.mxu0 %v442
  %v685 = vpop.f32.mrf.mxu0
  %v686 = vadd.f32 %v128, %v685
  %v687 = vpop.f32.mrf.mxu0
  %v688 = vpop.f32.mrf.mxu0
  %v689 = vadd.f32 %v128, %v688
  %v690 = vpop.f32.mrf.mxu0
  %691 = vmatprep.mubr.bf16.mxu0 0
  %692 = vmatmul.mubr.bf16.gmra.mxu0 %v445
  %v693 = vpop.f32.mrf.mxu0
  %v694 = vadd.f32 %v128, %v693
  %v695 = vpop.f32.mrf.mxu0
  %v696 = vpop.f32.mrf.mxu0
  %v697 = vadd.f32 %v128, %v696
  %v698 = vpop.f32.mrf.mxu0
  %699 = vmatprep.mubr.bf16.mxu0 0
  %700 = vmatmul.mubr.bf16.gmra.mxu0 %v448
  %v701 = vpop.f32.mrf.mxu0
  %v702 = vadd.f32 %v128, %v701
  %v703 = vpop.f32.mrf.mxu0
  %v704 = vpop.f32.mrf.mxu0
  %v705 = vadd.f32 %v128, %v704
  %v706 = vpop.f32.mrf.mxu0
  %707 = vmatprep.mubr.bf16.mxu0 0
  %708 = vmatmul.mubr.bf16.gmra.mxu0 %v451
  %v709 = vpop.f32.mrf.mxu0
  %v710 = vadd.f32 %v128, %v709
  %v711 = vpop.f32.mrf.mxu0
  %v712 = vpop.f32.mrf.mxu0
  %v713 = vadd.f32 %v128, %v712
  %v714 = vpop.f32.mrf.mxu0
  %715 = vmatprep.mubr.bf16.mxu0 0
  %716 = vmatmul.mubr.bf16.gmra.mxu0 %v454
  %v717 = vpop.f32.mrf.mxu0
  %v718 = vadd.f32 %v128, %v717
  %v719 = vpop.f32.mrf.mxu0
  %v720 = vpop.f32.mrf.mxu0
  %v721 = vadd.f32 %v128, %v720
  %v722 = vpop.f32.mrf.mxu0
  %723 = vmatprep.mubr.bf16.mxu0 0
  %724 = vmatmul.mubr.bf16.gmra.mxu0 %v457
  %v725 = vpop.f32.mrf.mxu0
  %v726 = vadd.f32 %v128, %v725
  %v727 = vpop.f32.mrf.mxu0
  %v728 = vpop.f32.mrf.mxu0
  %v729 = vadd.f32 %v128, %v728
  %v730 = vpop.f32.mrf.mxu0
  %731 = vmatprep.mubr.bf16.mxu0 0
  %732 = vmatmul.mubr.bf16.gmra.mxu0 %v460
  %v733 = vpop.f32.mrf.mxu0
  %v734 = vadd.f32 %v128, %v733
  %v735 = vpop.f32.mrf.mxu0
  %v736 = vpop.f32.mrf.mxu0
  %v737 = vadd.f32 %v128, %v736
  %v738 = vpop.f32.mrf.mxu0
  %739 = vmatprep.mubr.bf16.mxu0 0
  %740 = vmatmul.mubr.bf16.gmra.mxu0 %v463
  %v741 = vpop.f32.mrf.mxu0
  %v742 = vadd.f32 %v128, %v741
  %v743 = vpop.f32.mrf.mxu0
  %v744 = vpop.f32.mrf.mxu0
  %v745 = vadd.f32 %v128, %v744
  %v746 = vpop.f32.mrf.mxu0
  %747 = vmatprep.mubr.bf16.mxu0 0
  %748 = vmatmul.mubr.bf16.gmra.mxu0 %v466
  %v749 = vpop.f32.mrf.mxu0
  %v750 = vadd.f32 %v128, %v749
  %v751 = vpop.f32.mrf.mxu0
  %v752 = vpop.f32.mrf.mxu0
  %v753 = vadd.f32 %v128, %v752
  %v754 = vpop.f32.mrf.mxu0
  %755 = vmatprep.mubr.bf16.mxu0 0
  %756 = vmatmul.mubr.bf16.gmra.mxu0 %v469
  %v757 = vpop.f32.mrf.mxu0
  %v758 = vadd.f32 %v128, %v757
  %v759 = vpop.f32.mrf.mxu0
  %v760 = vpop.f32.mrf.mxu0
  %v761 = vadd.f32 %v128, %v760
  %v762 = vpop.f32.mrf.mxu0
  %763 = vmatprep.mubr.bf16.mxu0 0
  %764 = vmatmul.mubr.bf16.gmra.mxu0 %v472
  %v765 = vpop.f32.mrf.mxu0
  %v766 = vadd.f32 %v128, %v765
  %v767 = vpop.f32.mrf.mxu0
  %v768 = vpop.f32.mrf.mxu0
  %v769 = vadd.f32 %v128, %v768
  %v770 = vpop.f32.mrf.mxu0
  %771 = vmatprep.mubr.bf16.mxu0 0
  %772 = vmatmul.mubr.bf16.gmra.mxu0 %v475
  %v773 = vpop.f32.mrf.mxu0
  %v774 = vadd.f32 %v128, %v773
  %v775 = vpop.f32.mrf.mxu0
  %v776 = vpop.f32.mrf.mxu0
  %v777 = vadd.f32 %v128, %v776
  %v778 = vpop.f32.mrf.mxu0
  %779 = vmatprep.mubr.bf16.mxu0 0
  %780 = vmatmul.mubr.bf16.gmra.mxu0 %v478
  %v781 = vpop.f32.mrf.mxu0
  %v782 = vadd.f32 %v128, %v781
  %v783 = vpop.f32.mrf.mxu0
  %v784 = vpop.f32.mrf.mxu0
  %v785 = vadd.f32 %v128, %v784
  %v786 = vpop.f32.mrf.mxu0
  %787 = vmatprep.mubr.bf16.mxu0 0
  %788 = vmatmul.mubr.bf16.gmra.mxu0 %v481
  %v789 = vpop.f32.mrf.mxu0
  %v790 = vadd.f32 %v128, %v789
  %v791 = vpop.f32.mrf.mxu0
  %v792 = vpop.f32.mrf.mxu0
  %v793 = vadd.f32 %v128, %v792
  %v794 = vpop.f32.mrf.mxu0
  %795 = vmatprep.mubr.bf16.mxu0 0
  %796 = vmatmul.mubr.bf16.gmra.mxu0 %v484
  %v797 = vpop.f32.mrf.mxu0
  %v798 = vadd.f32 %v128, %v797
  %v799 = vpop.f32.mrf.mxu0
  %v800 = vpop.f32.mrf.mxu0
  %v801 = vadd.f32 %v128, %v800
  %v802 = vpop.f32.mrf.mxu0
  %803 = vmatprep.mubr.bf16.mxu0 0
  %804 = vmatmul.mubr.bf16.gmra.mxu0 %v487
  %v805 = vpop.f32.mrf.mxu0
  %v806 = vadd.f32 %v128, %v805
  %v807 = vpop.f32.mrf.mxu0
  %v808 = vpop.f32.mrf.mxu0
  %v809 = vadd.f32 %v128, %v808
  %v810 = vpop.f32.mrf.mxu0
  %811 = vmatprep.mubr.bf16.mxu0 0
  %812 = vmatmul.mubr.bf16.gmra.mxu0 %v490
  %v813 = vpop.f32.mrf.mxu0
  %v814 = vadd.f32 %v128, %v813
  %v815 = vpop.f32.mrf.mxu0
  %v816 = vpop.f32.mrf.mxu0
  %v817 = vadd.f32 %v128, %v816
  %v818 = vpop.f32.mrf.mxu0
  %819 = vmatprep.mubr.bf16.mxu0 0
  %820 = vmatmul.mubr.bf16.gmra.mxu0 %v493
  %v821 = vpop.f32.mrf.mxu0
  %v822 = vadd.f32 %v128, %v821
  %v823 = vpop.f32.mrf.mxu0
  %v824 = vpop.f32.mrf.mxu0
  %v825 = vadd.f32 %v128, %v824
  %v826 = vpop.f32.mrf.mxu0
  %827 = vmatprep.mubr.bf16.mxu0 0
  %828 = vmatmul.mubr.bf16.gmra.mxu0 %v496
  %v829 = vpop.f32.mrf.mxu0
  %v830 = vadd.f32 %v128, %v829
  %v831 = vpop.f32.mrf.mxu0
  %v832 = vpop.f32.mrf.mxu0
  %v833 = vadd.f32 %v128, %v832
  %v834 = vpop.f32.mrf.mxu0
  %835 = vmatprep.mubr.bf16.mxu0 0
  %836 = vmatmul.mubr.bf16.gmra.mxu0 %v499
  %v837 = vpop.f32.mrf.mxu0
  %v838 = vadd.f32 %v128, %v837
  %v839 = vpop.f32.mrf.mxu0
  %v840 = vpop.f32.mrf.mxu0
  %v841 = vadd.f32 %v128, %v840
  %v842 = vpop.f32.mrf.mxu0
  %843 = vmatprep.mubr.bf16.mxu0 0
  %844 = vmatmul.mubr.bf16.gmra.mxu0 %v502
  %v845 = vpop.f32.mrf.mxu0
  %v846 = vadd.f32 %v128, %v845
  %v847 = vpop.f32.mrf.mxu0
  %v848 = vpop.f32.mrf.mxu0
  %v849 = vadd.f32 %v128, %v848
  %v850 = vpop.f32.mrf.mxu0
  %851 = vmatprep.mubr.bf16.mxu0 0
  %852 = vmatmul.mubr.bf16.gmra.mxu0 %v505
  %v853 = vpop.f32.mrf.mxu0
  %v854 = vadd.f32 %v128, %v853
  %v855 = vpop.f32.mrf.mxu0
  %v856 = vpop.f32.mrf.mxu0
  %v857 = vadd.f32 %v128, %v856
  %v858 = vpop.f32.mrf.mxu0
  %859 = vmatprep.mubr.bf16.mxu0 0
  %860 = vmatmul.mubr.bf16.gmra.mxu0 %v508
  %v861 = vpop.f32.mrf.mxu0
  %v862 = vadd.f32 %v128, %v861
  %v863 = vpop.f32.mrf.mxu0
  %v864 = vpop.f32.mrf.mxu0
  %v865 = vadd.f32 %v128, %v864
  %v866 = vpop.f32.mrf.mxu0
  %867 = vmatprep.mubr.bf16.mxu0 0
  %868 = vmatmul.mubr.bf16.gmra.mxu0 %v511
  %v869 = vpop.f32.mrf.mxu0
  %v870 = vadd.f32 %v128, %v869
  %v871 = vpop.f32.mrf.mxu0
  %v872 = vpop.f32.mrf.mxu0
  %v873 = vadd.f32 %v128, %v872
  %v874 = vpop.f32.mrf.mxu0
  %875 = vmatprep.mubr.bf16.mxu0 0
  %876 = vmatmul.mubr.bf16.gmra.mxu0 %v514
  %v877 = vpop.f32.mrf.mxu0
  %v878 = vadd.f32 %v128, %v877
  %v879 = vpop.f32.mrf.mxu0
  %v880 = vpop.f32.mrf.mxu0
  %v881 = vadd.f32 %v128, %v880
  %v882 = vpop.f32.mrf.mxu0
  %883 = vmatprep.mubr.bf16.mxu0 0
  %884 = vmatmul.mubr.bf16.gmra.mxu0 %v517
  %v885 = vpop.f32.mrf.mxu0
  %v886 = vadd.f32 %v128, %v885
  %v887 = vpop.f32.mrf.mxu0
  %v888 = vpop.f32.mrf.mxu0
  %v889 = vadd.f32 %v128, %v888
  %v890 = vpop.f32.mrf.mxu0
  %891 = vmatprep.mubr.bf16.mxu0 0
  %892 = vmatmul.mubr.bf16.gmra.mxu0 %v520
  %v893 = vpop.f32.mrf.mxu0
  %v894 = vadd.f32 %v128, %v893
  %v895 = vpop.f32.mrf.mxu0
  %v896 = vpop.f32.mrf.mxu0
  %v897 = vadd.f32 %v128, %v896
  %v898 = vpop.f32.mrf.mxu0
  %899 = vmatprep.mubr.bf16.mxu0 0
  %900 = vmatmul.mubr.bf16.gmra.mxu0 %v523
  %v901 = vpop.f32.mrf.mxu0
  %v902 = vadd.f32 %v128, %v901
  %v903 = vpop.f32.mrf.mxu0
  %v904 = vpop.f32.mrf.mxu0
  %v905 = vadd.f32 %v128, %v904
  %v906 = vpop.f32.mrf.mxu0
  %907 = vmatprep.mubr.bf16.mxu0 0
  %908 = vmatmul.mubr.bf16.gmra.mxu0 %v526
  %v909 = vpop.f32.mrf.mxu0
  %v910 = vadd.f32 %v128, %v909
  %v911 = vpop.f32.mrf.mxu0
  %v912 = vpop.f32.mrf.mxu0
  %v913 = vadd.f32 %v128, %v912
  %v914 = vpop.f32.mrf.mxu0
  %915 = vmatprep.mubr.bf16.mxu0 0
  %916 = vmatmul.mubr.bf16.gmra.mxu0 %v529
  %v917 = vpop.f32.mrf.mxu0
  %v918 = vadd.f32 %v128, %v917
  %v919 = vpop.f32.mrf.mxu0
  %v920 = vpop.f32.mrf.mxu0
  %v921 = vadd.f32 %v128, %v920
  %v922 = vpop.f32.mrf.mxu0
  %923 = vmatprep.mubr.bf16.mxu0 0
  %924 = vmatmul.mubr.bf16.gmra.mxu0 %v532
  %v925 = vpop.f32.mrf.mxu0
  %v926 = vadd.f32 %v128, %v925
  %v927 = vpop.f32.mrf.mxu0
  %v928 = vpop.f32.mrf.mxu0
  %v929 = vadd.f32 %v128, %v928
  %v930 = vpop.f32.mrf.mxu0
  %931 = vmatprep.mubr.bf16.mxu0 0
  %932 = vmatmul.mubr.bf16.gmra.mxu0 %v535
  %v933 = vpop.f32.mrf.mxu0
  %v934 = vadd.f32 %v128, %v933
  %v935 = vpop.f32.mrf.mxu0
  %v936 = vpop.f32.mrf.mxu0
  %v937 = vadd.f32 %v128, %v936
  %v938 = vpop.f32.mrf.mxu0
  %939 = vmatprep.mubr.bf16.mxu0 0
  %940 = vmatmul.mubr.bf16.gmra.mxu0 %v538
  %v941 = vpop.f32.mrf.mxu0
  %v942 = vadd.f32 %v128, %v941
  %v943 = vpop.f32.mrf.mxu0
  %v944 = vpop.f32.mrf.mxu0
  %v945 = vadd.f32 %v128, %v944
  %v946 = vpop.f32.mrf.mxu0
  %947 = vmatprep.mubr.bf16.mxu0 0
  %948 = vmatmul.mubr.bf16.gmra.mxu0 %v541
  %v949 = vpop.f32.mrf.mxu0
  %v950 = vadd.f32 %v128, %v949
  %v951 = vpop.f32.mrf.mxu0
  %v952 = vpop.f32.mrf.mxu0
  %v953 = vadd.f32 %v128, %v952
  %v954 = vpop.f32.mrf.mxu0
  %955 = vmatprep.mubr.bf16.mxu0 0
  %956 = vmatmul.mubr.bf16.gmra.mxu0 %v544
  %v957 = vpop.f32.mrf.mxu0
  %v958 = vadd.f32 %v128, %v957
  %v959 = vpop.f32.mrf.mxu0
  %v960 = vpop.f32.mrf.mxu0
  %v961 = vadd.f32 %v128, %v960
  %v962 = vpop.f32.mrf.mxu0
  %963 = vmatprep.mubr.bf16.mxu0 0
  %964 = vmatmul.mubr.bf16.gmra.mxu0 %v547
  %v965 = vpop.f32.mrf.mxu0
  %v966 = vadd.f32 %v128, %v965
  %v967 = vpop.f32.mrf.mxu0
  %v968 = vpop.f32.mrf.mxu0
  %v969 = vadd.f32 %v128, %v968
  %v970 = vpop.f32.mrf.mxu0
  %971 = vmatprep.mubr.bf16.mxu0 0
  %972 = vmatmul.mubr.bf16.gmra.mxu0 %v550
  %v973 = vpop.f32.mrf.mxu0
  %v974 = vadd.f32 %v128, %v973
  %v975 = vpop.f32.mrf.mxu0
  %v976 = vpop.f32.mrf.mxu0
  %v977 = vadd.f32 %v128, %v976
  %v978 = vpop.f32.mrf.mxu0
  %979 = vmatprep.mubr.bf16.mxu0 0
  %980 = vmatmul.mubr.bf16.gmra.mxu0 %v553
  %v981 = vpop.f32.mrf.mxu0
  %v982 = vadd.f32 %v128, %v981
  %v983 = vpop.f32.mrf.mxu0
  %v984 = vpop.f32.mrf.mxu0
  %v985 = vadd.f32 %v128, %v984
  %v986 = vpop.f32.mrf.mxu0
  %987 = vdwg.mxu0
  %v988 = vpack.c.bf16 %v593, %v590
  %v989 = vpack.c.bf16 %v601, %v598
  %v990 = vpack.c.bf16 %v609, %v606
  %v991 = vpack.c.bf16 %v617, %v614
  %v992 = vpack.c.bf16 %v625, %v622
  %v993 = vpack.c.bf16 %v633, %v630
  %v994 = vpack.c.bf16 %v641, %v638
  %v995 = vpack.c.bf16 %v649, %v646
  %v996 = vpack.c.bf16 %v657, %v654
  %v997 = vpack.c.bf16 %v665, %v662
  %v998 = vpack.c.bf16 %v673, %v670
  %v999 = vpack.c.bf16 %v681, %v678
  %v1000 = vpack.c.bf16 %v689, %v686
  %v1001 = vpack.c.bf16 %v697, %v694
  %v1002 = vpack.c.bf16 %v705, %v702
  %v1003 = vpack.c.bf16 %v713, %v710
  %v1004 = vpack.c.bf16 %v721, %v718
  %v1005 = vpack.c.bf16 %v729, %v726
  %v1006 = vpack.c.bf16 %v737, %v734
  %v1007 = vpack.c.bf16 %v745, %v742
  %v1008 = vpack.c.bf16 %v753, %v750
  %v1009 = vpack.c.bf16 %v761, %v758
  %v1010 = vpack.c.bf16 %v769, %v766
  %v1011 = vpack.c.bf16 %v777, %v774
  %v1012 = vpack.c.bf16 %v785, %v782
  %v1013 = vpack.c.bf16 %v793, %v790
  %v1014 = vpack.c.bf16 %v801, %v798
  %v1015 = vpack.c.bf16 %v809, %v806
  %v1016 = vpack.c.bf16 %v817, %v814
  %v1017 = vpack.c.bf16 %v825, %v822
  %v1018 = vpack.c.bf16 %v833, %v830
  %v1019 = vpack.c.bf16 %v841, %v838
  %v1020 = vpack.c.bf16 %v849, %v846
  %v1021 = vpack.c.bf16 %v857, %v854
  %v1022 = vpack.c.bf16 %v865, %v862
  %v1023 = vpack.c.bf16 %v873, %v870
  %v1024 = vpack.c.bf16 %v881, %v878
  %v1025 = vpack.c.bf16 %v889, %v886
  %v1026 = vpack.c.bf16 %v897, %v894
  %v1027 = vpack.c.bf16 %v905, %v902
  %v1028 = vpack.c.bf16 %v913, %v910
  %v1029 = vpack.c.bf16 %v921, %v918
  %v1030 = vpack.c.bf16 %v929, %v926
  %v1031 = vpack.c.bf16 %v937, %v934
  %v1032 = vpack.c.bf16 %v945, %v942
  %v1033 = vpack.c.bf16 %v953, %v950
  %v1034 = vpack.c.bf16 %v961, %v958
  %v1035 = vpack.c.bf16 %v969, %v966
  %v1036 = vpack.c.bf16 %v977, %v974
  %v1037 = vpack.c.bf16 %v985, %v982
  %v1088 = vunpack.c.l.b16 %v988
  %v1089 = vunpack.c.h.b16 %v988
  %v1090 = vunpack.c.l.b16 %v989
  %v1091 = vunpack.c.h.b16 %v989
  %v1092 = vunpack.c.l.b16 %v990
  %v1093 = vunpack.c.h.b16 %v990
  %v1094 = vunpack.c.l.b16 %v991
  %v1095 = vunpack.c.h.b16 %v991
  %v1096 = vunpack.c.l.b16 %v992
  %v1097 = vunpack.c.h.b16 %v992
  %v1098 = vunpack.c.l.b16 %v993
  %v1099 = vunpack.c.h.b16 %v993
  %v1100 = vunpack.c.l.b16 %v994
  %v1101 = vunpack.c.h.b16 %v994
  %v1102 = vunpack.c.l.b16 %v995
  %v1103 = vunpack.c.h.b16 %v995
  %v1104 = vunpack.c.l.b16 %v996
  %v1105 = vunpack.c.h.b16 %v996
  %v1106 = vunpack.c.l.b16 %v997
  %v1107 = vunpack.c.h.b16 %v997
  %v1108 = vunpack.c.l.b16 %v998
  %v1109 = vunpack.c.h.b16 %v998
  %v1110 = vunpack.c.l.b16 %v999
  %v1111 = vunpack.c.h.b16 %v999
  %v1112 = vunpack.c.l.b16 %v1000
  %v1113 = vunpack.c.h.b16 %v1000
  %v1114 = vunpack.c.l.b16 %v1001
  %v1115 = vunpack.c.h.b16 %v1001
  %v1116 = vunpack.c.l.b16 %v1002
  %v1117 = vunpack.c.h.b16 %v1002
  %v1118 = vunpack.c.l.b16 %v1003
  %v1119 = vunpack.c.h.b16 %v1003
  %v1120 = vunpack.c.l.b16 %v1004
  %v1121 = vunpack.c.h.b16 %v1004
  %v1122 = vunpack.c.l.b16 %v1005
  %v1123 = vunpack.c.h.b16 %v1005
  %v1124 = vunpack.c.l.b16 %v1006
  %v1125 = vunpack.c.h.b16 %v1006
  %v1126 = vunpack.c.l.b16 %v1007
  %v1127 = vunpack.c.h.b16 %v1007
  %v1128 = vunpack.c.l.b16 %v1008
  %v1129 = vunpack.c.h.b16 %v1008
  %v1130 = vunpack.c.l.b16 %v1009
  %v1131 = vunpack.c.h.b16 %v1009
  %v1132 = vunpack.c.l.b16 %v1010
  %v1133 = vunpack.c.h.b16 %v1010
  %v1134 = vunpack.c.l.b16 %v1011
  %v1135 = vunpack.c.h.b16 %v1011
  %v1136 = vunpack.c.l.b16 %v1012
  %v1137 = vunpack.c.h.b16 %v1012
  %v1138 = vunpack.c.l.b16 %v1013
  %v1139 = vunpack.c.h.b16 %v1013
  %v1140 = vunpack.c.l.b16 %v1014
  %v1141 = vunpack.c.h.b16 %v1014
  %v1142 = vunpack.c.l.b16 %v1015
  %v1143 = vunpack.c.h.b16 %v1015
  %v1144 = vunpack.c.l.b16 %v1016
  %v1145 = vunpack.c.h.b16 %v1016
  %v1146 = vunpack.c.l.b16 %v1017
  %v1147 = vunpack.c.h.b16 %v1017
  %v1148 = vunpack.c.l.b16 %v1018
  %v1149 = vunpack.c.h.b16 %v1018
  %v1150 = vunpack.c.l.b16 %v1019
  %v1151 = vunpack.c.h.b16 %v1019
  %v1152 = vunpack.c.l.b16 %v1020
  %v1153 = vunpack.c.h.b16 %v1020
  %v1154 = vunpack.c.l.b16 %v1021
  %v1155 = vunpack.c.h.b16 %v1021
  %v1156 = vunpack.c.l.b16 %v1022
  %v1157 = vunpack.c.h.b16 %v1022
  %v1158 = vunpack.c.l.b16 %v1023
  %v1159 = vunpack.c.h.b16 %v1023
  %v1160 = vunpack.c.l.b16 %v1024
  %v1161 = vunpack.c.h.b16 %v1024
  %v1162 = vunpack.c.l.b16 %v1025
  %v1163 = vunpack.c.h.b16 %v1025
  %v1164 = vunpack.c.l.b16 %v1026
  %v1165 = vunpack.c.h.b16 %v1026
  %v1166 = vunpack.c.l.b16 %v1027
  %v1167 = vunpack.c.h.b16 %v1027
  %v1168 = vunpack.c.l.b16 %v1028
  %v1169 = vunpack.c.h.b16 %v1028
  %v1170 = vunpack.c.l.b16 %v1029
  %v1171 = vunpack.c.h.b16 %v1029
  %v1172 = vunpack.c.l.b16 %v1030
  %v1173 = vunpack.c.h.b16 %v1030
  %v1174 = vunpack.c.l.b16 %v1031
  %v1175 = vunpack.c.h.b16 %v1031
  %v1176 = vunpack.c.l.b16 %v1032
  %v1177 = vunpack.c.h.b16 %v1032
  %v1178 = vunpack.c.l.b16 %v1033
  %v1179 = vunpack.c.h.b16 %v1033
  %v1180 = vunpack.c.l.b16 %v1034
  %v1181 = vunpack.c.h.b16 %v1034
  %v1182 = vunpack.c.l.b16 %v1035
  %v1183 = vunpack.c.h.b16 %v1035
  %v1184 = vunpack.c.l.b16 %v1036
  %v1185 = vunpack.c.h.b16 %v1036
  %v1186 = vunpack.c.l.b16 %v1037
  %v1187 = vunpack.c.h.b16 %v1037
  %v1188 = vpack.c.b16 %v1088, %v1088
  %v1189 = vpack.c.b16 %v1089, %v1089
  %v1190 = vpack.c.b16 %v1090, %v1090
  %v1191 = vpack.c.b16 %v1091, %v1091
  %v1192 = vpack.c.b16 %v1092, %v1092
  %v1193 = vpack.c.b16 %v1093, %v1093
  %v1194 = vpack.c.b16 %v1094, %v1094
  %v1195 = vpack.c.b16 %v1095, %v1095
  %v1196 = vpack.c.b16 %v1096, %v1096
  %v1197 = vpack.c.b16 %v1097, %v1097
  %v1198 = vpack.c.b16 %v1098, %v1098
  %v1199 = vpack.c.b16 %v1099, %v1099
  %v1200 = vpack.c.b16 %v1100, %v1100
  %v1201 = vpack.c.b16 %v1101, %v1101
  %v1202 = vpack.c.b16 %v1102, %v1102
  %v1203 = vpack.c.b16 %v1103, %v1103
  %v1204 = vpack.c.b16 %v1104, %v1104
  %v1205 = vpack.c.b16 %v1105, %v1105
  %v1206 = vpack.c.b16 %v1106, %v1106
  %v1207 = vpack.c.b16 %v1107, %v1107
  %v1208 = vpack.c.b16 %v1108, %v1108
  %v1209 = vpack.c.b16 %v1109, %v1109
  %v1210 = vpack.c.b16 %v1110, %v1110
  %v1211 = vpack.c.b16 %v1111, %v1111
  %v1212 = vpack.c.b16 %v1112, %v1112
  %v1213 = vpack.c.b16 %v1113, %v1113
  %v1214 = vpack.c.b16 %v1114, %v1114
  %v1215 = vpack.c.b16 %v1115, %v1115
  %v1216 = vpack.c.b16 %v1116, %v1116
  %v1217 = vpack.c.b16 %v1117, %v1117
  %v1218 = vpack.c.b16 %v1118, %v1118
  %v1219 = vpack.c.b16 %v1119, %v1119
  %v1220 = vpack.c.b16 %v1120, %v1120
  %v1221 = vpack.c.b16 %v1121, %v1121
  %v1222 = vpack.c.b16 %v1122, %v1122
  %v1223 = vpack.c.b16 %v1123, %v1123
  %v1224 = vpack.c.b16 %v1124, %v1124
  %v1225 = vpack.c.b16 %v1125, %v1125
  %v1226 = vpack.c.b16 %v1126, %v1126
  %v1227 = vpack.c.b16 %v1127, %v1127
  %v1228 = vpack.c.b16 %v1128, %v1128
  %v1229 = vpack.c.b16 %v1129, %v1129
  %v1230 = vpack.c.b16 %v1130, %v1130
  %v1231 = vpack.c.b16 %v1131, %v1131
  %v1232 = vpack.c.b16 %v1132, %v1132
  %v1233 = vpack.c.b16 %v1133, %v1133
  %v1234 = vpack.c.b16 %v1134, %v1134
  %v1235 = vpack.c.b16 %v1135, %v1135
  %v1236 = vpack.c.b16 %v1136, %v1136
  %v1237 = vpack.c.b16 %v1137, %v1137
  %v1238 = vpack.c.b16 %v1138, %v1138
  %v1239 = vpack.c.b16 %v1139, %v1139
  %v1240 = vpack.c.b16 %v1140, %v1140
  %v1241 = vpack.c.b16 %v1141, %v1141
  %v1242 = vpack.c.b16 %v1142, %v1142
  %v1243 = vpack.c.b16 %v1143, %v1143
  %v1244 = vpack.c.b16 %v1144, %v1144
  %v1245 = vpack.c.b16 %v1145, %v1145
  %v1246 = vpack.c.b16 %v1146, %v1146
  %v1247 = vpack.c.b16 %v1147, %v1147
  %v1248 = vpack.c.b16 %v1148, %v1148
  %v1249 = vpack.c.b16 %v1149, %v1149
  %v1250 = vpack.c.b16 %v1150, %v1150
  %v1251 = vpack.c.b16 %v1151, %v1151
  %v1252 = vpack.c.b16 %v1152, %v1152
  %v1253 = vpack.c.b16 %v1153, %v1153
  %v1254 = vpack.c.b16 %v1154, %v1154
  %v1255 = vpack.c.b16 %v1155, %v1155
  %v1256 = vpack.c.b16 %v1156, %v1156
  %v1257 = vpack.c.b16 %v1157, %v1157
  %v1258 = vpack.c.b16 %v1158, %v1158
  %v1259 = vpack.c.b16 %v1159, %v1159
  %v1260 = vpack.c.b16 %v1160, %v1160
  %v1261 = vpack.c.b16 %v1161, %v1161
  %v1262 = vpack.c.b16 %v1162, %v1162
  %v1263 = vpack.c.b16 %v1163, %v1163
  %v1264 = vpack.c.b16 %v1164, %v1164
  %v1265 = vpack.c.b16 %v1165, %v1165
  %v1266 = vpack.c.b16 %v1166, %v1166
  %v1267 = vpack.c.b16 %v1167, %v1167
  %v1268 = vpack.c.b16 %v1168, %v1168
  %v1269 = vpack.c.b16 %v1169, %v1169
  %v1270 = vpack.c.b16 %v1170, %v1170
  %v1271 = vpack.c.b16 %v1171, %v1171
  %v1272 = vpack.c.b16 %v1172, %v1172
  %v1273 = vpack.c.b16 %v1173, %v1173
  %v1274 = vpack.c.b16 %v1174, %v1174
  %v1275 = vpack.c.b16 %v1175, %v1175
  %v1276 = vpack.c.b16 %v1176, %v1176
  %v1277 = vpack.c.b16 %v1177, %v1177
  %v1278 = vpack.c.b16 %v1178, %v1178
  %v1279 = vpack.c.b16 %v1179, %v1179
  %v1280 = vpack.c.b16 %v1180, %v1180
  %v1281 = vpack.c.b16 %v1181, %v1181
  %v1282 = vpack.c.b16 %v1182, %v1182
  %v1283 = vpack.c.b16 %v1183, %v1183
  %v1284 = vpack.c.b16 %v1184, %v1184
  %v1285 = vpack.c.b16 %v1185, %v1185
  %v1286 = vpack.c.b16 %v1186, %v1186
  %v1287 = vpack.c.b16 %v1187, %v1187
  %1388 = vst [vmem:[%s3] sm:$0xf] %v1188
  %1389 = vst [vmem:[%s3 + $0x4] sm:$0xf] %v1189
  %1390 = vst [vmem:[%s3 + $0x8] sm:$0xf] %v1190
  %1391 = vst [vmem:[%s3 + $0xc] sm:$0xf] %v1191
  %1392 = vst [vmem:[%s3 + $0x10] sm:$0xf] %v1192
  %1393 = vst [vmem:[%s3 + $0x14] sm:$0xf] %v1193
  %1394 = vst [vmem:[%s3 + $0x18] sm:$0xf] %v1194
  %1395 = vst [vmem:[%s3 + $0x1c] sm:$0xf] %v1195
  %1396 = vst [vmem:[%s3 + $0x20] sm:$0xf] %v1196
  %1397 = vst [vmem:[%s3 + $0x24] sm:$0xf] %v1197
  %1398 = vst [vmem:[%s3 + $0x28] sm:$0xf] %v1198
  %1399 = vst [vmem:[%s3 + $0x2c] sm:$0xf] %v1199
  %1400 = vst [vmem:[%s3 + $0x30] sm:$0xf] %v1200
  %1401 = vst [vmem:[%s3 + $0x34] sm:$0xf] %v1201
  %1402 = vst [vmem:[%s3 + $0x38] sm:$0xf] %v1202
  %1403 = vst [vmem:[%s3 + $0x3c] sm:$0xf] %v1203
  %1404 = vst [vmem:[%s3 + $0x40] sm:$0xf] %v1204
  %1405 = vst [vmem:[%s3 + $0x44] sm:$0xf] %v1205
  %1406 = vst [vmem:[%s3 + $0x48] sm:$0xf] %v1206
  %1407 = vst [vmem:[%s3 + $0x4c] sm:$0xf] %v1207
  %1408 = vst [vmem:[%s3 + $0x50] sm:$0xf] %v1208
  %1409 = vst [vmem:[%s3 + $0x54] sm:$0xf] %v1209
  %1410 = vst [vmem:[%s3 + $0x58] sm:$0xf] %v1210
  %1411 = vst [vmem:[%s3 + $0x5c] sm:$0xf] %v1211
  %1412 = vst [vmem:[%s3 + $0x60] sm:$0xf] %v1212
  %1413 = vst [vmem:[%s3 + $0x64] sm:$0xf] %v1213
  %1414 = vst [vmem:[%s3 + $0x68] sm:$0xf] %v1214
  %1415 = vst [vmem:[%s3 + $0x6c] sm:$0xf] %v1215
  %1416 = vst [vmem:[%s3 + $0x70] sm:$0xf] %v1216
  %1417 = vst [vmem:[%s3 + $0x74] sm:$0xf] %v1217
  %1418 = vst [vmem:[%s3 + $0x78] sm:$0xf] %v1218
  %1419 = vst [vmem:[%s3 + $0x7c] sm:$0xf] %v1219
  %1420 = vst [vmem:[%s3 + $0x80] sm:$0xf] %v1220
  %1421 = vst [vmem:[%s3 + $0x84] sm:$0xf] %v1221
  %1422 = vst [vmem:[%s3 + $0x88] sm:$0xf] %v1222
  %1423 = vst [vmem:[%s3 + $0x8c] sm:$0xf] %v1223
  %1424 = vst [vmem:[%s3 + $0x90] sm:$0xf] %v1224
  %1425 = vst [vmem:[%s3 + $0x94] sm:$0xf] %v1225
  %1426 = vst [vmem:[%s3 + $0x98] sm:$0xf] %v1226
  %1427 = vst [vmem:[%s3 + $0x9c] sm:$0xf] %v1227
  %1428 = vst [vmem:[%s3 + $0xa0] sm:$0xf] %v1228
  %1429 = vst [vmem:[%s3 + $0xa4] sm:$0xf] %v1229
  %1430 = vst [vmem:[%s3 + $0xa8] sm:$0xf] %v1230
  %1431 = vst [vmem:[%s3 + $0xac] sm:$0xf] %v1231
  %1432 = vst [vmem:[%s3 + $0xb0] sm:$0xf] %v1232
  %1433 = vst [vmem:[%s3 + $0xb4] sm:$0xf] %v1233
  %1434 = vst [vmem:[%s3 + $0xb8] sm:$0xf] %v1234
  %1435 = vst [vmem:[%s3 + $0xbc] sm:$0xf] %v1235
  %1436 = vst [vmem:[%s3 + $0xc0] sm:$0xf] %v1236
  %1437 = vst [vmem:[%s3 + $0xc4] sm:$0xf] %v1237
  %1438 = vst [vmem:[%s3 + $0xc8] sm:$0xf] %v1238
  %1439 = vst [vmem:[%s3 + $0xcc] sm:$0xf] %v1239
  %1440 = vst [vmem:[%s3 + $0xd0] sm:$0xf] %v1240
  %1441 = vst [vmem:[%s3 + $0xd4] sm:$0xf] %v1241
  %1442 = vst [vmem:[%s3 + $0xd8] sm:$0xf] %v1242
  %1443 = vst [vmem:[%s3 + $0xdc] sm:$0xf] %v1243
  %1444 = vst [vmem:[%s3 + $0xe0] sm:$0xf] %v1244
  %1445 = vst [vmem:[%s3 + $0xe4] sm:$0xf] %v1245
  %1446 = vst [vmem:[%s3 + $0xe8] sm:$0xf] %v1246
  %1447 = vst [vmem:[%s3 + $0xec] sm:$0xf] %v1247
  %1448 = vst [vmem:[%s3 + $0xf0] sm:$0xf] %v1248
  %1449 = vst [vmem:[%s3 + $0xf4] sm:$0xf] %v1249
  %1450 = vst [vmem:[%s3 + $0xf8] sm:$0xf] %v1250
  %1451 = vst [vmem:[%s3 + $0xfc] sm:$0xf] %v1251
  %1452 = vst [vmem:[%s3 + $0x100] sm:$0xf] %v1252
  %1453 = vst [vmem:[%s3 + $0x104] sm:$0xf] %v1253
  %1454 = vst [vmem:[%s3 + $0x108] sm:$0xf] %v1254
  %1455 = vst [vmem:[%s3 + $0x10c] sm:$0xf] %v1255
  %1456 = vst [vmem:[%s3 + $0x110] sm:$0xf] %v1256
  %1457 = vst [vmem:[%s3 + $0x114] sm:$0xf] %v1257
  %1458 = vst [vmem:[%s3 + $0x118] sm:$0xf] %v1258
  %1459 = vst [vmem:[%s3 + $0x11c] sm:$0xf] %v1259
  %1460 = vst [vmem:[%s3 + $0x120] sm:$0xf] %v1260
  %1461 = vst [vmem:[%s3 + $0x124] sm:$0xf] %v1261
  %1462 = vst [vmem:[%s3 + $0x128] sm:$0xf] %v1262
  %1463 = vst [vmem:[%s3 + $0x12c] sm:$0xf] %v1263
  %1464 = vst [vmem:[%s3 + $0x130] sm:$0xf] %v1264
  %1465 = vst [vmem:[%s3 + $0x134] sm:$0xf] %v1265
  %1466 = vst [vmem:[%s3 + $0x138] sm:$0xf] %v1266
  %1467 = vst [vmem:[%s3 + $0x13c] sm:$0xf] %v1267
  %1468 = vst [vmem:[%s3 + $0x140] sm:$0xf] %v1268
  %1469 = vst [vmem:[%s3 + $0x144] sm:$0xf] %v1269
  %1470 = vst [vmem:[%s3 + $0x148] sm:$0xf] %v1270
  %1471 = vst [vmem:[%s3 + $0x14c] sm:$0xf] %v1271
  %1472 = vst [vmem:[%s3 + $0x150] sm:$0xf] %v1272
  %1473 = vst [vmem:[%s3 + $0x154] sm:$0xf] %v1273
  %1474 = vst [vmem:[%s3 + $0x158] sm:$0xf] %v1274
  %1475 = vst [vmem:[%s3 + $0x15c] sm:$0xf] %v1275
  %1476 = vst [vmem:[%s3 + $0x160] sm:$0xf] %v1276
  %1477 = vst [vmem:[%s3 + $0x164] sm:$0xf] %v1277
  %1478 = vst [vmem:[%s3 + $0x168] sm:$0xf] %v1278
  %1479 = vst [vmem:[%s3 + $0x16c] sm:$0xf] %v1279
  %1480 = vst [vmem:[%s3 + $0x170] sm:$0xf] %v1280
  %1481 = vst [vmem:[%s3 + $0x174] sm:$0xf] %v1281
  %1482 = vst [vmem:[%s3 + $0x178] sm:$0xf] %v1282
  %1483 = vst [vmem:[%s3 + $0x17c] sm:$0xf] %v1283
  %1484 = vst [vmem:[%s3 + $0x180] sm:$0xf] %v1284
  %1485 = vst [vmem:[%s3 + $0x184] sm:$0xf] %v1285
  %1486 = vst [vmem:[%s3 + $0x188] sm:$0xf] %v1286
  %1487 = vst [vmem:[%s3 + $0x18c] sm:$0xf] %v1287
  // Predicated region
  $region14: #{vae_forward.11} parent=0 // pred_check
    _
  $region15: #{vae_forward.11} parent=0 // pred_check_branch
    %1489 = sbr.rel (0) target = $region17
  $region16: #{vae_forward.11} parent=0 // pred_region
    _
  $region17: #{vae_forward.11} parent=0 // pred_fallthru
    _
  // Predicated region
  $region18: #{vae_forward.11} parent=0 // pred_check
    _
  $region19: #{vae_forward.11} parent=0 // pred_check_branch
    %1491 = sbr.rel (0) target = $region21
  $region20: #{vae_forward.11} parent=0 // pred_region
    _
  $region21: #{vae_forward.11} parent=0 // pred_fallthru
    _

</llo_original>
